<compile_context>
chip_gen: v7x
topology: tpu7x:2x2x1
jax: 0.10.0
libtpu: 0.0.40
codegen_flags: <defaults>
</compile_context>

<pallas_src>
import functools

import jax
import jax.numpy as jnp
from jax.experimental import pallas as pl
from jax.experimental.pallas import tpu as pltpu


def _svd_noise_kernel(B, M, num_heads,
                      x12_ref, u_ref, vh_ref, s_ref, hmask_ref,
                      w12a_ref, b12a_ref, w12b_ref, b12b_ref,
                      w3_ref, b3_ref,
                      wq_ref, wk_ref, wv_ref,
                      wproj_ref, bproj_ref,
                      w4a_ref, b4a_ref, w4b_ref, b4b_ref,
                      pred_ref):
    f32 = jnp.float32
    bf16 = jnp.bfloat16
    H = num_heads
    N = M  # tokens per batch element

    # ---- fused mlp1(U^T) + mlp2(Vh): block-diag first layer, stacked second --
    h = jnp.dot(x12_ref[...], w12a_ref[...], preferred_element_type=f32)
    h = jnp.maximum(h + b12a_ref[...], 0.0)                       # (B*M, 128)
    m12 = jnp.dot(h.astype(bf16), w12b_ref[...], preferred_element_type=f32)
    m12 = m12 + b12b_ref[...]                                     # (B*M, M)

    # ---- mlp3(s), broadcast over the token dimension -------------------------
    m3 = jnp.dot(s_ref[...].astype(bf16), w3_ref[...], preferred_element_type=f32)
    m3 = m3 + b3_ref[...]                                         # (B, M)

    tok = m12.reshape(B, N, M) + m3[:, None, :]                   # (B, N, C)
    tok_bf = tok.reshape(B * N, M).astype(bf16)                   # (B*N, C)

    # ---- attention: q/k/v for the whole batch, one matmul each ---------------
    # (attention scale is pre-folded into wq by the wrapper)
    q = jnp.dot(tok_bf, wq_ref[...], preferred_element_type=f32)
    k = jnp.dot(tok_bf, wk_ref[...], preferred_element_type=f32)
    v = jnp.dot(tok_bf, wv_ref[...], preferred_element_type=f32)
    q3 = q.astype(bf16).reshape(B, N, M)
    k3 = k.astype(bf16).reshape(B, N, M)
    v3 = v.astype(bf16).reshape(B, N, M)

    # Head-mask trick: zeroing q's lanes outside head h makes a full K=C matmul
    # produce exactly head h's scores -> all heads vectorized, no reshuffles.
    hmask = hmask_ref[...]                                        # (H, 1, C) {0,1}
    qm = (q3[:, None, :, :] * hmask[None, :, :, :]).reshape(B, H * N, M)

    scores = jnp.einsum('bqc,bkc->bqk', qm, k3,
                        preferred_element_type=f32)               # (B, H*N, N)
    mmax = jnp.max(scores, axis=-1, keepdims=True)
    e = jnp.exp(scores - mmax)
    denom = jnp.sum(e, axis=-1, keepdims=True)
    p = e * pl.reciprocal(denom, approx=True)                     # softmax (f32)

    out = jnp.einsum('bqk,bkc->bqc', p.astype(bf16), v3,
                     preferred_element_type=f32)                  # (B, H*N, C)

    # Keep head h's own lanes of its block, then sum over heads AND tokens in a
    # single axis-1 reduction.  Divided by N this is mean_tokens(attention out).
    mask_rows = jnp.broadcast_to(hmask, (H, N, M)).astype(f32).reshape(1, H * N, M)
    attn_mean = jnp.sum(out * mask_rows, axis=1) * (1.0 / N)      # (B, C)

    # proj after the mean (mean commutes with the affine proj layer)
    pr = jnp.dot(attn_mean.astype(bf16), wproj_ref[...],
                 preferred_element_type=f32) + bproj_ref[...]     # (B, C)

    # ---- mlp4 + singular-value residual --------------------------------------
    z = jnp.dot(pr.astype(bf16), w4a_ref[...], preferred_element_type=f32)
    z = jnp.maximum(z + b4a_ref[...], 0.0)                        # (B, 1024)
    sig = jnp.dot(z.astype(bf16), w4b_ref[...], preferred_element_type=f32)
    sig = sig + b4b_ref[...] + s_ref[...]                         # (B, M)

    # ---- pred = U @ diag(sigma) @ Vh == (U * sigma) @ Vh ----------------------
    us = (u_ref[...] * sig[:, None, :]).astype(bf16)              # (B, M, M)
    pred_ref[...] = jnp.einsum('bij,bjk->bik', us, vh_ref[...],
                               preferred_element_type=f32)        # (B, M, M)


def init_params(key, M, num_heads=8):
    """Deterministic PyTorch-Linear-style init. Weights stored as (in, out)."""
    def lin(k, fan_in, fan_out):
        k1, k2 = jax.random.split(k)
        lim = 1.0 / jnp.sqrt(jnp.float32(fan_in))
        w = jax.random.uniform(k1, (fan_in, fan_out), jnp.float32, -lim, lim)
        b = jax.random.uniform(k2, (1, fan_out), jnp.float32, -lim, lim)
        return w, b

    keys = jax.random.split(key, 9)
    w1a, b1a = lin(keys[0], M, 64)
    w1b, b1b = lin(keys[1], 64, M)
    w2a, b2a = lin(keys[2], M, 64)
    w2b, b2b = lin(keys[3], 64, M)
    w3, b3 = lin(keys[4], M, M)
    wqkv, _ = lin(keys[5], M, 3 * M)          # qkv_bias=False
    wproj, bproj = lin(keys[6], M, M)
    w4a, b4a = lin(keys[7], M, 1024)
    w4b, b4b = lin(keys[8], 1024, M)
    # NOTE: self.bn (BatchNorm2d) is never used in forward() -> omitted.
    return [w1a, b1a, w1b, b1b,
            w2a, b2a, w2b, b2b,
            w3, b3,
            wqkv, wproj, bproj,
            w4a, b4a, w4b, b4b]


def pack_params(weights, M, num_heads=8, mm_dtype=jnp.bfloat16):
    """Preprocess module params once into kernel-ready operands.

    - fuse mlp1/mlp2 (block-diag first layer, stacked second layer, summed bias)
    - split qkv into wq/wk/wv, fold the attention scale into wq
    - build the per-head lane mask
    - cast matmul operands to bf16 (biases stay f32)
    """
    (w1a, b1a, w1b, b1b, w2a, b2a, w2b, b2b, w3, b3,
     wqkv, wproj, bproj, w4a, b4a, w4b, b4b) = weights
    assert M % num_heads == 0, "attention dim must be divisible by num_heads"
    D = M // num_heads
    scale = float(D) ** -0.5
    hid = w1a.shape[1]                                   # 64

    w12a = jnp.zeros((2 * M, 2 * hid), jnp.float32)
    w12a = w12a.at[:M, :hid].set(w1a).at[M:, hid:].set(w2a)
    b12a = jnp.concatenate([b1a, b2a], axis=-1)          # (1, 2*hid)
    w12b = jnp.concatenate([w1b, w2b], axis=0)           # (2*hid, M)
    b12b = b1b + b2b                                     # (1, M)

    wq = wqkv[:, 0:M] * scale
    wk = wqkv[:, M:2 * M]
    wv = wqkv[:, 2 * M:3 * M]

    head_ids = jnp.arange(M, dtype=jnp.int32) // D
    hmask = (head_ids[None, :] == jnp.arange(num_heads, dtype=jnp.int32)[:, None])
    hmask = hmask.astype(mm_dtype).reshape(num_heads, 1, M)

    c = lambda a: a.astype(mm_dtype)
    return dict(
        hmask=hmask,
        w12a=c(w12a), b12a=b12a, w12b=c(w12b), b12b=b12b,
        w3=c(w3), b3=b3,
        wq=c(wq), wk=c(wk), wv=c(wv),
        wproj=c(wproj), bproj=bproj,
        w4a=c(w4a), b4a=b4a, w4b=c(w4b), b4b=b4b,
    )


@functools.partial(jax.jit, static_argnames=("num_heads",))
def svd_noise_unet_forward(x, packed, num_heads=8):
    B, C, Hh, W = x.shape
    assert C == 4, "in_channels must be 4 (a=2, c=2 rearrange)"
    assert Hh == W
    M = 2 * Hh
    assert M % num_heads == 0

    # einops 'b (a c) h w -> b (a h) (c w)', a=2, c=2
    xm = (x.reshape(B, 2, 2, Hh, W)
           .transpose(0, 1, 3, 2, 4)
           .reshape(B, 2 * Hh, 2 * W)).astype(jnp.float32)

    # TODO(synk): batched SVD has no Pallas TPU equivalent; computed in plain JAX.
    U, S, Vh = jnp.linalg.svd(xm)
    UT = jnp.swapaxes(U, 1, 2)                       # hoisted transpose (free in XLA)

    bf16 = jnp.bfloat16
    x12 = jnp.concatenate([UT.reshape(B * M, M), Vh.reshape(B * M, M)],
                          axis=-1).astype(bf16)      # (B*M, 2M)
    u_bf = U.astype(bf16)                            # (B, M, M)
    vh_bf = Vh.astype(bf16)                          # (B, M, M)
    s2 = S.astype(jnp.float32)                       # (B, M)

    operands = [x12, u_bf, vh_bf, s2, packed["hmask"],
                packed["w12a"], packed["b12a"], packed["w12b"], packed["b12b"],
                packed["w3"], packed["b3"],
                packed["wq"], packed["wk"], packed["wv"],
                packed["wproj"], packed["bproj"],
                packed["w4a"], packed["b4a"], packed["w4b"], packed["b4b"]]

    vmem_spec = pl.BlockSpec(memory_space=pltpu.MemorySpace.VMEM)
    pred = pl.pallas_call(
        functools.partial(_svd_noise_kernel, B, M, num_heads),
        out_shape=jax.ShapeDtypeStruct((B, M, M), jnp.float32),
        in_specs=[vmem_spec] * len(operands),
        out_specs=vmem_spec,
        compiler_params=pltpu.CompilerParams(vmem_limit_bytes=32 * 1024 * 1024),
    )(*operands)

    # inverse rearrange: 'b (a h) (c w) -> b (a c) h w', a=2, c=2
    out = (pred.reshape(B, 2, Hh, 2, W)
               .transpose(0, 1, 3, 2, 4)
               .reshape(B, 4, Hh, W))
    return out


def reference_forward(x, packed, num_heads=8):
    """Plain-JAX reference (f32 math on the same packed parameters)."""
    f32 = jnp.float32
    B, C, Hh, W = x.shape
    M = 2 * Hh
    D = M // num_heads
    up = lambda a: a.astype(f32)

    xm = (x.reshape(B, 2, 2, Hh, W).transpose(0, 1, 3, 2, 4)
           .reshape(B, 2 * Hh, 2 * W)).astype(f32)
    U, S, Vh = jnp.linalg.svd(xm)
    UT = jnp.swapaxes(U, 1, 2)

    h = jax.nn.relu(jnp.concatenate([UT, Vh], axis=-1) @ up(packed["w12a"])
                    + packed["b12a"])
    tok = h @ up(packed["w12b"]) + packed["b12b"]
    tok = tok + (S @ up(packed["w3"]) + packed["b3"])[:, None, :]

    q = tok @ up(packed["wq"])                       # scale already folded into wq
    k = tok @ up(packed["wk"])
    v = tok @ up(packed["wv"])
    qh = q.reshape(B, M, num_heads, D).transpose(0, 2, 1, 3)
    kh = k.reshape(B, M, num_heads, D).transpose(0, 2, 1, 3)
    vv = v.reshape(B, M, num_heads, D).transpose(0, 2, 1, 3)
    p = jax.nn.softmax(qh @ jnp.swapaxes(kh, -1, -2), axis=-1)
    o = (p @ vv).transpose(0, 2, 1, 3).reshape(B, M, M)
    o = o @ up(packed["wproj"]) + packed["bproj"]
    mean = o.mean(axis=1)

    z = jax.nn.relu(mean @ up(packed["w4a"]) + packed["b4a"])
    sig = z @ up(packed["w4b"]) + packed["b4b"] + S
    pred = jnp.einsum('bij,bjk->bik', U * sig[:, None, :], Vh)
    return (pred.reshape(B, 2, Hh, 2, W).transpose(0, 1, 3, 2, 4)
                .reshape(B, 4, Hh, W))


if __name__ == "__main__":
    # Small shapes consistent with the module: resolution=16, in/out channels=4.
    B, Cc, Hh, W = 2, 4, 16, 16
    M = 2 * Hh  # 32; attention dim=32, num_heads=8, head_dim=4
    num_heads = 8

    key = jax.random.PRNGKey(0)
    kx, kp = jax.random.split(key)
    x = jax.random.normal(kx, (B, Cc, Hh, W), dtype=jnp.float32)
    weights = init_params(kp, M, num_heads=num_heads)
    packed = pack_params(weights, M, num_heads=num_heads)

    out = svd_noise_unet_forward(x, packed, num_heads=num_heads)
    out = jax.block_until_ready(out)
    assert out.shape == (B, Cc, Hh, W)
    assert bool(jnp.all(jnp.isfinite(out)))

    # Numerical check vs a plain-JAX reference (loose tolerance: kernel runs the
    # matmuls in bf16 with f32 accumulation).
    ref = reference_forward(x, packed, num_heads=num_heads)
    err = float(jnp.max(jnp.abs(out.astype(jnp.float32) - ref)))
    scl = float(jnp.max(jnp.abs(ref))) + 1e-6
    assert err / scl < 0.1, f"kernel/reference mismatch: max|diff|={err}, scale={scl}"

    print("KERNEL_OK")
</pallas_src>

<mosaic_0001>
module attributes {stable_mosaic.version = 11 : i64} {
  func.func @_svd_noise_kernel(%arg0: memref<64x64xbf16, #tpu.memory_space<vmem>>, %arg1: memref<2x32x32xbf16, #tpu.memory_space<vmem>>, %arg2: memref<2x32x32xbf16, #tpu.memory_space<vmem>>, %arg3: memref<2x32xf32, #tpu.memory_space<vmem>>, %arg4: memref<8x1x32xbf16, #tpu.memory_space<vmem>>, %arg5: memref<64x128xbf16, #tpu.memory_space<vmem>>, %arg6: memref<1x128xf32, #tpu.memory_space<vmem>>, %arg7: memref<128x32xbf16, #tpu.memory_space<vmem>>, %arg8: memref<1x32xf32, #tpu.memory_space<vmem>>, %arg9: memref<32x32xbf16, #tpu.memory_space<vmem>>, %arg10: memref<1x32xf32, #tpu.memory_space<vmem>>, %arg11: memref<32x32xbf16, #tpu.memory_space<vmem>>, %arg12: memref<32x32xbf16, #tpu.memory_space<vmem>>, %arg13: memref<32x32xbf16, #tpu.memory_space<vmem>>, %arg14: memref<32x32xbf16, #tpu.memory_space<vmem>>, %arg15: memref<1x32xf32, #tpu.memory_space<vmem>>, %arg16: memref<32x1024xbf16, #tpu.memory_space<vmem>>, %arg17: memref<1x1024xf32, #tpu.memory_space<vmem>>, %arg18: memref<1024x32xbf16, #tpu.memory_space<vmem>>, %arg19: memref<1x32xf32, #tpu.memory_space<vmem>>, %arg20: memref<2x32x32xf32, #tpu.memory_space<vmem>>) attributes {dimension_semantics = [], scalar_prefetch = 0 : i64, scratch_operands = 0 : i64, tpu.core_type = #tpu.core_type<tc>} {
    %c0 = arith.constant 0 : index
    %c0_0 = arith.constant 0 : index
    %0 = vector.load %arg0[%c0, %c0_0] : memref<64x64xbf16, #tpu.memory_space<vmem>>, vector<64x64xbf16>
    %c0_1 = arith.constant 0 : index
    %c0_2 = arith.constant 0 : index
    %1 = vector.load %arg5[%c0_1, %c0_2] : memref<64x128xbf16, #tpu.memory_space<vmem>>, vector<64x128xbf16>
    %cst = arith.constant dense<0.000000e+00> : vector<64x128xf32>
    %2 = tpu.matmul %0, %1, %cst {dimension_numbers = #tpu.dot_dimension_numbers<[1], [0], [0], [1], [0, 0, 1, 1], [], []>} : vector<64x64xbf16>, vector<64x128xbf16>, vector<64x128xf32> -> vector<64x128xf32>
    %c0_3 = arith.constant 0 : index
    %c0_4 = arith.constant 0 : index
    %3 = vector.load %arg6[%c0_3, %c0_4] : memref<1x128xf32, #tpu.memory_space<vmem>>, vector<1x128xf32>
    %4 = vector.broadcast %3 : vector<1x128xf32> to vector<64x128xf32>
    %5 = arith.addf %2, %4 : vector<64x128xf32>
    %cst_5 = arith.constant 0.000000e+00 : f32
    %6 = vector.broadcast %cst_5 : f32 to vector<64x128xf32>
    %7 = arith.maximumf %5, %6 : vector<64x128xf32>
    %8 = arith.truncf %7 : vector<64x128xf32> to vector<64x128xbf16>
    %c0_6 = arith.constant 0 : index
    %c0_7 = arith.constant 0 : index
    %9 = vector.load %arg7[%c0_6, %c0_7] : memref<128x32xbf16, #tpu.memory_space<vmem>>, vector<128x32xbf16>
    %cst_8 = arith.constant dense<0.000000e+00> : vector<64x32xf32>
    %10 = tpu.matmul %8, %9, %cst_8 {dimension_numbers = #tpu.dot_dimension_numbers<[1], [0], [0], [1], [0, 0, 1, 1], [], []>} : vector<64x128xbf16>, vector<128x32xbf16>, vector<64x32xf32> -> vector<64x32xf32>
    %c0_9 = arith.constant 0 : index
    %c0_10 = arith.constant 0 : index
    %11 = vector.load %arg8[%c0_9, %c0_10] : memref<1x32xf32, #tpu.memory_space<vmem>>, vector<1x32xf32>
    %12 = vector.broadcast %11 : vector<1x32xf32> to vector<64x32xf32>
    %13 = arith.addf %10, %12 : vector<64x32xf32>
    %c0_11 = arith.constant 0 : index
    %c0_12 = arith.constant 0 : index
    %14 = vector.load %arg3[%c0_11, %c0_12] : memref<2x32xf32, #tpu.memory_space<vmem>>, vector<2x32xf32>
    %15 = arith.truncf %14 : vector<2x32xf32> to vector<2x32xbf16>
    %c0_13 = arith.constant 0 : index
    %c0_14 = arith.constant 0 : index
    %16 = vector.load %arg9[%c0_13, %c0_14] : memref<32x32xbf16, #tpu.memory_space<vmem>>, vector<32x32xbf16>
    %cst_15 = arith.constant dense<0.000000e+00> : vector<2x32xf32>
    %17 = tpu.matmul %15, %16, %cst_15 {dimension_numbers = #tpu.dot_dimension_numbers<[1], [0], [0], [1], [0, 0, 1, 1], [], []>} : vector<2x32xbf16>, vector<32x32xbf16>, vector<2x32xf32> -> vector<2x32xf32>
    %c0_16 = arith.constant 0 : index
    %c0_17 = arith.constant 0 : index
    %18 = vector.load %arg10[%c0_16, %c0_17] : memref<1x32xf32, #tpu.memory_space<vmem>>, vector<1x32xf32>
    %19 = vector.broadcast %18 : vector<1x32xf32> to vector<2x32xf32>
    %20 = arith.addf %17, %19 : vector<2x32xf32>
    %21 = vector.shape_cast %13 : vector<64x32xf32> to vector<2x32x32xf32>
    %22 = vector.shape_cast %20 : vector<2x32xf32> to vector<2x1x32xf32>
    %23 = vector.broadcast %22 : vector<2x1x32xf32> to vector<2x32x32xf32>
    %24 = arith.addf %21, %23 : vector<2x32x32xf32>
    %25 = vector.shape_cast %24 : vector<2x32x32xf32> to vector<64x32xf32>
    %26 = arith.truncf %25 : vector<64x32xf32> to vector<64x32xbf16>
    %c0_18 = arith.constant 0 : index
    %c0_19 = arith.constant 0 : index
    %27 = vector.load %arg11[%c0_18, %c0_19] : memref<32x32xbf16, #tpu.memory_space<vmem>>, vector<32x32xbf16>
    %cst_20 = arith.constant dense<0.000000e+00> : vector<64x32xf32>
    %28 = tpu.matmul %26, %27, %cst_20 {dimension_numbers = #tpu.dot_dimension_numbers<[1], [0], [0], [1], [0, 0, 1, 1], [], []>} : vector<64x32xbf16>, vector<32x32xbf16>, vector<64x32xf32> -> vector<64x32xf32>
    %c0_21 = arith.constant 0 : index
    %c0_22 = arith.constant 0 : index
    %29 = vector.load %arg12[%c0_21, %c0_22] : memref<32x32xbf16, #tpu.memory_space<vmem>>, vector<32x32xbf16>
    %cst_23 = arith.constant dense<0.000000e+00> : vector<64x32xf32>
    %30 = tpu.matmul %26, %29, %cst_23 {dimension_numbers = #tpu.dot_dimension_numbers<[1], [0], [0], [1], [0, 0, 1, 1], [], []>} : vector<64x32xbf16>, vector<32x32xbf16>, vector<64x32xf32> -> vector<64x32xf32>
    %c0_24 = arith.constant 0 : index
    %c0_25 = arith.constant 0 : index
    %31 = vector.load %arg13[%c0_24, %c0_25] : memref<32x32xbf16, #tpu.memory_space<vmem>>, vector<32x32xbf16>
    %cst_26 = arith.constant dense<0.000000e+00> : vector<64x32xf32>
    %32 = tpu.matmul %26, %31, %cst_26 {dimension_numbers = #tpu.dot_dimension_numbers<[1], [0], [0], [1], [0, 0, 1, 1], [], []>} : vector<64x32xbf16>, vector<32x32xbf16>, vector<64x32xf32> -> vector<64x32xf32>
    %33 = arith.truncf %28 : vector<64x32xf32> to vector<64x32xbf16>
    %34 = vector.shape_cast %33 : vector<64x32xbf16> to vector<2x32x32xbf16>
    %35 = arith.truncf %30 : vector<64x32xf32> to vector<64x32xbf16>
    %36 = vector.shape_cast %35 : vector<64x32xbf16> to vector<2x32x32xbf16>
    %37 = arith.truncf %32 : vector<64x32xf32> to vector<64x32xbf16>
    %38 = vector.shape_cast %37 : vector<64x32xbf16> to vector<2x32x32xbf16>
    %c0_27 = arith.constant 0 : index
    %c0_28 = arith.constant 0 : index
    %c0_29 = arith.constant 0 : index
    %39 = vector.load %arg4[%c0_27, %c0_28, %c0_29] : memref<8x1x32xbf16, #tpu.memory_space<vmem>>, vector<8x1x32xbf16>
    %40 = vector.shape_cast %34 : vector<2x32x32xbf16> to vector<2x1x32x32xbf16>
    %41 = vector.shape_cast %39 : vector<8x1x32xbf16> to vector<1x8x1x32xbf16>
    %42 = vector.broadcast %40 : vector<2x1x32x32xbf16> to vector<2x8x32x32xbf16>
    %43 = vector.broadcast %41 : vector<1x8x1x32xbf16> to vector<2x8x32x32xbf16>
    %44 = arith.mulf %42, %43 : vector<2x8x32x32xbf16>
    %45 = vector.shape_cast %44 : vector<2x8x32x32xbf16> to vector<2x256x32xbf16>
    "tpu.trace_start"() <{level = 10 : i32, message = "bqc,bkc->bqk"}> : () -> ()
    %cst_30 = arith.constant dense<0.000000e+00> : vector<2x256x32xf32>
    %46 = tpu.matmul %45, %36, %cst_30 {dimension_numbers = #tpu.dot_dimension_numbers<[2], [2], [1], [1], [0, 0, 0, 1, 1, 1], [0], [0]>} : vector<2x256x32xbf16>, vector<2x32x32xbf16>, vector<2x256x32xf32> -> vector<2x256x32xf32>
    "tpu.trace_stop"() : () -> ()
    %cst_31 = arith.constant dense<0xFF800000> : vector<2x256xf32>
    %47 = vector.multi_reduction <maximumf>, %46, %cst_31 [2] : vector<2x256x32xf32> to vector<2x256xf32>
    %48 = vector.shape_cast %47 : vector<2x256xf32> to vector<2x256x1xf32>
    %49 = vector.broadcast %48 : vector<2x256x1xf32> to vector<2x256x32xf32>
    %50 = arith.subf %46, %49 : vector<2x256x32xf32>
    %51 = math.exp %50 : vector<2x256x32xf32>
    %cst_32 = arith.constant dense<0.000000e+00> : vector<2x256xf32>
    %52 = vector.multi_reduction <add>, %51, %cst_32 [2] : vector<2x256x32xf32> to vector<2x256xf32>
    %53 = vector.shape_cast %52 : vector<2x256xf32> to vector<2x256x1xf32>
    %54 = tpu.reciprocal %53 {approx = true} : vector<2x256x1xf32> -> vector<2x256x1xf32>
    %55 = vector.broadcast %54 : vector<2x256x1xf32> to vector<2x256x32xf32>
    %56 = arith.mulf %51, %55 : vector<2x256x32xf32>
    %57 = arith.truncf %56 : vector<2x256x32xf32> to vector<2x256x32xbf16>
    "tpu.trace_start"() <{level = 10 : i32, message = "bqk,bkc->bqc"}> : () -> ()
    %cst_33 = arith.constant dense<0.000000e+00> : vector<2x256x32xf32>
    %58 = tpu.matmul %57, %38, %cst_33 {dimension_numbers = #tpu.dot_dimension_numbers<[2], [1], [1], [2], [0, 0, 0, 1, 1, 2], [0], [0]>} : vector<2x256x32xbf16>, vector<2x32x32xbf16>, vector<2x256x32xf32> -> vector<2x256x32xf32>
    "tpu.trace_stop"() : () -> ()
    %59 = vector.shape_cast %39 : vector<8x1x32xbf16> to vector<8x1x32xbf16>
    %60 = vector.broadcast %59 : vector<8x1x32xbf16> to vector<8x32x32xbf16>
    %61 = arith.extf %60 : vector<8x32x32xbf16> to vector<8x32x32xf32>
    %62 = vector.shape_cast %61 : vector<8x32x32xf32> to vector<1x256x32xf32>
    %63 = vector.broadcast %62 : vector<1x256x32xf32> to vector<2x256x32xf32>
    %64 = arith.mulf %58, %63 : vector<2x256x32xf32>
    %cst_34 = arith.constant dense<0.000000e+00> : vector<2x32xf32>
    %65 = vector.multi_reduction <add>, %64, %cst_34 [1] : vector<2x256x32xf32> to vector<2x32xf32>
    %cst_35 = arith.constant 3.125000e-02 : f32
    %66 = vector.broadcast %cst_35 : f32 to vector<2x32xf32>
    %67 = arith.mulf %65, %66 : vector<2x32xf32>
    %68 = arith.truncf %67 : vector<2x32xf32> to vector<2x32xbf16>
    %c0_36 = arith.constant 0 : index
    %c0_37 = arith.constant 0 : index
    %69 = vector.load %arg14[%c0_36, %c0_37] : memref<32x32xbf16, #tpu.memory_space<vmem>>, vector<32x32xbf16>
    %cst_38 = arith.constant dense<0.000000e+00> : vector<2x32xf32>
    %70 = tpu.matmul %68, %69, %cst_38 {dimension_numbers = #tpu.dot_dimension_numbers<[1], [0], [0], [1], [0, 0, 1, 1], [], []>} : vector<2x32xbf16>, vector<32x32xbf16>, vector<2x32xf32> -> vector<2x32xf32>
    %c0_39 = arith.constant 0 : index
    %c0_40 = arith.constant 0 : index
    %71 = vector.load %arg15[%c0_39, %c0_40] : memref<1x32xf32, #tpu.memory_space<vmem>>, vector<1x32xf32>
    %72 = vector.broadcast %71 : vector<1x32xf32> to vector<2x32xf32>
    %73 = arith.addf %70, %72 : vector<2x32xf32>
    %74 = arith.truncf %73 : vector<2x32xf32> to vector<2x32xbf16>
    %c0_41 = arith.constant 0 : index
    %c0_42 = arith.constant 0 : index
    %75 = vector.load %arg16[%c0_41, %c0_42] : memref<32x1024xbf16, #tpu.memory_space<vmem>>, vector<32x1024xbf16>
    %cst_43 = arith.constant dense<0.000000e+00> : vector<2x1024xf32>
    %76 = tpu.matmul %74, %75, %cst_43 {dimension_numbers = #tpu.dot_dimension_numbers<[1], [0], [0], [1], [0, 0, 1, 1], [], []>} : vector<2x32xbf16>, vector<32x1024xbf16>, vector<2x1024xf32> -> vector<2x1024xf32>
    %c0_44 = arith.constant 0 : index
    %c0_45 = arith.constant 0 : index
    %77 = vector.load %arg17[%c0_44, %c0_45] : memref<1x1024xf32, #tpu.memory_space<vmem>>, vector<1x1024xf32>
    %78 = vector.broadcast %77 : vector<1x1024xf32> to vector<2x1024xf32>
    %79 = arith.addf %76, %78 : vector<2x1024xf32>
    %cst_46 = arith.constant 0.000000e+00 : f32
    %80 = vector.broadcast %cst_46 : f32 to vector<2x1024xf32>
    %81 = arith.maximumf %79, %80 : vector<2x1024xf32>
    %82 = arith.truncf %81 : vector<2x1024xf32> to vector<2x1024xbf16>
    %c0_47 = arith.constant 0 : index
    %c0_48 = arith.constant 0 : index
    %83 = vector.load %arg18[%c0_47, %c0_48] : memref<1024x32xbf16, #tpu.memory_space<vmem>>, vector<1024x32xbf16>
    %cst_49 = arith.constant dense<0.000000e+00> : vector<2x32xf32>
    %84 = tpu.matmul %82, %83, %cst_49 {dimension_numbers = #tpu.dot_dimension_numbers<[1], [0], [0], [1], [0, 0, 1, 1], [], []>} : vector<2x1024xbf16>, vector<1024x32xbf16>, vector<2x32xf32> -> vector<2x32xf32>
    %c0_50 = arith.constant 0 : index
    %c0_51 = arith.constant 0 : index
    %85 = vector.load %arg19[%c0_50, %c0_51] : memref<1x32xf32, #tpu.memory_space<vmem>>, vector<1x32xf32>
    %86 = vector.broadcast %85 : vector<1x32xf32> to vector<2x32xf32>
    %87 = arith.addf %84, %86 : vector<2x32xf32>
    %c0_52 = arith.constant 0 : index
    %c0_53 = arith.constant 0 : index
    %88 = vector.load %arg3[%c0_52, %c0_53] : memref<2x32xf32, #tpu.memory_space<vmem>>, vector<2x32xf32>
    %89 = arith.addf %87, %88 : vector<2x32xf32>
    %c0_54 = arith.constant 0 : index
    %c0_55 = arith.constant 0 : index
    %c0_56 = arith.constant 0 : index
    %90 = vector.load %arg1[%c0_54, %c0_55, %c0_56] : memref<2x32x32xbf16, #tpu.memory_space<vmem>>, vector<2x32x32xbf16>
    %91 = vector.shape_cast %89 : vector<2x32xf32> to vector<2x1x32xf32>
    %92 = arith.extf %90 : vector<2x32x32xbf16> to vector<2x32x32xf32>
    %93 = vector.broadcast %91 : vector<2x1x32xf32> to vector<2x32x32xf32>
    %94 = arith.mulf %92, %93 : vector<2x32x32xf32>
    %95 = arith.truncf %94 : vector<2x32x32xf32> to vector<2x32x32xbf16>
    %c0_57 = arith.constant 0 : index
    %c0_58 = arith.constant 0 : index
    %c0_59 = arith.constant 0 : index
    %96 = vector.load %arg2[%c0_57, %c0_58, %c0_59] : memref<2x32x32xbf16, #tpu.memory_space<vmem>>, vector<2x32x32xbf16>
    "tpu.trace_start"() <{level = 10 : i32, message = "bij,bjk->bik"}> : () -> ()
    %cst_60 = arith.constant dense<0.000000e+00> : vector<2x32x32xf32>
    %97 = tpu.matmul %95, %96, %cst_60 {dimension_numbers = #tpu.dot_dimension_numbers<[2], [1], [1], [2], [0, 0, 0, 1, 1, 2], [0], [0]>} : vector<2x32x32xbf16>, vector<2x32x32xbf16>, vector<2x32x32xf32> -> vector<2x32x32xf32>
    "tpu.trace_stop"() : () -> ()
    %c0_61 = arith.constant 0 : index
    %c0_62 = arith.constant 0 : index
    %c0_63 = arith.constant 0 : index
    %98 = vector.load %arg20[%c0_61, %c0_62, %c0_63] : memref<2x32x32xf32, #tpu.memory_space<vmem>>, vector<2x32x32xf32>
    tpu.vector_store %arg20[%c0_61, %c0_62, %c0_63], %97 {strides = array<i32>} : memref<2x32x32xf32, #tpu.memory_space<vmem>>, vector<2x32x32xf32>,
    return
  }
}

</mosaic_0001>

<llo_original>
// kernel: custom-call.57
$region0: #{custom-call.57}
  %s0 = inlined_call_operand.vmem [shape: f32[2,64,32], index: 0, kind: input, shape index: {}]
  %s1 = inlined_call_operand.vmem [shape: f32[2,64,32], index: 1, kind: output, shape index: {0}]
  %s2 = inlined_call_operand.vmem [shape: f32[2,32], index: 2, kind: output, shape index: {1}]
  %3 = xla_tuple %s1, %s2
  $region1: #{custom-call.57} parent=0
    #allocation0 [shape = 'u8[65536]{0}', space=vmem, size = 0x10000, scoped, tag = 'operand span for operand 0']
    #allocation1 [shape = 'u8[65536]{0}', space=vmem, size = 0x10000, scoped, tag = 'operand span for operand 1']
    #allocation2 [shape = 'u8[4096]{0}', space=vmem, size = 0x1000, scoped, tag = 'operand span for operand 2']
    #allocation3 [shape = 'u8[2048]{0}', space=vmem, size = 0x800, scoped, tag = 'packed  for operand 2']
    loop: start=0, step=1, limit=4
    $region2: #{custom-call.57} parent=1 // loop_pre_header
      _
    $region3: #{custom-call.57} parent=1 // loop_header
      %s5 = sphi 0, %s9
      %p6 = scmp.ge.s32.totalorder %s5, 4
      %s12 = sphi 0, %s31
      %s13 = sphi 0, %s27
      %s14 = sphi 0, %s23
      %s15 = sphi 0, %s12
      %s16 = sphi 0, %s13
      %s17 = sphi 0, %s14
      %s18 = sphi 0, %s15
      %s19 = sphi 0, %s16
      %s20 = sphi 0, %s17
      %s46 = sphi 0, %s48
      %s49 = sphi 0, %s46
      %s50 = sphi 0, %s49
      %s66 = sphi 0, %s50
    $region4: #{custom-call.57} parent=1 // loop_header_branch
      %8 = sbr.rel (%p6) target = $region8
    $region5: #{custom-call.57} parent=1 // loop_body
      %s10 = ssub.s32 %s5, 1
      %s11 = ssub.s32 %s5, 2
      %s21 = sadd.s32 1, %s14
      %p22 = scmp.ge.s32.totalorder %s21, 1
      %s23 = scalar_select %p22, 0, %s21
      %s24 = sadd.s32 1, %s13
      %s25 = scalar_select %p22, %s24, %s13
      %p26 = scmp.ge.s32.totalorder %s25, 1
      %s27 = scalar_select %p26, 0, %s25
      %s28 = sadd.s32 1, %s12
      %s29 = scalar_select %p26, %s28, %s12
      %p30 = scmp.ge.s32.totalorder %s29, 2
      %s31 = scalar_select %p30, 0, %s29
      %p32 = scmp.lt.s32.totalorder %s12, 0
      %s33 = ssub.s32 0, %s12
      %s34 = scalar_select %p32, %s33, %s12
      %s35 = sshrl.u32 %s34, 3
      %s36 = ssub.s32 0, %s35
      %s37 = scalar_select %p32, %s36, %s35
      %p38 = scmp.lt.s32.totalorder %s31, 0
      %s39 = ssub.s32 0, %s31
      %s40 = scalar_select %p38, %s39, %s31
      %s41 = sshrl.u32 %s40, 3
      %s42 = ssub.s32 0, %s41
      %s43 = scalar_select %p38, %s42, %s41
      %s44 = ssub.s32 %s37, %s43
      %p45 = scmp.eq.s32.totalorder %s44, 0
      %s47 = sadd.s32 %s46, 1
      %s48 = scalar_select %p45, %s46, %s47
      %p51 = pneg %p45
      %p52 = scmp.eq.s32.totalorder %s5, 1
      %p53 = por %p51, %p52
      %p54 = scmp.ne.s32.totalorder %s46, %s49
      %p55 = scmp.eq.s32.totalorder %s5, 0
      %p56 = por %p54, %p55
      %p57 = scmp.ne.s32.totalorder %s46, %s49
      %p58 = scmp.eq.s32.totalorder %s10, 1
      %p59 = por %p57, %p58
      %p60 = scmp.ne.s32.totalorder %s49, %s50
      %p61 = scmp.eq.s32.totalorder %s10, 0
      %p62 = por %p60, %p61
      %p63 = scmp.ne.s32.totalorder %s49, %s50
      %p64 = scmp.eq.s32.totalorder %s11, 1
      %p65 = por %p63, %p64
      %p67 = scmp.ne.s32.totalorder %s50, %s66
      %p68 = scmp.eq.s32.totalorder %s11, 0
      %p69 = por %p67, %p68
      %p70 = scmp.le.s32.totalorder 1, %s5
      %p71 = scmp.lt.s32.totalorder %s5, 3
      %p72 = pnand %p70, %p71
      %p73 = pneg %p72
      // Predicated region
      $region9: #{custom-call.57} parent=5 // pred_check
        _
      $region10: #{custom-call.57} parent=5 // pred_check_branch
        %75 = sbr.rel (%p72) target = $region12
      $region11: #{custom-call.57} parent=5 // pred_region
        %s76 = ssub.s32 %s5, 1
      $region12: #{custom-call.57} parent=5 // pred_fallthru
        _
      %p77 = scmp.lt.s32.totalorder %s5, 2
      // Predicated region
      $region13: #{custom-call.57} parent=5 // pred_check
        %p78 = pneg %p77
      $region14: #{custom-call.57} parent=5 // pred_check_branch
        %80 = sbr.rel (%p78) target = $region16
      $region15: #{custom-call.57} parent=5 // pred_region
        %s81 = sand.u32 %s5, 1
        %s82 = sand.u32 %s5, 1
        %s83 = smul.addr %s82, 64
        %s84 = scalar_lea.vmem [#allocation0], %s83
        %s85 = smul.u32 8, %s13
        %s86 = sadd.s32 %s14, %s85
        %s87 = smul.addr %s12, 8
        %s88 = sadd.s32 %s86, %s87
        %s89 = smul.addr %s88, 8
        %s90 = scalar_lea.vmem %s0, %s89
        // Predicated region
        $region17: #{custom-call.57} parent=15 // pred_check
          _
        $region18: #{custom-call.57} parent=15 // pred_check_branch
          %92 = sbr.rel (0) target = $region20
        $region19: #{custom-call.57} parent=15 // pred_region
          // Predicated region
          $region21: #{custom-call.57} parent=19 // pred_check
            _
          $region22: #{custom-call.57} parent=19 // pred_check_branch
            %94 = sbr.rel (0) target = $region24
          $region23: #{custom-call.57} parent=19 // pred_region
            // Predicated region
            $region36: #{custom-call.57} parent=23 // pred_check
              _
            $region37: #{custom-call.57} parent=23 // pred_check_branch
              %123 = sbr.rel (0) target = $region39
            $region38: #{custom-call.57} parent=23 // pred_region
              loop: start=0, step=1, limit=1
              $region40: #{custom-call.57} parent=38 // loop_pre_header
                _
              $region41: #{custom-call.57} parent=38 // loop_header
                %s125 = sphi 0, %s129
                %p126 = scmp.ge.s32.totalorder %s125, 1
                %s130 = sphi %s90, %s90
                %s131 = sphi %s84, %s84
              $region42: #{custom-call.57} parent=38 // loop_header_branch
                %128 = sbr.rel (%p126) target = $region46
              $region43: #{custom-call.57} parent=38 // loop_body
                %v132 = vld [vmem:[%s130] sm:$0xff]
                %133 = vst [vmem:[%s131] sm:$0xff] %v132
                %v134 = vld [vmem:[%s130 + $0x8] sm:$0xff]
                %135 = vst [vmem:[%s131 + $0x8] sm:$0xff] %v134
                %v136 = vld [vmem:[%s130 + $0x10] sm:$0xff]
                %137 = vst [vmem:[%s131 + $0x10] sm:$0xff] %v136
                %v138 = vld [vmem:[%s130 + $0x18] sm:$0xff]
                %139 = vst [vmem:[%s131 + $0x18] sm:$0xff] %v138
                %v140 = vld [vmem:[%s130 + $0x20] sm:$0xff]
                %141 = vst [vmem:[%s131 + $0x20] sm:$0xff] %v140
                %v142 = vld [vmem:[%s130 + $0x28] sm:$0xff]
                %143 = vst [vmem:[%s131 + $0x28] sm:$0xff] %v142
                %v144 = vld [vmem:[%s130 + $0x30] sm:$0xff]
                %145 = vst [vmem:[%s131 + $0x30] sm:$0xff] %v144
                %v146 = vld [vmem:[%s130 + $0x38] sm:$0xff]
                %147 = vst [vmem:[%s131 + $0x38] sm:$0xff] %v146
              $region44: #{custom-call.57} parent=38 // loop_footer
                %s129 = sadd.s32 1, %s125
              $region45: #{custom-call.57} parent=38 // loop_footer_branch
                %124 = sbr.rel target = $region41
              $region46: #{custom-call.57} parent=38 // loop_exit
                _
            $region39: #{custom-call.57} parent=23 // pred_fallthru
              _
            // Predicated region
            $region47: #{custom-call.57} parent=23 // pred_check
              _
            $region48: #{custom-call.57} parent=23 // pred_check_branch
              %149 = sbr.rel target = $region50
            $region49: #{custom-call.57} parent=23 // pred_region
              _
            $region50: #{custom-call.57} parent=23 // pred_fallthru
              _
          $region24: #{custom-call.57} parent=19 // pred_fallthru
            _
          // Predicated region
          $region25: #{custom-call.57} parent=19 // pred_check
            _
          $region26: #{custom-call.57} parent=19 // pred_check_branch
            %96 = sbr.rel target = $region28
          $region27: #{custom-call.57} parent=19 // pred_region
            loop: start=0, step=1, limit=1
            $region29: #{custom-call.57} parent=27 // loop_pre_header
              _
            $region30: #{custom-call.57} parent=27 // loop_header
              %s99 = sphi 0, %s103
              %p100 = scmp.ge.s32.totalorder %s99, 1
              %s104 = sphi %s90, %s90
              %s105 = sphi %s84, %s84
            $region31: #{custom-call.57} parent=27 // loop_header_branch
              %102 = sbr.rel (%p100) target = $region35
            $region32: #{custom-call.57} parent=27 // loop_body
              %v106 = vld [vmem:[%s104] sm:$0xff]
              %107 = vst [vmem:[%s105] sm:$0xff] %v106
              %v108 = vld [vmem:[%s104 + $0x8] sm:$0xff]
              %109 = vst [vmem:[%s105 + $0x8] sm:$0xff] %v108
              %v110 = vld [vmem:[%s104 + $0x10] sm:$0xff]
              %111 = vst [vmem:[%s105 + $0x10] sm:$0xff] %v110
              %v112 = vld [vmem:[%s104 + $0x18] sm:$0xff]
              %113 = vst [vmem:[%s105 + $0x18] sm:$0xff] %v112
              %v114 = vld [vmem:[%s104 + $0x20] sm:$0xff]
              %115 = vst [vmem:[%s105 + $0x20] sm:$0xff] %v114
              %v116 = vld [vmem:[%s104 + $0x28] sm:$0xff]
              %117 = vst [vmem:[%s105 + $0x28] sm:$0xff] %v116
              %v118 = vld [vmem:[%s104 + $0x30] sm:$0xff]
              %119 = vst [vmem:[%s105 + $0x30] sm:$0xff] %v118
              %v120 = vld [vmem:[%s104 + $0x38] sm:$0xff]
              %121 = vst [vmem:[%s105 + $0x38] sm:$0xff] %v120
            $region33: #{custom-call.57} parent=27 // loop_footer
              %s103 = sadd.s32 1, %s99
            $region34: #{custom-call.57} parent=27 // loop_footer_branch
              %98 = sbr.rel target = $region30
            $region35: #{custom-call.57} parent=27 // loop_exit
              _
          $region28: #{custom-call.57} parent=19 // pred_fallthru
            _
        $region20: #{custom-call.57} parent=15 // pred_fallthru
          _
        %150 = vnop
      $region16: #{custom-call.57} parent=5 // pred_fallthru
        _
      %p151 = scmp.le.s32.totalorder 1, %s5
      %p152 = scmp.lt.s32.totalorder %s5, 3
      %p153 = pnand %p151, %p152
      %p154 = pneg %p153
      // Predicated region
      $region51: #{custom-call.57} parent=5 // pred_check
        _
      $region52: #{custom-call.57} parent=5 // pred_check_branch
        %156 = sbr.rel (%p153) target = $region54
      $region53: #{custom-call.57} parent=5 // pred_region
        #allocation4 [shape = 'f32[64,128]{1,0}', space=vmem, size = 0x8000, scoped, tag = 'scratch for Householder reflectors']
        %s157 = ssub.s32 %s5, 1
        %s158 = sand.u32 %s10, 1
        %s159 = sand.u32 %s10, 1
        %s160 = smul.addr %s159, 64
        %s161 = scalar_lea.vmem [#allocation0], %s160
        %s162 = sand.u32 %s10, 1
        %s163 = sand.u32 %s10, 1
        %s164 = smul.addr %s163, 64
        %s165 = scalar_lea.vmem [#allocation0], %s164
        %s166 = sand.u32 %s10, 1
        %s167 = sand.u32 %s10, 1
        %s168 = smul.addr %s167, 64
        %s169 = scalar_lea.vmem [#allocation1], %s168
        %p170 = pneg %p62
        %p171 = pneg %p59
        %s172 = sand.u32 %s49, 1
        %s173 = sand.u32 %s49, 1
        %s174 = smul.addr %s173, 2
        %s175 = scalar_lea.vmem [#allocation3], %s174
        %s176 = smul.u32 8, %s16
        %s177 = smul.u32 8, %s16
        %p178 = scmp.lt.s32.totalorder %s15, 0
        %s179 = ssub.s32 0, %s15
        %s180 = scalar_select %p178, %s179, %s15
        %s181 = sshrl.u32 %s180, 3
        %s182 = ssub.s32 0, %s181
        %s183 = scalar_select %p178, %s182, %s181
        %s184 = sand.u32 %s15, 7
        %s185 = scalar_lea.vmem [#allocation2], %s184
        %v186 = vld [vmem:[%s161] sm:$0xff]
        %187 = vst [vmem:[%s169] sm:$0xff] %v186
        %s188 = scalar_lea.vmem %s169, 8 [#allocation1]
        %s189 = scalar_lea.vmem %s161, 8 [#allocation0]
        %v190 = vld [vmem:[%s189] sm:$0xff]
        %191 = vst [vmem:[%s188] sm:$0xff] %v190
        %s192 = scalar_lea.vmem %s169, 16 [#allocation1]
        %s193 = scalar_lea.vmem %s161, 16 [#allocation0]
        %v194 = vld [vmem:[%s193] sm:$0xff]
        %195 = vst [vmem:[%s192] sm:$0xff] %v194
        %s196 = scalar_lea.vmem %s169, 24 [#allocation1]
        %s197 = scalar_lea.vmem %s161, 24 [#allocation0]
        %v198 = vld [vmem:[%s197] sm:$0xff]
        %199 = vst [vmem:[%s196] sm:$0xff] %v198
        %s200 = scalar_lea.vmem %s169, 32 [#allocation1]
        %s201 = scalar_lea.vmem %s161, 32 [#allocation0]
        %v202 = vld [vmem:[%s201] sm:$0xff]
        %203 = vst [vmem:[%s200] sm:$0xff] %v202
        %s204 = scalar_lea.vmem %s169, 40 [#allocation1]
        %s205 = scalar_lea.vmem %s161, 40 [#allocation0]
        %v206 = vld [vmem:[%s205] sm:$0xff]
        %207 = vst [vmem:[%s204] sm:$0xff] %v206
        %s208 = scalar_lea.vmem %s169, 48 [#allocation1]
        %s209 = scalar_lea.vmem %s161, 48 [#allocation0]
        %v210 = vld [vmem:[%s209] sm:$0xff]
        %211 = vst [vmem:[%s208] sm:$0xff] %v210
        %s212 = scalar_lea.vmem %s169, 56 [#allocation1]
        %s213 = scalar_lea.vmem %s161, 56 [#allocation0]
        %v214 = vld [vmem:[%s213] sm:$0xff]
        %215 = vst [vmem:[%s212] sm:$0xff] %v214
        %216 = vst [vmem:[%s185] sm:$0x1] 0.0
        loop: start=0, step=1, limit=32
        $region55: #{custom-call.57} parent=53 // loop_pre_header
          _
        $region56: #{custom-call.57} parent=53 // loop_header
          %s218 = sphi 0, %s222
          %p219 = scmp.ge.s32.totalorder %s218, 32
        $region57: #{custom-call.57} parent=53 // loop_header_branch
          %221 = sbr.rel (%p219) target = $region61
        $region58: #{custom-call.57} parent=53 // loop_body
          %v223 = vld [vmem:[%s169] sm:$0xff]
          %v224 = vlaneseq
          %v225 = vshrl.u32 %v224, 7
          %v227 = vstv %s218
          %vm228 = vcmp.gt.s32.totalorder %v225, %v227
          %v229 = vsel %vm228, %v223, 0.0
          %v230 = vmul.f32 %v229, %v229
          %s231 = scalar_lea.vmem %s169, 8 [#allocation1]
          %v232 = vld [vmem:[%s231] sm:$0xff]
          %v233 = vlaneseq
          %v234 = vshrl.u32 %v233, 7
          %v235 = vadd.s32 %v234, 8
          %v236 = vstv %s218
          %vm237 = vcmp.gt.s32.totalorder %v235, %v236
          %v238 = vsel %vm237, %v232, 0.0
          %v239 = vmul.f32 %v238, %v238
          %v240 = vadd.f32 %v230, %v239
          %s241 = scalar_lea.vmem %s169, 16 [#allocation1]
          %v242 = vld [vmem:[%s241] sm:$0xff]
          %v243 = vlaneseq
          %v244 = vshrl.u32 %v243, 7
          %v245 = vadd.s32 %v244, 16
          %v246 = vstv %s218
          %vm247 = vcmp.gt.s32.totalorder %v245, %v246
          %v248 = vsel %vm247, %v242, 0.0
          %v249 = vmul.f32 %v248, %v248
          %v250 = vadd.f32 %v240, %v249
          %s251 = scalar_lea.vmem %s169, 24 [#allocation1]
          %v252 = vld [vmem:[%s251] sm:$0xff]
          %v253 = vlaneseq
          %v254 = vshrl.u32 %v253, 7
          %v255 = vadd.s32 %v254, 24
          %v256 = vstv %s218
          %vm257 = vcmp.gt.s32.totalorder %v255, %v256
          %v258 = vsel %vm257, %v252, 0.0
          %v259 = vmul.f32 %v258, %v258
          %v260 = vadd.f32 %v250, %v259
          %s261 = scalar_lea.vmem %s169, 32 [#allocation1]
          %v262 = vld [vmem:[%s261] sm:$0xff]
          %v263 = vlaneseq
          %v264 = vshrl.u32 %v263, 7
          %v265 = vadd.s32 %v264, 32
          %v266 = vstv %s218
          %vm267 = vcmp.gt.s32.totalorder %v265, %v266
          %v268 = vsel %vm267, %v262, 0.0
          %v269 = vmul.f32 %v268, %v268
          %v270 = vadd.f32 %v260, %v269
          %s271 = scalar_lea.vmem %s169, 40 [#allocation1]
          %v272 = vld [vmem:[%s271] sm:$0xff]
          %v273 = vlaneseq
          %v274 = vshrl.u32 %v273, 7
          %v275 = vadd.s32 %v274, 40
          %v276 = vstv %s218
          %vm277 = vcmp.gt.s32.totalorder %v275, %v276
          %v278 = vsel %vm277, %v272, 0.0
          %v279 = vmul.f32 %v278, %v278
          %v280 = vadd.f32 %v270, %v279
          %s281 = scalar_lea.vmem %s169, 48 [#allocation1]
          %v282 = vld [vmem:[%s281] sm:$0xff]
          %v283 = vlaneseq
          %v284 = vshrl.u32 %v283, 7
          %v285 = vadd.s32 %v284, 48
          %v286 = vstv %s218
          %vm287 = vcmp.gt.s32.totalorder %v285, %v286
          %v288 = vsel %vm287, %v282, 0.0
          %v289 = vmul.f32 %v288, %v288
          %v290 = vadd.f32 %v280, %v289
          %s291 = scalar_lea.vmem %s169, 56 [#allocation1]
          %v292 = vld [vmem:[%s291] sm:$0xff]
          %v293 = vlaneseq
          %v294 = vshrl.u32 %v293, 7
          %v295 = vadd.s32 %v294, 56
          %v296 = vstv %s218
          %vm297 = vcmp.gt.s32.totalorder %v295, %v296
          %vm298 = vcmp.lt.s32.totalorder %v295, 64
          %vm299 = vmand %vm297, %vm298
          %v300 = vsel %vm299, %v292, 0.0
          %v301 = vmul.f32 %v300, %v300
          %v302 = vadd.f32 %v290, %v301
          %v303 = vrot.slane %v302, 4
          %v304 = vadd.f32 %v302, %v303
          %v305 = vrot.slane %v304, 2
          %v306 = vadd.f32 %v304, %v305
          %v307 = vrot.slane %v306, 1
          %v308 = vadd.f32 %v306, %v307
          %v309 = vrsqrt.pop %v308
          %v310 = vmul.f32 %v308, %v309
          %vm311 = vcmp.eq.f32.partialorder %v308, inf
          %v312 = vsel %vm311, %v308, %v310
          %vm313 = vcmp.eq.f32.partialorder %v308, 0.0
          %v314 = vand.u32 %v308, 2147483648
          %v315 = vsel %vm313, %v314, %v312
          %vm316 = vcmp.eq.f32.partialorder %v308, 0.0
          %s317 = sshrl.u32 %s218, 3
          %s318 = sand.u32 %s218, 7
          %s319 = smul.addr %s317, 8
          %s320 = sadd.s32 %s318, %s319
          %s321 = scalar_lea.vmem %s169, %s320 [#allocation1]
          %v322 = vld [vmem:[%s321] ss:$0 sm:$0xff]
          %v323 = vand.u32 2147483647, %v322
          %v324 = vmax.f32 %v323, 0.0
          %v325 = vand.u32 2147483647, %v315
          %v326 = vmax.f32 %v324, %v325
          %v327 = vrcp.pop %v326
          %v328 = vmul.f32 %v323, %v327
          %v329 = vmul.f32 %v328, %v328
          %v330 = vrcp.pop %v326
          %v331 = vmul.f32 0.0, %v330
          %v332 = vmul.f32 %v331, %v331
          %v333 = vadd.f32 %v329, %v332
          %v334 = vrcp.pop %v326
          %v335 = vmul.f32 %v325, %v334
          %v336 = vmul.f32 %v335, %v335
          %v337 = vadd.f32 %v333, %v336
          %vm338 = vcmp.eq.f32.partialorder %v326, 0.0
          %v339 = vrsqrt.pop %v337
          %v340 = vmul.f32 %v337, %v339
          %vm341 = vcmp.eq.f32.partialorder %v337, inf
          %v342 = vsel %vm341, %v337, %v340
          %vm343 = vcmp.eq.f32.partialorder %v337, 0.0
          %v344 = vand.u32 %v337, 2147483648
          %v345 = vsel %vm343, %v344, %v342
          %v346 = vmul.f32 %v326, %v345
          %v347 = vsel %vm338, 0.0, %v346
          %vm348 = vcmp.lt.f32.partialorder %v322, 0.0
          %v349 = vxor.u32 %v347, 2147483648
          %v350 = vsel %vm348, %v347, %v349
          %v351 = vsub.f32 %v350, %v322
          %v352 = vrcp.pop %v350
          %v353 = vmul.f32 %v351, %v352
          %v354 = vsel %vm316, %v322, %v350
          %v355 = vsel %vm316, 0.0, %v353
          %v356 = vsub.f32 %v322, %v354
          %s357 = smov %s169
          %v358 = vlaneseq
          %v359 = vshrl.u32 %v358, 7
          %v360 = vmov %v359
          %v361 = vld [vmem:[%s357] sm:$0xff]
          %v363 = vstv %s218
          %vm364 = vcmp.gt.s32.totalorder %v360, %v363
          %v365 = vsel %vm364, %v361, 0.0
          %v366 = vrcp.pop %v356
          %v367 = vmul.f32 %v365, %v366
          %v368 = vsel %vm316, 0.0, %v367
          %v369 = vstv %s218
          %v370 = vlaneseq
          %v371 = vand.u32 %v370, 127
          %vm372 = vcmp.eq.s32.totalorder %v371, %v369
          %v373 = vsel %vm372, %v368, 0.0
          %374 = vadd.xlane.f32.xlu0 %v373
          %v375 = vpop.xlane.xlu0 %374
          %376 = vst [vmem:[#allocation4] sm:$0xff] %v375
          %s377 = scalar_lea.vmem %s357, 8
          %v378 = vld [vmem:[%s377] sm:$0xff]
          %v379 = vadd.s32 %v360, 8
          %v380 = vstv %s218
          %vm381 = vcmp.gt.s32.totalorder %v379, %v380
          %v382 = vsel %vm381, %v378, 0.0
          %v383 = vrcp.pop %v356
          %v384 = vmul.f32 %v382, %v383
          %v385 = vsel %vm316, 0.0, %v384
          %v386 = vstv %s218
          %v387 = vlaneseq
          %v388 = vand.u32 %v387, 127
          %vm389 = vcmp.eq.s32.totalorder %v388, %v386
          %v390 = vsel %vm389, %v385, 0.0
          %391 = vadd.xlane.f32.xlu0 %v390
          %v392 = vpop.xlane.xlu0 %391
          %s393 = scalar_lea.vmem [#allocation4], 8
          %394 = vst [vmem:[%s393] sm:$0xff] %v392
          %s395 = scalar_lea.vmem %s357, 16
          %v396 = vld [vmem:[%s395] sm:$0xff]
          %v397 = vadd.s32 %v360, 16
          %v398 = vstv %s218
          %vm399 = vcmp.gt.s32.totalorder %v397, %v398
          %v400 = vsel %vm399, %v396, 0.0
          %v401 = vrcp.pop %v356
          %v402 = vmul.f32 %v400, %v401
          %v403 = vsel %vm316, 0.0, %v402
          %v404 = vstv %s218
          %v405 = vlaneseq
          %v406 = vand.u32 %v405, 127
          %vm407 = vcmp.eq.s32.totalorder %v406, %v404
          %v408 = vsel %vm407, %v403, 0.0
          %409 = vadd.xlane.f32.xlu0 %v408
          %v410 = vpop.xlane.xlu0 %409
          %s411 = scalar_lea.vmem [#allocation4], 16
          %412 = vst [vmem:[%s411] sm:$0xff] %v410
          %s413 = scalar_lea.vmem %s357, 24
          %v414 = vld [vmem:[%s413] sm:$0xff]
          %v415 = vadd.s32 %v360, 24
          %v416 = vstv %s218
          %vm417 = vcmp.gt.s32.totalorder %v415, %v416
          %v418 = vsel %vm417, %v414, 0.0
          %v419 = vrcp.pop %v356
          %v420 = vmul.f32 %v418, %v419
          %v421 = vsel %vm316, 0.0, %v420
          %v422 = vstv %s218
          %v423 = vlaneseq
          %v424 = vand.u32 %v423, 127
          %vm425 = vcmp.eq.s32.totalorder %v424, %v422
          %v426 = vsel %vm425, %v421, 0.0
          %427 = vadd.xlane.f32.xlu0 %v426
          %v428 = vpop.xlane.xlu0 %427
          %s429 = scalar_lea.vmem [#allocation4], 24
          %430 = vst [vmem:[%s429] sm:$0xff] %v428
          %s431 = scalar_lea.vmem %s357, 32
          %v432 = vld [vmem:[%s431] sm:$0xff]
          %v433 = vadd.s32 %v360, 32
          %v434 = vstv %s218
          %vm435 = vcmp.gt.s32.totalorder %v433, %v434
          %v436 = vsel %vm435, %v432, 0.0
          %v437 = vrcp.pop %v356
          %v438 = vmul.f32 %v436, %v437
          %v439 = vsel %vm316, 0.0, %v438
          %v440 = vstv %s218
          %v441 = vlaneseq
          %v442 = vand.u32 %v441, 127
          %vm443 = vcmp.eq.s32.totalorder %v442, %v440
          %v444 = vsel %vm443, %v439, 0.0
          %445 = vadd.xlane.f32.xlu0 %v444
          %v446 = vpop.xlane.xlu0 %445
          %s447 = scalar_lea.vmem [#allocation4], 32
          %448 = vst [vmem:[%s447] sm:$0xff] %v446
          %s449 = scalar_lea.vmem %s357, 40
          %v450 = vld [vmem:[%s449] sm:$0xff]
          %v451 = vadd.s32 %v360, 40
          %v452 = vstv %s218
          %vm453 = vcmp.gt.s32.totalorder %v451, %v452
          %v454 = vsel %vm453, %v450, 0.0
          %v455 = vrcp.pop %v356
          %v456 = vmul.f32 %v454, %v455
          %v457 = vsel %vm316, 0.0, %v456
          %v458 = vstv %s218
          %v459 = vlaneseq
          %v460 = vand.u32 %v459, 127
          %vm461 = vcmp.eq.s32.totalorder %v460, %v458
          %v462 = vsel %vm461, %v457, 0.0
          %463 = vadd.xlane.f32.xlu0 %v462
          %v464 = vpop.xlane.xlu0 %463
          %s465 = scalar_lea.vmem [#allocation4], 40
          %466 = vst [vmem:[%s465] sm:$0xff] %v464
          %s467 = scalar_lea.vmem %s357, 48
          %v468 = vld [vmem:[%s467] sm:$0xff]
          %v469 = vadd.s32 %v360, 48
          %v470 = vstv %s218
          %vm471 = vcmp.gt.s32.totalorder %v469, %v470
          %v472 = vsel %vm471, %v468, 0.0
          %v473 = vrcp.pop %v356
          %v474 = vmul.f32 %v472, %v473
          %v475 = vsel %vm316, 0.0, %v474
          %v476 = vstv %s218
          %v477 = vlaneseq
          %v478 = vand.u32 %v477, 127
          %vm479 = vcmp.eq.s32.totalorder %v478, %v476
          %v480 = vsel %vm479, %v475, 0.0
          %481 = vadd.xlane.f32.xlu0 %v480
          %v482 = vpop.xlane.xlu0 %481
          %s483 = scalar_lea.vmem [#allocation4], 48
          %484 = vst [vmem:[%s483] sm:$0xff] %v482
          %s485 = scalar_lea.vmem %s357, 56
          %v486 = vld [vmem:[%s485] sm:$0xff]
          %v487 = vadd.s32 %v360, 56
          %v488 = vstv %s218
          %vm489 = vcmp.gt.s32.totalorder %v487, %v488
          %vm490 = vcmp.lt.s32.totalorder %v487, 64
          %vm491 = vmand %vm489, %vm490
          %v492 = vsel %vm491, %v486, 0.0
          %v493 = vrcp.pop %v356
          %v494 = vmul.f32 %v492, %v493
          %v495 = vsel %vm316, 0.0, %v494
          %v496 = vstv %s218
          %v497 = vlaneseq
          %v498 = vand.u32 %v497, 127
          %vm499 = vcmp.eq.s32.totalorder %v498, %v496
          %v500 = vsel %vm499, %v495, 0.0
          %501 = vadd.xlane.f32.xlu0 %v500
          %v502 = vpop.xlane.xlu0 %501
          %s503 = scalar_lea.vmem [#allocation4], 56
          %504 = vst [vmem:[%s503] sm:$0xff] %v502
          %s505 = scalar_lea.vmem [#allocation4], %s218
          %506 = vst [vmem:[%s505] sm:$0x1] 1.0
          %v507 = vstv %s218
          %v508 = vlaneseq
          %v509 = vand.u32 %v508, 127
          %vm510 = vcmp.eq.s32.totalorder %v509, %v507
          %v511 = vsel %vm510, %v355, 0.0
          %512 = vadd.xlane.f32.xlu0 %v511
          %v513 = vpop.xlane.xlu0 %512
          %v514 = vstv %s218
          %v515 = vlaneseq
          %v516 = vand.u32 %v515, 127
          %vm517 = vcmp.eq.s32.totalorder %v516, %v514
          %v518 = vld [vmem:[%s185] ss:$0 sm:$0xff]
          %v519 = vsel %vm517, %v513, %v518
          %520 = vst [vmem:[%s185] sm:$0x1] %v519
          %s521 = smov %s169
          %s522 = smov [#allocation4]
          %v523 = vlaneseq
          %v524 = vshrl.u32 %v523, 7
          %v525 = vmov %v524
          %v527 = vld [vmem:[%s522] sm:$0xff]
          %v528 = vld [vmem:[%s521] sm:$0xff]
          %v529 = vmul.f32 %v527, %v528
          %v530 = vadd.s32 %v525, 8
          %s531 = scalar_lea.vmem %s522, 8
          %v532 = vld [vmem:[%s531] sm:$0xff]
          %s533 = scalar_lea.vmem %s521, 8
          %v534 = vld [vmem:[%s533] sm:$0xff]
          %v535 = vmul.f32 %v532, %v534
          %v536 = vadd.f32 %v529, %v535
          %v537 = vadd.s32 %v525, 16
          %s538 = scalar_lea.vmem %s522, 16
          %v539 = vld [vmem:[%s538] sm:$0xff]
          %s540 = scalar_lea.vmem %s521, 16
          %v541 = vld [vmem:[%s540] sm:$0xff]
          %v542 = vmul.f32 %v539, %v541
          %v543 = vadd.f32 %v536, %v542
          %v544 = vadd.s32 %v525, 24
          %s545 = scalar_lea.vmem %s522, 24
          %v546 = vld [vmem:[%s545] sm:$0xff]
          %s547 = scalar_lea.vmem %s521, 24
          %v548 = vld [vmem:[%s547] sm:$0xff]
          %v549 = vmul.f32 %v546, %v548
          %v550 = vadd.f32 %v543, %v549
          %v551 = vadd.s32 %v525, 32
          %s552 = scalar_lea.vmem %s522, 32
          %v553 = vld [vmem:[%s552] sm:$0xff]
          %s554 = scalar_lea.vmem %s521, 32
          %v555 = vld [vmem:[%s554] sm:$0xff]
          %v556 = vmul.f32 %v553, %v555
          %v557 = vadd.f32 %v550, %v556
          %v558 = vadd.s32 %v525, 40
          %s559 = scalar_lea.vmem %s522, 40
          %v560 = vld [vmem:[%s559] sm:$0xff]
          %s561 = scalar_lea.vmem %s521, 40
          %v562 = vld [vmem:[%s561] sm:$0xff]
          %v563 = vmul.f32 %v560, %v562
          %v564 = vadd.f32 %v557, %v563
          %v565 = vadd.s32 %v525, 48
          %s566 = scalar_lea.vmem %s522, 48
          %v567 = vld [vmem:[%s566] sm:$0xff]
          %s568 = scalar_lea.vmem %s521, 48
          %v569 = vld [vmem:[%s568] sm:$0xff]
          %v570 = vmul.f32 %v567, %v569
          %v571 = vadd.f32 %v564, %v570
          %v572 = vadd.s32 %v525, 56
          %s573 = scalar_lea.vmem %s522, 56
          %v574 = vld [vmem:[%s573] sm:$0xff]
          %s575 = scalar_lea.vmem %s521, 56
          %v576 = vld [vmem:[%s575] sm:$0xff]
          %v577 = vmul.f32 %v574, %v576
          %vm578 = vcmp.lt.s32.totalorder %v572, 64
          %v579 = vsel %vm578, %v577, 0.0
          %v580 = vadd.f32 %v571, %v579
          %v581 = vrot.slane %v580, 4
          %v582 = vadd.f32 %v580, %v581
          %v583 = vrot.slane %v582, 2
          %v584 = vadd.f32 %v582, %v583
          %v585 = vrot.slane %v584, 1
          %v586 = vadd.f32 %v584, %v585
          %s587 = smov %s521
          %s588 = smov %s522
          %v589 = vlaneseq
          %v590 = vshrl.u32 %v589, 7
          %v591 = vmov %v590
          %v592 = vmul.f32 %v586, %v513
          %v594 = vlaneseq
          %v595 = vand.u32 %v594, 127
          %v596 = vld [vmem:[%s588] sm:$0xff]
          %v597 = vmul.f32 %v596, %v592
          %v598 = vld [vmem:[%s587] sm:$0xff]
          %v599 = vstv %s218
          %vm600 = vcmp.gt.s32.totalorder %v595, %v599
          %v601 = vsub.f32 %v598, %v597
          %v602 = vsel %vm600, %v601, %v598
          %v603 = vstv %s218
          %v604 = vlaneseq
          %v605 = vand.u32 %v604, 127
          %vm606 = vcmp.eq.s32.totalorder %v605, %v603
          %v607 = vstv %s218
          %vm608 = vcmp.ge.s32.totalorder %v591, %v607
          %vm609 = vmand %vm606, %vm608
          %v610 = vsel %vm609, %v596, %v602
          %611 = vst [vmem:[%s587] sm:$0xff] %v610
          %v612 = vadd.s32 %v591, 8
          %v613 = vlaneseq
          %v614 = vand.u32 %v613, 127
          %s615 = scalar_lea.vmem %s588, 8
          %v616 = vld [vmem:[%s615] sm:$0xff]
          %v617 = vmul.f32 %v616, %v592
          %s618 = scalar_lea.vmem %s587, 8
          %v619 = vld [vmem:[%s618] sm:$0xff]
          %v620 = vstv %s218
          %vm621 = vcmp.gt.s32.totalorder %v614, %v620
          %v622 = vsub.f32 %v619, %v617
          %v623 = vsel %vm621, %v622, %v619
          %v624 = vstv %s218
          %v625 = vlaneseq
          %v626 = vand.u32 %v625, 127
          %vm627 = vcmp.eq.s32.totalorder %v626, %v624
          %v628 = vstv %s218
          %vm629 = vcmp.ge.s32.totalorder %v612, %v628
          %vm630 = vmand %vm627, %vm629
          %v631 = vsel %vm630, %v616, %v623
          %632 = vst [vmem:[%s618] sm:$0xff] %v631
          %v633 = vadd.s32 %v591, 16
          %v634 = vlaneseq
          %v635 = vand.u32 %v634, 127
          %s636 = scalar_lea.vmem %s588, 16
          %v637 = vld [vmem:[%s636] sm:$0xff]
          %v638 = vmul.f32 %v637, %v592
          %s639 = scalar_lea.vmem %s587, 16
          %v640 = vld [vmem:[%s639] sm:$0xff]
          %v641 = vstv %s218
          %vm642 = vcmp.gt.s32.totalorder %v635, %v641
          %v643 = vsub.f32 %v640, %v638
          %v644 = vsel %vm642, %v643, %v640
          %v645 = vstv %s218
          %v646 = vlaneseq
          %v647 = vand.u32 %v646, 127
          %vm648 = vcmp.eq.s32.totalorder %v647, %v645
          %v649 = vstv %s218
          %vm650 = vcmp.ge.s32.totalorder %v633, %v649
          %vm651 = vmand %vm648, %vm650
          %v652 = vsel %vm651, %v637, %v644
          %653 = vst [vmem:[%s639] sm:$0xff] %v652
          %v654 = vadd.s32 %v591, 24
          %v655 = vlaneseq
          %v656 = vand.u32 %v655, 127
          %s657 = scalar_lea.vmem %s588, 24
          %v658 = vld [vmem:[%s657] sm:$0xff]
          %v659 = vmul.f32 %v658, %v592
          %s660 = scalar_lea.vmem %s587, 24
          %v661 = vld [vmem:[%s660] sm:$0xff]
          %v662 = vstv %s218
          %vm663 = vcmp.gt.s32.totalorder %v656, %v662
          %v664 = vsub.f32 %v661, %v659
          %v665 = vsel %vm663, %v664, %v661
          %v666 = vstv %s218
          %v667 = vlaneseq
          %v668 = vand.u32 %v667, 127
          %vm669 = vcmp.eq.s32.totalorder %v668, %v666
          %v670 = vstv %s218
          %vm671 = vcmp.ge.s32.totalorder %v654, %v670
          %vm672 = vmand %vm669, %vm671
          %v673 = vsel %vm672, %v658, %v665
          %674 = vst [vmem:[%s660] sm:$0xff] %v673
          %v675 = vadd.s32 %v591, 32
          %v676 = vlaneseq
          %v677 = vand.u32 %v676, 127
          %s678 = scalar_lea.vmem %s588, 32
          %v679 = vld [vmem:[%s678] sm:$0xff]
          %v680 = vmul.f32 %v679, %v592
          %s681 = scalar_lea.vmem %s587, 32
          %v682 = vld [vmem:[%s681] sm:$0xff]
          %v683 = vstv %s218
          %vm684 = vcmp.gt.s32.totalorder %v677, %v683
          %v685 = vsub.f32 %v682, %v680
          %v686 = vsel %vm684, %v685, %v682
          %v687 = vstv %s218
          %v688 = vlaneseq
          %v689 = vand.u32 %v688, 127
          %vm690 = vcmp.eq.s32.totalorder %v689, %v687
          %v691 = vstv %s218
          %vm692 = vcmp.ge.s32.totalorder %v675, %v691
          %vm693 = vmand %vm690, %vm692
          %v694 = vsel %vm693, %v679, %v686
          %695 = vst [vmem:[%s681] sm:$0xff] %v694
          %v696 = vadd.s32 %v591, 40
          %v697 = vlaneseq
          %v698 = vand.u32 %v697, 127
          %s699 = scalar_lea.vmem %s588, 40
          %v700 = vld [vmem:[%s699] sm:$0xff]
          %v701 = vmul.f32 %v700, %v592
          %s702 = scalar_lea.vmem %s587, 40
          %v703 = vld [vmem:[%s702] sm:$0xff]
          %v704 = vstv %s218
          %vm705 = vcmp.gt.s32.totalorder %v698, %v704
          %v706 = vsub.f32 %v703, %v701
          %v707 = vsel %vm705, %v706, %v703
          %v708 = vstv %s218
          %v709 = vlaneseq
          %v710 = vand.u32 %v709, 127
          %vm711 = vcmp.eq.s32.totalorder %v710, %v708
          %v712 = vstv %s218
          %vm713 = vcmp.ge.s32.totalorder %v696, %v712
          %vm714 = vmand %vm711, %vm713
          %v715 = vsel %vm714, %v700, %v707
          %716 = vst [vmem:[%s702] sm:$0xff] %v715
          %v717 = vadd.s32 %v591, 48
          %v718 = vlaneseq
          %v719 = vand.u32 %v718, 127
          %s720 = scalar_lea.vmem %s588, 48
          %v721 = vld [vmem:[%s720] sm:$0xff]
          %v722 = vmul.f32 %v721, %v592
          %s723 = scalar_lea.vmem %s587, 48
          %v724 = vld [vmem:[%s723] sm:$0xff]
          %v725 = vstv %s218
          %vm726 = vcmp.gt.s32.totalorder %v719, %v725
          %v727 = vsub.f32 %v724, %v722
          %v728 = vsel %vm726, %v727, %v724
          %v729 = vstv %s218
          %v730 = vlaneseq
          %v731 = vand.u32 %v730, 127
          %vm732 = vcmp.eq.s32.totalorder %v731, %v729
          %v733 = vstv %s218
          %vm734 = vcmp.ge.s32.totalorder %v717, %v733
          %vm735 = vmand %vm732, %vm734
          %v736 = vsel %vm735, %v721, %v728
          %737 = vst [vmem:[%s723] sm:$0xff] %v736
          %v738 = vadd.s32 %v591, 56
          %v739 = vlaneseq
          %v740 = vand.u32 %v739, 127
          %s741 = scalar_lea.vmem %s588, 56
          %v742 = vld [vmem:[%s741] sm:$0xff]
          %v743 = vmul.f32 %v742, %v592
          %s744 = scalar_lea.vmem %s587, 56
          %v745 = vld [vmem:[%s744] sm:$0xff]
          %v746 = vstv %s218
          %vm747 = vcmp.gt.s32.totalorder %v740, %v746
          %v748 = vsub.f32 %v745, %v743
          %v749 = vsel %vm747, %v748, %v745
          %v750 = vstv %s218
          %v751 = vlaneseq
          %v752 = vand.u32 %v751, 127
          %vm753 = vcmp.eq.s32.totalorder %v752, %v750
          %v754 = vstv %s218
          %vm755 = vcmp.ge.s32.totalorder %v738, %v754
          %vm756 = vmand %vm753, %vm755
          %v757 = vsel %vm756, %v742, %v749
          %758 = vst [vmem:[%s744] sm:$0xff] %v757
          %s759 = scalar_lea.vmem %s587, %s218
          %v760 = vld [vmem:[%s759] ss:$0 sm:$0xff]
          %v761 = vstv %s218
          %v762 = vlaneseq
          %v763 = vand.u32 %v762, 127
          %vm764 = vcmp.eq.s32.totalorder %v763, %v761
          %v765 = vsel %vm764, %v354, %v760
          %766 = vst [vmem:[%s759] sm:$0x1] %v765
        $region59: #{custom-call.57} parent=53 // loop_footer
          %s222 = sadd.s32 1, %s218
        $region60: #{custom-call.57} parent=53 // loop_footer_branch
          %217 = sbr.rel target = $region56
        $region61: #{custom-call.57} parent=53 // loop_exit
          _
        %s768 = sshllo.u32 0, 2
        %v770 = vld [vmem:[#allocation2] sm:%s768]
        %s771 = sshllo.u32 0, 2
        %772 = vst [vmem:[%s175] sm:%s771] %v770
        %s773 = sand.u32 %s10, 1
        %s774 = sand.u32 %s10, 1
        %s775 = smul.addr %s774, 64
        %s776 = scalar_lea.vmem [#allocation1], %s775
        %s777 = sand.u32 %s49, 1
        %s778 = sand.u32 %s49, 1
        %s779 = smul.addr %s778, 2
        %s780 = scalar_lea.vmem [#allocation3], %s779
        %s781 = smul.u32 8, %s16
        %s782 = sadd.s32 %s17, %s781
        %s783 = smul.addr %s15, 8
        %s784 = sadd.s32 %s782, %s783
        %s785 = smul.addr %s784, 8
        %s786 = scalar_lea.vmem %s1, %s785
        // Predicated region
        $region62: #{custom-call.57} parent=53 // pred_check
          _
        $region63: #{custom-call.57} parent=53 // pred_check_branch
          %788 = sbr.rel (0) target = $region65
        $region64: #{custom-call.57} parent=53 // pred_region
          // Predicated region
          $region66: #{custom-call.57} parent=64 // pred_check
            _
          $region67: #{custom-call.57} parent=64 // pred_check_branch
            %790 = sbr.rel (0) target = $region69
          $region68: #{custom-call.57} parent=64 // pred_region
            // Predicated region
            $region81: #{custom-call.57} parent=68 // pred_check
              _
            $region82: #{custom-call.57} parent=68 // pred_check_branch
              %819 = sbr.rel (0) target = $region84
            $region83: #{custom-call.57} parent=68 // pred_region
              loop: start=0, step=1, limit=1
              $region85: #{custom-call.57} parent=83 // loop_pre_header
                _
              $region86: #{custom-call.57} parent=83 // loop_header
                %s821 = sphi 0, %s825
                %p822 = scmp.ge.s32.totalorder %s821, 1
                %s826 = sphi %s776, %s776
                %s827 = sphi %s786, %s786
              $region87: #{custom-call.57} parent=83 // loop_header_branch
                %824 = sbr.rel (%p822) target = $region91
              $region88: #{custom-call.57} parent=83 // loop_body
                %v828 = vld [vmem:[%s826] sm:$0xff]
                %829 = vst [vmem:[%s827] sm:$0xff] %v828
                %v830 = vld [vmem:[%s826 + $0x8] sm:$0xff]
                %831 = vst [vmem:[%s827 + $0x8] sm:$0xff] %v830
                %v832 = vld [vmem:[%s826 + $0x10] sm:$0xff]
                %833 = vst [vmem:[%s827 + $0x10] sm:$0xff] %v832
                %v834 = vld [vmem:[%s826 + $0x18] sm:$0xff]
                %835 = vst [vmem:[%s827 + $0x18] sm:$0xff] %v834
                %v836 = vld [vmem:[%s826 + $0x20] sm:$0xff]
                %837 = vst [vmem:[%s827 + $0x20] sm:$0xff] %v836
                %v838 = vld [vmem:[%s826 + $0x28] sm:$0xff]
                %839 = vst [vmem:[%s827 + $0x28] sm:$0xff] %v838
                %v840 = vld [vmem:[%s826 + $0x30] sm:$0xff]
                %841 = vst [vmem:[%s827 + $0x30] sm:$0xff] %v840
                %v842 = vld [vmem:[%s826 + $0x38] sm:$0xff]
                %843 = vst [vmem:[%s827 + $0x38] sm:$0xff] %v842
              $region89: #{custom-call.57} parent=83 // loop_footer
                %s825 = sadd.s32 1, %s821
              $region90: #{custom-call.57} parent=83 // loop_footer_branch
                %820 = sbr.rel target = $region86
              $region91: #{custom-call.57} parent=83 // loop_exit
                _
            $region84: #{custom-call.57} parent=68 // pred_fallthru
              _
            // Predicated region
            $region92: #{custom-call.57} parent=68 // pred_check
              _
            $region93: #{custom-call.57} parent=68 // pred_check_branch
              %845 = sbr.rel target = $region95
            $region94: #{custom-call.57} parent=68 // pred_region
              _
            $region95: #{custom-call.57} parent=68 // pred_fallthru
              _
          $region69: #{custom-call.57} parent=64 // pred_fallthru
            _
          // Predicated region
          $region70: #{custom-call.57} parent=64 // pred_check
            _
          $region71: #{custom-call.57} parent=64 // pred_check_branch
            %792 = sbr.rel target = $region73
          $region72: #{custom-call.57} parent=64 // pred_region
            loop: start=0, step=1, limit=1
            $region74: #{custom-call.57} parent=72 // loop_pre_header
              _
            $region75: #{custom-call.57} parent=72 // loop_header
              %s795 = sphi 0, %s799
              %p796 = scmp.ge.s32.totalorder %s795, 1
              %s800 = sphi %s776, %s776
              %s801 = sphi %s786, %s786
            $region76: #{custom-call.57} parent=72 // loop_header_branch
              %798 = sbr.rel (%p796) target = $region80
            $region77: #{custom-call.57} parent=72 // loop_body
              %v802 = vld [vmem:[%s800] sm:$0xff]
              %803 = vst [vmem:[%s801] sm:$0xff] %v802
              %v804 = vld [vmem:[%s800 + $0x8] sm:$0xff]
              %805 = vst [vmem:[%s801 + $0x8] sm:$0xff] %v804
              %v806 = vld [vmem:[%s800 + $0x10] sm:$0xff]
              %807 = vst [vmem:[%s801 + $0x10] sm:$0xff] %v806
              %v808 = vld [vmem:[%s800 + $0x18] sm:$0xff]
              %809 = vst [vmem:[%s801 + $0x18] sm:$0xff] %v808
              %v810 = vld [vmem:[%s800 + $0x20] sm:$0xff]
              %811 = vst [vmem:[%s801 + $0x20] sm:$0xff] %v810
              %v812 = vld [vmem:[%s800 + $0x28] sm:$0xff]
              %813 = vst [vmem:[%s801 + $0x28] sm:$0xff] %v812
              %v814 = vld [vmem:[%s800 + $0x30] sm:$0xff]
              %815 = vst [vmem:[%s801 + $0x30] sm:$0xff] %v814
              %v816 = vld [vmem:[%s800 + $0x38] sm:$0xff]
              %817 = vst [vmem:[%s801 + $0x38] sm:$0xff] %v816
            $region78: #{custom-call.57} parent=72 // loop_footer
              %s799 = sadd.s32 1, %s795
            $region79: #{custom-call.57} parent=72 // loop_footer_branch
              %794 = sbr.rel target = $region75
            $region80: #{custom-call.57} parent=72 // loop_exit
              _
          $region73: #{custom-call.57} parent=64 // pred_fallthru
            _
        $region65: #{custom-call.57} parent=53 // pred_fallthru
          _
        %846 = vnop
        // Predicated region
        $region96: #{custom-call.57} parent=53 // pred_check
          %p847 = pneg %p59
        $region97: #{custom-call.57} parent=53 // pred_check_branch
          %849 = sbr.rel (%p847) target = $region99
        $region98: #{custom-call.57} parent=53 // pred_region
          %p850 = scmp.lt.s32.totalorder %s15, 0
          %s851 = ssub.s32 0, %s15
          %s852 = scalar_select %p850, %s851, %s15
          %s853 = sshrl.u32 %s852, 3
          %s854 = ssub.s32 0, %s853
          %s855 = scalar_select %p850, %s854, %s853
          %s856 = smul.addr %s855, 2
          %s857 = scalar_lea.vmem %s2, %s856
          // Predicated region
          $region100: #{custom-call.57} parent=98 // pred_check
            _
          $region101: #{custom-call.57} parent=98 // pred_check_branch
            %859 = sbr.rel (0) target = $region103
          $region102: #{custom-call.57} parent=98 // pred_region
            // Predicated region
            $region104: #{custom-call.57} parent=102 // pred_check
              _
            $region105: #{custom-call.57} parent=102 // pred_check_branch
              %861 = sbr.rel target = $region107
            $region106: #{custom-call.57} parent=102 // pred_region
              // Predicated region
              $region119: #{custom-call.57} parent=106 // pred_check
                _
              $region120: #{custom-call.57} parent=106 // pred_check_branch
                %876 = sbr.rel (0) target = $region122
              $region121: #{custom-call.57} parent=106 // pred_region
                loop: start=0, step=1, limit=1
                $region123: #{custom-call.57} parent=121 // loop_pre_header
                  _
                $region124: #{custom-call.57} parent=121 // loop_header
                  %s879 = sphi 0, %s883
                  %p880 = scmp.ge.s32.totalorder %s879, 1
                  %s884 = sphi %s780, %s780
                  %s885 = sphi %s857, %s857
                $region125: #{custom-call.57} parent=121 // loop_header_branch
                  %882 = sbr.rel (%p880) target = $region129
                $region126: #{custom-call.57} parent=121 // loop_body
                  %v886 = vld [vmem:[%s884] sm:$0x3]
                  %887 = vst [vmem:[%s885] sm:$0x3] %v886
                $region127: #{custom-call.57} parent=121 // loop_footer
                  %s883 = sadd.s32 1, %s879
                $region128: #{custom-call.57} parent=121 // loop_footer_branch
                  %878 = sbr.rel target = $region124
                $region129: #{custom-call.57} parent=121 // loop_exit
                  _
              $region122: #{custom-call.57} parent=106 // pred_fallthru
                _
            $region107: #{custom-call.57} parent=102 // pred_fallthru
              _
            // Predicated region
            $region108: #{custom-call.57} parent=102 // pred_check
              _
            $region109: #{custom-call.57} parent=102 // pred_check_branch
              %863 = sbr.rel (0) target = $region111
            $region110: #{custom-call.57} parent=102 // pred_region
              loop: start=0, step=1, limit=1
              $region112: #{custom-call.57} parent=110 // loop_pre_header
                _
              $region113: #{custom-call.57} parent=110 // loop_header
                %s866 = sphi 0, %s870
                %p867 = scmp.ge.s32.totalorder %s866, 1
                %s871 = sphi %s780, %s780
                %s872 = sphi %s857, %s857
              $region114: #{custom-call.57} parent=110 // loop_header_branch
                %869 = sbr.rel (%p867) target = $region118
              $region115: #{custom-call.57} parent=110 // loop_body
                %v873 = vld [vmem:[%s871] sm:$0x3]
                %874 = vst [vmem:[%s872] sm:$0x3] %v873
              $region116: #{custom-call.57} parent=110 // loop_footer
                %s870 = sadd.s32 1, %s866
              $region117: #{custom-call.57} parent=110 // loop_footer_branch
                %865 = sbr.rel target = $region113
              $region118: #{custom-call.57} parent=110 // loop_exit
                _
            $region111: #{custom-call.57} parent=102 // pred_fallthru
              _
          $region103: #{custom-call.57} parent=98 // pred_fallthru
            _
          %888 = vnop
        $region99: #{custom-call.57} parent=53 // pred_fallthru
          _
      $region54: #{custom-call.57} parent=5 // pred_fallthru
        _
      %p889 = scmp.le.s32.totalorder 2, %s5
      // Predicated region
      $region130: #{custom-call.57} parent=5 // pred_check
        %p890 = pneg %p889
      $region131: #{custom-call.57} parent=5 // pred_check_branch
        %892 = sbr.rel (%p890) target = $region133
      $region132: #{custom-call.57} parent=5 // pred_region
        %s893 = ssub.s32 %s5, 2
        %s894 = sand.u32 %s11, 1
        %s895 = sand.u32 %s11, 1
        %s896 = smul.addr %s895, 64
        %s897 = scalar_lea.vmem [#allocation1], %s896
        // Predicated region
        $region134: #{custom-call.57} parent=132 // pred_check
          %p898 = pneg %p65
        $region135: #{custom-call.57} parent=132 // pred_check_branch
          %900 = sbr.rel (%p898) target = $region137
        $region136: #{custom-call.57} parent=132 // pred_region
          %s901 = sand.u32 %s50, 1
          %s902 = sand.u32 %s50, 1
          %s903 = smul.addr %s902, 2
          %s904 = scalar_lea.vmem [#allocation3], %s903
        $region137: #{custom-call.57} parent=132 // pred_fallthru
          _
      $region133: #{custom-call.57} parent=5 // pred_fallthru
        _
    $region6: #{custom-call.57} parent=1 // loop_footer
      %s9 = sadd.s32 1, %s5
    $region7: #{custom-call.57} parent=1 // loop_footer_branch
      %4 = sbr.rel target = $region3
    $region8: #{custom-call.57} parent=1 // loop_exit
      _

// kernel: custom-call.58
$region0: #{custom-call.58}
  %s0 = inlined_call_operand.vmem [shape: f32[2,32,32], index: 0, kind: input, shape index: {}]
  %s1 = inlined_call_operand.vmem [shape: f32[2,32,32], index: 1, kind: output, shape index: {}]
  $region1: #{custom-call.58} parent=0
    #allocation0 [shape = 'u8[32768]{0}', space=vmem, size = 0x8000, scoped, tag = 'operand span for operand 0']
    #allocation1 [shape = 'u8[32768]{0}', space=vmem, size = 0x8000, scoped, tag = 'operand span for operand 1']
    loop: start=0, step=1, limit=4
    $region2: #{custom-call.58} parent=1 // loop_pre_header
      _
    $region3: #{custom-call.58} parent=1 // loop_header
      %s3 = sphi 0, %s7
      %p4 = scmp.ge.s32.totalorder %s3, 4
    $region4: #{custom-call.58} parent=1 // loop_header_branch
      %6 = sbr.rel (%p4) target = $region8
    $region5: #{custom-call.58} parent=1 // loop_body
      %s8 = ssub.s32 %s3, 1
      %s9 = ssub.s32 %s3, 2
      %s10 = sadd.s32 %s3, 1
      %p11 = scmp.le.s32.totalorder 1, %s3
      %p12 = scmp.lt.s32.totalorder %s3, 3
      %p13 = pnand %p11, %p12
      %p14 = pneg %p13
      // Predicated region
      $region9: #{custom-call.58} parent=5 // pred_check
        _
      $region10: #{custom-call.58} parent=5 // pred_check_branch
        %16 = sbr.rel (%p13) target = $region12
      $region11: #{custom-call.58} parent=5 // pred_region
        %s17 = ssub.s32 %s3, 1
      $region12: #{custom-call.58} parent=5 // pred_fallthru
        _
      %p18 = scmp.lt.s32.totalorder %s3, 2
      // Predicated region
      $region13: #{custom-call.58} parent=5 // pred_check
        %p19 = pneg %p18
      $region14: #{custom-call.58} parent=5 // pred_check_branch
        %21 = sbr.rel (%p19) target = $region16
      $region15: #{custom-call.58} parent=5 // pred_region
        %s22 = sand.u32 %s3, 1
        %s23 = sand.u32 %s3, 1
        %s24 = smul.addr %s23, 32
        %s25 = scalar_lea.vmem [#allocation0], %s24
        %s26 = smul.addr %s3, 32
        %s27 = scalar_lea.vmem %s0, %s26
        // Predicated region
        $region17: #{custom-call.58} parent=15 // pred_check
          _
        $region18: #{custom-call.58} parent=15 // pred_check_branch
          %29 = sbr.rel (0) target = $region20
        $region19: #{custom-call.58} parent=15 // pred_region
          // Predicated region
          $region21: #{custom-call.58} parent=19 // pred_check
            _
          $region22: #{custom-call.58} parent=19 // pred_check_branch
            %31 = sbr.rel (0) target = $region24
          $region23: #{custom-call.58} parent=19 // pred_region
            loop: start=0, step=1, limit=1
            $region25: #{custom-call.58} parent=23 // loop_pre_header
              _
            $region26: #{custom-call.58} parent=23 // loop_header
              %s33 = sphi 0, %s37
              %p34 = scmp.ge.s32.totalorder %s33, 1
              %s38 = sphi %s27, %s27
              %s39 = sphi %s25, %s25
            $region27: #{custom-call.58} parent=23 // loop_header_branch
              %36 = sbr.rel (%p34) target = $region31
            $region28: #{custom-call.58} parent=23 // loop_body
              %v40 = vld [vmem:[%s38] sm:$0xff]
              %41 = vst [vmem:[%s39] sm:$0xff] %v40
              %v42 = vld [vmem:[%s38 + $0x8] sm:$0xff]
              %43 = vst [vmem:[%s39 + $0x8] sm:$0xff] %v42
              %v44 = vld [vmem:[%s38 + $0x10] sm:$0xff]
              %45 = vst [vmem:[%s39 + $0x10] sm:$0xff] %v44
              %v46 = vld [vmem:[%s38 + $0x18] sm:$0xff]
              %47 = vst [vmem:[%s39 + $0x18] sm:$0xff] %v46
            $region29: #{custom-call.58} parent=23 // loop_footer
              %s37 = sadd.s32 1, %s33
            $region30: #{custom-call.58} parent=23 // loop_footer_branch
              %32 = sbr.rel target = $region26
            $region31: #{custom-call.58} parent=23 // loop_exit
              _
          $region24: #{custom-call.58} parent=19 // pred_fallthru
            _
          // Predicated region
          $region32: #{custom-call.58} parent=19 // pred_check
            _
          $region33: #{custom-call.58} parent=19 // pred_check_branch
            %49 = sbr.rel target = $region35
          $region34: #{custom-call.58} parent=19 // pred_region
            _
          $region35: #{custom-call.58} parent=19 // pred_fallthru
            _
        $region20: #{custom-call.58} parent=15 // pred_fallthru
          _
        %50 = vnop
      $region16: #{custom-call.58} parent=5 // pred_fallthru
        _
      %p51 = scmp.le.s32.totalorder 1, %s3
      %p52 = scmp.lt.s32.totalorder %s3, 3
      %p53 = pnand %p51, %p52
      %p54 = pneg %p53
      // Predicated region
      $region36: #{custom-call.58} parent=5 // pred_check
        _
      $region37: #{custom-call.58} parent=5 // pred_check_branch
        %56 = sbr.rel (%p53) target = $region39
      $region38: #{custom-call.58} parent=5 // pred_region
        %s57 = ssub.s32 %s3, 1
        %s58 = sand.u32 %s8, 1
        %s59 = sand.u32 %s8, 1
        %s60 = smul.addr %s59, 32
        %s61 = scalar_lea.vmem [#allocation0], %s60
        %s62 = sand.u32 %s8, 1
        %s63 = sand.u32 %s8, 1
        %s64 = smul.addr %s63, 32
        %s65 = scalar_lea.vmem [#allocation0], %s64
        %s66 = sand.u32 %s8, 1
        %s67 = sand.u32 %s8, 1
        %s68 = smul.addr %s67, 32
        %s69 = scalar_lea.vmem [#allocation1], %s68
        %v70 = vlaneseq
        %v71 = vand.u32 %v70, 127
        %v72 = vlaneseq
        %v73 = vshrl.u32 %v72, 7
        %vm75 = vcmp.eq.s32.totalorder %v71, %v73
        %v76 = vld [vmem:[%s61] sm:$0xff]
        %v77 = vlaneseq
        %v78 = vand.u32 %v77, 127
        %vm79 = vcmp.eq.s32.totalorder %v78, 0
        %v80 = vsel %vm79, %v76, 1.0
        %v81 = vsel %vm75, %v80, 0.0
        %v82 = vlaneseq
        %v83 = vand.u32 %v82, 127
        %v84 = vlaneseq
        %v85 = vshrl.u32 %v84, 7
        %v86 = vadd.s32 %v85, 8
        %vm87 = vcmp.eq.s32.totalorder %v83, %v86
        %v88 = vsel %vm87, 1.0, 0.0
        %v89 = vlaneseq
        %v90 = vand.u32 %v89, 127
        %v91 = vlaneseq
        %v92 = vshrl.u32 %v91, 7
        %v93 = vadd.s32 %v92, 16
        %vm94 = vcmp.eq.s32.totalorder %v90, %v93
        %v95 = vsel %vm94, 1.0, 0.0
        %v96 = vlaneseq
        %v97 = vand.u32 %v96, 127
        %v98 = vlaneseq
        %v99 = vshrl.u32 %v98, 7
        %v100 = vadd.s32 %v99, 24
        %vm101 = vcmp.eq.s32.totalorder %v97, %v100
        %v102 = vsel %vm101, 1.0, 0.0
        %s103 = scalar_lea.vmem %s61, 1 [#allocation0]
        %v104 = vld [vmem:[%s103] ss:$0 sm:$0xff]
        %vm105 = vcmask 261120
        %v106 = vsel %vm105, %v104, 0.0
        %v107 = vlaneseq
        %v108 = vand.u32 %v107, 127
        %vm109 = vcmp.eq.s32.totalorder %v108, 1
        %v110 = vmul.f32 %v106, %v81
        %111 = vadd.xlane.f32.xlu0 %v110
        %v112 = vpop.xlane.xlu0 %111
        %v113 = vsel %vm109, %v112, %v81
        %s114 = scalar_lea.vmem %s61, 2 [#allocation0]
        %v115 = vld [vmem:[%s114] ss:$0 sm:$0xff]
        %vm116 = vcmask 261120
        %v117 = vsel %vm116, %v115, 0.0
        %v118 = vlaneseq
        %v119 = vand.u32 %v118, 127
        %vm120 = vcmp.eq.s32.totalorder %v119, 2
        %v121 = vmul.f32 %v117, %v113
        %122 = vadd.xlane.f32.xlu0 %v121
        %v123 = vpop.xlane.xlu0 %122
        %v124 = vsel %vm120, %v123, %v113
        %s125 = scalar_lea.vmem %s61, 3 [#allocation0]
        %v126 = vld [vmem:[%s125] ss:$0 sm:$0xff]
        %vm127 = vcmask 261120
        %v128 = vsel %vm127, %v126, 0.0
        %v129 = vlaneseq
        %v130 = vand.u32 %v129, 127
        %vm131 = vcmp.eq.s32.totalorder %v130, 3
        %v132 = vmul.f32 %v128, %v124
        %133 = vadd.xlane.f32.xlu0 %v132
        %v134 = vpop.xlane.xlu0 %133
        %v135 = vsel %vm131, %v134, %v124
        %s136 = scalar_lea.vmem %s61, 4 [#allocation0]
        %v137 = vld [vmem:[%s136] ss:$0 sm:$0xff]
        %vm138 = vcmask 261120
        %v139 = vsel %vm138, %v137, 0.0
        %v140 = vlaneseq
        %v141 = vand.u32 %v140, 127
        %vm142 = vcmp.eq.s32.totalorder %v141, 4
        %v143 = vmul.f32 %v139, %v135
        %144 = vadd.xlane.f32.xlu0 %v143
        %v145 = vpop.xlane.xlu0 %144
        %v146 = vsel %vm142, %v145, %v135
        %s147 = scalar_lea.vmem %s61, 5 [#allocation0]
        %v148 = vld [vmem:[%s147] ss:$0 sm:$0xff]
        %vm149 = vcmask 261120
        %v150 = vsel %vm149, %v148, 0.0
        %v151 = vlaneseq
        %v152 = vand.u32 %v151, 127
        %vm153 = vcmp.eq.s32.totalorder %v152, 5
        %v154 = vmul.f32 %v150, %v146
        %155 = vadd.xlane.f32.xlu0 %v154
        %v156 = vpop.xlane.xlu0 %155
        %v157 = vsel %vm153, %v156, %v146
        %s158 = scalar_lea.vmem %s61, 6 [#allocation0]
        %v159 = vld [vmem:[%s158] ss:$0 sm:$0xff]
        %vm160 = vcmask 261120
        %v161 = vsel %vm160, %v159, 0.0
        %v162 = vlaneseq
        %v163 = vand.u32 %v162, 127
        %vm164 = vcmp.eq.s32.totalorder %v163, 6
        %v165 = vmul.f32 %v161, %v157
        %166 = vadd.xlane.f32.xlu0 %v165
        %v167 = vpop.xlane.xlu0 %166
        %v168 = vsel %vm164, %v167, %v157
        %s169 = scalar_lea.vmem %s61, 7 [#allocation0]
        %v170 = vld [vmem:[%s169] ss:$0 sm:$0xff]
        %vm171 = vcmask 261120
        %v172 = vsel %vm171, %v170, 0.0
        %v173 = vlaneseq
        %v174 = vand.u32 %v173, 127
        %vm175 = vcmp.eq.s32.totalorder %v174, 7
        %v176 = vmul.f32 %v172, %v168
        %177 = vadd.xlane.f32.xlu0 %v176
        %v178 = vpop.xlane.xlu0 %177
        %v179 = vsel %vm175, %v178, %v168
        %s180 = scalar_lea.vmem %s61, 8 [#allocation0]
        %v181 = vld [vmem:[%s180] ss:$0 sm:$0xff]
        %vm182 = vcmask 261120
        %v183 = vsel %vm182, %v181, 0.0
        %v184 = vlaneseq
        %v185 = vand.u32 %v184, 127
        %vm186 = vcmp.eq.s32.totalorder %v185, 8
        %v187 = vmul.f32 %v183, %v179
        %188 = vadd.xlane.f32.xlu0 %v187
        %v189 = vpop.xlane.xlu0 %188
        %v190 = vsel %vm186, %v189, %v179
        %v191 = vmul.f32 %v183, %v88
        %192 = vadd.xlane.f32.xlu0 %v191
        %v193 = vpop.xlane.xlu0 %192
        %v194 = vsel %vm186, %v193, %v88
        %s195 = scalar_lea.vmem %s61, 9 [#allocation0]
        %v196 = vld [vmem:[%s195] ss:$0 sm:$0xff]
        %vm197 = vcmask 261120
        %v198 = vsel %vm197, %v196, 0.0
        %v199 = vlaneseq
        %v200 = vand.u32 %v199, 127
        %vm201 = vcmp.eq.s32.totalorder %v200, 9
        %v202 = vmul.f32 %v198, %v190
        %203 = vadd.xlane.f32.xlu0 %v202
        %v204 = vpop.xlane.xlu0 %203
        %v205 = vsel %vm201, %v204, %v190
        %v206 = vmul.f32 %v198, %v194
        %207 = vadd.xlane.f32.xlu0 %v206
        %v208 = vpop.xlane.xlu0 %207
        %v209 = vsel %vm201, %v208, %v194
        %s210 = scalar_lea.vmem %s61, 10 [#allocation0]
        %v211 = vld [vmem:[%s210] ss:$0 sm:$0xff]
        %vm212 = vcmask 261120
        %v213 = vsel %vm212, %v211, 0.0
        %v214 = vlaneseq
        %v215 = vand.u32 %v214, 127
        %vm216 = vcmp.eq.s32.totalorder %v215, 10
        %v217 = vmul.f32 %v213, %v205
        %218 = vadd.xlane.f32.xlu0 %v217
        %v219 = vpop.xlane.xlu0 %218
        %v220 = vsel %vm216, %v219, %v205
        %v221 = vmul.f32 %v213, %v209
        %222 = vadd.xlane.f32.xlu0 %v221
        %v223 = vpop.xlane.xlu0 %222
        %v224 = vsel %vm216, %v223, %v209
        %s225 = scalar_lea.vmem %s61, 11 [#allocation0]
        %v226 = vld [vmem:[%s225] ss:$0 sm:$0xff]
        %vm227 = vcmask 261120
        %v228 = vsel %vm227, %v226, 0.0
        %v229 = vlaneseq
        %v230 = vand.u32 %v229, 127
        %vm231 = vcmp.eq.s32.totalorder %v230, 11
        %v232 = vmul.f32 %v228, %v220
        %233 = vadd.xlane.f32.xlu0 %v232
        %v234 = vpop.xlane.xlu0 %233
        %v235 = vsel %vm231, %v234, %v220
        %v236 = vmul.f32 %v228, %v224
        %237 = vadd.xlane.f32.xlu0 %v236
        %v238 = vpop.xlane.xlu0 %237
        %v239 = vsel %vm231, %v238, %v224
        %s240 = scalar_lea.vmem %s61, 12 [#allocation0]
        %v241 = vld [vmem:[%s240] ss:$0 sm:$0xff]
        %vm242 = vcmask 261120
        %v243 = vsel %vm242, %v241, 0.0
        %v244 = vlaneseq
        %v245 = vand.u32 %v244, 127
        %vm246 = vcmp.eq.s32.totalorder %v245, 12
        %v247 = vmul.f32 %v243, %v235
        %248 = vadd.xlane.f32.xlu0 %v247
        %v249 = vpop.xlane.xlu0 %248
        %v250 = vsel %vm246, %v249, %v235
        %v251 = vmul.f32 %v243, %v239
        %252 = vadd.xlane.f32.xlu0 %v251
        %v253 = vpop.xlane.xlu0 %252
        %v254 = vsel %vm246, %v253, %v239
        %s255 = scalar_lea.vmem %s61, 13 [#allocation0]
        %v256 = vld [vmem:[%s255] ss:$0 sm:$0xff]
        %vm257 = vcmask 261120
        %v258 = vsel %vm257, %v256, 0.0
        %v259 = vlaneseq
        %v260 = vand.u32 %v259, 127
        %vm261 = vcmp.eq.s32.totalorder %v260, 13
        %v262 = vmul.f32 %v258, %v250
        %263 = vadd.xlane.f32.xlu0 %v262
        %v264 = vpop.xlane.xlu0 %263
        %v265 = vsel %vm261, %v264, %v250
        %v266 = vmul.f32 %v258, %v254
        %267 = vadd.xlane.f32.xlu0 %v266
        %v268 = vpop.xlane.xlu0 %267
        %v269 = vsel %vm261, %v268, %v254
        %s270 = scalar_lea.vmem %s61, 14 [#allocation0]
        %v271 = vld [vmem:[%s270] ss:$0 sm:$0xff]
        %vm272 = vcmask 261120
        %v273 = vsel %vm272, %v271, 0.0
        %v274 = vlaneseq
        %v275 = vand.u32 %v274, 127
        %vm276 = vcmp.eq.s32.totalorder %v275, 14
        %v277 = vmul.f32 %v273, %v265
        %278 = vadd.xlane.f32.xlu0 %v277
        %v279 = vpop.xlane.xlu0 %278
        %v280 = vsel %vm276, %v279, %v265
        %v281 = vmul.f32 %v273, %v269
        %282 = vadd.xlane.f32.xlu0 %v281
        %v283 = vpop.xlane.xlu0 %282
        %v284 = vsel %vm276, %v283, %v269
        %s285 = scalar_lea.vmem %s61, 15 [#allocation0]
        %v286 = vld [vmem:[%s285] ss:$0 sm:$0xff]
        %vm287 = vcmask 261120
        %v288 = vsel %vm287, %v286, 0.0
        %v289 = vlaneseq
        %v290 = vand.u32 %v289, 127
        %vm291 = vcmp.eq.s32.totalorder %v290, 15
        %v292 = vmul.f32 %v288, %v280
        %293 = vadd.xlane.f32.xlu0 %v292
        %v294 = vpop.xlane.xlu0 %293
        %v295 = vsel %vm291, %v294, %v280
        %v296 = vmul.f32 %v288, %v284
        %297 = vadd.xlane.f32.xlu0 %v296
        %v298 = vpop.xlane.xlu0 %297
        %v299 = vsel %vm291, %v298, %v284
        %s300 = scalar_lea.vmem %s61, 16 [#allocation0]
        %v301 = vld [vmem:[%s300] ss:$0 sm:$0xff]
        %vm302 = vcmask 261120
        %v303 = vsel %vm302, %v301, 0.0
        %v304 = vlaneseq
        %v305 = vand.u32 %v304, 127
        %vm306 = vcmp.eq.s32.totalorder %v305, 16
        %v307 = vmul.f32 %v303, %v295
        %308 = vadd.xlane.f32.xlu0 %v307
        %v309 = vpop.xlane.xlu0 %308
        %v310 = vsel %vm306, %v309, %v295
        %v311 = vmul.f32 %v303, %v299
        %312 = vadd.xlane.f32.xlu0 %v311
        %v313 = vpop.xlane.xlu0 %312
        %v314 = vsel %vm306, %v313, %v299
        %v315 = vmul.f32 %v303, %v95
        %316 = vadd.xlane.f32.xlu0 %v315
        %v317 = vpop.xlane.xlu0 %316
        %v318 = vsel %vm306, %v317, %v95
        %s319 = scalar_lea.vmem %s61, 17 [#allocation0]
        %v320 = vld [vmem:[%s319] ss:$0 sm:$0xff]
        %vm321 = vcmask 261120
        %v322 = vsel %vm321, %v320, 0.0
        %v323 = vlaneseq
        %v324 = vand.u32 %v323, 127
        %vm325 = vcmp.eq.s32.totalorder %v324, 17
        %v326 = vmul.f32 %v322, %v310
        %327 = vadd.xlane.f32.xlu0 %v326
        %v328 = vpop.xlane.xlu0 %327
        %v329 = vsel %vm325, %v328, %v310
        %v330 = vmul.f32 %v322, %v314
        %331 = vadd.xlane.f32.xlu0 %v330
        %v332 = vpop.xlane.xlu0 %331
        %v333 = vsel %vm325, %v332, %v314
        %v334 = vmul.f32 %v322, %v318
        %335 = vadd.xlane.f32.xlu0 %v334
        %v336 = vpop.xlane.xlu0 %335
        %v337 = vsel %vm325, %v336, %v318
        %s338 = scalar_lea.vmem %s61, 18 [#allocation0]
        %v339 = vld [vmem:[%s338] ss:$0 sm:$0xff]
        %vm340 = vcmask 261120
        %v341 = vsel %vm340, %v339, 0.0
        %v342 = vlaneseq
        %v343 = vand.u32 %v342, 127
        %vm344 = vcmp.eq.s32.totalorder %v343, 18
        %v345 = vmul.f32 %v341, %v329
        %346 = vadd.xlane.f32.xlu0 %v345
        %v347 = vpop.xlane.xlu0 %346
        %v348 = vsel %vm344, %v347, %v329
        %v349 = vmul.f32 %v341, %v333
        %350 = vadd.xlane.f32.xlu0 %v349
        %v351 = vpop.xlane.xlu0 %350
        %v352 = vsel %vm344, %v351, %v333
        %v353 = vmul.f32 %v341, %v337
        %354 = vadd.xlane.f32.xlu0 %v353
        %v355 = vpop.xlane.xlu0 %354
        %v356 = vsel %vm344, %v355, %v337
        %s357 = scalar_lea.vmem %s61, 19 [#allocation0]
        %v358 = vld [vmem:[%s357] ss:$0 sm:$0xff]
        %vm359 = vcmask 261120
        %v360 = vsel %vm359, %v358, 0.0
        %v361 = vlaneseq
        %v362 = vand.u32 %v361, 127
        %vm363 = vcmp.eq.s32.totalorder %v362, 19
        %v364 = vmul.f32 %v360, %v348
        %365 = vadd.xlane.f32.xlu0 %v364
        %v366 = vpop.xlane.xlu0 %365
        %v367 = vsel %vm363, %v366, %v348
        %v368 = vmul.f32 %v360, %v352
        %369 = vadd.xlane.f32.xlu0 %v368
        %v370 = vpop.xlane.xlu0 %369
        %v371 = vsel %vm363, %v370, %v352
        %v372 = vmul.f32 %v360, %v356
        %373 = vadd.xlane.f32.xlu0 %v372
        %v374 = vpop.xlane.xlu0 %373
        %v375 = vsel %vm363, %v374, %v356
        %s376 = scalar_lea.vmem %s61, 20 [#allocation0]
        %v377 = vld [vmem:[%s376] ss:$0 sm:$0xff]
        %vm378 = vcmask 261120
        %v379 = vsel %vm378, %v377, 0.0
        %v380 = vlaneseq
        %v381 = vand.u32 %v380, 127
        %vm382 = vcmp.eq.s32.totalorder %v381, 20
        %v383 = vmul.f32 %v379, %v367
        %384 = vadd.xlane.f32.xlu0 %v383
        %v385 = vpop.xlane.xlu0 %384
        %v386 = vsel %vm382, %v385, %v367
        %v387 = vmul.f32 %v379, %v371
        %388 = vadd.xlane.f32.xlu0 %v387
        %v389 = vpop.xlane.xlu0 %388
        %v390 = vsel %vm382, %v389, %v371
        %v391 = vmul.f32 %v379, %v375
        %392 = vadd.xlane.f32.xlu0 %v391
        %v393 = vpop.xlane.xlu0 %392
        %v394 = vsel %vm382, %v393, %v375
        %s395 = scalar_lea.vmem %s61, 21 [#allocation0]
        %v396 = vld [vmem:[%s395] ss:$0 sm:$0xff]
        %vm397 = vcmask 261120
        %v398 = vsel %vm397, %v396, 0.0
        %v399 = vlaneseq
        %v400 = vand.u32 %v399, 127
        %vm401 = vcmp.eq.s32.totalorder %v400, 21
        %v402 = vmul.f32 %v398, %v386
        %403 = vadd.xlane.f32.xlu0 %v402
        %v404 = vpop.xlane.xlu0 %403
        %v405 = vsel %vm401, %v404, %v386
        %v406 = vmul.f32 %v398, %v390
        %407 = vadd.xlane.f32.xlu0 %v406
        %v408 = vpop.xlane.xlu0 %407
        %v409 = vsel %vm401, %v408, %v390
        %v410 = vmul.f32 %v398, %v394
        %411 = vadd.xlane.f32.xlu0 %v410
        %v412 = vpop.xlane.xlu0 %411
        %v413 = vsel %vm401, %v412, %v394
        %s414 = scalar_lea.vmem %s61, 22 [#allocation0]
        %v415 = vld [vmem:[%s414] ss:$0 sm:$0xff]
        %vm416 = vcmask 261120
        %v417 = vsel %vm416, %v415, 0.0
        %v418 = vlaneseq
        %v419 = vand.u32 %v418, 127
        %vm420 = vcmp.eq.s32.totalorder %v419, 22
        %v421 = vmul.f32 %v417, %v405
        %422 = vadd.xlane.f32.xlu0 %v421
        %v423 = vpop.xlane.xlu0 %422
        %v424 = vsel %vm420, %v423, %v405
        %v425 = vmul.f32 %v417, %v409
        %426 = vadd.xlane.f32.xlu0 %v425
        %v427 = vpop.xlane.xlu0 %426
        %v428 = vsel %vm420, %v427, %v409
        %v429 = vmul.f32 %v417, %v413
        %430 = vadd.xlane.f32.xlu0 %v429
        %v431 = vpop.xlane.xlu0 %430
        %v432 = vsel %vm420, %v431, %v413
        %s433 = scalar_lea.vmem %s61, 23 [#allocation0]
        %v434 = vld [vmem:[%s433] ss:$0 sm:$0xff]
        %vm435 = vcmask 261120
        %v436 = vsel %vm435, %v434, 0.0
        %v437 = vlaneseq
        %v438 = vand.u32 %v437, 127
        %vm439 = vcmp.eq.s32.totalorder %v438, 23
        %v440 = vmul.f32 %v436, %v424
        %441 = vadd.xlane.f32.xlu0 %v440
        %v442 = vpop.xlane.xlu0 %441
        %v443 = vsel %vm439, %v442, %v424
        %v444 = vmul.f32 %v436, %v428
        %445 = vadd.xlane.f32.xlu0 %v444
        %v446 = vpop.xlane.xlu0 %445
        %v447 = vsel %vm439, %v446, %v428
        %v448 = vmul.f32 %v436, %v432
        %449 = vadd.xlane.f32.xlu0 %v448
        %v450 = vpop.xlane.xlu0 %449
        %v451 = vsel %vm439, %v450, %v432
        %s452 = scalar_lea.vmem %s61, 24 [#allocation0]
        %v453 = vld [vmem:[%s452] ss:$0 sm:$0xff]
        %vm454 = vcmask 261120
        %v455 = vsel %vm454, %v453, 0.0
        %v456 = vlaneseq
        %v457 = vand.u32 %v456, 127
        %vm458 = vcmp.eq.s32.totalorder %v457, 24
        %v459 = vmul.f32 %v455, %v443
        %460 = vadd.xlane.f32.xlu0 %v459
        %v461 = vpop.xlane.xlu0 %460
        %v462 = vsel %vm458, %v461, %v443
        %v463 = vmul.f32 %v455, %v447
        %464 = vadd.xlane.f32.xlu0 %v463
        %v465 = vpop.xlane.xlu0 %464
        %v466 = vsel %vm458, %v465, %v447
        %v467 = vmul.f32 %v455, %v451
        %468 = vadd.xlane.f32.xlu0 %v467
        %v469 = vpop.xlane.xlu0 %468
        %v470 = vsel %vm458, %v469, %v451
        %v471 = vmul.f32 %v455, %v102
        %472 = vadd.xlane.f32.xlu0 %v471
        %v473 = vpop.xlane.xlu0 %472
        %v474 = vsel %vm458, %v473, %v102
        %s475 = scalar_lea.vmem %s61, 25 [#allocation0]
        %v476 = vld [vmem:[%s475] ss:$0 sm:$0xff]
        %vm477 = vcmask 261120
        %v478 = vsel %vm477, %v476, 0.0
        %v479 = vlaneseq
        %v480 = vand.u32 %v479, 127
        %vm481 = vcmp.eq.s32.totalorder %v480, 25
        %v482 = vmul.f32 %v478, %v462
        %483 = vadd.xlane.f32.xlu0 %v482
        %v484 = vpop.xlane.xlu0 %483
        %v485 = vsel %vm481, %v484, %v462
        %v486 = vmul.f32 %v478, %v466
        %487 = vadd.xlane.f32.xlu0 %v486
        %v488 = vpop.xlane.xlu0 %487
        %v489 = vsel %vm481, %v488, %v466
        %v490 = vmul.f32 %v478, %v470
        %491 = vadd.xlane.f32.xlu0 %v490
        %v492 = vpop.xlane.xlu0 %491
        %v493 = vsel %vm481, %v492, %v470
        %v494 = vmul.f32 %v478, %v474
        %495 = vadd.xlane.f32.xlu0 %v494
        %v496 = vpop.xlane.xlu0 %495
        %v497 = vsel %vm481, %v496, %v474
        %s498 = scalar_lea.vmem %s61, 26 [#allocation0]
        %v499 = vld [vmem:[%s498] ss:$0 sm:$0xff]
        %vm500 = vcmask 261120
        %v501 = vsel %vm500, %v499, 0.0
        %v502 = vlaneseq
        %v503 = vand.u32 %v502, 127
        %vm504 = vcmp.eq.s32.totalorder %v503, 26
        %v505 = vmul.f32 %v501, %v485
        %506 = vadd.xlane.f32.xlu0 %v505
        %v507 = vpop.xlane.xlu0 %506
        %v508 = vsel %vm504, %v507, %v485
        %v509 = vmul.f32 %v501, %v489
        %510 = vadd.xlane.f32.xlu0 %v509
        %v511 = vpop.xlane.xlu0 %510
        %v512 = vsel %vm504, %v511, %v489
        %v513 = vmul.f32 %v501, %v493
        %514 = vadd.xlane.f32.xlu0 %v513
        %v515 = vpop.xlane.xlu0 %514
        %v516 = vsel %vm504, %v515, %v493
        %v517 = vmul.f32 %v501, %v497
        %518 = vadd.xlane.f32.xlu0 %v517
        %v519 = vpop.xlane.xlu0 %518
        %v520 = vsel %vm504, %v519, %v497
        %s521 = scalar_lea.vmem %s61, 27 [#allocation0]
        %v522 = vld [vmem:[%s521] ss:$0 sm:$0xff]
        %vm523 = vcmask 261120
        %v524 = vsel %vm523, %v522, 0.0
        %v525 = vlaneseq
        %v526 = vand.u32 %v525, 127
        %vm527 = vcmp.eq.s32.totalorder %v526, 27
        %v528 = vmul.f32 %v524, %v508
        %529 = vadd.xlane.f32.xlu0 %v528
        %v530 = vpop.xlane.xlu0 %529
        %v531 = vsel %vm527, %v530, %v508
        %v532 = vmul.f32 %v524, %v512
        %533 = vadd.xlane.f32.xlu0 %v532
        %v534 = vpop.xlane.xlu0 %533
        %v535 = vsel %vm527, %v534, %v512
        %v536 = vmul.f32 %v524, %v516
        %537 = vadd.xlane.f32.xlu0 %v536
        %v538 = vpop.xlane.xlu0 %537
        %v539 = vsel %vm527, %v538, %v516
        %v540 = vmul.f32 %v524, %v520
        %541 = vadd.xlane.f32.xlu0 %v540
        %v542 = vpop.xlane.xlu0 %541
        %v543 = vsel %vm527, %v542, %v520
        %s544 = scalar_lea.vmem %s61, 28 [#allocation0]
        %v545 = vld [vmem:[%s544] ss:$0 sm:$0xff]
        %vm546 = vcmask 261120
        %v547 = vsel %vm546, %v545, 0.0
        %v548 = vlaneseq
        %v549 = vand.u32 %v548, 127
        %vm550 = vcmp.eq.s32.totalorder %v549, 28
        %v551 = vmul.f32 %v547, %v531
        %552 = vadd.xlane.f32.xlu0 %v551
        %v553 = vpop.xlane.xlu0 %552
        %v554 = vsel %vm550, %v553, %v531
        %v555 = vmul.f32 %v547, %v535
        %556 = vadd.xlane.f32.xlu0 %v555
        %v557 = vpop.xlane.xlu0 %556
        %v558 = vsel %vm550, %v557, %v535
        %v559 = vmul.f32 %v547, %v539
        %560 = vadd.xlane.f32.xlu0 %v559
        %v561 = vpop.xlane.xlu0 %560
        %v562 = vsel %vm550, %v561, %v539
        %v563 = vmul.f32 %v547, %v543
        %564 = vadd.xlane.f32.xlu0 %v563
        %v565 = vpop.xlane.xlu0 %564
        %v566 = vsel %vm550, %v565, %v543
        %s567 = scalar_lea.vmem %s61, 29 [#allocation0]
        %v568 = vld [vmem:[%s567] ss:$0 sm:$0xff]
        %vm569 = vcmask 261120
        %v570 = vsel %vm569, %v568, 0.0
        %v571 = vlaneseq
        %v572 = vand.u32 %v571, 127
        %vm573 = vcmp.eq.s32.totalorder %v572, 29
        %v574 = vmul.f32 %v570, %v554
        %575 = vadd.xlane.f32.xlu0 %v574
        %v576 = vpop.xlane.xlu0 %575
        %v577 = vsel %vm573, %v576, %v554
        %v578 = vmul.f32 %v570, %v558
        %579 = vadd.xlane.f32.xlu0 %v578
        %v580 = vpop.xlane.xlu0 %579
        %v581 = vsel %vm573, %v580, %v558
        %v582 = vmul.f32 %v570, %v562
        %583 = vadd.xlane.f32.xlu0 %v582
        %v584 = vpop.xlane.xlu0 %583
        %v585 = vsel %vm573, %v584, %v562
        %v586 = vmul.f32 %v570, %v566
        %587 = vadd.xlane.f32.xlu0 %v586
        %v588 = vpop.xlane.xlu0 %587
        %v589 = vsel %vm573, %v588, %v566
        %s590 = scalar_lea.vmem %s61, 30 [#allocation0]
        %v591 = vld [vmem:[%s590] ss:$0 sm:$0xff]
        %vm592 = vcmask 261120
        %v593 = vsel %vm592, %v591, 0.0
        %v594 = vlaneseq
        %v595 = vand.u32 %v594, 127
        %vm596 = vcmp.eq.s32.totalorder %v595, 30
        %v597 = vmul.f32 %v593, %v577
        %598 = vadd.xlane.f32.xlu0 %v597
        %v599 = vpop.xlane.xlu0 %598
        %v600 = vsel %vm596, %v599, %v577
        %v601 = vmul.f32 %v593, %v581
        %602 = vadd.xlane.f32.xlu0 %v601
        %v603 = vpop.xlane.xlu0 %602
        %v604 = vsel %vm596, %v603, %v581
        %v605 = vmul.f32 %v593, %v585
        %606 = vadd.xlane.f32.xlu0 %v605
        %v607 = vpop.xlane.xlu0 %606
        %v608 = vsel %vm596, %v607, %v585
        %v609 = vmul.f32 %v593, %v589
        %610 = vadd.xlane.f32.xlu0 %v609
        %v611 = vpop.xlane.xlu0 %610
        %v612 = vsel %vm596, %v611, %v589
        %s613 = scalar_lea.vmem %s61, 31 [#allocation0]
        %v614 = vld [vmem:[%s613] ss:$0 sm:$0xff]
        %vm615 = vcmask 261120
        %v616 = vsel %vm615, %v614, 0.0
        %v617 = vlaneseq
        %v618 = vand.u32 %v617, 127
        %vm619 = vcmp.eq.s32.totalorder %v618, 31
        %v620 = vmul.f32 %v616, %v600
        %621 = vadd.xlane.f32.xlu0 %v620
        %v622 = vpop.xlane.xlu0 %621
        %v623 = vsel %vm619, %v622, %v600
        %v624 = vmul.f32 %v616, %v604
        %625 = vadd.xlane.f32.xlu0 %v624
        %v626 = vpop.xlane.xlu0 %625
        %v627 = vsel %vm619, %v626, %v604
        %v628 = vmul.f32 %v616, %v608
        %629 = vadd.xlane.f32.xlu0 %v628
        %v630 = vpop.xlane.xlu0 %629
        %v631 = vsel %vm619, %v630, %v608
        %v632 = vmul.f32 %v616, %v612
        %633 = vadd.xlane.f32.xlu0 %v632
        %v634 = vpop.xlane.xlu0 %633
        %v635 = vsel %vm619, %v634, %v612
        %636 = vst [vmem:[%s69] sm:$0xff] %v623
        %s637 = scalar_lea.vmem %s69, 8 [#allocation1]
        %638 = vst [vmem:[%s637] sm:$0xff] %v627
        %s639 = scalar_lea.vmem %s69, 16 [#allocation1]
        %640 = vst [vmem:[%s639] sm:$0xff] %v631
        %s641 = scalar_lea.vmem %s69, 24 [#allocation1]
        %642 = vst [vmem:[%s641] sm:$0xff] %v635
        %s643 = sand.u32 %s8, 1
        %s644 = sand.u32 %s8, 1
        %s645 = smul.addr %s644, 32
        %s646 = scalar_lea.vmem [#allocation1], %s645
        %s647 = smul.addr %s8, 32
        %s648 = scalar_lea.vmem %s1, %s647
        // Predicated region
        $region40: #{custom-call.58} parent=38 // pred_check
          _
        $region41: #{custom-call.58} parent=38 // pred_check_branch
          %650 = sbr.rel (0) target = $region43
        $region42: #{custom-call.58} parent=38 // pred_region
          // Predicated region
          $region44: #{custom-call.58} parent=42 // pred_check
            _
          $region45: #{custom-call.58} parent=42 // pred_check_branch
            %652 = sbr.rel (0) target = $region47
          $region46: #{custom-call.58} parent=42 // pred_region
            loop: start=0, step=1, limit=1
            $region48: #{custom-call.58} parent=46 // loop_pre_header
              _
            $region49: #{custom-call.58} parent=46 // loop_header
              %s654 = sphi 0, %s658
              %p655 = scmp.ge.s32.totalorder %s654, 1
              %s659 = sphi %s646, %s646
              %s660 = sphi %s648, %s648
            $region50: #{custom-call.58} parent=46 // loop_header_branch
              %657 = sbr.rel (%p655) target = $region54
            $region51: #{custom-call.58} parent=46 // loop_body
              %v661 = vld [vmem:[%s659] sm:$0xff]
              %662 = vst [vmem:[%s660] sm:$0xff] %v661
              %v663 = vld [vmem:[%s659 + $0x8] sm:$0xff]
              %664 = vst [vmem:[%s660 + $0x8] sm:$0xff] %v663
              %v665 = vld [vmem:[%s659 + $0x10] sm:$0xff]
              %666 = vst [vmem:[%s660 + $0x10] sm:$0xff] %v665
              %v667 = vld [vmem:[%s659 + $0x18] sm:$0xff]
              %668 = vst [vmem:[%s660 + $0x18] sm:$0xff] %v667
            $region52: #{custom-call.58} parent=46 // loop_footer
              %s658 = sadd.s32 1, %s654
            $region53: #{custom-call.58} parent=46 // loop_footer_branch
              %653 = sbr.rel target = $region49
            $region54: #{custom-call.58} parent=46 // loop_exit
              _
          $region47: #{custom-call.58} parent=42 // pred_fallthru
            _
          // Predicated region
          $region55: #{custom-call.58} parent=42 // pred_check
            _
          $region56: #{custom-call.58} parent=42 // pred_check_branch
            %670 = sbr.rel target = $region58
          $region57: #{custom-call.58} parent=42 // pred_region
            _
          $region58: #{custom-call.58} parent=42 // pred_fallthru
            _
        $region43: #{custom-call.58} parent=38 // pred_fallthru
          _
        %671 = vnop
      $region39: #{custom-call.58} parent=5 // pred_fallthru
        _
      %p672 = scmp.le.s32.totalorder 2, %s3
      // Predicated region
      $region59: #{custom-call.58} parent=5 // pred_check
        %p673 = pneg %p672
      $region60: #{custom-call.58} parent=5 // pred_check_branch
        %675 = sbr.rel (%p673) target = $region62
      $region61: #{custom-call.58} parent=5 // pred_region
        %s676 = ssub.s32 %s3, 2
        %s677 = sand.u32 %s9, 1
        %s678 = sand.u32 %s9, 1
        %s679 = smul.addr %s678, 32
        %s680 = scalar_lea.vmem [#allocation1], %s679
      $region62: #{custom-call.58} parent=5 // pred_fallthru
        _
    $region6: #{custom-call.58} parent=1 // loop_footer
      %s7 = sadd.s32 1, %s3
    $region7: #{custom-call.58} parent=1 // loop_footer_branch
      %2 = sbr.rel target = $region3
    $region8: #{custom-call.58} parent=1 // loop_exit
      _

// kernel: custom-call.50
$region0: #{custom-call.50}
  %s0 = inlined_call_operand.hbm [shape: pred[2], index: 0, kind: output, shape index: {}]

// kernel: custom-call.55
$region0: #{custom-call.55}
  %s0 = inlined_call_operand.vmem [shape: f32[2,32,32], index: 0, kind: input, shape index: {}]
  %s1 = inlined_call_operand.vmem [shape: f32[2,32,32], index: 1, kind: output, shape index: {}]
  $region1: #{custom-call.55} parent=0
    #allocation0 [shape = 'u8[32768]{0}', space=vmem, size = 0x8000, scoped, tag = 'operand span for operand 0']
    #allocation1 [shape = 'u8[32768]{0}', space=vmem, size = 0x8000, scoped, tag = 'operand span for operand 1']
    loop: start=0, step=1, limit=4
    $region2: #{custom-call.55} parent=1 // loop_pre_header
      _
    $region3: #{custom-call.55} parent=1 // loop_header
      %s3 = sphi 0, %s7
      %p4 = scmp.ge.s32.totalorder %s3, 4
      %s10 = sphi 0, %s29
      %s11 = sphi 0, %s25
      %s12 = sphi 0, %s21
      %s13 = sphi 0, %s10
      %s14 = sphi 0, %s11
      %s15 = sphi 0, %s12
      %s16 = sphi 0, %s13
      %s17 = sphi 0, %s14
      %s18 = sphi 0, %s15
    $region4: #{custom-call.55} parent=1 // loop_header_branch
      %6 = sbr.rel (%p4) target = $region8
    $region5: #{custom-call.55} parent=1 // loop_body
      %s8 = ssub.s32 %s3, 1
      %s9 = ssub.s32 %s3, 2
      %s19 = sadd.s32 1, %s12
      %p20 = scmp.ge.s32.totalorder %s19, 1
      %s21 = scalar_select %p20, 0, %s19
      %s22 = sadd.s32 1, %s11
      %s23 = scalar_select %p20, %s22, %s11
      %p24 = scmp.ge.s32.totalorder %s23, 1
      %s25 = scalar_select %p24, 0, %s23
      %s26 = sadd.s32 1, %s10
      %s27 = scalar_select %p24, %s26, %s10
      %p28 = scmp.ge.s32.totalorder %s27, 2
      %s29 = scalar_select %p28, 0, %s27
      %p30 = scmp.le.s32.totalorder 1, %s3
      %p31 = scmp.lt.s32.totalorder %s3, 3
      %p32 = pnand %p30, %p31
      %p33 = pneg %p32
      // Predicated region
      $region9: #{custom-call.55} parent=5 // pred_check
        _
      $region10: #{custom-call.55} parent=5 // pred_check_branch
        %35 = sbr.rel (%p32) target = $region12
      $region11: #{custom-call.55} parent=5 // pred_region
        %s36 = ssub.s32 %s3, 1
      $region12: #{custom-call.55} parent=5 // pred_fallthru
        _
      %p37 = scmp.lt.s32.totalorder %s3, 2
      // Predicated region
      $region13: #{custom-call.55} parent=5 // pred_check
        %p38 = pneg %p37
      $region14: #{custom-call.55} parent=5 // pred_check_branch
        %40 = sbr.rel (%p38) target = $region16
      $region15: #{custom-call.55} parent=5 // pred_region
        %s41 = sand.u32 %s3, 1
        %s42 = sand.u32 %s3, 1
        %s43 = smul.addr %s42, 32
        %s44 = scalar_lea.vmem [#allocation0], %s43
        %s45 = sadd.s32 %s12, %s11
        %s46 = smul.addr %s10, 4
        %s47 = sadd.s32 %s45, %s46
        %s48 = smul.addr %s47, 8
        %s49 = scalar_lea.vmem %s0, %s48
        // Predicated region
        $region17: #{custom-call.55} parent=15 // pred_check
          _
        $region18: #{custom-call.55} parent=15 // pred_check_branch
          %51 = sbr.rel (0) target = $region20
        $region19: #{custom-call.55} parent=15 // pred_region
          // Predicated region
          $region21: #{custom-call.55} parent=19 // pred_check
            _
          $region22: #{custom-call.55} parent=19 // pred_check_branch
            %53 = sbr.rel (0) target = $region24
          $region23: #{custom-call.55} parent=19 // pred_region
            // Predicated region
            $region36: #{custom-call.55} parent=23 // pred_check
              _
            $region37: #{custom-call.55} parent=23 // pred_check_branch
              %74 = sbr.rel (0) target = $region39
            $region38: #{custom-call.55} parent=23 // pred_region
              loop: start=0, step=1, limit=1
              $region40: #{custom-call.55} parent=38 // loop_pre_header
                _
              $region41: #{custom-call.55} parent=38 // loop_header
                %s76 = sphi 0, %s80
                %p77 = scmp.ge.s32.totalorder %s76, 1
                %s81 = sphi %s49, %s49
                %s82 = sphi %s44, %s44
              $region42: #{custom-call.55} parent=38 // loop_header_branch
                %79 = sbr.rel (%p77) target = $region46
              $region43: #{custom-call.55} parent=38 // loop_body
                %v83 = vld [vmem:[%s81] sm:$0xff]
                %84 = vst [vmem:[%s82] sm:$0xff] %v83
                %v85 = vld [vmem:[%s81 + $0x8] sm:$0xff]
                %86 = vst [vmem:[%s82 + $0x8] sm:$0xff] %v85
                %v87 = vld [vmem:[%s81 + $0x10] sm:$0xff]
                %88 = vst [vmem:[%s82 + $0x10] sm:$0xff] %v87
                %v89 = vld [vmem:[%s81 + $0x18] sm:$0xff]
                %90 = vst [vmem:[%s82 + $0x18] sm:$0xff] %v89
              $region44: #{custom-call.55} parent=38 // loop_footer
                %s80 = sadd.s32 1, %s76
              $region45: #{custom-call.55} parent=38 // loop_footer_branch
                %75 = sbr.rel target = $region41
              $region46: #{custom-call.55} parent=38 // loop_exit
                _
            $region39: #{custom-call.55} parent=23 // pred_fallthru
              _
            // Predicated region
            $region47: #{custom-call.55} parent=23 // pred_check
              _
            $region48: #{custom-call.55} parent=23 // pred_check_branch
              %92 = sbr.rel target = $region50
            $region49: #{custom-call.55} parent=23 // pred_region
              _
            $region50: #{custom-call.55} parent=23 // pred_fallthru
              _
          $region24: #{custom-call.55} parent=19 // pred_fallthru
            _
          // Predicated region
          $region25: #{custom-call.55} parent=19 // pred_check
            _
          $region26: #{custom-call.55} parent=19 // pred_check_branch
            %55 = sbr.rel target = $region28
          $region27: #{custom-call.55} parent=19 // pred_region
            loop: start=0, step=1, limit=1
            $region29: #{custom-call.55} parent=27 // loop_pre_header
              _
            $region30: #{custom-call.55} parent=27 // loop_header
              %s58 = sphi 0, %s62
              %p59 = scmp.ge.s32.totalorder %s58, 1
              %s63 = sphi %s49, %s49
              %s64 = sphi %s44, %s44
            $region31: #{custom-call.55} parent=27 // loop_header_branch
              %61 = sbr.rel (%p59) target = $region35
            $region32: #{custom-call.55} parent=27 // loop_body
              %v65 = vld [vmem:[%s63] sm:$0xff]
              %66 = vst [vmem:[%s64] sm:$0xff] %v65
              %v67 = vld [vmem:[%s63 + $0x8] sm:$0xff]
              %68 = vst [vmem:[%s64 + $0x8] sm:$0xff] %v67
              %v69 = vld [vmem:[%s63 + $0x10] sm:$0xff]
              %70 = vst [vmem:[%s64 + $0x10] sm:$0xff] %v69
              %v71 = vld [vmem:[%s63 + $0x18] sm:$0xff]
              %72 = vst [vmem:[%s64 + $0x18] sm:$0xff] %v71
            $region33: #{custom-call.55} parent=27 // loop_footer
              %s62 = sadd.s32 1, %s58
            $region34: #{custom-call.55} parent=27 // loop_footer_branch
              %57 = sbr.rel target = $region30
            $region35: #{custom-call.55} parent=27 // loop_exit
              _
          $region28: #{custom-call.55} parent=19 // pred_fallthru
            _
        $region20: #{custom-call.55} parent=15 // pred_fallthru
          _
        %93 = vnop
      $region16: #{custom-call.55} parent=5 // pred_fallthru
        _
      %p94 = scmp.le.s32.totalorder 1, %s3
      %p95 = scmp.lt.s32.totalorder %s3, 3
      %p96 = pnand %p94, %p95
      %p97 = pneg %p96
      // Predicated region
      $region51: #{custom-call.55} parent=5 // pred_check
        _
      $region52: #{custom-call.55} parent=5 // pred_check_branch
        %99 = sbr.rel (%p96) target = $region54
      $region53: #{custom-call.55} parent=5 // pred_region
        %s100 = ssub.s32 %s3, 1
        %s101 = sand.u32 %s8, 1
        %s102 = sand.u32 %s8, 1
        %s103 = smul.addr %s102, 32
        %s104 = scalar_lea.vmem [#allocation0], %s103
        %s105 = sand.u32 %s8, 1
        %s106 = sand.u32 %s8, 1
        %s107 = smul.addr %s106, 32
        %s108 = scalar_lea.vmem [#allocation0], %s107
        %s109 = sand.u32 %s8, 1
        %s110 = sand.u32 %s8, 1
        %s111 = smul.addr %s110, 32
        %s112 = scalar_lea.vmem [#allocation1], %s111
        %113 = vst [vmem:[%s112] sm:$0xff] 0.0
        %s114 = scalar_lea.vmem %s112, 8 [#allocation1]
        %115 = vst [vmem:[%s114] sm:$0xff] 0.0
        %s116 = scalar_lea.vmem %s112, 16 [#allocation1]
        %117 = vst [vmem:[%s116] sm:$0xff] 0.0
        %s118 = scalar_lea.vmem %s112, 24 [#allocation1]
        %119 = vst [vmem:[%s118] sm:$0xff] 0.0
        %vm120 = vcmask 7168
        %v121 = vld [vmem:[%s112] ss:$0 sm:$0xff]
        %v122 = vld [vmem:[%s104] ss:$0 sm:$0xff]
        %v123 = vmul.f32 %v121, %v121
        %124 = vadd.xlane.f32.xlu0 %v123
        %v125 = vpop.xlane.xlu0 %124
        %v126 = vsub.f32 %v122, %v125
        %v127 = vrsqrt.pop %v126
        %v128 = vld [vmem:[%s104] sm:$0xff]
        %v129 = vld [vmem:[%s112] sm:$0xff]
        %v130 = vmul.f32 %v129, %v121
        %131 = vadd.xlane.f32.xlu0 %v130
        %v132 = vpop.xlane.xlu0 %131
        %v133 = vsub.f32 %v128, %v132
        %v134 = vmul.f32 %v133, %v127
        %v135 = vsel %vm120, %v134, 0.0
        %v136 = vadd.f32 %v129, %v135
        %137 = vst [vmem:[%s112] sm:$0xff] %v136
        %s138 = scalar_lea.vmem %s104, 8 [#allocation0]
        %v139 = vld [vmem:[%s138] sm:$0xff]
        %s140 = scalar_lea.vmem %s112, 8 [#allocation1]
        %v141 = vld [vmem:[%s140] sm:$0xff]
        %v142 = vmul.f32 %v141, %v121
        %143 = vadd.xlane.f32.xlu0 %v142
        %v144 = vpop.xlane.xlu0 %143
        %v145 = vsub.f32 %v139, %v144
        %v146 = vmul.f32 %v145, %v127
        %v147 = vsel %vm120, %v146, 0.0
        %v148 = vadd.f32 %v141, %v147
        %s149 = scalar_lea.vmem %s112, 8 [#allocation1]
        %150 = vst [vmem:[%s149] sm:$0xff] %v148
        %s151 = scalar_lea.vmem %s104, 16 [#allocation0]
        %v152 = vld [vmem:[%s151] sm:$0xff]
        %s153 = scalar_lea.vmem %s112, 16 [#allocation1]
        %v154 = vld [vmem:[%s153] sm:$0xff]
        %v155 = vmul.f32 %v154, %v121
        %156 = vadd.xlane.f32.xlu0 %v155
        %v157 = vpop.xlane.xlu0 %156
        %v158 = vsub.f32 %v152, %v157
        %v159 = vmul.f32 %v158, %v127
        %v160 = vsel %vm120, %v159, 0.0
        %v161 = vadd.f32 %v154, %v160
        %s162 = scalar_lea.vmem %s112, 16 [#allocation1]
        %163 = vst [vmem:[%s162] sm:$0xff] %v161
        %s164 = scalar_lea.vmem %s104, 24 [#allocation0]
        %v165 = vld [vmem:[%s164] sm:$0xff]
        %s166 = scalar_lea.vmem %s112, 24 [#allocation1]
        %v167 = vld [vmem:[%s166] sm:$0xff]
        %v168 = vmul.f32 %v167, %v121
        %169 = vadd.xlane.f32.xlu0 %v168
        %v170 = vpop.xlane.xlu0 %169
        %v171 = vsub.f32 %v165, %v170
        %v172 = vmul.f32 %v171, %v127
        %v173 = vsel %vm120, %v172, 0.0
        %v174 = vadd.f32 %v167, %v173
        %s175 = scalar_lea.vmem %s112, 24 [#allocation1]
        %176 = vst [vmem:[%s175] sm:$0xff] %v174
        %vm177 = vcmask 15368
        %s178 = scalar_lea.vmem %s112, 1 [#allocation1]
        %v179 = vld [vmem:[%s178] ss:$0 sm:$0xff]
        %s180 = scalar_lea.vmem %s104, 1 [#allocation0]
        %v181 = vld [vmem:[%s180] ss:$0 sm:$0xff]
        %v182 = vmul.f32 %v179, %v179
        %183 = vadd.xlane.f32.xlu0 %v182
        %v184 = vpop.xlane.xlu0 %183
        %v185 = vsub.f32 %v181, %v184
        %v186 = vrsqrt.pop %v185
        %v187 = vld [vmem:[%s104] sm:$0xff]
        %v188 = vld [vmem:[%s112] sm:$0xff]
        %v189 = vmul.f32 %v188, %v179
        %190 = vadd.xlane.f32.xlu0 %v189
        %v191 = vpop.xlane.xlu0 %190
        %v192 = vsub.f32 %v187, %v191
        %v193 = vmul.f32 %v192, %v186
        %vm194 = vcmask 1047553
        %vm195 = vmand %vm177, %vm194
        %v196 = vsel %vm195, %v193, 0.0
        %v197 = vadd.f32 %v188, %v196
        %198 = vst [vmem:[%s112] sm:$0xff] %v197
        %s199 = scalar_lea.vmem %s104, 8 [#allocation0]
        %v200 = vld [vmem:[%s199] sm:$0xff]
        %s201 = scalar_lea.vmem %s112, 8 [#allocation1]
        %v202 = vld [vmem:[%s201] sm:$0xff]
        %v203 = vmul.f32 %v202, %v179
        %204 = vadd.xlane.f32.xlu0 %v203
        %v205 = vpop.xlane.xlu0 %204
        %v206 = vsub.f32 %v200, %v205
        %v207 = vmul.f32 %v206, %v186
        %v208 = vsel %vm177, %v207, 0.0
        %v209 = vadd.f32 %v202, %v208
        %s210 = scalar_lea.vmem %s112, 8 [#allocation1]
        %211 = vst [vmem:[%s210] sm:$0xff] %v209
        %s212 = scalar_lea.vmem %s104, 16 [#allocation0]
        %v213 = vld [vmem:[%s212] sm:$0xff]
        %s214 = scalar_lea.vmem %s112, 16 [#allocation1]
        %v215 = vld [vmem:[%s214] sm:$0xff]
        %v216 = vmul.f32 %v215, %v179
        %217 = vadd.xlane.f32.xlu0 %v216
        %v218 = vpop.xlane.xlu0 %217
        %v219 = vsub.f32 %v213, %v218
        %v220 = vmul.f32 %v219, %v186
        %v221 = vsel %vm177, %v220, 0.0
        %v222 = vadd.f32 %v215, %v221
        %s223 = scalar_lea.vmem %s112, 16 [#allocation1]
        %224 = vst [vmem:[%s223] sm:$0xff] %v222
        %s225 = scalar_lea.vmem %s104, 24 [#allocation0]
        %v226 = vld [vmem:[%s225] sm:$0xff]
        %s227 = scalar_lea.vmem %s112, 24 [#allocation1]
        %v228 = vld [vmem:[%s227] sm:$0xff]
        %v229 = vmul.f32 %v228, %v179
        %230 = vadd.xlane.f32.xlu0 %v229
        %v231 = vpop.xlane.xlu0 %230
        %v232 = vsub.f32 %v226, %v231
        %v233 = vmul.f32 %v232, %v186
        %v234 = vsel %vm177, %v233, 0.0
        %v235 = vadd.f32 %v228, %v234
        %s236 = scalar_lea.vmem %s112, 24 [#allocation1]
        %237 = vst [vmem:[%s236] sm:$0xff] %v235
        %vm238 = vcmask 23568
        %s239 = scalar_lea.vmem %s112, 2 [#allocation1]
        %v240 = vld [vmem:[%s239] ss:$0 sm:$0xff]
        %s241 = scalar_lea.vmem %s104, 2 [#allocation0]
        %v242 = vld [vmem:[%s241] ss:$0 sm:$0xff]
        %v243 = vmul.f32 %v240, %v240
        %244 = vadd.xlane.f32.xlu0 %v243
        %v245 = vpop.xlane.xlu0 %244
        %v246 = vsub.f32 %v242, %v245
        %v247 = vrsqrt.pop %v246
        %v248 = vld [vmem:[%s104] sm:$0xff]
        %v249 = vld [vmem:[%s112] sm:$0xff]
        %v250 = vmul.f32 %v249, %v240
        %251 = vadd.xlane.f32.xlu0 %v250
        %v252 = vpop.xlane.xlu0 %251
        %v253 = vsub.f32 %v248, %v252
        %v254 = vmul.f32 %v253, %v247
        %vm255 = vcmask 1047554
        %vm256 = vmand %vm238, %vm255
        %v257 = vsel %vm256, %v254, 0.0
        %v258 = vadd.f32 %v249, %v257
        %259 = vst [vmem:[%s112] sm:$0xff] %v258
        %s260 = scalar_lea.vmem %s104, 8 [#allocation0]
        %v261 = vld [vmem:[%s260] sm:$0xff]
        %s262 = scalar_lea.vmem %s112, 8 [#allocation1]
        %v263 = vld [vmem:[%s262] sm:$0xff]
        %v264 = vmul.f32 %v263, %v240
        %265 = vadd.xlane.f32.xlu0 %v264
        %v266 = vpop.xlane.xlu0 %265
        %v267 = vsub.f32 %v261, %v266
        %v268 = vmul.f32 %v267, %v247
        %v269 = vsel %vm238, %v268, 0.0
        %v270 = vadd.f32 %v263, %v269
        %s271 = scalar_lea.vmem %s112, 8 [#allocation1]
        %272 = vst [vmem:[%s271] sm:$0xff] %v270
        %s273 = scalar_lea.vmem %s104, 16 [#allocation0]
        %v274 = vld [vmem:[%s273] sm:$0xff]
        %s275 = scalar_lea.vmem %s112, 16 [#allocation1]
        %v276 = vld [vmem:[%s275] sm:$0xff]
        %v277 = vmul.f32 %v276, %v240
        %278 = vadd.xlane.f32.xlu0 %v277
        %v279 = vpop.xlane.xlu0 %278
        %v280 = vsub.f32 %v274, %v279
        %v281 = vmul.f32 %v280, %v247
        %v282 = vsel %vm238, %v281, 0.0
        %v283 = vadd.f32 %v276, %v282
        %s284 = scalar_lea.vmem %s112, 16 [#allocation1]
        %285 = vst [vmem:[%s284] sm:$0xff] %v283
        %s286 = scalar_lea.vmem %s104, 24 [#allocation0]
        %v287 = vld [vmem:[%s286] sm:$0xff]
        %s288 = scalar_lea.vmem %s112, 24 [#allocation1]
        %v289 = vld [vmem:[%s288] sm:$0xff]
        %v290 = vmul.f32 %v289, %v240
        %291 = vadd.xlane.f32.xlu0 %v290
        %v292 = vpop.xlane.xlu0 %291
        %v293 = vsub.f32 %v287, %v292
        %v294 = vmul.f32 %v293, %v247
        %v295 = vsel %vm238, %v294, 0.0
        %v296 = vadd.f32 %v289, %v295
        %s297 = scalar_lea.vmem %s112, 24 [#allocation1]
        %298 = vst [vmem:[%s297] sm:$0xff] %v296
        %vm299 = vcmask 31768
        %s300 = scalar_lea.vmem %s112, 3 [#allocation1]
        %v301 = vld [vmem:[%s300] ss:$0 sm:$0xff]
        %s302 = scalar_lea.vmem %s104, 3 [#allocation0]
        %v303 = vld [vmem:[%s302] ss:$0 sm:$0xff]
        %v304 = vmul.f32 %v301, %v301
        %305 = vadd.xlane.f32.xlu0 %v304
        %v306 = vpop.xlane.xlu0 %305
        %v307 = vsub.f32 %v303, %v306
        %v308 = vrsqrt.pop %v307
        %v309 = vld [vmem:[%s104] sm:$0xff]
        %v310 = vld [vmem:[%s112] sm:$0xff]
        %v311 = vmul.f32 %v310, %v301
        %312 = vadd.xlane.f32.xlu0 %v311
        %v313 = vpop.xlane.xlu0 %312
        %v314 = vsub.f32 %v309, %v313
        %v315 = vmul.f32 %v314, %v308
        %vm316 = vcmask 1047555
        %vm317 = vmand %vm299, %vm316
        %v318 = vsel %vm317, %v315, 0.0
        %v319 = vadd.f32 %v310, %v318
        %320 = vst [vmem:[%s112] sm:$0xff] %v319
        %s321 = scalar_lea.vmem %s104, 8 [#allocation0]
        %v322 = vld [vmem:[%s321] sm:$0xff]
        %s323 = scalar_lea.vmem %s112, 8 [#allocation1]
        %v324 = vld [vmem:[%s323] sm:$0xff]
        %v325 = vmul.f32 %v324, %v301
        %326 = vadd.xlane.f32.xlu0 %v325
        %v327 = vpop.xlane.xlu0 %326
        %v328 = vsub.f32 %v322, %v327
        %v329 = vmul.f32 %v328, %v308
        %v330 = vsel %vm299, %v329, 0.0
        %v331 = vadd.f32 %v324, %v330
        %s332 = scalar_lea.vmem %s112, 8 [#allocation1]
        %333 = vst [vmem:[%s332] sm:$0xff] %v331
        %s334 = scalar_lea.vmem %s104, 16 [#allocation0]
        %v335 = vld [vmem:[%s334] sm:$0xff]
        %s336 = scalar_lea.vmem %s112, 16 [#allocation1]
        %v337 = vld [vmem:[%s336] sm:$0xff]
        %v338 = vmul.f32 %v337, %v301
        %339 = vadd.xlane.f32.xlu0 %v338
        %v340 = vpop.xlane.xlu0 %339
        %v341 = vsub.f32 %v335, %v340
        %v342 = vmul.f32 %v341, %v308
        %v343 = vsel %vm299, %v342, 0.0
        %v344 = vadd.f32 %v337, %v343
        %s345 = scalar_lea.vmem %s112, 16 [#allocation1]
        %346 = vst [vmem:[%s345] sm:$0xff] %v344
        %s347 = scalar_lea.vmem %s104, 24 [#allocation0]
        %v348 = vld [vmem:[%s347] sm:$0xff]
        %s349 = scalar_lea.vmem %s112, 24 [#allocation1]
        %v350 = vld [vmem:[%s349] sm:$0xff]
        %v351 = vmul.f32 %v350, %v301
        %352 = vadd.xlane.f32.xlu0 %v351
        %v353 = vpop.xlane.xlu0 %352
        %v354 = vsub.f32 %v348, %v353
        %v355 = vmul.f32 %v354, %v308
        %v356 = vsel %vm299, %v355, 0.0
        %v357 = vadd.f32 %v350, %v356
        %s358 = scalar_lea.vmem %s112, 24 [#allocation1]
        %359 = vst [vmem:[%s358] sm:$0xff] %v357
        %vm360 = vcmask 39968
        %s361 = scalar_lea.vmem %s112, 4 [#allocation1]
        %v362 = vld [vmem:[%s361] ss:$0 sm:$0xff]
        %s363 = scalar_lea.vmem %s104, 4 [#allocation0]
        %v364 = vld [vmem:[%s363] ss:$0 sm:$0xff]
        %v365 = vmul.f32 %v362, %v362
        %366 = vadd.xlane.f32.xlu0 %v365
        %v367 = vpop.xlane.xlu0 %366
        %v368 = vsub.f32 %v364, %v367
        %v369 = vrsqrt.pop %v368
        %v370 = vld [vmem:[%s104] sm:$0xff]
        %v371 = vld [vmem:[%s112] sm:$0xff]
        %v372 = vmul.f32 %v371, %v362
        %373 = vadd.xlane.f32.xlu0 %v372
        %v374 = vpop.xlane.xlu0 %373
        %v375 = vsub.f32 %v370, %v374
        %v376 = vmul.f32 %v375, %v369
        %vm377 = vcmask 1047556
        %vm378 = vmand %vm360, %vm377
        %v379 = vsel %vm378, %v376, 0.0
        %v380 = vadd.f32 %v371, %v379
        %381 = vst [vmem:[%s112] sm:$0xff] %v380
        %s382 = scalar_lea.vmem %s104, 8 [#allocation0]
        %v383 = vld [vmem:[%s382] sm:$0xff]
        %s384 = scalar_lea.vmem %s112, 8 [#allocation1]
        %v385 = vld [vmem:[%s384] sm:$0xff]
        %v386 = vmul.f32 %v385, %v362
        %387 = vadd.xlane.f32.xlu0 %v386
        %v388 = vpop.xlane.xlu0 %387
        %v389 = vsub.f32 %v383, %v388
        %v390 = vmul.f32 %v389, %v369
        %v391 = vsel %vm360, %v390, 0.0
        %v392 = vadd.f32 %v385, %v391
        %s393 = scalar_lea.vmem %s112, 8 [#allocation1]
        %394 = vst [vmem:[%s393] sm:$0xff] %v392
        %s395 = scalar_lea.vmem %s104, 16 [#allocation0]
        %v396 = vld [vmem:[%s395] sm:$0xff]
        %s397 = scalar_lea.vmem %s112, 16 [#allocation1]
        %v398 = vld [vmem:[%s397] sm:$0xff]
        %v399 = vmul.f32 %v398, %v362
        %400 = vadd.xlane.f32.xlu0 %v399
        %v401 = vpop.xlane.xlu0 %400
        %v402 = vsub.f32 %v396, %v401
        %v403 = vmul.f32 %v402, %v369
        %v404 = vsel %vm360, %v403, 0.0
        %v405 = vadd.f32 %v398, %v404
        %s406 = scalar_lea.vmem %s112, 16 [#allocation1]
        %407 = vst [vmem:[%s406] sm:$0xff] %v405
        %s408 = scalar_lea.vmem %s104, 24 [#allocation0]
        %v409 = vld [vmem:[%s408] sm:$0xff]
        %s410 = scalar_lea.vmem %s112, 24 [#allocation1]
        %v411 = vld [vmem:[%s410] sm:$0xff]
        %v412 = vmul.f32 %v411, %v362
        %413 = vadd.xlane.f32.xlu0 %v412
        %v414 = vpop.xlane.xlu0 %413
        %v415 = vsub.f32 %v409, %v414
        %v416 = vmul.f32 %v415, %v369
        %v417 = vsel %vm360, %v416, 0.0
        %v418 = vadd.f32 %v411, %v417
        %s419 = scalar_lea.vmem %s112, 24 [#allocation1]
        %420 = vst [vmem:[%s419] sm:$0xff] %v418
        %vm421 = vcmask 48168
        %s422 = scalar_lea.vmem %s112, 5 [#allocation1]
        %v423 = vld [vmem:[%s422] ss:$0 sm:$0xff]
        %s424 = scalar_lea.vmem %s104, 5 [#allocation0]
        %v425 = vld [vmem:[%s424] ss:$0 sm:$0xff]
        %v426 = vmul.f32 %v423, %v423
        %427 = vadd.xlane.f32.xlu0 %v426
        %v428 = vpop.xlane.xlu0 %427
        %v429 = vsub.f32 %v425, %v428
        %v430 = vrsqrt.pop %v429
        %v431 = vld [vmem:[%s104] sm:$0xff]
        %v432 = vld [vmem:[%s112] sm:$0xff]
        %v433 = vmul.f32 %v432, %v423
        %434 = vadd.xlane.f32.xlu0 %v433
        %v435 = vpop.xlane.xlu0 %434
        %v436 = vsub.f32 %v431, %v435
        %v437 = vmul.f32 %v436, %v430
        %vm438 = vcmask 1047557
        %vm439 = vmand %vm421, %vm438
        %v440 = vsel %vm439, %v437, 0.0
        %v441 = vadd.f32 %v432, %v440
        %442 = vst [vmem:[%s112] sm:$0xff] %v441
        %s443 = scalar_lea.vmem %s104, 8 [#allocation0]
        %v444 = vld [vmem:[%s443] sm:$0xff]
        %s445 = scalar_lea.vmem %s112, 8 [#allocation1]
        %v446 = vld [vmem:[%s445] sm:$0xff]
        %v447 = vmul.f32 %v446, %v423
        %448 = vadd.xlane.f32.xlu0 %v447
        %v449 = vpop.xlane.xlu0 %448
        %v450 = vsub.f32 %v444, %v449
        %v451 = vmul.f32 %v450, %v430
        %v452 = vsel %vm421, %v451, 0.0
        %v453 = vadd.f32 %v446, %v452
        %s454 = scalar_lea.vmem %s112, 8 [#allocation1]
        %455 = vst [vmem:[%s454] sm:$0xff] %v453
        %s456 = scalar_lea.vmem %s104, 16 [#allocation0]
        %v457 = vld [vmem:[%s456] sm:$0xff]
        %s458 = scalar_lea.vmem %s112, 16 [#allocation1]
        %v459 = vld [vmem:[%s458] sm:$0xff]
        %v460 = vmul.f32 %v459, %v423
        %461 = vadd.xlane.f32.xlu0 %v460
        %v462 = vpop.xlane.xlu0 %461
        %v463 = vsub.f32 %v457, %v462
        %v464 = vmul.f32 %v463, %v430
        %v465 = vsel %vm421, %v464, 0.0
        %v466 = vadd.f32 %v459, %v465
        %s467 = scalar_lea.vmem %s112, 16 [#allocation1]
        %468 = vst [vmem:[%s467] sm:$0xff] %v466
        %s469 = scalar_lea.vmem %s104, 24 [#allocation0]
        %v470 = vld [vmem:[%s469] sm:$0xff]
        %s471 = scalar_lea.vmem %s112, 24 [#allocation1]
        %v472 = vld [vmem:[%s471] sm:$0xff]
        %v473 = vmul.f32 %v472, %v423
        %474 = vadd.xlane.f32.xlu0 %v473
        %v475 = vpop.xlane.xlu0 %474
        %v476 = vsub.f32 %v470, %v475
        %v477 = vmul.f32 %v476, %v430
        %v478 = vsel %vm421, %v477, 0.0
        %v479 = vadd.f32 %v472, %v478
        %s480 = scalar_lea.vmem %s112, 24 [#allocation1]
        %481 = vst [vmem:[%s480] sm:$0xff] %v479
        %vm482 = vcmask 56368
        %s483 = scalar_lea.vmem %s112, 6 [#allocation1]
        %v484 = vld [vmem:[%s483] ss:$0 sm:$0xff]
        %s485 = scalar_lea.vmem %s104, 6 [#allocation0]
        %v486 = vld [vmem:[%s485] ss:$0 sm:$0xff]
        %v487 = vmul.f32 %v484, %v484
        %488 = vadd.xlane.f32.xlu0 %v487
        %v489 = vpop.xlane.xlu0 %488
        %v490 = vsub.f32 %v486, %v489
        %v491 = vrsqrt.pop %v490
        %v492 = vld [vmem:[%s104] sm:$0xff]
        %v493 = vld [vmem:[%s112] sm:$0xff]
        %v494 = vmul.f32 %v493, %v484
        %495 = vadd.xlane.f32.xlu0 %v494
        %v496 = vpop.xlane.xlu0 %495
        %v497 = vsub.f32 %v492, %v496
        %v498 = vmul.f32 %v497, %v491
        %vm499 = vcmask 1047558
        %vm500 = vmand %vm482, %vm499
        %v501 = vsel %vm500, %v498, 0.0
        %v502 = vadd.f32 %v493, %v501
        %503 = vst [vmem:[%s112] sm:$0xff] %v502
        %s504 = scalar_lea.vmem %s104, 8 [#allocation0]
        %v505 = vld [vmem:[%s504] sm:$0xff]
        %s506 = scalar_lea.vmem %s112, 8 [#allocation1]
        %v507 = vld [vmem:[%s506] sm:$0xff]
        %v508 = vmul.f32 %v507, %v484
        %509 = vadd.xlane.f32.xlu0 %v508
        %v510 = vpop.xlane.xlu0 %509
        %v511 = vsub.f32 %v505, %v510
        %v512 = vmul.f32 %v511, %v491
        %v513 = vsel %vm482, %v512, 0.0
        %v514 = vadd.f32 %v507, %v513
        %s515 = scalar_lea.vmem %s112, 8 [#allocation1]
        %516 = vst [vmem:[%s515] sm:$0xff] %v514
        %s517 = scalar_lea.vmem %s104, 16 [#allocation0]
        %v518 = vld [vmem:[%s517] sm:$0xff]
        %s519 = scalar_lea.vmem %s112, 16 [#allocation1]
        %v520 = vld [vmem:[%s519] sm:$0xff]
        %v521 = vmul.f32 %v520, %v484
        %522 = vadd.xlane.f32.xlu0 %v521
        %v523 = vpop.xlane.xlu0 %522
        %v524 = vsub.f32 %v518, %v523
        %v525 = vmul.f32 %v524, %v491
        %v526 = vsel %vm482, %v525, 0.0
        %v527 = vadd.f32 %v520, %v526
        %s528 = scalar_lea.vmem %s112, 16 [#allocation1]
        %529 = vst [vmem:[%s528] sm:$0xff] %v527
        %s530 = scalar_lea.vmem %s104, 24 [#allocation0]
        %v531 = vld [vmem:[%s530] sm:$0xff]
        %s532 = scalar_lea.vmem %s112, 24 [#allocation1]
        %v533 = vld [vmem:[%s532] sm:$0xff]
        %v534 = vmul.f32 %v533, %v484
        %535 = vadd.xlane.f32.xlu0 %v534
        %v536 = vpop.xlane.xlu0 %535
        %v537 = vsub.f32 %v531, %v536
        %v538 = vmul.f32 %v537, %v491
        %v539 = vsel %vm482, %v538, 0.0
        %v540 = vadd.f32 %v533, %v539
        %s541 = scalar_lea.vmem %s112, 24 [#allocation1]
        %542 = vst [vmem:[%s541] sm:$0xff] %v540
        %vm543 = vcmask 64568
        %s544 = scalar_lea.vmem %s112, 7 [#allocation1]
        %v545 = vld [vmem:[%s544] ss:$0 sm:$0xff]
        %s546 = scalar_lea.vmem %s104, 7 [#allocation0]
        %v547 = vld [vmem:[%s546] ss:$0 sm:$0xff]
        %v548 = vmul.f32 %v545, %v545
        %549 = vadd.xlane.f32.xlu0 %v548
        %v550 = vpop.xlane.xlu0 %549
        %v551 = vsub.f32 %v547, %v550
        %v552 = vrsqrt.pop %v551
        %v553 = vld [vmem:[%s104] sm:$0xff]
        %v554 = vld [vmem:[%s112] sm:$0xff]
        %v555 = vmul.f32 %v554, %v545
        %556 = vadd.xlane.f32.xlu0 %v555
        %v557 = vpop.xlane.xlu0 %556
        %v558 = vsub.f32 %v553, %v557
        %v559 = vmul.f32 %v558, %v552
        %vm560 = vcmask 1047559
        %vm561 = vmand %vm543, %vm560
        %v562 = vsel %vm561, %v559, 0.0
        %v563 = vadd.f32 %v554, %v562
        %564 = vst [vmem:[%s112] sm:$0xff] %v563
        %s565 = scalar_lea.vmem %s104, 8 [#allocation0]
        %v566 = vld [vmem:[%s565] sm:$0xff]
        %s567 = scalar_lea.vmem %s112, 8 [#allocation1]
        %v568 = vld [vmem:[%s567] sm:$0xff]
        %v569 = vmul.f32 %v568, %v545
        %570 = vadd.xlane.f32.xlu0 %v569
        %v571 = vpop.xlane.xlu0 %570
        %v572 = vsub.f32 %v566, %v571
        %v573 = vmul.f32 %v572, %v552
        %v574 = vsel %vm543, %v573, 0.0
        %v575 = vadd.f32 %v568, %v574
        %s576 = scalar_lea.vmem %s112, 8 [#allocation1]
        %577 = vst [vmem:[%s576] sm:$0xff] %v575
        %s578 = scalar_lea.vmem %s104, 16 [#allocation0]
        %v579 = vld [vmem:[%s578] sm:$0xff]
        %s580 = scalar_lea.vmem %s112, 16 [#allocation1]
        %v581 = vld [vmem:[%s580] sm:$0xff]
        %v582 = vmul.f32 %v581, %v545
        %583 = vadd.xlane.f32.xlu0 %v582
        %v584 = vpop.xlane.xlu0 %583
        %v585 = vsub.f32 %v579, %v584
        %v586 = vmul.f32 %v585, %v552
        %v587 = vsel %vm543, %v586, 0.0
        %v588 = vadd.f32 %v581, %v587
        %s589 = scalar_lea.vmem %s112, 16 [#allocation1]
        %590 = vst [vmem:[%s589] sm:$0xff] %v588
        %s591 = scalar_lea.vmem %s104, 24 [#allocation0]
        %v592 = vld [vmem:[%s591] sm:$0xff]
        %s593 = scalar_lea.vmem %s112, 24 [#allocation1]
        %v594 = vld [vmem:[%s593] sm:$0xff]
        %v595 = vmul.f32 %v594, %v545
        %596 = vadd.xlane.f32.xlu0 %v595
        %v597 = vpop.xlane.xlu0 %596
        %v598 = vsub.f32 %v592, %v597
        %v599 = vmul.f32 %v598, %v552
        %v600 = vsel %vm543, %v599, 0.0
        %v601 = vadd.f32 %v594, %v600
        %s602 = scalar_lea.vmem %s112, 24 [#allocation1]
        %603 = vst [vmem:[%s602] sm:$0xff] %v601
        %vm604 = vcmask 72768
        %s605 = scalar_lea.vmem %s112, 8 [#allocation1]
        %v606 = vld [vmem:[%s605] ss:$0 sm:$0xff]
        %s607 = scalar_lea.vmem %s104, 8 [#allocation0]
        %v608 = vld [vmem:[%s607] ss:$0 sm:$0xff]
        %v609 = vmul.f32 %v606, %v606
        %610 = vadd.xlane.f32.xlu0 %v609
        %v611 = vpop.xlane.xlu0 %610
        %v612 = vsub.f32 %v608, %v611
        %v613 = vrsqrt.pop %v612
        %s614 = scalar_lea.vmem %s104, 8 [#allocation0]
        %v615 = vld [vmem:[%s614] sm:$0xff]
        %s616 = scalar_lea.vmem %s112, 8 [#allocation1]
        %v617 = vld [vmem:[%s616] sm:$0xff]
        %v618 = vmul.f32 %v617, %v606
        %619 = vadd.xlane.f32.xlu0 %v618
        %v620 = vpop.xlane.xlu0 %619
        %v621 = vsub.f32 %v615, %v620
        %v622 = vmul.f32 %v621, %v613
        %v623 = vsel %vm604, %v622, 0.0
        %v624 = vadd.f32 %v617, %v623
        %s625 = scalar_lea.vmem %s112, 8 [#allocation1]
        %626 = vst [vmem:[%s625] sm:$0xff] %v624
        %s627 = scalar_lea.vmem %s104, 16 [#allocation0]
        %v628 = vld [vmem:[%s627] sm:$0xff]
        %s629 = scalar_lea.vmem %s112, 16 [#allocation1]
        %v630 = vld [vmem:[%s629] sm:$0xff]
        %v631 = vmul.f32 %v630, %v606
        %632 = vadd.xlane.f32.xlu0 %v631
        %v633 = vpop.xlane.xlu0 %632
        %v634 = vsub.f32 %v628, %v633
        %v635 = vmul.f32 %v634, %v613
        %v636 = vsel %vm604, %v635, 0.0
        %v637 = vadd.f32 %v630, %v636
        %s638 = scalar_lea.vmem %s112, 16 [#allocation1]
        %639 = vst [vmem:[%s638] sm:$0xff] %v637
        %s640 = scalar_lea.vmem %s104, 24 [#allocation0]
        %v641 = vld [vmem:[%s640] sm:$0xff]
        %s642 = scalar_lea.vmem %s112, 24 [#allocation1]
        %v643 = vld [vmem:[%s642] sm:$0xff]
        %v644 = vmul.f32 %v643, %v606
        %645 = vadd.xlane.f32.xlu0 %v644
        %v646 = vpop.xlane.xlu0 %645
        %v647 = vsub.f32 %v641, %v646
        %v648 = vmul.f32 %v647, %v613
        %v649 = vsel %vm604, %v648, 0.0
        %v650 = vadd.f32 %v643, %v649
        %s651 = scalar_lea.vmem %s112, 24 [#allocation1]
        %652 = vst [vmem:[%s651] sm:$0xff] %v650
        %vm653 = vcmask 80968
        %s654 = scalar_lea.vmem %s112, 9 [#allocation1]
        %v655 = vld [vmem:[%s654] ss:$0 sm:$0xff]
        %s656 = scalar_lea.vmem %s104, 9 [#allocation0]
        %v657 = vld [vmem:[%s656] ss:$0 sm:$0xff]
        %v658 = vmul.f32 %v655, %v655
        %659 = vadd.xlane.f32.xlu0 %v658
        %v660 = vpop.xlane.xlu0 %659
        %v661 = vsub.f32 %v657, %v660
        %v662 = vrsqrt.pop %v661
        %s663 = scalar_lea.vmem %s104, 8 [#allocation0]
        %v664 = vld [vmem:[%s663] sm:$0xff]
        %s665 = scalar_lea.vmem %s112, 8 [#allocation1]
        %v666 = vld [vmem:[%s665] sm:$0xff]
        %v667 = vmul.f32 %v666, %v655
        %668 = vadd.xlane.f32.xlu0 %v667
        %v669 = vpop.xlane.xlu0 %668
        %v670 = vsub.f32 %v664, %v669
        %v671 = vmul.f32 %v670, %v662
        %vm672 = vcmask 1047553
        %vm673 = vmand %vm653, %vm672
        %v674 = vsel %vm673, %v671, 0.0
        %v675 = vadd.f32 %v666, %v674
        %s676 = scalar_lea.vmem %s112, 8 [#allocation1]
        %677 = vst [vmem:[%s676] sm:$0xff] %v675
        %s678 = scalar_lea.vmem %s104, 16 [#allocation0]
        %v679 = vld [vmem:[%s678] sm:$0xff]
        %s680 = scalar_lea.vmem %s112, 16 [#allocation1]
        %v681 = vld [vmem:[%s680] sm:$0xff]
        %v682 = vmul.f32 %v681, %v655
        %683 = vadd.xlane.f32.xlu0 %v682
        %v684 = vpop.xlane.xlu0 %683
        %v685 = vsub.f32 %v679, %v684
        %v686 = vmul.f32 %v685, %v662
        %v687 = vsel %vm653, %v686, 0.0
        %v688 = vadd.f32 %v681, %v687
        %s689 = scalar_lea.vmem %s112, 16 [#allocation1]
        %690 = vst [vmem:[%s689] sm:$0xff] %v688
        %s691 = scalar_lea.vmem %s104, 24 [#allocation0]
        %v692 = vld [vmem:[%s691] sm:$0xff]
        %s693 = scalar_lea.vmem %s112, 24 [#allocation1]
        %v694 = vld [vmem:[%s693] sm:$0xff]
        %v695 = vmul.f32 %v694, %v655
        %696 = vadd.xlane.f32.xlu0 %v695
        %v697 = vpop.xlane.xlu0 %696
        %v698 = vsub.f32 %v692, %v697
        %v699 = vmul.f32 %v698, %v662
        %v700 = vsel %vm653, %v699, 0.0
        %v701 = vadd.f32 %v694, %v700
        %s702 = scalar_lea.vmem %s112, 24 [#allocation1]
        %703 = vst [vmem:[%s702] sm:$0xff] %v701
        %vm704 = vcmask 89168
        %s705 = scalar_lea.vmem %s112, 10 [#allocation1]
        %v706 = vld [vmem:[%s705] ss:$0 sm:$0xff]
        %s707 = scalar_lea.vmem %s104, 10 [#allocation0]
        %v708 = vld [vmem:[%s707] ss:$0 sm:$0xff]
        %v709 = vmul.f32 %v706, %v706
        %710 = vadd.xlane.f32.xlu0 %v709
        %v711 = vpop.xlane.xlu0 %710
        %v712 = vsub.f32 %v708, %v711
        %v713 = vrsqrt.pop %v712
        %s714 = scalar_lea.vmem %s104, 8 [#allocation0]
        %v715 = vld [vmem:[%s714] sm:$0xff]
        %s716 = scalar_lea.vmem %s112, 8 [#allocation1]
        %v717 = vld [vmem:[%s716] sm:$0xff]
        %v718 = vmul.f32 %v717, %v706
        %719 = vadd.xlane.f32.xlu0 %v718
        %v720 = vpop.xlane.xlu0 %719
        %v721 = vsub.f32 %v715, %v720
        %v722 = vmul.f32 %v721, %v713
        %vm723 = vcmask 1047554
        %vm724 = vmand %vm704, %vm723
        %v725 = vsel %vm724, %v722, 0.0
        %v726 = vadd.f32 %v717, %v725
        %s727 = scalar_lea.vmem %s112, 8 [#allocation1]
        %728 = vst [vmem:[%s727] sm:$0xff] %v726
        %s729 = scalar_lea.vmem %s104, 16 [#allocation0]
        %v730 = vld [vmem:[%s729] sm:$0xff]
        %s731 = scalar_lea.vmem %s112, 16 [#allocation1]
        %v732 = vld [vmem:[%s731] sm:$0xff]
        %v733 = vmul.f32 %v732, %v706
        %734 = vadd.xlane.f32.xlu0 %v733
        %v735 = vpop.xlane.xlu0 %734
        %v736 = vsub.f32 %v730, %v735
        %v737 = vmul.f32 %v736, %v713
        %v738 = vsel %vm704, %v737, 0.0
        %v739 = vadd.f32 %v732, %v738
        %s740 = scalar_lea.vmem %s112, 16 [#allocation1]
        %741 = vst [vmem:[%s740] sm:$0xff] %v739
        %s742 = scalar_lea.vmem %s104, 24 [#allocation0]
        %v743 = vld [vmem:[%s742] sm:$0xff]
        %s744 = scalar_lea.vmem %s112, 24 [#allocation1]
        %v745 = vld [vmem:[%s744] sm:$0xff]
        %v746 = vmul.f32 %v745, %v706
        %747 = vadd.xlane.f32.xlu0 %v746
        %v748 = vpop.xlane.xlu0 %747
        %v749 = vsub.f32 %v743, %v748
        %v750 = vmul.f32 %v749, %v713
        %v751 = vsel %vm704, %v750, 0.0
        %v752 = vadd.f32 %v745, %v751
        %s753 = scalar_lea.vmem %s112, 24 [#allocation1]
        %754 = vst [vmem:[%s753] sm:$0xff] %v752
        %vm755 = vcmask 97368
        %s756 = scalar_lea.vmem %s112, 11 [#allocation1]
        %v757 = vld [vmem:[%s756] ss:$0 sm:$0xff]
        %s758 = scalar_lea.vmem %s104, 11 [#allocation0]
        %v759 = vld [vmem:[%s758] ss:$0 sm:$0xff]
        %v760 = vmul.f32 %v757, %v757
        %761 = vadd.xlane.f32.xlu0 %v760
        %v762 = vpop.xlane.xlu0 %761
        %v763 = vsub.f32 %v759, %v762
        %v764 = vrsqrt.pop %v763
        %s765 = scalar_lea.vmem %s104, 8 [#allocation0]
        %v766 = vld [vmem:[%s765] sm:$0xff]
        %s767 = scalar_lea.vmem %s112, 8 [#allocation1]
        %v768 = vld [vmem:[%s767] sm:$0xff]
        %v769 = vmul.f32 %v768, %v757
        %770 = vadd.xlane.f32.xlu0 %v769
        %v771 = vpop.xlane.xlu0 %770
        %v772 = vsub.f32 %v766, %v771
        %v773 = vmul.f32 %v772, %v764
        %vm774 = vcmask 1047555
        %vm775 = vmand %vm755, %vm774
        %v776 = vsel %vm775, %v773, 0.0
        %v777 = vadd.f32 %v768, %v776
        %s778 = scalar_lea.vmem %s112, 8 [#allocation1]
        %779 = vst [vmem:[%s778] sm:$0xff] %v777
        %s780 = scalar_lea.vmem %s104, 16 [#allocation0]
        %v781 = vld [vmem:[%s780] sm:$0xff]
        %s782 = scalar_lea.vmem %s112, 16 [#allocation1]
        %v783 = vld [vmem:[%s782] sm:$0xff]
        %v784 = vmul.f32 %v783, %v757
        %785 = vadd.xlane.f32.xlu0 %v784
        %v786 = vpop.xlane.xlu0 %785
        %v787 = vsub.f32 %v781, %v786
        %v788 = vmul.f32 %v787, %v764
        %v789 = vsel %vm755, %v788, 0.0
        %v790 = vadd.f32 %v783, %v789
        %s791 = scalar_lea.vmem %s112, 16 [#allocation1]
        %792 = vst [vmem:[%s791] sm:$0xff] %v790
        %s793 = scalar_lea.vmem %s104, 24 [#allocation0]
        %v794 = vld [vmem:[%s793] sm:$0xff]
        %s795 = scalar_lea.vmem %s112, 24 [#allocation1]
        %v796 = vld [vmem:[%s795] sm:$0xff]
        %v797 = vmul.f32 %v796, %v757
        %798 = vadd.xlane.f32.xlu0 %v797
        %v799 = vpop.xlane.xlu0 %798
        %v800 = vsub.f32 %v794, %v799
        %v801 = vmul.f32 %v800, %v764
        %v802 = vsel %vm755, %v801, 0.0
        %v803 = vadd.f32 %v796, %v802
        %s804 = scalar_lea.vmem %s112, 24 [#allocation1]
        %805 = vst [vmem:[%s804] sm:$0xff] %v803
        %vm806 = vcmask 105568
        %s807 = scalar_lea.vmem %s112, 12 [#allocation1]
        %v808 = vld [vmem:[%s807] ss:$0 sm:$0xff]
        %s809 = scalar_lea.vmem %s104, 12 [#allocation0]
        %v810 = vld [vmem:[%s809] ss:$0 sm:$0xff]
        %v811 = vmul.f32 %v808, %v808
        %812 = vadd.xlane.f32.xlu0 %v811
        %v813 = vpop.xlane.xlu0 %812
        %v814 = vsub.f32 %v810, %v813
        %v815 = vrsqrt.pop %v814
        %s816 = scalar_lea.vmem %s104, 8 [#allocation0]
        %v817 = vld [vmem:[%s816] sm:$0xff]
        %s818 = scalar_lea.vmem %s112, 8 [#allocation1]
        %v819 = vld [vmem:[%s818] sm:$0xff]
        %v820 = vmul.f32 %v819, %v808
        %821 = vadd.xlane.f32.xlu0 %v820
        %v822 = vpop.xlane.xlu0 %821
        %v823 = vsub.f32 %v817, %v822
        %v824 = vmul.f32 %v823, %v815
        %vm825 = vcmask 1047556
        %vm826 = vmand %vm806, %vm825
        %v827 = vsel %vm826, %v824, 0.0
        %v828 = vadd.f32 %v819, %v827
        %s829 = scalar_lea.vmem %s112, 8 [#allocation1]
        %830 = vst [vmem:[%s829] sm:$0xff] %v828
        %s831 = scalar_lea.vmem %s104, 16 [#allocation0]
        %v832 = vld [vmem:[%s831] sm:$0xff]
        %s833 = scalar_lea.vmem %s112, 16 [#allocation1]
        %v834 = vld [vmem:[%s833] sm:$0xff]
        %v835 = vmul.f32 %v834, %v808
        %836 = vadd.xlane.f32.xlu0 %v835
        %v837 = vpop.xlane.xlu0 %836
        %v838 = vsub.f32 %v832, %v837
        %v839 = vmul.f32 %v838, %v815
        %v840 = vsel %vm806, %v839, 0.0
        %v841 = vadd.f32 %v834, %v840
        %s842 = scalar_lea.vmem %s112, 16 [#allocation1]
        %843 = vst [vmem:[%s842] sm:$0xff] %v841
        %s844 = scalar_lea.vmem %s104, 24 [#allocation0]
        %v845 = vld [vmem:[%s844] sm:$0xff]
        %s846 = scalar_lea.vmem %s112, 24 [#allocation1]
        %v847 = vld [vmem:[%s846] sm:$0xff]
        %v848 = vmul.f32 %v847, %v808
        %849 = vadd.xlane.f32.xlu0 %v848
        %v850 = vpop.xlane.xlu0 %849
        %v851 = vsub.f32 %v845, %v850
        %v852 = vmul.f32 %v851, %v815
        %v853 = vsel %vm806, %v852, 0.0
        %v854 = vadd.f32 %v847, %v853
        %s855 = scalar_lea.vmem %s112, 24 [#allocation1]
        %856 = vst [vmem:[%s855] sm:$0xff] %v854
        %vm857 = vcmask 113768
        %s858 = scalar_lea.vmem %s112, 13 [#allocation1]
        %v859 = vld [vmem:[%s858] ss:$0 sm:$0xff]
        %s860 = scalar_lea.vmem %s104, 13 [#allocation0]
        %v861 = vld [vmem:[%s860] ss:$0 sm:$0xff]
        %v862 = vmul.f32 %v859, %v859
        %863 = vadd.xlane.f32.xlu0 %v862
        %v864 = vpop.xlane.xlu0 %863
        %v865 = vsub.f32 %v861, %v864
        %v866 = vrsqrt.pop %v865
        %s867 = scalar_lea.vmem %s104, 8 [#allocation0]
        %v868 = vld [vmem:[%s867] sm:$0xff]
        %s869 = scalar_lea.vmem %s112, 8 [#allocation1]
        %v870 = vld [vmem:[%s869] sm:$0xff]
        %v871 = vmul.f32 %v870, %v859
        %872 = vadd.xlane.f32.xlu0 %v871
        %v873 = vpop.xlane.xlu0 %872
        %v874 = vsub.f32 %v868, %v873
        %v875 = vmul.f32 %v874, %v866
        %vm876 = vcmask 1047557
        %vm877 = vmand %vm857, %vm876
        %v878 = vsel %vm877, %v875, 0.0
        %v879 = vadd.f32 %v870, %v878
        %s880 = scalar_lea.vmem %s112, 8 [#allocation1]
        %881 = vst [vmem:[%s880] sm:$0xff] %v879
        %s882 = scalar_lea.vmem %s104, 16 [#allocation0]
        %v883 = vld [vmem:[%s882] sm:$0xff]
        %s884 = scalar_lea.vmem %s112, 16 [#allocation1]
        %v885 = vld [vmem:[%s884] sm:$0xff]
        %v886 = vmul.f32 %v885, %v859
        %887 = vadd.xlane.f32.xlu0 %v886
        %v888 = vpop.xlane.xlu0 %887
        %v889 = vsub.f32 %v883, %v888
        %v890 = vmul.f32 %v889, %v866
        %v891 = vsel %vm857, %v890, 0.0
        %v892 = vadd.f32 %v885, %v891
        %s893 = scalar_lea.vmem %s112, 16 [#allocation1]
        %894 = vst [vmem:[%s893] sm:$0xff] %v892
        %s895 = scalar_lea.vmem %s104, 24 [#allocation0]
        %v896 = vld [vmem:[%s895] sm:$0xff]
        %s897 = scalar_lea.vmem %s112, 24 [#allocation1]
        %v898 = vld [vmem:[%s897] sm:$0xff]
        %v899 = vmul.f32 %v898, %v859
        %900 = vadd.xlane.f32.xlu0 %v899
        %v901 = vpop.xlane.xlu0 %900
        %v902 = vsub.f32 %v896, %v901
        %v903 = vmul.f32 %v902, %v866
        %v904 = vsel %vm857, %v903, 0.0
        %v905 = vadd.f32 %v898, %v904
        %s906 = scalar_lea.vmem %s112, 24 [#allocation1]
        %907 = vst [vmem:[%s906] sm:$0xff] %v905
        %vm908 = vcmask 121968
        %s909 = scalar_lea.vmem %s112, 14 [#allocation1]
        %v910 = vld [vmem:[%s909] ss:$0 sm:$0xff]
        %s911 = scalar_lea.vmem %s104, 14 [#allocation0]
        %v912 = vld [vmem:[%s911] ss:$0 sm:$0xff]
        %v913 = vmul.f32 %v910, %v910
        %914 = vadd.xlane.f32.xlu0 %v913
        %v915 = vpop.xlane.xlu0 %914
        %v916 = vsub.f32 %v912, %v915
        %v917 = vrsqrt.pop %v916
        %s918 = scalar_lea.vmem %s104, 8 [#allocation0]
        %v919 = vld [vmem:[%s918] sm:$0xff]
        %s920 = scalar_lea.vmem %s112, 8 [#allocation1]
        %v921 = vld [vmem:[%s920] sm:$0xff]
        %v922 = vmul.f32 %v921, %v910
        %923 = vadd.xlane.f32.xlu0 %v922
        %v924 = vpop.xlane.xlu0 %923
        %v925 = vsub.f32 %v919, %v924
        %v926 = vmul.f32 %v925, %v917
        %vm927 = vcmask 1047558
        %vm928 = vmand %vm908, %vm927
        %v929 = vsel %vm928, %v926, 0.0
        %v930 = vadd.f32 %v921, %v929
        %s931 = scalar_lea.vmem %s112, 8 [#allocation1]
        %932 = vst [vmem:[%s931] sm:$0xff] %v930
        %s933 = scalar_lea.vmem %s104, 16 [#allocation0]
        %v934 = vld [vmem:[%s933] sm:$0xff]
        %s935 = scalar_lea.vmem %s112, 16 [#allocation1]
        %v936 = vld [vmem:[%s935] sm:$0xff]
        %v937 = vmul.f32 %v936, %v910
        %938 = vadd.xlane.f32.xlu0 %v937
        %v939 = vpop.xlane.xlu0 %938
        %v940 = vsub.f32 %v934, %v939
        %v941 = vmul.f32 %v940, %v917
        %v942 = vsel %vm908, %v941, 0.0
        %v943 = vadd.f32 %v936, %v942
        %s944 = scalar_lea.vmem %s112, 16 [#allocation1]
        %945 = vst [vmem:[%s944] sm:$0xff] %v943
        %s946 = scalar_lea.vmem %s104, 24 [#allocation0]
        %v947 = vld [vmem:[%s946] sm:$0xff]
        %s948 = scalar_lea.vmem %s112, 24 [#allocation1]
        %v949 = vld [vmem:[%s948] sm:$0xff]
        %v950 = vmul.f32 %v949, %v910
        %951 = vadd.xlane.f32.xlu0 %v950
        %v952 = vpop.xlane.xlu0 %951
        %v953 = vsub.f32 %v947, %v952
        %v954 = vmul.f32 %v953, %v917
        %v955 = vsel %vm908, %v954, 0.0
        %v956 = vadd.f32 %v949, %v955
        %s957 = scalar_lea.vmem %s112, 24 [#allocation1]
        %958 = vst [vmem:[%s957] sm:$0xff] %v956
        %vm959 = vcmask 130168
        %s960 = scalar_lea.vmem %s112, 15 [#allocation1]
        %v961 = vld [vmem:[%s960] ss:$0 sm:$0xff]
        %s962 = scalar_lea.vmem %s104, 15 [#allocation0]
        %v963 = vld [vmem:[%s962] ss:$0 sm:$0xff]
        %v964 = vmul.f32 %v961, %v961
        %965 = vadd.xlane.f32.xlu0 %v964
        %v966 = vpop.xlane.xlu0 %965
        %v967 = vsub.f32 %v963, %v966
        %v968 = vrsqrt.pop %v967
        %s969 = scalar_lea.vmem %s104, 8 [#allocation0]
        %v970 = vld [vmem:[%s969] sm:$0xff]
        %s971 = scalar_lea.vmem %s112, 8 [#allocation1]
        %v972 = vld [vmem:[%s971] sm:$0xff]
        %v973 = vmul.f32 %v972, %v961
        %974 = vadd.xlane.f32.xlu0 %v973
        %v975 = vpop.xlane.xlu0 %974
        %v976 = vsub.f32 %v970, %v975
        %v977 = vmul.f32 %v976, %v968
        %vm978 = vcmask 1047559
        %vm979 = vmand %vm959, %vm978
        %v980 = vsel %vm979, %v977, 0.0
        %v981 = vadd.f32 %v972, %v980
        %s982 = scalar_lea.vmem %s112, 8 [#allocation1]
        %983 = vst [vmem:[%s982] sm:$0xff] %v981
        %s984 = scalar_lea.vmem %s104, 16 [#allocation0]
        %v985 = vld [vmem:[%s984] sm:$0xff]
        %s986 = scalar_lea.vmem %s112, 16 [#allocation1]
        %v987 = vld [vmem:[%s986] sm:$0xff]
        %v988 = vmul.f32 %v987, %v961
        %989 = vadd.xlane.f32.xlu0 %v988
        %v990 = vpop.xlane.xlu0 %989
        %v991 = vsub.f32 %v985, %v990
        %v992 = vmul.f32 %v991, %v968
        %v993 = vsel %vm959, %v992, 0.0
        %v994 = vadd.f32 %v987, %v993
        %s995 = scalar_lea.vmem %s112, 16 [#allocation1]
        %996 = vst [vmem:[%s995] sm:$0xff] %v994
        %s997 = scalar_lea.vmem %s104, 24 [#allocation0]
        %v998 = vld [vmem:[%s997] sm:$0xff]
        %s999 = scalar_lea.vmem %s112, 24 [#allocation1]
        %v1000 = vld [vmem:[%s999] sm:$0xff]
        %v1001 = vmul.f32 %v1000, %v961
        %1002 = vadd.xlane.f32.xlu0 %v1001
        %v1003 = vpop.xlane.xlu0 %1002
        %v1004 = vsub.f32 %v998, %v1003
        %v1005 = vmul.f32 %v1004, %v968
        %v1006 = vsel %vm959, %v1005, 0.0
        %v1007 = vadd.f32 %v1000, %v1006
        %s1008 = scalar_lea.vmem %s112, 24 [#allocation1]
        %1009 = vst [vmem:[%s1008] sm:$0xff] %v1007
        %vm1010 = vcmask 138368
        %s1011 = scalar_lea.vmem %s112, 16 [#allocation1]
        %v1012 = vld [vmem:[%s1011] ss:$0 sm:$0xff]
        %s1013 = scalar_lea.vmem %s104, 16 [#allocation0]
        %v1014 = vld [vmem:[%s1013] ss:$0 sm:$0xff]
        %v1015 = vmul.f32 %v1012, %v1012
        %1016 = vadd.xlane.f32.xlu0 %v1015
        %v1017 = vpop.xlane.xlu0 %1016
        %v1018 = vsub.f32 %v1014, %v1017
        %v1019 = vrsqrt.pop %v1018
        %s1020 = scalar_lea.vmem %s104, 16 [#allocation0]
        %v1021 = vld [vmem:[%s1020] sm:$0xff]
        %s1022 = scalar_lea.vmem %s112, 16 [#allocation1]
        %v1023 = vld [vmem:[%s1022] sm:$0xff]
        %v1024 = vmul.f32 %v1023, %v1012
        %1025 = vadd.xlane.f32.xlu0 %v1024
        %v1026 = vpop.xlane.xlu0 %1025
        %v1027 = vsub.f32 %v1021, %v1026
        %v1028 = vmul.f32 %v1027, %v1019
        %v1029 = vsel %vm1010, %v1028, 0.0
        %v1030 = vadd.f32 %v1023, %v1029
        %s1031 = scalar_lea.vmem %s112, 16 [#allocation1]
        %1032 = vst [vmem:[%s1031] sm:$0xff] %v1030
        %s1033 = scalar_lea.vmem %s104, 24 [#allocation0]
        %v1034 = vld [vmem:[%s1033] sm:$0xff]
        %s1035 = scalar_lea.vmem %s112, 24 [#allocation1]
        %v1036 = vld [vmem:[%s1035] sm:$0xff]
        %v1037 = vmul.f32 %v1036, %v1012
        %1038 = vadd.xlane.f32.xlu0 %v1037
        %v1039 = vpop.xlane.xlu0 %1038
        %v1040 = vsub.f32 %v1034, %v1039
        %v1041 = vmul.f32 %v1040, %v1019
        %v1042 = vsel %vm1010, %v1041, 0.0
        %v1043 = vadd.f32 %v1036, %v1042
        %s1044 = scalar_lea.vmem %s112, 24 [#allocation1]
        %1045 = vst [vmem:[%s1044] sm:$0xff] %v1043
        %vm1046 = vcmask 146568
        %s1047 = scalar_lea.vmem %s112, 17 [#allocation1]
        %v1048 = vld [vmem:[%s1047] ss:$0 sm:$0xff]
        %s1049 = scalar_lea.vmem %s104, 17 [#allocation0]
        %v1050 = vld [vmem:[%s1049] ss:$0 sm:$0xff]
        %v1051 = vmul.f32 %v1048, %v1048
        %1052 = vadd.xlane.f32.xlu0 %v1051
        %v1053 = vpop.xlane.xlu0 %1052
        %v1054 = vsub.f32 %v1050, %v1053
        %v1055 = vrsqrt.pop %v1054
        %s1056 = scalar_lea.vmem %s104, 16 [#allocation0]
        %v1057 = vld [vmem:[%s1056] sm:$0xff]
        %s1058 = scalar_lea.vmem %s112, 16 [#allocation1]
        %v1059 = vld [vmem:[%s1058] sm:$0xff]
        %v1060 = vmul.f32 %v1059, %v1048
        %1061 = vadd.xlane.f32.xlu0 %v1060
        %v1062 = vpop.xlane.xlu0 %1061
        %v1063 = vsub.f32 %v1057, %v1062
        %v1064 = vmul.f32 %v1063, %v1055
        %vm1065 = vcmask 1047553
        %vm1066 = vmand %vm1046, %vm1065
        %v1067 = vsel %vm1066, %v1064, 0.0
        %v1068 = vadd.f32 %v1059, %v1067
        %s1069 = scalar_lea.vmem %s112, 16 [#allocation1]
        %1070 = vst [vmem:[%s1069] sm:$0xff] %v1068
        %s1071 = scalar_lea.vmem %s104, 24 [#allocation0]
        %v1072 = vld [vmem:[%s1071] sm:$0xff]
        %s1073 = scalar_lea.vmem %s112, 24 [#allocation1]
        %v1074 = vld [vmem:[%s1073] sm:$0xff]
        %v1075 = vmul.f32 %v1074, %v1048
        %1076 = vadd.xlane.f32.xlu0 %v1075
        %v1077 = vpop.xlane.xlu0 %1076
        %v1078 = vsub.f32 %v1072, %v1077
        %v1079 = vmul.f32 %v1078, %v1055
        %v1080 = vsel %vm1046, %v1079, 0.0
        %v1081 = vadd.f32 %v1074, %v1080
        %s1082 = scalar_lea.vmem %s112, 24 [#allocation1]
        %1083 = vst [vmem:[%s1082] sm:$0xff] %v1081
        %vm1084 = vcmask 154768
        %s1085 = scalar_lea.vmem %s112, 18 [#allocation1]
        %v1086 = vld [vmem:[%s1085] ss:$0 sm:$0xff]
        %s1087 = scalar_lea.vmem %s104, 18 [#allocation0]
        %v1088 = vld [vmem:[%s1087] ss:$0 sm:$0xff]
        %v1089 = vmul.f32 %v1086, %v1086
        %1090 = vadd.xlane.f32.xlu0 %v1089
        %v1091 = vpop.xlane.xlu0 %1090
        %v1092 = vsub.f32 %v1088, %v1091
        %v1093 = vrsqrt.pop %v1092
        %s1094 = scalar_lea.vmem %s104, 16 [#allocation0]
        %v1095 = vld [vmem:[%s1094] sm:$0xff]
        %s1096 = scalar_lea.vmem %s112, 16 [#allocation1]
        %v1097 = vld [vmem:[%s1096] sm:$0xff]
        %v1098 = vmul.f32 %v1097, %v1086
        %1099 = vadd.xlane.f32.xlu0 %v1098
        %v1100 = vpop.xlane.xlu0 %1099
        %v1101 = vsub.f32 %v1095, %v1100
        %v1102 = vmul.f32 %v1101, %v1093
        %vm1103 = vcmask 1047554
        %vm1104 = vmand %vm1084, %vm1103
        %v1105 = vsel %vm1104, %v1102, 0.0
        %v1106 = vadd.f32 %v1097, %v1105
        %s1107 = scalar_lea.vmem %s112, 16 [#allocation1]
        %1108 = vst [vmem:[%s1107] sm:$0xff] %v1106
        %s1109 = scalar_lea.vmem %s104, 24 [#allocation0]
        %v1110 = vld [vmem:[%s1109] sm:$0xff]
        %s1111 = scalar_lea.vmem %s112, 24 [#allocation1]
        %v1112 = vld [vmem:[%s1111] sm:$0xff]
        %v1113 = vmul.f32 %v1112, %v1086
        %1114 = vadd.xlane.f32.xlu0 %v1113
        %v1115 = vpop.xlane.xlu0 %1114
        %v1116 = vsub.f32 %v1110, %v1115
        %v1117 = vmul.f32 %v1116, %v1093
        %v1118 = vsel %vm1084, %v1117, 0.0
        %v1119 = vadd.f32 %v1112, %v1118
        %s1120 = scalar_lea.vmem %s112, 24 [#allocation1]
        %1121 = vst [vmem:[%s1120] sm:$0xff] %v1119
        %vm1122 = vcmask 162968
        %s1123 = scalar_lea.vmem %s112, 19 [#allocation1]
        %v1124 = vld [vmem:[%s1123] ss:$0 sm:$0xff]
        %s1125 = scalar_lea.vmem %s104, 19 [#allocation0]
        %v1126 = vld [vmem:[%s1125] ss:$0 sm:$0xff]
        %v1127 = vmul.f32 %v1124, %v1124
        %1128 = vadd.xlane.f32.xlu0 %v1127
        %v1129 = vpop.xlane.xlu0 %1128
        %v1130 = vsub.f32 %v1126, %v1129
        %v1131 = vrsqrt.pop %v1130
        %s1132 = scalar_lea.vmem %s104, 16 [#allocation0]
        %v1133 = vld [vmem:[%s1132] sm:$0xff]
        %s1134 = scalar_lea.vmem %s112, 16 [#allocation1]
        %v1135 = vld [vmem:[%s1134] sm:$0xff]
        %v1136 = vmul.f32 %v1135, %v1124
        %1137 = vadd.xlane.f32.xlu0 %v1136
        %v1138 = vpop.xlane.xlu0 %1137
        %v1139 = vsub.f32 %v1133, %v1138
        %v1140 = vmul.f32 %v1139, %v1131
        %vm1141 = vcmask 1047555
        %vm1142 = vmand %vm1122, %vm1141
        %v1143 = vsel %vm1142, %v1140, 0.0
        %v1144 = vadd.f32 %v1135, %v1143
        %s1145 = scalar_lea.vmem %s112, 16 [#allocation1]
        %1146 = vst [vmem:[%s1145] sm:$0xff] %v1144
        %s1147 = scalar_lea.vmem %s104, 24 [#allocation0]
        %v1148 = vld [vmem:[%s1147] sm:$0xff]
        %s1149 = scalar_lea.vmem %s112, 24 [#allocation1]
        %v1150 = vld [vmem:[%s1149] sm:$0xff]
        %v1151 = vmul.f32 %v1150, %v1124
        %1152 = vadd.xlane.f32.xlu0 %v1151
        %v1153 = vpop.xlane.xlu0 %1152
        %v1154 = vsub.f32 %v1148, %v1153
        %v1155 = vmul.f32 %v1154, %v1131
        %v1156 = vsel %vm1122, %v1155, 0.0
        %v1157 = vadd.f32 %v1150, %v1156
        %s1158 = scalar_lea.vmem %s112, 24 [#allocation1]
        %1159 = vst [vmem:[%s1158] sm:$0xff] %v1157
        %vm1160 = vcmask 171168
        %s1161 = scalar_lea.vmem %s112, 20 [#allocation1]
        %v1162 = vld [vmem:[%s1161] ss:$0 sm:$0xff]
        %s1163 = scalar_lea.vmem %s104, 20 [#allocation0]
        %v1164 = vld [vmem:[%s1163] ss:$0 sm:$0xff]
        %v1165 = vmul.f32 %v1162, %v1162
        %1166 = vadd.xlane.f32.xlu0 %v1165
        %v1167 = vpop.xlane.xlu0 %1166
        %v1168 = vsub.f32 %v1164, %v1167
        %v1169 = vrsqrt.pop %v1168
        %s1170 = scalar_lea.vmem %s104, 16 [#allocation0]
        %v1171 = vld [vmem:[%s1170] sm:$0xff]
        %s1172 = scalar_lea.vmem %s112, 16 [#allocation1]
        %v1173 = vld [vmem:[%s1172] sm:$0xff]
        %v1174 = vmul.f32 %v1173, %v1162
        %1175 = vadd.xlane.f32.xlu0 %v1174
        %v1176 = vpop.xlane.xlu0 %1175
        %v1177 = vsub.f32 %v1171, %v1176
        %v1178 = vmul.f32 %v1177, %v1169
        %vm1179 = vcmask 1047556
        %vm1180 = vmand %vm1160, %vm1179
        %v1181 = vsel %vm1180, %v1178, 0.0
        %v1182 = vadd.f32 %v1173, %v1181
        %s1183 = scalar_lea.vmem %s112, 16 [#allocation1]
        %1184 = vst [vmem:[%s1183] sm:$0xff] %v1182
        %s1185 = scalar_lea.vmem %s104, 24 [#allocation0]
        %v1186 = vld [vmem:[%s1185] sm:$0xff]
        %s1187 = scalar_lea.vmem %s112, 24 [#allocation1]
        %v1188 = vld [vmem:[%s1187] sm:$0xff]
        %v1189 = vmul.f32 %v1188, %v1162
        %1190 = vadd.xlane.f32.xlu0 %v1189
        %v1191 = vpop.xlane.xlu0 %1190
        %v1192 = vsub.f32 %v1186, %v1191
        %v1193 = vmul.f32 %v1192, %v1169
        %v1194 = vsel %vm1160, %v1193, 0.0
        %v1195 = vadd.f32 %v1188, %v1194
        %s1196 = scalar_lea.vmem %s112, 24 [#allocation1]
        %1197 = vst [vmem:[%s1196] sm:$0xff] %v1195
        %vm1198 = vcmask 179368
        %s1199 = scalar_lea.vmem %s112, 21 [#allocation1]
        %v1200 = vld [vmem:[%s1199] ss:$0 sm:$0xff]
        %s1201 = scalar_lea.vmem %s104, 21 [#allocation0]
        %v1202 = vld [vmem:[%s1201] ss:$0 sm:$0xff]
        %v1203 = vmul.f32 %v1200, %v1200
        %1204 = vadd.xlane.f32.xlu0 %v1203
        %v1205 = vpop.xlane.xlu0 %1204
        %v1206 = vsub.f32 %v1202, %v1205
        %v1207 = vrsqrt.pop %v1206
        %s1208 = scalar_lea.vmem %s104, 16 [#allocation0]
        %v1209 = vld [vmem:[%s1208] sm:$0xff]
        %s1210 = scalar_lea.vmem %s112, 16 [#allocation1]
        %v1211 = vld [vmem:[%s1210] sm:$0xff]
        %v1212 = vmul.f32 %v1211, %v1200
        %1213 = vadd.xlane.f32.xlu0 %v1212
        %v1214 = vpop.xlane.xlu0 %1213
        %v1215 = vsub.f32 %v1209, %v1214
        %v1216 = vmul.f32 %v1215, %v1207
        %vm1217 = vcmask 1047557
        %vm1218 = vmand %vm1198, %vm1217
        %v1219 = vsel %vm1218, %v1216, 0.0
        %v1220 = vadd.f32 %v1211, %v1219
        %s1221 = scalar_lea.vmem %s112, 16 [#allocation1]
        %1222 = vst [vmem:[%s1221] sm:$0xff] %v1220
        %s1223 = scalar_lea.vmem %s104, 24 [#allocation0]
        %v1224 = vld [vmem:[%s1223] sm:$0xff]
        %s1225 = scalar_lea.vmem %s112, 24 [#allocation1]
        %v1226 = vld [vmem:[%s1225] sm:$0xff]
        %v1227 = vmul.f32 %v1226, %v1200
        %1228 = vadd.xlane.f32.xlu0 %v1227
        %v1229 = vpop.xlane.xlu0 %1228
        %v1230 = vsub.f32 %v1224, %v1229
        %v1231 = vmul.f32 %v1230, %v1207
        %v1232 = vsel %vm1198, %v1231, 0.0
        %v1233 = vadd.f32 %v1226, %v1232
        %s1234 = scalar_lea.vmem %s112, 24 [#allocation1]
        %1235 = vst [vmem:[%s1234] sm:$0xff] %v1233
        %vm1236 = vcmask 187568
        %s1237 = scalar_lea.vmem %s112, 22 [#allocation1]
        %v1238 = vld [vmem:[%s1237] ss:$0 sm:$0xff]
        %s1239 = scalar_lea.vmem %s104, 22 [#allocation0]
        %v1240 = vld [vmem:[%s1239] ss:$0 sm:$0xff]
        %v1241 = vmul.f32 %v1238, %v1238
        %1242 = vadd.xlane.f32.xlu0 %v1241
        %v1243 = vpop.xlane.xlu0 %1242
        %v1244 = vsub.f32 %v1240, %v1243
        %v1245 = vrsqrt.pop %v1244
        %s1246 = scalar_lea.vmem %s104, 16 [#allocation0]
        %v1247 = vld [vmem:[%s1246] sm:$0xff]
        %s1248 = scalar_lea.vmem %s112, 16 [#allocation1]
        %v1249 = vld [vmem:[%s1248] sm:$0xff]
        %v1250 = vmul.f32 %v1249, %v1238
        %1251 = vadd.xlane.f32.xlu0 %v1250
        %v1252 = vpop.xlane.xlu0 %1251
        %v1253 = vsub.f32 %v1247, %v1252
        %v1254 = vmul.f32 %v1253, %v1245
        %vm1255 = vcmask 1047558
        %vm1256 = vmand %vm1236, %vm1255
        %v1257 = vsel %vm1256, %v1254, 0.0
        %v1258 = vadd.f32 %v1249, %v1257
        %s1259 = scalar_lea.vmem %s112, 16 [#allocation1]
        %1260 = vst [vmem:[%s1259] sm:$0xff] %v1258
        %s1261 = scalar_lea.vmem %s104, 24 [#allocation0]
        %v1262 = vld [vmem:[%s1261] sm:$0xff]
        %s1263 = scalar_lea.vmem %s112, 24 [#allocation1]
        %v1264 = vld [vmem:[%s1263] sm:$0xff]
        %v1265 = vmul.f32 %v1264, %v1238
        %1266 = vadd.xlane.f32.xlu0 %v1265
        %v1267 = vpop.xlane.xlu0 %1266
        %v1268 = vsub.f32 %v1262, %v1267
        %v1269 = vmul.f32 %v1268, %v1245
        %v1270 = vsel %vm1236, %v1269, 0.0
        %v1271 = vadd.f32 %v1264, %v1270
        %s1272 = scalar_lea.vmem %s112, 24 [#allocation1]
        %1273 = vst [vmem:[%s1272] sm:$0xff] %v1271
        %vm1274 = vcmask 195768
        %s1275 = scalar_lea.vmem %s112, 23 [#allocation1]
        %v1276 = vld [vmem:[%s1275] ss:$0 sm:$0xff]
        %s1277 = scalar_lea.vmem %s104, 23 [#allocation0]
        %v1278 = vld [vmem:[%s1277] ss:$0 sm:$0xff]
        %v1279 = vmul.f32 %v1276, %v1276
        %1280 = vadd.xlane.f32.xlu0 %v1279
        %v1281 = vpop.xlane.xlu0 %1280
        %v1282 = vsub.f32 %v1278, %v1281
        %v1283 = vrsqrt.pop %v1282
        %s1284 = scalar_lea.vmem %s104, 16 [#allocation0]
        %v1285 = vld [vmem:[%s1284] sm:$0xff]
        %s1286 = scalar_lea.vmem %s112, 16 [#allocation1]
        %v1287 = vld [vmem:[%s1286] sm:$0xff]
        %v1288 = vmul.f32 %v1287, %v1276
        %1289 = vadd.xlane.f32.xlu0 %v1288
        %v1290 = vpop.xlane.xlu0 %1289
        %v1291 = vsub.f32 %v1285, %v1290
        %v1292 = vmul.f32 %v1291, %v1283
        %vm1293 = vcmask 1047559
        %vm1294 = vmand %vm1274, %vm1293
        %v1295 = vsel %vm1294, %v1292, 0.0
        %v1296 = vadd.f32 %v1287, %v1295
        %s1297 = scalar_lea.vmem %s112, 16 [#allocation1]
        %1298 = vst [vmem:[%s1297] sm:$0xff] %v1296
        %s1299 = scalar_lea.vmem %s104, 24 [#allocation0]
        %v1300 = vld [vmem:[%s1299] sm:$0xff]
        %s1301 = scalar_lea.vmem %s112, 24 [#allocation1]
        %v1302 = vld [vmem:[%s1301] sm:$0xff]
        %v1303 = vmul.f32 %v1302, %v1276
        %1304 = vadd.xlane.f32.xlu0 %v1303
        %v1305 = vpop.xlane.xlu0 %1304
        %v1306 = vsub.f32 %v1300, %v1305
        %v1307 = vmul.f32 %v1306, %v1283
        %v1308 = vsel %vm1274, %v1307, 0.0
        %v1309 = vadd.f32 %v1302, %v1308
        %s1310 = scalar_lea.vmem %s112, 24 [#allocation1]
        %1311 = vst [vmem:[%s1310] sm:$0xff] %v1309
        %vm1312 = vcmask 203968
        %s1313 = scalar_lea.vmem %s112, 24 [#allocation1]
        %v1314 = vld [vmem:[%s1313] ss:$0 sm:$0xff]
        %s1315 = scalar_lea.vmem %s104, 24 [#allocation0]
        %v1316 = vld [vmem:[%s1315] ss:$0 sm:$0xff]
        %v1317 = vmul.f32 %v1314, %v1314
        %1318 = vadd.xlane.f32.xlu0 %v1317
        %v1319 = vpop.xlane.xlu0 %1318
        %v1320 = vsub.f32 %v1316, %v1319
        %v1321 = vrsqrt.pop %v1320
        %s1322 = scalar_lea.vmem %s104, 24 [#allocation0]
        %v1323 = vld [vmem:[%s1322] sm:$0xff]
        %s1324 = scalar_lea.vmem %s112, 24 [#allocation1]
        %v1325 = vld [vmem:[%s1324] sm:$0xff]
        %v1326 = vmul.f32 %v1325, %v1314
        %1327 = vadd.xlane.f32.xlu0 %v1326
        %v1328 = vpop.xlane.xlu0 %1327
        %v1329 = vsub.f32 %v1323, %v1328
        %v1330 = vmul.f32 %v1329, %v1321
        %v1331 = vsel %vm1312, %v1330, 0.0
        %v1332 = vadd.f32 %v1325, %v1331
        %s1333 = scalar_lea.vmem %s112, 24 [#allocation1]
        %1334 = vst [vmem:[%s1333] sm:$0xff] %v1332
        %vm1335 = vcmask 212168
        %s1336 = scalar_lea.vmem %s112, 25 [#allocation1]
        %v1337 = vld [vmem:[%s1336] ss:$0 sm:$0xff]
        %s1338 = scalar_lea.vmem %s104, 25 [#allocation0]
        %v1339 = vld [vmem:[%s1338] ss:$0 sm:$0xff]
        %v1340 = vmul.f32 %v1337, %v1337
        %1341 = vadd.xlane.f32.xlu0 %v1340
        %v1342 = vpop.xlane.xlu0 %1341
        %v1343 = vsub.f32 %v1339, %v1342
        %v1344 = vrsqrt.pop %v1343
        %s1345 = scalar_lea.vmem %s104, 24 [#allocation0]
        %v1346 = vld [vmem:[%s1345] sm:$0xff]
        %s1347 = scalar_lea.vmem %s112, 24 [#allocation1]
        %v1348 = vld [vmem:[%s1347] sm:$0xff]
        %v1349 = vmul.f32 %v1348, %v1337
        %1350 = vadd.xlane.f32.xlu0 %v1349
        %v1351 = vpop.xlane.xlu0 %1350
        %v1352 = vsub.f32 %v1346, %v1351
        %v1353 = vmul.f32 %v1352, %v1344
        %vm1354 = vcmask 1047553
        %vm1355 = vmand %vm1335, %vm1354
        %v1356 = vsel %vm1355, %v1353, 0.0
        %v1357 = vadd.f32 %v1348, %v1356
        %s1358 = scalar_lea.vmem %s112, 24 [#allocation1]
        %1359 = vst [vmem:[%s1358] sm:$0xff] %v1357
        %vm1360 = vcmask 220368
        %s1361 = scalar_lea.vmem %s112, 26 [#allocation1]
        %v1362 = vld [vmem:[%s1361] ss:$0 sm:$0xff]
        %s1363 = scalar_lea.vmem %s104, 26 [#allocation0]
        %v1364 = vld [vmem:[%s1363] ss:$0 sm:$0xff]
        %v1365 = vmul.f32 %v1362, %v1362
        %1366 = vadd.xlane.f32.xlu0 %v1365
        %v1367 = vpop.xlane.xlu0 %1366
        %v1368 = vsub.f32 %v1364, %v1367
        %v1369 = vrsqrt.pop %v1368
        %s1370 = scalar_lea.vmem %s104, 24 [#allocation0]
        %v1371 = vld [vmem:[%s1370] sm:$0xff]
        %s1372 = scalar_lea.vmem %s112, 24 [#allocation1]
        %v1373 = vld [vmem:[%s1372] sm:$0xff]
        %v1374 = vmul.f32 %v1373, %v1362
        %1375 = vadd.xlane.f32.xlu0 %v1374
        %v1376 = vpop.xlane.xlu0 %1375
        %v1377 = vsub.f32 %v1371, %v1376
        %v1378 = vmul.f32 %v1377, %v1369
        %vm1379 = vcmask 1047554
        %vm1380 = vmand %vm1360, %vm1379
        %v1381 = vsel %vm1380, %v1378, 0.0
        %v1382 = vadd.f32 %v1373, %v1381
        %s1383 = scalar_lea.vmem %s112, 24 [#allocation1]
        %1384 = vst [vmem:[%s1383] sm:$0xff] %v1382
        %vm1385 = vcmask 228568
        %s1386 = scalar_lea.vmem %s112, 27 [#allocation1]
        %v1387 = vld [vmem:[%s1386] ss:$0 sm:$0xff]
        %s1388 = scalar_lea.vmem %s104, 27 [#allocation0]
        %v1389 = vld [vmem:[%s1388] ss:$0 sm:$0xff]
        %v1390 = vmul.f32 %v1387, %v1387
        %1391 = vadd.xlane.f32.xlu0 %v1390
        %v1392 = vpop.xlane.xlu0 %1391
        %v1393 = vsub.f32 %v1389, %v1392
        %v1394 = vrsqrt.pop %v1393
        %s1395 = scalar_lea.vmem %s104, 24 [#allocation0]
        %v1396 = vld [vmem:[%s1395] sm:$0xff]
        %s1397 = scalar_lea.vmem %s112, 24 [#allocation1]
        %v1398 = vld [vmem:[%s1397] sm:$0xff]
        %v1399 = vmul.f32 %v1398, %v1387
        %1400 = vadd.xlane.f32.xlu0 %v1399
        %v1401 = vpop.xlane.xlu0 %1400
        %v1402 = vsub.f32 %v1396, %v1401
        %v1403 = vmul.f32 %v1402, %v1394
        %vm1404 = vcmask 1047555
        %vm1405 = vmand %vm1385, %vm1404
        %v1406 = vsel %vm1405, %v1403, 0.0
        %v1407 = vadd.f32 %v1398, %v1406
        %s1408 = scalar_lea.vmem %s112, 24 [#allocation1]
        %1409 = vst [vmem:[%s1408] sm:$0xff] %v1407
        %vm1410 = vcmask 236768
        %s1411 = scalar_lea.vmem %s112, 28 [#allocation1]
        %v1412 = vld [vmem:[%s1411] ss:$0 sm:$0xff]
        %s1413 = scalar_lea.vmem %s104, 28 [#allocation0]
        %v1414 = vld [vmem:[%s1413] ss:$0 sm:$0xff]
        %v1415 = vmul.f32 %v1412, %v1412
        %1416 = vadd.xlane.f32.xlu0 %v1415
        %v1417 = vpop.xlane.xlu0 %1416
        %v1418 = vsub.f32 %v1414, %v1417
        %v1419 = vrsqrt.pop %v1418
        %s1420 = scalar_lea.vmem %s104, 24 [#allocation0]
        %v1421 = vld [vmem:[%s1420] sm:$0xff]
        %s1422 = scalar_lea.vmem %s112, 24 [#allocation1]
        %v1423 = vld [vmem:[%s1422] sm:$0xff]
        %v1424 = vmul.f32 %v1423, %v1412
        %1425 = vadd.xlane.f32.xlu0 %v1424
        %v1426 = vpop.xlane.xlu0 %1425
        %v1427 = vsub.f32 %v1421, %v1426
        %v1428 = vmul.f32 %v1427, %v1419
        %vm1429 = vcmask 1047556
        %vm1430 = vmand %vm1410, %vm1429
        %v1431 = vsel %vm1430, %v1428, 0.0
        %v1432 = vadd.f32 %v1423, %v1431
        %s1433 = scalar_lea.vmem %s112, 24 [#allocation1]
        %1434 = vst [vmem:[%s1433] sm:$0xff] %v1432
        %vm1435 = vcmask 244968
        %s1436 = scalar_lea.vmem %s112, 29 [#allocation1]
        %v1437 = vld [vmem:[%s1436] ss:$0 sm:$0xff]
        %s1438 = scalar_lea.vmem %s104, 29 [#allocation0]
        %v1439 = vld [vmem:[%s1438] ss:$0 sm:$0xff]
        %v1440 = vmul.f32 %v1437, %v1437
        %1441 = vadd.xlane.f32.xlu0 %v1440
        %v1442 = vpop.xlane.xlu0 %1441
        %v1443 = vsub.f32 %v1439, %v1442
        %v1444 = vrsqrt.pop %v1443
        %s1445 = scalar_lea.vmem %s104, 24 [#allocation0]
        %v1446 = vld [vmem:[%s1445] sm:$0xff]
        %s1447 = scalar_lea.vmem %s112, 24 [#allocation1]
        %v1448 = vld [vmem:[%s1447] sm:$0xff]
        %v1449 = vmul.f32 %v1448, %v1437
        %1450 = vadd.xlane.f32.xlu0 %v1449
        %v1451 = vpop.xlane.xlu0 %1450
        %v1452 = vsub.f32 %v1446, %v1451
        %v1453 = vmul.f32 %v1452, %v1444
        %vm1454 = vcmask 1047557
        %vm1455 = vmand %vm1435, %vm1454
        %v1456 = vsel %vm1455, %v1453, 0.0
        %v1457 = vadd.f32 %v1448, %v1456
        %s1458 = scalar_lea.vmem %s112, 24 [#allocation1]
        %1459 = vst [vmem:[%s1458] sm:$0xff] %v1457
        %vm1460 = vcmask 253168
        %s1461 = scalar_lea.vmem %s112, 30 [#allocation1]
        %v1462 = vld [vmem:[%s1461] ss:$0 sm:$0xff]
        %s1463 = scalar_lea.vmem %s104, 30 [#allocation0]
        %v1464 = vld [vmem:[%s1463] ss:$0 sm:$0xff]
        %v1465 = vmul.f32 %v1462, %v1462
        %1466 = vadd.xlane.f32.xlu0 %v1465
        %v1467 = vpop.xlane.xlu0 %1466
        %v1468 = vsub.f32 %v1464, %v1467
        %v1469 = vrsqrt.pop %v1468
        %s1470 = scalar_lea.vmem %s104, 24 [#allocation0]
        %v1471 = vld [vmem:[%s1470] sm:$0xff]
        %s1472 = scalar_lea.vmem %s112, 24 [#allocation1]
        %v1473 = vld [vmem:[%s1472] sm:$0xff]
        %v1474 = vmul.f32 %v1473, %v1462
        %1475 = vadd.xlane.f32.xlu0 %v1474
        %v1476 = vpop.xlane.xlu0 %1475
        %v1477 = vsub.f32 %v1471, %v1476
        %v1478 = vmul.f32 %v1477, %v1469
        %vm1479 = vcmask 1047558
        %vm1480 = vmand %vm1460, %vm1479
        %v1481 = vsel %vm1480, %v1478, 0.0
        %v1482 = vadd.f32 %v1473, %v1481
        %s1483 = scalar_lea.vmem %s112, 24 [#allocation1]
        %1484 = vst [vmem:[%s1483] sm:$0xff] %v1482
        %vm1485 = vcmask 261368
        %s1486 = scalar_lea.vmem %s112, 31 [#allocation1]
        %v1487 = vld [vmem:[%s1486] ss:$0 sm:$0xff]
        %s1488 = scalar_lea.vmem %s104, 31 [#allocation0]
        %v1489 = vld [vmem:[%s1488] ss:$0 sm:$0xff]
        %v1490 = vmul.f32 %v1487, %v1487
        %1491 = vadd.xlane.f32.xlu0 %v1490
        %v1492 = vpop.xlane.xlu0 %1491
        %v1493 = vsub.f32 %v1489, %v1492
        %v1494 = vrsqrt.pop %v1493
        %s1495 = scalar_lea.vmem %s104, 24 [#allocation0]
        %v1496 = vld [vmem:[%s1495] sm:$0xff]
        %s1497 = scalar_lea.vmem %s112, 24 [#allocation1]
        %v1498 = vld [vmem:[%s1497] sm:$0xff]
        %v1499 = vmul.f32 %v1498, %v1487
        %1500 = vadd.xlane.f32.xlu0 %v1499
        %v1501 = vpop.xlane.xlu0 %1500
        %v1502 = vsub.f32 %v1496, %v1501
        %v1503 = vmul.f32 %v1502, %v1494
        %vm1504 = vcmask 1047559
        %vm1505 = vmand %vm1485, %vm1504
        %v1506 = vsel %vm1505, %v1503, 0.0
        %v1507 = vadd.f32 %v1498, %v1506
        %s1508 = scalar_lea.vmem %s112, 24 [#allocation1]
        %1509 = vst [vmem:[%s1508] sm:$0xff] %v1507
        %s1510 = sand.u32 %s8, 1
        %s1511 = sand.u32 %s8, 1
        %s1512 = smul.addr %s1511, 32
        %s1513 = scalar_lea.vmem [#allocation1], %s1512
        %s1514 = sadd.s32 %s15, %s14
        %s1515 = smul.addr %s13, 4
        %s1516 = sadd.s32 %s1514, %s1515
        %s1517 = smul.addr %s1516, 8
        %s1518 = scalar_lea.vmem %s1, %s1517
        // Predicated region
        $region55: #{custom-call.55} parent=53 // pred_check
          _
        $region56: #{custom-call.55} parent=53 // pred_check_branch
          %1520 = sbr.rel (0) target = $region58
        $region57: #{custom-call.55} parent=53 // pred_region
          // Predicated region
          $region59: #{custom-call.55} parent=57 // pred_check
            _
          $region60: #{custom-call.55} parent=57 // pred_check_branch
            %1522 = sbr.rel (0) target = $region62
          $region61: #{custom-call.55} parent=57 // pred_region
            // Predicated region
            $region74: #{custom-call.55} parent=61 // pred_check
              _
            $region75: #{custom-call.55} parent=61 // pred_check_branch
              %1543 = sbr.rel (0) target = $region77
            $region76: #{custom-call.55} parent=61 // pred_region
              loop: start=0, step=1, limit=1
              $region78: #{custom-call.55} parent=76 // loop_pre_header
                _
              $region79: #{custom-call.55} parent=76 // loop_header
                %s1545 = sphi 0, %s1549
                %p1546 = scmp.ge.s32.totalorder %s1545, 1
                %s1550 = sphi %s1513, %s1513
                %s1551 = sphi %s1518, %s1518
              $region80: #{custom-call.55} parent=76 // loop_header_branch
                %1548 = sbr.rel (%p1546) target = $region84
              $region81: #{custom-call.55} parent=76 // loop_body
                %v1552 = vld [vmem:[%s1550] sm:$0xff]
                %1553 = vst [vmem:[%s1551] sm:$0xff] %v1552
                %v1554 = vld [vmem:[%s1550 + $0x8] sm:$0xff]
                %1555 = vst [vmem:[%s1551 + $0x8] sm:$0xff] %v1554
                %v1556 = vld [vmem:[%s1550 + $0x10] sm:$0xff]
                %1557 = vst [vmem:[%s1551 + $0x10] sm:$0xff] %v1556
                %v1558 = vld [vmem:[%s1550 + $0x18] sm:$0xff]
                %1559 = vst [vmem:[%s1551 + $0x18] sm:$0xff] %v1558
              $region82: #{custom-call.55} parent=76 // loop_footer
                %s1549 = sadd.s32 1, %s1545
              $region83: #{custom-call.55} parent=76 // loop_footer_branch
                %1544 = sbr.rel target = $region79
              $region84: #{custom-call.55} parent=76 // loop_exit
                _
            $region77: #{custom-call.55} parent=61 // pred_fallthru
              _
            // Predicated region
            $region85: #{custom-call.55} parent=61 // pred_check
              _
            $region86: #{custom-call.55} parent=61 // pred_check_branch
              %1561 = sbr.rel target = $region88
            $region87: #{custom-call.55} parent=61 // pred_region
              _
            $region88: #{custom-call.55} parent=61 // pred_fallthru
              _
          $region62: #{custom-call.55} parent=57 // pred_fallthru
            _
          // Predicated region
          $region63: #{custom-call.55} parent=57 // pred_check
            _
          $region64: #{custom-call.55} parent=57 // pred_check_branch
            %1524 = sbr.rel target = $region66
          $region65: #{custom-call.55} parent=57 // pred_region
            loop: start=0, step=1, limit=1
            $region67: #{custom-call.55} parent=65 // loop_pre_header
              _
            $region68: #{custom-call.55} parent=65 // loop_header
              %s1527 = sphi 0, %s1531
              %p1528 = scmp.ge.s32.totalorder %s1527, 1
              %s1532 = sphi %s1513, %s1513
              %s1533 = sphi %s1518, %s1518
            $region69: #{custom-call.55} parent=65 // loop_header_branch
              %1530 = sbr.rel (%p1528) target = $region73
            $region70: #{custom-call.55} parent=65 // loop_body
              %v1534 = vld [vmem:[%s1532] sm:$0xff]
              %1535 = vst [vmem:[%s1533] sm:$0xff] %v1534
              %v1536 = vld [vmem:[%s1532 + $0x8] sm:$0xff]
              %1537 = vst [vmem:[%s1533 + $0x8] sm:$0xff] %v1536
              %v1538 = vld [vmem:[%s1532 + $0x10] sm:$0xff]
              %1539 = vst [vmem:[%s1533 + $0x10] sm:$0xff] %v1538
              %v1540 = vld [vmem:[%s1532 + $0x18] sm:$0xff]
              %1541 = vst [vmem:[%s1533 + $0x18] sm:$0xff] %v1540
            $region71: #{custom-call.55} parent=65 // loop_footer
              %s1531 = sadd.s32 1, %s1527
            $region72: #{custom-call.55} parent=65 // loop_footer_branch
              %1526 = sbr.rel target = $region68
            $region73: #{custom-call.55} parent=65 // loop_exit
              _
          $region66: #{custom-call.55} parent=57 // pred_fallthru
            _
        $region58: #{custom-call.55} parent=53 // pred_fallthru
          _
        %1562 = vnop
      $region54: #{custom-call.55} parent=5 // pred_fallthru
        _
      %p1563 = scmp.le.s32.totalorder 2, %s3
      // Predicated region
      $region89: #{custom-call.55} parent=5 // pred_check
        %p1564 = pneg %p1563
      $region90: #{custom-call.55} parent=5 // pred_check_branch
        %1566 = sbr.rel (%p1564) target = $region92
      $region91: #{custom-call.55} parent=5 // pred_region
        %s1567 = ssub.s32 %s3, 2
        %s1568 = sand.u32 %s9, 1
        %s1569 = sand.u32 %s9, 1
        %s1570 = smul.addr %s1569, 32
        %s1571 = scalar_lea.vmem [#allocation1], %s1570
      $region92: #{custom-call.55} parent=5 // pred_fallthru
        _
    $region6: #{custom-call.55} parent=1 // loop_footer
      %s7 = sadd.s32 1, %s3
    $region7: #{custom-call.55} parent=1 // loop_footer_branch
      %2 = sbr.rel target = $region3
    $region8: #{custom-call.55} parent=1 // loop_exit
      _

// kernel: custom-call.56
$region0: #{custom-call.56}
  %s0 = inlined_call_operand.vmem [shape: f32[2,1,32,32], index: 0, kind: input, shape index: {}]
  %s1 = inlined_call_operand.vmem [shape: f32[2,1,32,32], index: 1, kind: output, shape index: {}]
  $region1: #{custom-call.56} parent=0
    #allocation0 [shape = 'u8[32768]{0}', space=vmem, size = 0x8000, scoped, tag = 'operand span for operand 0']
    #allocation1 [shape = 'u8[32768]{0}', space=vmem, size = 0x8000, scoped, tag = 'operand span for operand 1']
    loop: start=0, step=1, limit=4
    $region2: #{custom-call.56} parent=1 // loop_pre_header
      _
    $region3: #{custom-call.56} parent=1 // loop_header
      %s3 = sphi 0, %s7
      %p4 = scmp.ge.s32.totalorder %s3, 4
      %s10 = sphi 0, %s36
      %s11 = sphi 0, %s32
      %s12 = sphi 0, %s28
      %s13 = sphi 0, %s24
      %s14 = sphi 0, %s10
      %s15 = sphi 0, %s11
      %s16 = sphi 0, %s12
      %s17 = sphi 0, %s13
      %s18 = sphi 0, %s14
      %s19 = sphi 0, %s15
      %s20 = sphi 0, %s16
      %s21 = sphi 0, %s17
    $region4: #{custom-call.56} parent=1 // loop_header_branch
      %6 = sbr.rel (%p4) target = $region8
    $region5: #{custom-call.56} parent=1 // loop_body
      %s8 = ssub.s32 %s3, 1
      %s9 = ssub.s32 %s3, 2
      %s22 = sadd.s32 1, %s13
      %p23 = scmp.ge.s32.totalorder %s22, 1
      %s24 = scalar_select %p23, 0, %s22
      %s25 = sadd.s32 1, %s12
      %s26 = scalar_select %p23, %s25, %s12
      %p27 = scmp.ge.s32.totalorder %s26, 1
      %s28 = scalar_select %p27, 0, %s26
      %s29 = sadd.s32 1, %s11
      %s30 = scalar_select %p27, %s29, %s11
      %p31 = scmp.ge.s32.totalorder %s30, 1
      %s32 = scalar_select %p31, 0, %s30
      %s33 = sadd.s32 1, %s10
      %s34 = scalar_select %p31, %s33, %s10
      %p35 = scmp.ge.s32.totalorder %s34, 2
      %s36 = scalar_select %p35, 0, %s34
      %p37 = scmp.le.s32.totalorder 1, %s3
      %p38 = scmp.lt.s32.totalorder %s3, 3
      %p39 = pnand %p37, %p38
      %p40 = pneg %p39
      // Predicated region
      $region9: #{custom-call.56} parent=5 // pred_check
        _
      $region10: #{custom-call.56} parent=5 // pred_check_branch
        %42 = sbr.rel (%p39) target = $region12
      $region11: #{custom-call.56} parent=5 // pred_region
        %s43 = ssub.s32 %s3, 1
      $region12: #{custom-call.56} parent=5 // pred_fallthru
        _
      %p44 = scmp.lt.s32.totalorder %s3, 2
      // Predicated region
      $region13: #{custom-call.56} parent=5 // pred_check
        %p45 = pneg %p44
      $region14: #{custom-call.56} parent=5 // pred_check_branch
        %47 = sbr.rel (%p45) target = $region16
      $region15: #{custom-call.56} parent=5 // pred_region
        %s48 = sand.u32 %s3, 1
        %s49 = sand.u32 %s3, 1
        %s50 = smul.addr %s49, 32
        %s51 = scalar_lea.vmem [#allocation0], %s50
        %s52 = sadd.s32 %s13, %s12
        %s53 = smul.addr %s11, 4
        %s54 = sadd.s32 %s52, %s53
        %s55 = smul.addr %s10, 4
        %s56 = sadd.s32 %s54, %s55
        %s57 = smul.addr %s56, 8
        %s58 = scalar_lea.vmem %s0, %s57
        // Predicated region
        $region17: #{custom-call.56} parent=15 // pred_check
          _
        $region18: #{custom-call.56} parent=15 // pred_check_branch
          %60 = sbr.rel (0) target = $region20
        $region19: #{custom-call.56} parent=15 // pred_region
          // Predicated region
          $region21: #{custom-call.56} parent=19 // pred_check
            _
          $region22: #{custom-call.56} parent=19 // pred_check_branch
            %62 = sbr.rel (0) target = $region24
          $region23: #{custom-call.56} parent=19 // pred_region
            // Predicated region
            $region36: #{custom-call.56} parent=23 // pred_check
              _
            $region37: #{custom-call.56} parent=23 // pred_check_branch
              %83 = sbr.rel (0) target = $region39
            $region38: #{custom-call.56} parent=23 // pred_region
              loop: start=0, step=1, limit=1
              $region40: #{custom-call.56} parent=38 // loop_pre_header
                _
              $region41: #{custom-call.56} parent=38 // loop_header
                %s85 = sphi 0, %s89
                %p86 = scmp.ge.s32.totalorder %s85, 1
                %s90 = sphi %s58, %s58
                %s91 = sphi %s51, %s51
              $region42: #{custom-call.56} parent=38 // loop_header_branch
                %88 = sbr.rel (%p86) target = $region46
              $region43: #{custom-call.56} parent=38 // loop_body
                %v92 = vld [vmem:[%s90] sm:$0xff]
                %93 = vst [vmem:[%s91] sm:$0xff] %v92
                %v94 = vld [vmem:[%s90 + $0x8] sm:$0xff]
                %95 = vst [vmem:[%s91 + $0x8] sm:$0xff] %v94
                %v96 = vld [vmem:[%s90 + $0x10] sm:$0xff]
                %97 = vst [vmem:[%s91 + $0x10] sm:$0xff] %v96
                %v98 = vld [vmem:[%s90 + $0x18] sm:$0xff]
                %99 = vst [vmem:[%s91 + $0x18] sm:$0xff] %v98
              $region44: #{custom-call.56} parent=38 // loop_footer
                %s89 = sadd.s32 1, %s85
              $region45: #{custom-call.56} parent=38 // loop_footer_branch
                %84 = sbr.rel target = $region41
              $region46: #{custom-call.56} parent=38 // loop_exit
                _
            $region39: #{custom-call.56} parent=23 // pred_fallthru
              _
            // Predicated region
            $region47: #{custom-call.56} parent=23 // pred_check
              _
            $region48: #{custom-call.56} parent=23 // pred_check_branch
              %101 = sbr.rel target = $region50
            $region49: #{custom-call.56} parent=23 // pred_region
              _
            $region50: #{custom-call.56} parent=23 // pred_fallthru
              _
          $region24: #{custom-call.56} parent=19 // pred_fallthru
            _
          // Predicated region
          $region25: #{custom-call.56} parent=19 // pred_check
            _
          $region26: #{custom-call.56} parent=19 // pred_check_branch
            %64 = sbr.rel target = $region28
          $region27: #{custom-call.56} parent=19 // pred_region
            loop: start=0, step=1, limit=1
            $region29: #{custom-call.56} parent=27 // loop_pre_header
              _
            $region30: #{custom-call.56} parent=27 // loop_header
              %s67 = sphi 0, %s71
              %p68 = scmp.ge.s32.totalorder %s67, 1
              %s72 = sphi %s58, %s58
              %s73 = sphi %s51, %s51
            $region31: #{custom-call.56} parent=27 // loop_header_branch
              %70 = sbr.rel (%p68) target = $region35
            $region32: #{custom-call.56} parent=27 // loop_body
              %v74 = vld [vmem:[%s72] sm:$0xff]
              %75 = vst [vmem:[%s73] sm:$0xff] %v74
              %v76 = vld [vmem:[%s72 + $0x8] sm:$0xff]
              %77 = vst [vmem:[%s73 + $0x8] sm:$0xff] %v76
              %v78 = vld [vmem:[%s72 + $0x10] sm:$0xff]
              %79 = vst [vmem:[%s73 + $0x10] sm:$0xff] %v78
              %v80 = vld [vmem:[%s72 + $0x18] sm:$0xff]
              %81 = vst [vmem:[%s73 + $0x18] sm:$0xff] %v80
            $region33: #{custom-call.56} parent=27 // loop_footer
              %s71 = sadd.s32 1, %s67
            $region34: #{custom-call.56} parent=27 // loop_footer_branch
              %66 = sbr.rel target = $region30
            $region35: #{custom-call.56} parent=27 // loop_exit
              _
          $region28: #{custom-call.56} parent=19 // pred_fallthru
            _
        $region20: #{custom-call.56} parent=15 // pred_fallthru
          _
        %102 = vnop
      $region16: #{custom-call.56} parent=5 // pred_fallthru
        _
      %p103 = scmp.le.s32.totalorder 1, %s3
      %p104 = scmp.lt.s32.totalorder %s3, 3
      %p105 = pnand %p103, %p104
      %p106 = pneg %p105
      // Predicated region
      $region51: #{custom-call.56} parent=5 // pred_check
        _
      $region52: #{custom-call.56} parent=5 // pred_check_branch
        %108 = sbr.rel (%p105) target = $region54
      $region53: #{custom-call.56} parent=5 // pred_region
        #allocation2 [shape = 'f32[32,32]{1,0}', space=vmem, size = 0x4000, scoped, tag = 'rescaled input a']
        %s109 = ssub.s32 %s3, 1
        %s110 = sand.u32 %s8, 1
        %s111 = sand.u32 %s8, 1
        %s112 = smul.addr %s111, 32
        %s113 = scalar_lea.vmem [#allocation0], %s112
        %s114 = sand.u32 %s8, 1
        %s115 = sand.u32 %s8, 1
        %s116 = smul.addr %s115, 32
        %s117 = scalar_lea.vmem [#allocation0], %s116
        %s118 = sand.u32 %s8, 1
        %s119 = sand.u32 %s8, 1
        %s120 = smul.addr %s119, 32
        %s121 = scalar_lea.vmem [#allocation1], %s120
        %v122 = vlaneseq
        %v123 = vand.u32 %v122, 127
        %vm124 = vcmp.lt.s32.totalorder %v123, 32
        %v125 = vlaneseq
        %v126 = vshrl.u32 %v125, 7
        %vm128 = vcmp.eq.s32.totalorder %v126, %v123
        %v129 = vld [vmem:[%s113] sm:$0xff]
        %v130 = vsel %vm128, %v129, 0.0
        %131 = vadd.xlane.f32.xlu0 %v130
        %v132 = vpop.xlane.xlu0 %131
        %vm133 = vcmp.ge.s32.totalorder %v126, %v123
        %vm134 = vmand %vm133, %vm124
        %v135 = vsel %vm134, %v129, 0.0
        %v136 = vrcp.pop %v132
        %v137 = vmul.f32 %v135, %v136
        %138 = vst [vmem:[#allocation2] sm:$0xff] %v137
        %s139 = scalar_lea.vmem %s113, 8 [#allocation0]
        %s140 = scalar_lea.vmem [#allocation2], 8
        %v141 = vlaneseq
        %v142 = vshrl.u32 %v141, 7
        %v143 = vadd.s32 %v142, 8
        %vm144 = vcmp.eq.s32.totalorder %v143, %v123
        %v145 = vld [vmem:[%s139] sm:$0xff]
        %v146 = vsel %vm144, %v145, 0.0
        %147 = vadd.xlane.f32.xlu0 %v146
        %v148 = vpop.xlane.xlu0 %147
        %vm149 = vcmp.ge.s32.totalorder %v143, %v123
        %vm150 = vmand %vm149, %vm124
        %v151 = vsel %vm150, %v145, 0.0
        %v152 = vrcp.pop %v148
        %v153 = vmul.f32 %v151, %v152
        %154 = vst [vmem:[%s140] sm:$0xff] %v153
        %s155 = scalar_lea.vmem %s113, 16 [#allocation0]
        %s156 = scalar_lea.vmem [#allocation2], 16
        %v157 = vlaneseq
        %v158 = vshrl.u32 %v157, 7
        %v159 = vadd.s32 %v158, 16
        %vm160 = vcmp.eq.s32.totalorder %v159, %v123
        %v161 = vld [vmem:[%s155] sm:$0xff]
        %v162 = vsel %vm160, %v161, 0.0
        %163 = vadd.xlane.f32.xlu0 %v162
        %v164 = vpop.xlane.xlu0 %163
        %vm165 = vcmp.ge.s32.totalorder %v159, %v123
        %vm166 = vmand %vm165, %vm124
        %v167 = vsel %vm166, %v161, 0.0
        %v168 = vrcp.pop %v164
        %v169 = vmul.f32 %v167, %v168
        %170 = vst [vmem:[%s156] sm:$0xff] %v169
        %s171 = scalar_lea.vmem %s113, 24 [#allocation0]
        %s172 = scalar_lea.vmem [#allocation2], 24
        %v173 = vlaneseq
        %v174 = vshrl.u32 %v173, 7
        %v175 = vadd.s32 %v174, 24
        %vm176 = vcmp.eq.s32.totalorder %v175, %v123
        %v177 = vld [vmem:[%s171] sm:$0xff]
        %v178 = vsel %vm176, %v177, 0.0
        %179 = vadd.xlane.f32.xlu0 %v178
        %v180 = vpop.xlane.xlu0 %179
        %vm181 = vcmp.ge.s32.totalorder %v175, %v123
        %vm182 = vmand %vm181, %vm124
        %v183 = vsel %vm182, %v177, 0.0
        %v184 = vrcp.pop %v180
        %v185 = vmul.f32 %v183, %v184
        %186 = vst [vmem:[%s172] sm:$0xff] %v185
        %v187 = vlaneseq
        %v188 = vand.u32 %v187, 127
        %v189 = vlaneseq
        %v190 = vshrl.u32 %v189, 7
        %vm192 = vcmp.eq.s32.totalorder %v188, %v190
        %v193 = vlaneseq
        %v194 = vand.u32 %v193, 127
        %vm195 = vcmp.eq.s32.totalorder %v194, 0
        %v196 = vsel %vm195, 1.0, -1.0
        %v197 = vsel %vm192, %v196, 0.0
        %v198 = vlaneseq
        %v199 = vand.u32 %v198, 127
        %v200 = vlaneseq
        %v201 = vshrl.u32 %v200, 7
        %v202 = vadd.s32 %v201, 8
        %vm203 = vcmp.eq.s32.totalorder %v199, %v202
        %v204 = vsel %vm203, -1.0, 0.0
        %v205 = vlaneseq
        %v206 = vand.u32 %v205, 127
        %v207 = vlaneseq
        %v208 = vshrl.u32 %v207, 7
        %v209 = vadd.s32 %v208, 16
        %vm210 = vcmp.eq.s32.totalorder %v206, %v209
        %v211 = vsel %vm210, -1.0, 0.0
        %v212 = vlaneseq
        %v213 = vand.u32 %v212, 127
        %v214 = vlaneseq
        %v215 = vshrl.u32 %v214, 7
        %v216 = vadd.s32 %v215, 24
        %vm217 = vcmp.eq.s32.totalorder %v213, %v216
        %v218 = vsel %vm217, -1.0, 0.0
        %s219 = scalar_lea.vmem [#allocation2], 1
        %v220 = vld [vmem:[%s219] ss:$0 sm:$0xff]
        %v221 = vxor.u32 %v220, 2147483648
        %v222 = vlaneseq
        %v223 = vand.u32 %v222, 127
        %vm224 = vcmp.eq.s32.totalorder %v223, 1
        %v225 = vmul.f32 %v221, %v197
        %226 = vadd.xlane.f32.xlu0 %v225
        %v227 = vpop.xlane.xlu0 %226
        %v228 = vsel %vm224, %v227, %v197
        %s229 = scalar_lea.vmem [#allocation2], 2
        %v230 = vld [vmem:[%s229] ss:$0 sm:$0xff]
        %v231 = vxor.u32 %v230, 2147483648
        %v232 = vlaneseq
        %v233 = vand.u32 %v232, 127
        %vm234 = vcmp.eq.s32.totalorder %v233, 2
        %v235 = vmul.f32 %v231, %v228
        %236 = vadd.xlane.f32.xlu0 %v235
        %v237 = vpop.xlane.xlu0 %236
        %v238 = vsel %vm234, %v237, %v228
        %s239 = scalar_lea.vmem [#allocation2], 3
        %v240 = vld [vmem:[%s239] ss:$0 sm:$0xff]
        %v241 = vxor.u32 %v240, 2147483648
        %v242 = vlaneseq
        %v243 = vand.u32 %v242, 127
        %vm244 = vcmp.eq.s32.totalorder %v243, 3
        %v245 = vmul.f32 %v241, %v238
        %246 = vadd.xlane.f32.xlu0 %v245
        %v247 = vpop.xlane.xlu0 %246
        %v248 = vsel %vm244, %v247, %v238
        %s249 = scalar_lea.vmem [#allocation2], 4
        %v250 = vld [vmem:[%s249] ss:$0 sm:$0xff]
        %v251 = vxor.u32 %v250, 2147483648
        %v252 = vlaneseq
        %v253 = vand.u32 %v252, 127
        %vm254 = vcmp.eq.s32.totalorder %v253, 4
        %v255 = vmul.f32 %v251, %v248
        %256 = vadd.xlane.f32.xlu0 %v255
        %v257 = vpop.xlane.xlu0 %256
        %v258 = vsel %vm254, %v257, %v248
        %s259 = scalar_lea.vmem [#allocation2], 5
        %v260 = vld [vmem:[%s259] ss:$0 sm:$0xff]
        %v261 = vxor.u32 %v260, 2147483648
        %v262 = vlaneseq
        %v263 = vand.u32 %v262, 127
        %vm264 = vcmp.eq.s32.totalorder %v263, 5
        %v265 = vmul.f32 %v261, %v258
        %266 = vadd.xlane.f32.xlu0 %v265
        %v267 = vpop.xlane.xlu0 %266
        %v268 = vsel %vm264, %v267, %v258
        %s269 = scalar_lea.vmem [#allocation2], 6
        %v270 = vld [vmem:[%s269] ss:$0 sm:$0xff]
        %v271 = vxor.u32 %v270, 2147483648
        %v272 = vlaneseq
        %v273 = vand.u32 %v272, 127
        %vm274 = vcmp.eq.s32.totalorder %v273, 6
        %v275 = vmul.f32 %v271, %v268
        %276 = vadd.xlane.f32.xlu0 %v275
        %v277 = vpop.xlane.xlu0 %276
        %v278 = vsel %vm274, %v277, %v268
        %s279 = scalar_lea.vmem [#allocation2], 7
        %v280 = vld [vmem:[%s279] ss:$0 sm:$0xff]
        %v281 = vxor.u32 %v280, 2147483648
        %v282 = vlaneseq
        %v283 = vand.u32 %v282, 127
        %vm284 = vcmp.eq.s32.totalorder %v283, 7
        %v285 = vmul.f32 %v281, %v278
        %286 = vadd.xlane.f32.xlu0 %v285
        %v287 = vpop.xlane.xlu0 %286
        %v288 = vsel %vm284, %v287, %v278
        %s289 = scalar_lea.vmem [#allocation2], 8
        %v290 = vld [vmem:[%s289] ss:$0 sm:$0xff]
        %v291 = vxor.u32 %v290, 2147483648
        %v292 = vlaneseq
        %v293 = vand.u32 %v292, 127
        %vm294 = vcmp.eq.s32.totalorder %v293, 8
        %v295 = vmul.f32 %v291, %v288
        %296 = vadd.xlane.f32.xlu0 %v295
        %v297 = vpop.xlane.xlu0 %296
        %v298 = vsel %vm294, %v297, %v288
        %v299 = vmul.f32 %v291, %v204
        %300 = vadd.xlane.f32.xlu0 %v299
        %v301 = vpop.xlane.xlu0 %300
        %v302 = vsel %vm294, %v301, %v204
        %s303 = scalar_lea.vmem [#allocation2], 9
        %v304 = vld [vmem:[%s303] ss:$0 sm:$0xff]
        %v305 = vxor.u32 %v304, 2147483648
        %v306 = vlaneseq
        %v307 = vand.u32 %v306, 127
        %vm308 = vcmp.eq.s32.totalorder %v307, 9
        %v309 = vmul.f32 %v305, %v298
        %310 = vadd.xlane.f32.xlu0 %v309
        %v311 = vpop.xlane.xlu0 %310
        %v312 = vsel %vm308, %v311, %v298
        %v313 = vmul.f32 %v305, %v302
        %314 = vadd.xlane.f32.xlu0 %v313
        %v315 = vpop.xlane.xlu0 %314
        %v316 = vsel %vm308, %v315, %v302
        %s317 = scalar_lea.vmem [#allocation2], 10
        %v318 = vld [vmem:[%s317] ss:$0 sm:$0xff]
        %v319 = vxor.u32 %v318, 2147483648
        %v320 = vlaneseq
        %v321 = vand.u32 %v320, 127
        %vm322 = vcmp.eq.s32.totalorder %v321, 10
        %v323 = vmul.f32 %v319, %v312
        %324 = vadd.xlane.f32.xlu0 %v323
        %v325 = vpop.xlane.xlu0 %324
        %v326 = vsel %vm322, %v325, %v312
        %v327 = vmul.f32 %v319, %v316
        %328 = vadd.xlane.f32.xlu0 %v327
        %v329 = vpop.xlane.xlu0 %328
        %v330 = vsel %vm322, %v329, %v316
        %s331 = scalar_lea.vmem [#allocation2], 11
        %v332 = vld [vmem:[%s331] ss:$0 sm:$0xff]
        %v333 = vxor.u32 %v332, 2147483648
        %v334 = vlaneseq
        %v335 = vand.u32 %v334, 127
        %vm336 = vcmp.eq.s32.totalorder %v335, 11
        %v337 = vmul.f32 %v333, %v326
        %338 = vadd.xlane.f32.xlu0 %v337
        %v339 = vpop.xlane.xlu0 %338
        %v340 = vsel %vm336, %v339, %v326
        %v341 = vmul.f32 %v333, %v330
        %342 = vadd.xlane.f32.xlu0 %v341
        %v343 = vpop.xlane.xlu0 %342
        %v344 = vsel %vm336, %v343, %v330
        %s345 = scalar_lea.vmem [#allocation2], 12
        %v346 = vld [vmem:[%s345] ss:$0 sm:$0xff]
        %v347 = vxor.u32 %v346, 2147483648
        %v348 = vlaneseq
        %v349 = vand.u32 %v348, 127
        %vm350 = vcmp.eq.s32.totalorder %v349, 12
        %v351 = vmul.f32 %v347, %v340
        %352 = vadd.xlane.f32.xlu0 %v351
        %v353 = vpop.xlane.xlu0 %352
        %v354 = vsel %vm350, %v353, %v340
        %v355 = vmul.f32 %v347, %v344
        %356 = vadd.xlane.f32.xlu0 %v355
        %v357 = vpop.xlane.xlu0 %356
        %v358 = vsel %vm350, %v357, %v344
        %s359 = scalar_lea.vmem [#allocation2], 13
        %v360 = vld [vmem:[%s359] ss:$0 sm:$0xff]
        %v361 = vxor.u32 %v360, 2147483648
        %v362 = vlaneseq
        %v363 = vand.u32 %v362, 127
        %vm364 = vcmp.eq.s32.totalorder %v363, 13
        %v365 = vmul.f32 %v361, %v354
        %366 = vadd.xlane.f32.xlu0 %v365
        %v367 = vpop.xlane.xlu0 %366
        %v368 = vsel %vm364, %v367, %v354
        %v369 = vmul.f32 %v361, %v358
        %370 = vadd.xlane.f32.xlu0 %v369
        %v371 = vpop.xlane.xlu0 %370
        %v372 = vsel %vm364, %v371, %v358
        %s373 = scalar_lea.vmem [#allocation2], 14
        %v374 = vld [vmem:[%s373] ss:$0 sm:$0xff]
        %v375 = vxor.u32 %v374, 2147483648
        %v376 = vlaneseq
        %v377 = vand.u32 %v376, 127
        %vm378 = vcmp.eq.s32.totalorder %v377, 14
        %v379 = vmul.f32 %v375, %v368
        %380 = vadd.xlane.f32.xlu0 %v379
        %v381 = vpop.xlane.xlu0 %380
        %v382 = vsel %vm378, %v381, %v368
        %v383 = vmul.f32 %v375, %v372
        %384 = vadd.xlane.f32.xlu0 %v383
        %v385 = vpop.xlane.xlu0 %384
        %v386 = vsel %vm378, %v385, %v372
        %s387 = scalar_lea.vmem [#allocation2], 15
        %v388 = vld [vmem:[%s387] ss:$0 sm:$0xff]
        %v389 = vxor.u32 %v388, 2147483648
        %v390 = vlaneseq
        %v391 = vand.u32 %v390, 127
        %vm392 = vcmp.eq.s32.totalorder %v391, 15
        %v393 = vmul.f32 %v389, %v382
        %394 = vadd.xlane.f32.xlu0 %v393
        %v395 = vpop.xlane.xlu0 %394
        %v396 = vsel %vm392, %v395, %v382
        %v397 = vmul.f32 %v389, %v386
        %398 = vadd.xlane.f32.xlu0 %v397
        %v399 = vpop.xlane.xlu0 %398
        %v400 = vsel %vm392, %v399, %v386
        %s401 = scalar_lea.vmem [#allocation2], 16
        %v402 = vld [vmem:[%s401] ss:$0 sm:$0xff]
        %v403 = vxor.u32 %v402, 2147483648
        %v404 = vlaneseq
        %v405 = vand.u32 %v404, 127
        %vm406 = vcmp.eq.s32.totalorder %v405, 16
        %v407 = vmul.f32 %v403, %v396
        %408 = vadd.xlane.f32.xlu0 %v407
        %v409 = vpop.xlane.xlu0 %408
        %v410 = vsel %vm406, %v409, %v396
        %v411 = vmul.f32 %v403, %v400
        %412 = vadd.xlane.f32.xlu0 %v411
        %v413 = vpop.xlane.xlu0 %412
        %v414 = vsel %vm406, %v413, %v400
        %v415 = vmul.f32 %v403, %v211
        %416 = vadd.xlane.f32.xlu0 %v415
        %v417 = vpop.xlane.xlu0 %416
        %v418 = vsel %vm406, %v417, %v211
        %s419 = scalar_lea.vmem [#allocation2], 17
        %v420 = vld [vmem:[%s419] ss:$0 sm:$0xff]
        %v421 = vxor.u32 %v420, 2147483648
        %v422 = vlaneseq
        %v423 = vand.u32 %v422, 127
        %vm424 = vcmp.eq.s32.totalorder %v423, 17
        %v425 = vmul.f32 %v421, %v410
        %426 = vadd.xlane.f32.xlu0 %v425
        %v427 = vpop.xlane.xlu0 %426
        %v428 = vsel %vm424, %v427, %v410
        %v429 = vmul.f32 %v421, %v414
        %430 = vadd.xlane.f32.xlu0 %v429
        %v431 = vpop.xlane.xlu0 %430
        %v432 = vsel %vm424, %v431, %v414
        %v433 = vmul.f32 %v421, %v418
        %434 = vadd.xlane.f32.xlu0 %v433
        %v435 = vpop.xlane.xlu0 %434
        %v436 = vsel %vm424, %v435, %v418
        %s437 = scalar_lea.vmem [#allocation2], 18
        %v438 = vld [vmem:[%s437] ss:$0 sm:$0xff]
        %v439 = vxor.u32 %v438, 2147483648
        %v440 = vlaneseq
        %v441 = vand.u32 %v440, 127
        %vm442 = vcmp.eq.s32.totalorder %v441, 18
        %v443 = vmul.f32 %v439, %v428
        %444 = vadd.xlane.f32.xlu0 %v443
        %v445 = vpop.xlane.xlu0 %444
        %v446 = vsel %vm442, %v445, %v428
        %v447 = vmul.f32 %v439, %v432
        %448 = vadd.xlane.f32.xlu0 %v447
        %v449 = vpop.xlane.xlu0 %448
        %v450 = vsel %vm442, %v449, %v432
        %v451 = vmul.f32 %v439, %v436
        %452 = vadd.xlane.f32.xlu0 %v451
        %v453 = vpop.xlane.xlu0 %452
        %v454 = vsel %vm442, %v453, %v436
        %s455 = scalar_lea.vmem [#allocation2], 19
        %v456 = vld [vmem:[%s455] ss:$0 sm:$0xff]
        %v457 = vxor.u32 %v456, 2147483648
        %v458 = vlaneseq
        %v459 = vand.u32 %v458, 127
        %vm460 = vcmp.eq.s32.totalorder %v459, 19
        %v461 = vmul.f32 %v457, %v446
        %462 = vadd.xlane.f32.xlu0 %v461
        %v463 = vpop.xlane.xlu0 %462
        %v464 = vsel %vm460, %v463, %v446
        %v465 = vmul.f32 %v457, %v450
        %466 = vadd.xlane.f32.xlu0 %v465
        %v467 = vpop.xlane.xlu0 %466
        %v468 = vsel %vm460, %v467, %v450
        %v469 = vmul.f32 %v457, %v454
        %470 = vadd.xlane.f32.xlu0 %v469
        %v471 = vpop.xlane.xlu0 %470
        %v472 = vsel %vm460, %v471, %v454
        %s473 = scalar_lea.vmem [#allocation2], 20
        %v474 = vld [vmem:[%s473] ss:$0 sm:$0xff]
        %v475 = vxor.u32 %v474, 2147483648
        %v476 = vlaneseq
        %v477 = vand.u32 %v476, 127
        %vm478 = vcmp.eq.s32.totalorder %v477, 20
        %v479 = vmul.f32 %v475, %v464
        %480 = vadd.xlane.f32.xlu0 %v479
        %v481 = vpop.xlane.xlu0 %480
        %v482 = vsel %vm478, %v481, %v464
        %v483 = vmul.f32 %v475, %v468
        %484 = vadd.xlane.f32.xlu0 %v483
        %v485 = vpop.xlane.xlu0 %484
        %v486 = vsel %vm478, %v485, %v468
        %v487 = vmul.f32 %v475, %v472
        %488 = vadd.xlane.f32.xlu0 %v487
        %v489 = vpop.xlane.xlu0 %488
        %v490 = vsel %vm478, %v489, %v472
        %s491 = scalar_lea.vmem [#allocation2], 21
        %v492 = vld [vmem:[%s491] ss:$0 sm:$0xff]
        %v493 = vxor.u32 %v492, 2147483648
        %v494 = vlaneseq
        %v495 = vand.u32 %v494, 127
        %vm496 = vcmp.eq.s32.totalorder %v495, 21
        %v497 = vmul.f32 %v493, %v482
        %498 = vadd.xlane.f32.xlu0 %v497
        %v499 = vpop.xlane.xlu0 %498
        %v500 = vsel %vm496, %v499, %v482
        %v501 = vmul.f32 %v493, %v486
        %502 = vadd.xlane.f32.xlu0 %v501
        %v503 = vpop.xlane.xlu0 %502
        %v504 = vsel %vm496, %v503, %v486
        %v505 = vmul.f32 %v493, %v490
        %506 = vadd.xlane.f32.xlu0 %v505
        %v507 = vpop.xlane.xlu0 %506
        %v508 = vsel %vm496, %v507, %v490
        %s509 = scalar_lea.vmem [#allocation2], 22
        %v510 = vld [vmem:[%s509] ss:$0 sm:$0xff]
        %v511 = vxor.u32 %v510, 2147483648
        %v512 = vlaneseq
        %v513 = vand.u32 %v512, 127
        %vm514 = vcmp.eq.s32.totalorder %v513, 22
        %v515 = vmul.f32 %v511, %v500
        %516 = vadd.xlane.f32.xlu0 %v515
        %v517 = vpop.xlane.xlu0 %516
        %v518 = vsel %vm514, %v517, %v500
        %v519 = vmul.f32 %v511, %v504
        %520 = vadd.xlane.f32.xlu0 %v519
        %v521 = vpop.xlane.xlu0 %520
        %v522 = vsel %vm514, %v521, %v504
        %v523 = vmul.f32 %v511, %v508
        %524 = vadd.xlane.f32.xlu0 %v523
        %v525 = vpop.xlane.xlu0 %524
        %v526 = vsel %vm514, %v525, %v508
        %s527 = scalar_lea.vmem [#allocation2], 23
        %v528 = vld [vmem:[%s527] ss:$0 sm:$0xff]
        %v529 = vxor.u32 %v528, 2147483648
        %v530 = vlaneseq
        %v531 = vand.u32 %v530, 127
        %vm532 = vcmp.eq.s32.totalorder %v531, 23
        %v533 = vmul.f32 %v529, %v518
        %534 = vadd.xlane.f32.xlu0 %v533
        %v535 = vpop.xlane.xlu0 %534
        %v536 = vsel %vm532, %v535, %v518
        %v537 = vmul.f32 %v529, %v522
        %538 = vadd.xlane.f32.xlu0 %v537
        %v539 = vpop.xlane.xlu0 %538
        %v540 = vsel %vm532, %v539, %v522
        %v541 = vmul.f32 %v529, %v526
        %542 = vadd.xlane.f32.xlu0 %v541
        %v543 = vpop.xlane.xlu0 %542
        %v544 = vsel %vm532, %v543, %v526
        %s545 = scalar_lea.vmem [#allocation2], 24
        %v546 = vld [vmem:[%s545] ss:$0 sm:$0xff]
        %v547 = vxor.u32 %v546, 2147483648
        %v548 = vlaneseq
        %v549 = vand.u32 %v548, 127
        %vm550 = vcmp.eq.s32.totalorder %v549, 24
        %v551 = vmul.f32 %v547, %v536
        %552 = vadd.xlane.f32.xlu0 %v551
        %v553 = vpop.xlane.xlu0 %552
        %v554 = vsel %vm550, %v553, %v536
        %v555 = vmul.f32 %v547, %v540
        %556 = vadd.xlane.f32.xlu0 %v555
        %v557 = vpop.xlane.xlu0 %556
        %v558 = vsel %vm550, %v557, %v540
        %v559 = vmul.f32 %v547, %v544
        %560 = vadd.xlane.f32.xlu0 %v559
        %v561 = vpop.xlane.xlu0 %560
        %v562 = vsel %vm550, %v561, %v544
        %v563 = vmul.f32 %v547, %v218
        %564 = vadd.xlane.f32.xlu0 %v563
        %v565 = vpop.xlane.xlu0 %564
        %v566 = vsel %vm550, %v565, %v218
        %s567 = scalar_lea.vmem [#allocation2], 25
        %v568 = vld [vmem:[%s567] ss:$0 sm:$0xff]
        %v569 = vxor.u32 %v568, 2147483648
        %v570 = vlaneseq
        %v571 = vand.u32 %v570, 127
        %vm572 = vcmp.eq.s32.totalorder %v571, 25
        %v573 = vmul.f32 %v569, %v554
        %574 = vadd.xlane.f32.xlu0 %v573
        %v575 = vpop.xlane.xlu0 %574
        %v576 = vsel %vm572, %v575, %v554
        %v577 = vmul.f32 %v569, %v558
        %578 = vadd.xlane.f32.xlu0 %v577
        %v579 = vpop.xlane.xlu0 %578
        %v580 = vsel %vm572, %v579, %v558
        %v581 = vmul.f32 %v569, %v562
        %582 = vadd.xlane.f32.xlu0 %v581
        %v583 = vpop.xlane.xlu0 %582
        %v584 = vsel %vm572, %v583, %v562
        %v585 = vmul.f32 %v569, %v566
        %586 = vadd.xlane.f32.xlu0 %v585
        %v587 = vpop.xlane.xlu0 %586
        %v588 = vsel %vm572, %v587, %v566
        %s589 = scalar_lea.vmem [#allocation2], 26
        %v590 = vld [vmem:[%s589] ss:$0 sm:$0xff]
        %v591 = vxor.u32 %v590, 2147483648
        %v592 = vlaneseq
        %v593 = vand.u32 %v592, 127
        %vm594 = vcmp.eq.s32.totalorder %v593, 26
        %v595 = vmul.f32 %v591, %v576
        %596 = vadd.xlane.f32.xlu0 %v595
        %v597 = vpop.xlane.xlu0 %596
        %v598 = vsel %vm594, %v597, %v576
        %v599 = vmul.f32 %v591, %v580
        %600 = vadd.xlane.f32.xlu0 %v599
        %v601 = vpop.xlane.xlu0 %600
        %v602 = vsel %vm594, %v601, %v580
        %v603 = vmul.f32 %v591, %v584
        %604 = vadd.xlane.f32.xlu0 %v603
        %v605 = vpop.xlane.xlu0 %604
        %v606 = vsel %vm594, %v605, %v584
        %v607 = vmul.f32 %v591, %v588
        %608 = vadd.xlane.f32.xlu0 %v607
        %v609 = vpop.xlane.xlu0 %608
        %v610 = vsel %vm594, %v609, %v588
        %s611 = scalar_lea.vmem [#allocation2], 27
        %v612 = vld [vmem:[%s611] ss:$0 sm:$0xff]
        %v613 = vxor.u32 %v612, 2147483648
        %v614 = vlaneseq
        %v615 = vand.u32 %v614, 127
        %vm616 = vcmp.eq.s32.totalorder %v615, 27
        %v617 = vmul.f32 %v613, %v598
        %618 = vadd.xlane.f32.xlu0 %v617
        %v619 = vpop.xlane.xlu0 %618
        %v620 = vsel %vm616, %v619, %v598
        %v621 = vmul.f32 %v613, %v602
        %622 = vadd.xlane.f32.xlu0 %v621
        %v623 = vpop.xlane.xlu0 %622
        %v624 = vsel %vm616, %v623, %v602
        %v625 = vmul.f32 %v613, %v606
        %626 = vadd.xlane.f32.xlu0 %v625
        %v627 = vpop.xlane.xlu0 %626
        %v628 = vsel %vm616, %v627, %v606
        %v629 = vmul.f32 %v613, %v610
        %630 = vadd.xlane.f32.xlu0 %v629
        %v631 = vpop.xlane.xlu0 %630
        %v632 = vsel %vm616, %v631, %v610
        %s633 = scalar_lea.vmem [#allocation2], 28
        %v634 = vld [vmem:[%s633] ss:$0 sm:$0xff]
        %v635 = vxor.u32 %v634, 2147483648
        %v636 = vlaneseq
        %v637 = vand.u32 %v636, 127
        %vm638 = vcmp.eq.s32.totalorder %v637, 28
        %v639 = vmul.f32 %v635, %v620
        %640 = vadd.xlane.f32.xlu0 %v639
        %v641 = vpop.xlane.xlu0 %640
        %v642 = vsel %vm638, %v641, %v620
        %v643 = vmul.f32 %v635, %v624
        %644 = vadd.xlane.f32.xlu0 %v643
        %v645 = vpop.xlane.xlu0 %644
        %v646 = vsel %vm638, %v645, %v624
        %v647 = vmul.f32 %v635, %v628
        %648 = vadd.xlane.f32.xlu0 %v647
        %v649 = vpop.xlane.xlu0 %648
        %v650 = vsel %vm638, %v649, %v628
        %v651 = vmul.f32 %v635, %v632
        %652 = vadd.xlane.f32.xlu0 %v651
        %v653 = vpop.xlane.xlu0 %652
        %v654 = vsel %vm638, %v653, %v632
        %s655 = scalar_lea.vmem [#allocation2], 29
        %v656 = vld [vmem:[%s655] ss:$0 sm:$0xff]
        %v657 = vxor.u32 %v656, 2147483648
        %v658 = vlaneseq
        %v659 = vand.u32 %v658, 127
        %vm660 = vcmp.eq.s32.totalorder %v659, 29
        %v661 = vmul.f32 %v657, %v642
        %662 = vadd.xlane.f32.xlu0 %v661
        %v663 = vpop.xlane.xlu0 %662
        %v664 = vsel %vm660, %v663, %v642
        %v665 = vmul.f32 %v657, %v646
        %666 = vadd.xlane.f32.xlu0 %v665
        %v667 = vpop.xlane.xlu0 %666
        %v668 = vsel %vm660, %v667, %v646
        %v669 = vmul.f32 %v657, %v650
        %670 = vadd.xlane.f32.xlu0 %v669
        %v671 = vpop.xlane.xlu0 %670
        %v672 = vsel %vm660, %v671, %v650
        %v673 = vmul.f32 %v657, %v654
        %674 = vadd.xlane.f32.xlu0 %v673
        %v675 = vpop.xlane.xlu0 %674
        %v676 = vsel %vm660, %v675, %v654
        %s677 = scalar_lea.vmem [#allocation2], 30
        %v678 = vld [vmem:[%s677] ss:$0 sm:$0xff]
        %v679 = vxor.u32 %v678, 2147483648
        %v680 = vlaneseq
        %v681 = vand.u32 %v680, 127
        %vm682 = vcmp.eq.s32.totalorder %v681, 30
        %v683 = vmul.f32 %v679, %v664
        %684 = vadd.xlane.f32.xlu0 %v683
        %v685 = vpop.xlane.xlu0 %684
        %v686 = vsel %vm682, %v685, %v664
        %v687 = vmul.f32 %v679, %v668
        %688 = vadd.xlane.f32.xlu0 %v687
        %v689 = vpop.xlane.xlu0 %688
        %v690 = vsel %vm682, %v689, %v668
        %v691 = vmul.f32 %v679, %v672
        %692 = vadd.xlane.f32.xlu0 %v691
        %v693 = vpop.xlane.xlu0 %692
        %v694 = vsel %vm682, %v693, %v672
        %v695 = vmul.f32 %v679, %v676
        %696 = vadd.xlane.f32.xlu0 %v695
        %v697 = vpop.xlane.xlu0 %696
        %v698 = vsel %vm682, %v697, %v676
        %s699 = scalar_lea.vmem [#allocation2], 31
        %v700 = vld [vmem:[%s699] ss:$0 sm:$0xff]
        %v701 = vxor.u32 %v700, 2147483648
        %v702 = vlaneseq
        %v703 = vand.u32 %v702, 127
        %vm704 = vcmp.eq.s32.totalorder %v703, 31
        %v705 = vmul.f32 %v701, %v686
        %706 = vadd.xlane.f32.xlu0 %v705
        %v707 = vpop.xlane.xlu0 %706
        %v708 = vsel %vm704, %v707, %v686
        %v709 = vmul.f32 %v701, %v690
        %710 = vadd.xlane.f32.xlu0 %v709
        %v711 = vpop.xlane.xlu0 %710
        %v712 = vsel %vm704, %v711, %v690
        %v713 = vmul.f32 %v701, %v694
        %714 = vadd.xlane.f32.xlu0 %v713
        %v715 = vpop.xlane.xlu0 %714
        %v716 = vsel %vm704, %v715, %v694
        %v717 = vmul.f32 %v701, %v698
        %718 = vadd.xlane.f32.xlu0 %v717
        %v719 = vpop.xlane.xlu0 %718
        %v720 = vsel %vm704, %v719, %v698
        %v721 = vrcp.pop %v132
        %v722 = vmul.f32 %v708, %v721
        %vm723 = vweird.f32 %v132
        %v724 = vsel %vm723, %v708, %v722
        %725 = vst [vmem:[%s121] sm:$0xff] %v724
        %v726 = vrcp.pop %v148
        %v727 = vmul.f32 %v712, %v726
        %vm728 = vweird.f32 %v148
        %v729 = vsel %vm728, %v712, %v727
        %s730 = scalar_lea.vmem %s121, 8 [#allocation1]
        %731 = vst [vmem:[%s730] sm:$0xff] %v729
        %v732 = vrcp.pop %v164
        %v733 = vmul.f32 %v716, %v732
        %vm734 = vweird.f32 %v164
        %v735 = vsel %vm734, %v716, %v733
        %s736 = scalar_lea.vmem %s121, 16 [#allocation1]
        %737 = vst [vmem:[%s736] sm:$0xff] %v735
        %v738 = vrcp.pop %v180
        %v739 = vmul.f32 %v720, %v738
        %vm740 = vweird.f32 %v180
        %v741 = vsel %vm740, %v720, %v739
        %s742 = scalar_lea.vmem %s121, 24 [#allocation1]
        %743 = vst [vmem:[%s742] sm:$0xff] %v741
        %s744 = sand.u32 %s8, 1
        %s745 = sand.u32 %s8, 1
        %s746 = smul.addr %s745, 32
        %s747 = scalar_lea.vmem [#allocation1], %s746
        %s748 = sadd.s32 %s17, %s16
        %s749 = smul.addr %s15, 4
        %s750 = sadd.s32 %s748, %s749
        %s751 = smul.addr %s14, 4
        %s752 = sadd.s32 %s750, %s751
        %s753 = smul.addr %s752, 8
        %s754 = scalar_lea.vmem %s1, %s753
        // Predicated region
        $region55: #{custom-call.56} parent=53 // pred_check
          _
        $region56: #{custom-call.56} parent=53 // pred_check_branch
          %756 = sbr.rel (0) target = $region58
        $region57: #{custom-call.56} parent=53 // pred_region
          // Predicated region
          $region59: #{custom-call.56} parent=57 // pred_check
            _
          $region60: #{custom-call.56} parent=57 // pred_check_branch
            %758 = sbr.rel (0) target = $region62
          $region61: #{custom-call.56} parent=57 // pred_region
            // Predicated region
            $region74: #{custom-call.56} parent=61 // pred_check
              _
            $region75: #{custom-call.56} parent=61 // pred_check_branch
              %779 = sbr.rel (0) target = $region77
            $region76: #{custom-call.56} parent=61 // pred_region
              loop: start=0, step=1, limit=1
              $region78: #{custom-call.56} parent=76 // loop_pre_header
                _
              $region79: #{custom-call.56} parent=76 // loop_header
                %s781 = sphi 0, %s785
                %p782 = scmp.ge.s32.totalorder %s781, 1
                %s786 = sphi %s747, %s747
                %s787 = sphi %s754, %s754
              $region80: #{custom-call.56} parent=76 // loop_header_branch
                %784 = sbr.rel (%p782) target = $region84
              $region81: #{custom-call.56} parent=76 // loop_body
                %v788 = vld [vmem:[%s786] sm:$0xff]
                %789 = vst [vmem:[%s787] sm:$0xff] %v788
                %v790 = vld [vmem:[%s786 + $0x8] sm:$0xff]
                %791 = vst [vmem:[%s787 + $0x8] sm:$0xff] %v790
                %v792 = vld [vmem:[%s786 + $0x10] sm:$0xff]
                %793 = vst [vmem:[%s787 + $0x10] sm:$0xff] %v792
                %v794 = vld [vmem:[%s786 + $0x18] sm:$0xff]
                %795 = vst [vmem:[%s787 + $0x18] sm:$0xff] %v794
              $region82: #{custom-call.56} parent=76 // loop_footer
                %s785 = sadd.s32 1, %s781
              $region83: #{custom-call.56} parent=76 // loop_footer_branch
                %780 = sbr.rel target = $region79
              $region84: #{custom-call.56} parent=76 // loop_exit
                _
            $region77: #{custom-call.56} parent=61 // pred_fallthru
              _
            // Predicated region
            $region85: #{custom-call.56} parent=61 // pred_check
              _
            $region86: #{custom-call.56} parent=61 // pred_check_branch
              %797 = sbr.rel target = $region88
            $region87: #{custom-call.56} parent=61 // pred_region
              _
            $region88: #{custom-call.56} parent=61 // pred_fallthru
              _
          $region62: #{custom-call.56} parent=57 // pred_fallthru
            _
          // Predicated region
          $region63: #{custom-call.56} parent=57 // pred_check
            _
          $region64: #{custom-call.56} parent=57 // pred_check_branch
            %760 = sbr.rel target = $region66
          $region65: #{custom-call.56} parent=57 // pred_region
            loop: start=0, step=1, limit=1
            $region67: #{custom-call.56} parent=65 // loop_pre_header
              _
            $region68: #{custom-call.56} parent=65 // loop_header
              %s763 = sphi 0, %s767
              %p764 = scmp.ge.s32.totalorder %s763, 1
              %s768 = sphi %s747, %s747
              %s769 = sphi %s754, %s754
            $region69: #{custom-call.56} parent=65 // loop_header_branch
              %766 = sbr.rel (%p764) target = $region73
            $region70: #{custom-call.56} parent=65 // loop_body
              %v770 = vld [vmem:[%s768] sm:$0xff]
              %771 = vst [vmem:[%s769] sm:$0xff] %v770
              %v772 = vld [vmem:[%s768 + $0x8] sm:$0xff]
              %773 = vst [vmem:[%s769 + $0x8] sm:$0xff] %v772
              %v774 = vld [vmem:[%s768 + $0x10] sm:$0xff]
              %775 = vst [vmem:[%s769 + $0x10] sm:$0xff] %v774
              %v776 = vld [vmem:[%s768 + $0x18] sm:$0xff]
              %777 = vst [vmem:[%s769 + $0x18] sm:$0xff] %v776
            $region71: #{custom-call.56} parent=65 // loop_footer
              %s767 = sadd.s32 1, %s763
            $region72: #{custom-call.56} parent=65 // loop_footer_branch
              %762 = sbr.rel target = $region68
            $region73: #{custom-call.56} parent=65 // loop_exit
              _
          $region66: #{custom-call.56} parent=57 // pred_fallthru
            _
        $region58: #{custom-call.56} parent=53 // pred_fallthru
          _
        %798 = vnop
      $region54: #{custom-call.56} parent=5 // pred_fallthru
        _
      %p799 = scmp.le.s32.totalorder 2, %s3
      // Predicated region
      $region89: #{custom-call.56} parent=5 // pred_check
        %p800 = pneg %p799
      $region90: #{custom-call.56} parent=5 // pred_check_branch
        %802 = sbr.rel (%p800) target = $region92
      $region91: #{custom-call.56} parent=5 // pred_region
        %s803 = ssub.s32 %s3, 2
        %s804 = sand.u32 %s9, 1
        %s805 = sand.u32 %s9, 1
        %s806 = smul.addr %s805, 32
        %s807 = scalar_lea.vmem [#allocation1], %s806
      $region92: #{custom-call.56} parent=5 // pred_fallthru
        _
    $region6: #{custom-call.56} parent=1 // loop_footer
      %s7 = sadd.s32 1, %s3
    $region7: #{custom-call.56} parent=1 // loop_footer_branch
      %2 = sbr.rel target = $region3
    $region8: #{custom-call.56} parent=1 // loop_exit
      _

// kernel: custom-call.22
$region0: #{custom-call.22}
  %s0 = inlined_call_operand.vmem [shape: f32[2,16,16], index: 0, kind: input, shape index: {}]
  %s1 = inlined_call_operand.vmem [shape: f32[2,16,16], index: 1, kind: input, shape index: {}]
  %s2 = inlined_call_operand.vmem [shape: f32[2,16,16], index: 2, kind: input, shape index: {}]
  %s3 = inlined_call_operand.vmem [shape: f32[2,16,16], index: 3, kind: input, shape index: {}]
  %s4 = inlined_call_operand.vmem [shape: f32[2,16], index: 4, kind: output, shape index: {0}]
  %s5 = inlined_call_operand.vmem [shape: f32[2,16], index: 5, kind: output, shape index: {1}]
  %s6 = inlined_call_operand.vmem [shape: f32[2,16,16], index: 6, kind: output, shape index: {2}]
  %s7 = inlined_call_operand.vmem [shape: f32[2,16,16], index: 7, kind: output, shape index: {3}]
  %s8 = inlined_call_operand.vmem [shape: f32[2,16,16], index: 8, kind: output, shape index: {4}]
  %s9 = inlined_call_operand.vmem [shape: f32[2,16,16], index: 9, kind: output, shape index: {5}]
  %10 = xla_tuple %s4, %s5, %s6, %s7, %s8, %s9
  $region1: #{custom-call.22} parent=0
    #allocation0 [shape = 'u8[16384]{0}', space=vmem, size = 0x4000, scoped, tag = 'operand span for operand 0']
    #allocation1 [shape = 'u8[16384]{0}', space=vmem, size = 0x4000, scoped, tag = 'operand span for operand 1']
    #allocation2 [shape = 'u8[16384]{0}', space=vmem, size = 0x4000, scoped, tag = 'operand span for operand 2']
    #allocation3 [shape = 'u8[16384]{0}', space=vmem, size = 0x4000, scoped, tag = 'operand span for operand 3']
    #allocation4 [shape = 'u8[4096]{0}', space=vmem, size = 0x1000, scoped, tag = 'operand span for operand 4']
    #allocation5 [shape = 'u8[2048]{0}', space=vmem, size = 0x800, scoped, tag = 'packed  for operand 4']
    #allocation6 [shape = 'u8[4096]{0}', space=vmem, size = 0x1000, scoped, tag = 'operand span for operand 5']
    #allocation7 [shape = 'u8[2048]{0}', space=vmem, size = 0x800, scoped, tag = 'packed  for operand 5']
    #allocation8 [shape = 'u8[16384]{0}', space=vmem, size = 0x4000, scoped, tag = 'operand span for operand 6']
    #allocation9 [shape = 'u8[16384]{0}', space=vmem, size = 0x4000, scoped, tag = 'operand span for operand 7']
    #allocation10 [shape = 'u8[16384]{0}', space=vmem, size = 0x4000, scoped, tag = 'operand span for operand 8']
    #allocation11 [shape = 'u8[16384]{0}', space=vmem, size = 0x4000, scoped, tag = 'operand span for operand 9']
    loop: start=0, step=1, limit=4
    $region2: #{custom-call.22} parent=1 // loop_pre_header
      _
    $region3: #{custom-call.22} parent=1 // loop_header
      %s12 = sphi 0, %s16
      %p13 = scmp.ge.s32.totalorder %s12, 4
      %s24 = sphi 0, %s26
      %s27 = sphi 0, %s24
      %s28 = sphi 0, %s27
      %s44 = sphi 0, %s28
      %s52 = sphi 0, %s54
      %s55 = sphi 0, %s52
      %s56 = sphi 0, %s55
      %s72 = sphi 0, %s56
    $region4: #{custom-call.22} parent=1 // loop_header_branch
      %15 = sbr.rel (%p13) target = $region8
    $region5: #{custom-call.22} parent=1 // loop_body
      %s17 = ssub.s32 %s12, 1
      %s18 = ssub.s32 %s12, 2
      %s19 = sadd.s32 %s12, 1
      %s20 = sshrl.u32 %s12, 3
      %s21 = sshrl.u32 %s19, 3
      %s22 = ssub.s32 %s20, %s21
      %p23 = scmp.eq.s32.totalorder %s22, 0
      %s25 = sadd.s32 %s24, 1
      %s26 = scalar_select %p23, %s24, %s25
      %p29 = pneg %p23
      %p30 = scmp.eq.s32.totalorder %s12, 1
      %p31 = por %p29, %p30
      %p32 = scmp.ne.s32.totalorder %s24, %s27
      %p33 = scmp.eq.s32.totalorder %s12, 0
      %p34 = por %p32, %p33
      %p35 = scmp.ne.s32.totalorder %s24, %s27
      %p36 = scmp.eq.s32.totalorder %s17, 1
      %p37 = por %p35, %p36
      %p38 = scmp.ne.s32.totalorder %s27, %s28
      %p39 = scmp.eq.s32.totalorder %s17, 0
      %p40 = por %p38, %p39
      %p41 = scmp.ne.s32.totalorder %s27, %s28
      %p42 = scmp.eq.s32.totalorder %s18, 1
      %p43 = por %p41, %p42
      %p45 = scmp.ne.s32.totalorder %s28, %s44
      %p46 = scmp.eq.s32.totalorder %s18, 0
      %p47 = por %p45, %p46
      %s48 = sshrl.u32 %s12, 3
      %s49 = sshrl.u32 %s19, 3
      %s50 = ssub.s32 %s48, %s49
      %p51 = scmp.eq.s32.totalorder %s50, 0
      %s53 = sadd.s32 %s52, 1
      %s54 = scalar_select %p51, %s52, %s53
      %p57 = pneg %p51
      %p58 = scmp.eq.s32.totalorder %s12, 1
      %p59 = por %p57, %p58
      %p60 = scmp.ne.s32.totalorder %s52, %s55
      %p61 = scmp.eq.s32.totalorder %s12, 0
      %p62 = por %p60, %p61
      %p63 = scmp.ne.s32.totalorder %s52, %s55
      %p64 = scmp.eq.s32.totalorder %s17, 1
      %p65 = por %p63, %p64
      %p66 = scmp.ne.s32.totalorder %s55, %s56
      %p67 = scmp.eq.s32.totalorder %s17, 0
      %p68 = por %p66, %p67
      %p69 = scmp.ne.s32.totalorder %s55, %s56
      %p70 = scmp.eq.s32.totalorder %s18, 1
      %p71 = por %p69, %p70
      %p73 = scmp.ne.s32.totalorder %s56, %s72
      %p74 = scmp.eq.s32.totalorder %s18, 0
      %p75 = por %p73, %p74
      %p76 = scmp.le.s32.totalorder 1, %s12
      %p77 = scmp.lt.s32.totalorder %s12, 3
      %p78 = pnand %p76, %p77
      %p79 = pneg %p78
      // Predicated region
      $region9: #{custom-call.22} parent=5 // pred_check
        _
      $region10: #{custom-call.22} parent=5 // pred_check_branch
        %81 = sbr.rel (%p78) target = $region12
      $region11: #{custom-call.22} parent=5 // pred_region
        %s82 = ssub.s32 %s12, 1
      $region12: #{custom-call.22} parent=5 // pred_fallthru
        _
      %p83 = scmp.lt.s32.totalorder %s12, 2
      // Predicated region
      $region13: #{custom-call.22} parent=5 // pred_check
        %p84 = pneg %p83
      $region14: #{custom-call.22} parent=5 // pred_check_branch
        %86 = sbr.rel (%p84) target = $region16
      $region15: #{custom-call.22} parent=5 // pred_region
        %s87 = sand.u32 %s12, 1
        %s88 = sand.u32 %s12, 1
        %s89 = smul.addr %s88, 16
        %s90 = scalar_lea.vmem [#allocation0], %s89
        %s91 = smul.addr %s12, 16
        %s92 = scalar_lea.vmem %s0, %s91
        // Predicated region
        $region17: #{custom-call.22} parent=15 // pred_check
          _
        $region18: #{custom-call.22} parent=15 // pred_check_branch
          %94 = sbr.rel (0) target = $region20
        $region19: #{custom-call.22} parent=15 // pred_region
          // Predicated region
          $region21: #{custom-call.22} parent=19 // pred_check
            _
          $region22: #{custom-call.22} parent=19 // pred_check_branch
            %96 = sbr.rel (0) target = $region24
          $region23: #{custom-call.22} parent=19 // pred_region
            loop: start=0, step=1, limit=1
            $region25: #{custom-call.22} parent=23 // loop_pre_header
              _
            $region26: #{custom-call.22} parent=23 // loop_header
              %s98 = sphi 0, %s102
              %p99 = scmp.ge.s32.totalorder %s98, 1
              %s103 = sphi %s92, %s92
              %s104 = sphi %s90, %s90
            $region27: #{custom-call.22} parent=23 // loop_header_branch
              %101 = sbr.rel (%p99) target = $region31
            $region28: #{custom-call.22} parent=23 // loop_body
              %v105 = vld [vmem:[%s103] sm:$0xff]
              %106 = vst [vmem:[%s104] sm:$0xff] %v105
              %v107 = vld [vmem:[%s103 + $0x8] sm:$0xff]
              %108 = vst [vmem:[%s104 + $0x8] sm:$0xff] %v107
            $region29: #{custom-call.22} parent=23 // loop_footer
              %s102 = sadd.s32 1, %s98
            $region30: #{custom-call.22} parent=23 // loop_footer_branch
              %97 = sbr.rel target = $region26
            $region31: #{custom-call.22} parent=23 // loop_exit
              _
          $region24: #{custom-call.22} parent=19 // pred_fallthru
            _
          // Predicated region
          $region32: #{custom-call.22} parent=19 // pred_check
            _
          $region33: #{custom-call.22} parent=19 // pred_check_branch
            %110 = sbr.rel target = $region35
          $region34: #{custom-call.22} parent=19 // pred_region
            _
          $region35: #{custom-call.22} parent=19 // pred_fallthru
            _
        $region20: #{custom-call.22} parent=15 // pred_fallthru
          _
        %111 = vnop
        %s112 = sand.u32 %s12, 1
        %s113 = sand.u32 %s12, 1
        %s114 = smul.addr %s113, 16
        %s115 = scalar_lea.vmem [#allocation1], %s114
        %s116 = smul.addr %s12, 16
        %s117 = scalar_lea.vmem %s1, %s116
        // Predicated region
        $region36: #{custom-call.22} parent=15 // pred_check
          _
        $region37: #{custom-call.22} parent=15 // pred_check_branch
          %119 = sbr.rel (0) target = $region39
        $region38: #{custom-call.22} parent=15 // pred_region
          // Predicated region
          $region40: #{custom-call.22} parent=38 // pred_check
            _
          $region41: #{custom-call.22} parent=38 // pred_check_branch
            %121 = sbr.rel (0) target = $region43
          $region42: #{custom-call.22} parent=38 // pred_region
            loop: start=0, step=1, limit=1
            $region44: #{custom-call.22} parent=42 // loop_pre_header
              _
            $region45: #{custom-call.22} parent=42 // loop_header
              %s123 = sphi 0, %s127
              %p124 = scmp.ge.s32.totalorder %s123, 1
              %s128 = sphi %s117, %s117
              %s129 = sphi %s115, %s115
            $region46: #{custom-call.22} parent=42 // loop_header_branch
              %126 = sbr.rel (%p124) target = $region50
            $region47: #{custom-call.22} parent=42 // loop_body
              %v130 = vld [vmem:[%s128] sm:$0xff]
              %131 = vst [vmem:[%s129] sm:$0xff] %v130
              %v132 = vld [vmem:[%s128 + $0x8] sm:$0xff]
              %133 = vst [vmem:[%s129 + $0x8] sm:$0xff] %v132
            $region48: #{custom-call.22} parent=42 // loop_footer
              %s127 = sadd.s32 1, %s123
            $region49: #{custom-call.22} parent=42 // loop_footer_branch
              %122 = sbr.rel target = $region45
            $region50: #{custom-call.22} parent=42 // loop_exit
              _
          $region43: #{custom-call.22} parent=38 // pred_fallthru
            _
          // Predicated region
          $region51: #{custom-call.22} parent=38 // pred_check
            _
          $region52: #{custom-call.22} parent=38 // pred_check_branch
            %135 = sbr.rel target = $region54
          $region53: #{custom-call.22} parent=38 // pred_region
            _
          $region54: #{custom-call.22} parent=38 // pred_fallthru
            _
        $region39: #{custom-call.22} parent=15 // pred_fallthru
          _
        %136 = vnop
        %s137 = sand.u32 %s12, 1
        %s138 = sand.u32 %s12, 1
        %s139 = smul.addr %s138, 16
        %s140 = scalar_lea.vmem [#allocation2], %s139
        %s141 = smul.addr %s12, 16
        %s142 = scalar_lea.vmem %s2, %s141
        // Predicated region
        $region55: #{custom-call.22} parent=15 // pred_check
          _
        $region56: #{custom-call.22} parent=15 // pred_check_branch
          %144 = sbr.rel (0) target = $region58
        $region57: #{custom-call.22} parent=15 // pred_region
          // Predicated region
          $region59: #{custom-call.22} parent=57 // pred_check
            _
          $region60: #{custom-call.22} parent=57 // pred_check_branch
            %146 = sbr.rel (0) target = $region62
          $region61: #{custom-call.22} parent=57 // pred_region
            loop: start=0, step=1, limit=1
            $region63: #{custom-call.22} parent=61 // loop_pre_header
              _
            $region64: #{custom-call.22} parent=61 // loop_header
              %s148 = sphi 0, %s152
              %p149 = scmp.ge.s32.totalorder %s148, 1
              %s153 = sphi %s142, %s142
              %s154 = sphi %s140, %s140
            $region65: #{custom-call.22} parent=61 // loop_header_branch
              %151 = sbr.rel (%p149) target = $region69
            $region66: #{custom-call.22} parent=61 // loop_body
              %v155 = vld [vmem:[%s153] sm:$0xff]
              %156 = vst [vmem:[%s154] sm:$0xff] %v155
              %v157 = vld [vmem:[%s153 + $0x8] sm:$0xff]
              %158 = vst [vmem:[%s154 + $0x8] sm:$0xff] %v157
            $region67: #{custom-call.22} parent=61 // loop_footer
              %s152 = sadd.s32 1, %s148
            $region68: #{custom-call.22} parent=61 // loop_footer_branch
              %147 = sbr.rel target = $region64
            $region69: #{custom-call.22} parent=61 // loop_exit
              _
          $region62: #{custom-call.22} parent=57 // pred_fallthru
            _
          // Predicated region
          $region70: #{custom-call.22} parent=57 // pred_check
            _
          $region71: #{custom-call.22} parent=57 // pred_check_branch
            %160 = sbr.rel target = $region73
          $region72: #{custom-call.22} parent=57 // pred_region
            _
          $region73: #{custom-call.22} parent=57 // pred_fallthru
            _
        $region58: #{custom-call.22} parent=15 // pred_fallthru
          _
        %161 = vnop
        %s162 = sand.u32 %s12, 1
        %s163 = sand.u32 %s12, 1
        %s164 = smul.addr %s163, 16
        %s165 = scalar_lea.vmem [#allocation3], %s164
        %s166 = smul.addr %s12, 16
        %s167 = scalar_lea.vmem %s3, %s166
        // Predicated region
        $region74: #{custom-call.22} parent=15 // pred_check
          _
        $region75: #{custom-call.22} parent=15 // pred_check_branch
          %169 = sbr.rel (0) target = $region77
        $region76: #{custom-call.22} parent=15 // pred_region
          // Predicated region
          $region78: #{custom-call.22} parent=76 // pred_check
            _
          $region79: #{custom-call.22} parent=76 // pred_check_branch
            %171 = sbr.rel (0) target = $region81
          $region80: #{custom-call.22} parent=76 // pred_region
            loop: start=0, step=1, limit=1
            $region82: #{custom-call.22} parent=80 // loop_pre_header
              _
            $region83: #{custom-call.22} parent=80 // loop_header
              %s173 = sphi 0, %s177
              %p174 = scmp.ge.s32.totalorder %s173, 1
              %s178 = sphi %s167, %s167
              %s179 = sphi %s165, %s165
            $region84: #{custom-call.22} parent=80 // loop_header_branch
              %176 = sbr.rel (%p174) target = $region88
            $region85: #{custom-call.22} parent=80 // loop_body
              %v180 = vld [vmem:[%s178] sm:$0xff]
              %181 = vst [vmem:[%s179] sm:$0xff] %v180
              %v182 = vld [vmem:[%s178 + $0x8] sm:$0xff]
              %183 = vst [vmem:[%s179 + $0x8] sm:$0xff] %v182
            $region86: #{custom-call.22} parent=80 // loop_footer
              %s177 = sadd.s32 1, %s173
            $region87: #{custom-call.22} parent=80 // loop_footer_branch
              %172 = sbr.rel target = $region83
            $region88: #{custom-call.22} parent=80 // loop_exit
              _
          $region81: #{custom-call.22} parent=76 // pred_fallthru
            _
          // Predicated region
          $region89: #{custom-call.22} parent=76 // pred_check
            _
          $region90: #{custom-call.22} parent=76 // pred_check_branch
            %185 = sbr.rel target = $region92
          $region91: #{custom-call.22} parent=76 // pred_region
            _
          $region92: #{custom-call.22} parent=76 // pred_fallthru
            _
        $region77: #{custom-call.22} parent=15 // pred_fallthru
          _
        %186 = vnop
      $region16: #{custom-call.22} parent=5 // pred_fallthru
        _
      %p187 = scmp.le.s32.totalorder 1, %s12
      %p188 = scmp.lt.s32.totalorder %s12, 3
      %p189 = pnand %p187, %p188
      %p190 = pneg %p189
      // Predicated region
      $region93: #{custom-call.22} parent=5 // pred_check
        _
      $region94: #{custom-call.22} parent=5 // pred_check_branch
        %192 = sbr.rel (%p189) target = $region96
      $region95: #{custom-call.22} parent=5 // pred_region
        #allocation12 [shape = 'f32[16,16]{1,0}', space=vmem, size = 0x2000, scoped, tag = 'a top-left matrix']
        #allocation13 [shape = 'f32[16,16]{1,0}', space=vmem, size = 0x2000, scoped, tag = 'a top-right matrix']
        #allocation14 [shape = 'f32[16,16]{1,0}', space=vmem, size = 0x2000, scoped, tag = 'a bottom-left matrix']
        #allocation15 [shape = 'f32[16,16]{1,0}', space=vmem, size = 0x2000, scoped, tag = 'a bottom-right matrix']
        %s193 = ssub.s32 %s12, 1
        %s194 = sand.u32 %s17, 1
        %s195 = sand.u32 %s17, 1
        %s196 = smul.addr %s195, 16
        %s197 = scalar_lea.vmem [#allocation0], %s196
        %s198 = sand.u32 %s17, 1
        %s199 = sand.u32 %s17, 1
        %s200 = smul.addr %s199, 16
        %s201 = scalar_lea.vmem [#allocation1], %s200
        %s202 = sand.u32 %s17, 1
        %s203 = sand.u32 %s17, 1
        %s204 = smul.addr %s203, 16
        %s205 = scalar_lea.vmem [#allocation2], %s204
        %s206 = sand.u32 %s17, 1
        %s207 = sand.u32 %s17, 1
        %s208 = smul.addr %s207, 16
        %s209 = scalar_lea.vmem [#allocation3], %s208
        %s210 = sand.u32 %s17, 1
        %s211 = sand.u32 %s17, 1
        %s212 = smul.addr %s211, 16
        %s213 = scalar_lea.vmem [#allocation0], %s212
        %s214 = sand.u32 %s17, 1
        %s215 = sand.u32 %s17, 1
        %s216 = smul.addr %s215, 16
        %s217 = scalar_lea.vmem [#allocation1], %s216
        %s218 = sand.u32 %s17, 1
        %s219 = sand.u32 %s17, 1
        %s220 = smul.addr %s219, 16
        %s221 = scalar_lea.vmem [#allocation2], %s220
        %s222 = sand.u32 %s17, 1
        %s223 = sand.u32 %s17, 1
        %s224 = smul.addr %s223, 16
        %s225 = scalar_lea.vmem [#allocation3], %s224
        %p226 = pneg %p40
        %p227 = pneg %p37
        %s228 = sand.u32 %s27, 1
        %s229 = sand.u32 %s27, 1
        %s230 = smul.addr %s229, 2
        %s231 = scalar_lea.vmem [#allocation5], %s230
        %p232 = pneg %p68
        %p233 = pneg %p65
        %s234 = sand.u32 %s55, 1
        %s235 = sand.u32 %s55, 1
        %s236 = smul.addr %s235, 2
        %s237 = scalar_lea.vmem [#allocation7], %s236
        %s238 = sand.u32 %s17, 1
        %s239 = sand.u32 %s17, 1
        %s240 = smul.addr %s239, 16
        %s241 = scalar_lea.vmem [#allocation8], %s240
        %s242 = sand.u32 %s17, 1
        %s243 = sand.u32 %s17, 1
        %s244 = smul.addr %s243, 16
        %s245 = scalar_lea.vmem [#allocation9], %s244
        %s246 = sand.u32 %s17, 1
        %s247 = sand.u32 %s17, 1
        %s248 = smul.addr %s247, 16
        %s249 = scalar_lea.vmem [#allocation10], %s248
        %s250 = sand.u32 %s17, 1
        %s251 = sand.u32 %s17, 1
        %s252 = smul.addr %s251, 16
        %s253 = scalar_lea.vmem [#allocation11], %s252
        %s254 = sshrl.u32 %s17, 3
        %s255 = sshrl.u32 %s17, 3
        %s256 = smov [#allocation12]
        %v257 = vld [vmem:[%s197] sm:$0xff]
        %258 = vst [vmem:[%s256] sm:$0xff] %v257
        %s259 = scalar_lea.vmem %s256, 8
        %s260 = scalar_lea.vmem %s197, 8 [#allocation0]
        %v261 = vld [vmem:[%s260] sm:$0xff]
        %262 = vst [vmem:[%s259] sm:$0xff] %v261
        %s263 = smov [#allocation13]
        %v264 = vld [vmem:[%s201] sm:$0xff]
        %265 = vst [vmem:[%s263] sm:$0xff] %v264
        %s266 = scalar_lea.vmem %s263, 8
        %s267 = scalar_lea.vmem %s201, 8 [#allocation1]
        %v268 = vld [vmem:[%s267] sm:$0xff]
        %269 = vst [vmem:[%s266] sm:$0xff] %v268
        %s270 = smov [#allocation14]
        %v271 = vld [vmem:[%s205] sm:$0xff]
        %272 = vst [vmem:[%s270] sm:$0xff] %v271
        %s273 = scalar_lea.vmem %s270, 8
        %s274 = scalar_lea.vmem %s205, 8 [#allocation2]
        %v275 = vld [vmem:[%s274] sm:$0xff]
        %276 = vst [vmem:[%s273] sm:$0xff] %v275
        %s277 = smov [#allocation15]
        %v278 = vld [vmem:[%s209] sm:$0xff]
        %279 = vst [vmem:[%s277] sm:$0xff] %v278
        %s280 = scalar_lea.vmem %s277, 8
        %s281 = scalar_lea.vmem %s209, 8 [#allocation3]
        %v282 = vld [vmem:[%s281] sm:$0xff]
        %283 = vst [vmem:[%s280] sm:$0xff] %v282
        %284 = vst [vmem:[%s241] sm:$0xff] 0.0
        %s285 = scalar_lea.vmem %s241, 8 [#allocation8]
        %286 = vst [vmem:[%s285] sm:$0xff] 0.0
        %287 = vst [vmem:[%s245] sm:$0xff] 0.0
        %s288 = scalar_lea.vmem %s245, 8 [#allocation9]
        %289 = vst [vmem:[%s288] sm:$0xff] 0.0
        %290 = vst [vmem:[%s249] sm:$0xff] 0.0
        %s291 = scalar_lea.vmem %s249, 8 [#allocation10]
        %292 = vst [vmem:[%s291] sm:$0xff] 0.0
        %293 = vst [vmem:[%s253] sm:$0xff] 0.0
        %s294 = scalar_lea.vmem %s253, 8 [#allocation11]
        %295 = vst [vmem:[%s294] sm:$0xff] 0.0
        %s296 = smov %s241
        %v297 = vlaneseq
        %v298 = vand.u32 %v297, 127
        %v299 = vmov %v298
        %v300 = vlaneseq
        %v301 = vshrl.u32 %v300, 7
        %v302 = vmov %v301
        %v303 = vld [vmem:[%s296] sm:$0xff]
        %vm306 = vcmp.eq.s32.totalorder %v302, %v299
        %v307 = vsel %vm306, 1.0, %v303
        %308 = vst [vmem:[%s296] sm:$0xff] %v307
        %s309 = scalar_lea.vmem %s296, 8
        %v310 = vld [vmem:[%s309] sm:$0xff]
        %v312 = vadd.s32 %v302, 8
        %vm313 = vcmp.eq.s32.totalorder %v312, %v299
        %v314 = vsel %vm313, 1.0, %v310
        %315 = vst [vmem:[%s309] sm:$0xff] %v314
        %s316 = smov %s253
        %v317 = vlaneseq
        %v318 = vand.u32 %v317, 127
        %v319 = vmov %v318
        %v320 = vlaneseq
        %v321 = vshrl.u32 %v320, 7
        %v322 = vmov %v321
        %v323 = vld [vmem:[%s316] sm:$0xff]
        %vm326 = vcmp.eq.s32.totalorder %v322, %v319
        %v327 = vsel %vm326, 1.0, %v323
        %328 = vst [vmem:[%s316] sm:$0xff] %v327
        %s329 = scalar_lea.vmem %s316, 8
        %v330 = vld [vmem:[%s329] sm:$0xff]
        %v332 = vadd.s32 %v322, 8
        %vm333 = vcmp.eq.s32.totalorder %v332, %v319
        %v334 = vsel %vm333, 1.0, %v330
        %335 = vst [vmem:[%s329] sm:$0xff] %v334
        // While loop
        $region97: #{custom-call.22} parent=95 // loop_pre_header
          _
        $region98: #{custom-call.22} parent=95 // loop_header
          %s337 = sphi 0, %s1235
          %v338 = vlaneseq
          %v339 = vand.u32 %v338, 127
          %v340 = vmov %v339
          %v341 = vlaneseq
          %v342 = vshrl.u32 %v341, 7
          %v343 = vmov %v342
          %s344 = smov [#allocation12]
          %v345 = vlaneseq
          %v346 = vand.u32 %v345, 127
          %vm347 = vcmp.ge.s32.totalorder %v346, 0
          %vm348 = vcmp.lt.s32.totalorder %v346, 16
          %vm349 = vmand %vm347, %vm348
          %v350 = vld [vmem:[%s344] sm:$0xff]
          %v351 = vsel %vm349, %v350, 0.0
          %v352 = vmul.f32 %v351, %v351
          %vm355 = vcmp.eq.s32.totalorder %v343, %v340
          %v356 = vsel %vm355, 0.0, %v352
          %s357 = scalar_lea.vmem %s344, 8
          %v358 = vld [vmem:[%s357] sm:$0xff]
          %v359 = vsel %vm349, %v358, 0.0
          %v360 = vmul.f32 %v359, %v359
          %v362 = vadd.s32 %v343, 8
          %vm363 = vcmp.eq.s32.totalorder %v362, %v340
          %v364 = vsel %vm363, 0.0, %v360
          %v365 = vadd.f32 %v356, %v364
          %v366 = vadd.f32 %v352, %v360
          %v367 = vlaneseq
          %v368 = vand.u32 %v367, 127
          %v369 = vmov %v368
          %v370 = vlaneseq
          %v371 = vshrl.u32 %v370, 7
          %v372 = vmov %v371
          %s373 = smov [#allocation13]
          %v374 = vlaneseq
          %v375 = vand.u32 %v374, 127
          %vm376 = vcmp.ge.s32.totalorder %v375, 0
          %vm377 = vcmp.lt.s32.totalorder %v375, 16
          %vm378 = vmand %vm376, %vm377
          %v379 = vld [vmem:[%s373] sm:$0xff]
          %v380 = vsel %vm378, %v379, 0.0
          %v381 = vmul.f32 %v380, %v380
          %v382 = vadd.f32 %v365, %v381
          %v383 = vadd.f32 %v366, %v381
          %s384 = scalar_lea.vmem %s373, 8
          %v385 = vld [vmem:[%s384] sm:$0xff]
          %v386 = vsel %vm378, %v385, 0.0
          %v387 = vmul.f32 %v386, %v386
          %v388 = vadd.f32 %v382, %v387
          %v389 = vadd.f32 %v383, %v387
          %v390 = vlaneseq
          %v391 = vand.u32 %v390, 127
          %v392 = vmov %v391
          %v393 = vlaneseq
          %v394 = vshrl.u32 %v393, 7
          %v395 = vmov %v394
          %s396 = smov [#allocation14]
          %v397 = vlaneseq
          %v398 = vand.u32 %v397, 127
          %vm399 = vcmp.ge.s32.totalorder %v398, 0
          %vm400 = vcmp.lt.s32.totalorder %v398, 16
          %vm401 = vmand %vm399, %vm400
          %v402 = vld [vmem:[%s396] sm:$0xff]
          %v403 = vsel %vm401, %v402, 0.0
          %v404 = vmul.f32 %v403, %v403
          %v405 = vadd.f32 %v388, %v404
          %v406 = vadd.f32 %v389, %v404
          %s407 = scalar_lea.vmem %s396, 8
          %v408 = vld [vmem:[%s407] sm:$0xff]
          %v409 = vsel %vm401, %v408, 0.0
          %v410 = vmul.f32 %v409, %v409
          %v411 = vadd.f32 %v405, %v410
          %v412 = vadd.f32 %v406, %v410
          %v413 = vlaneseq
          %v414 = vand.u32 %v413, 127
          %v415 = vmov %v414
          %v416 = vlaneseq
          %v417 = vshrl.u32 %v416, 7
          %v418 = vmov %v417
          %s419 = smov [#allocation15]
          %v420 = vlaneseq
          %v421 = vand.u32 %v420, 127
          %vm422 = vcmp.ge.s32.totalorder %v421, 0
          %vm423 = vcmp.lt.s32.totalorder %v421, 16
          %vm424 = vmand %vm422, %vm423
          %v425 = vld [vmem:[%s419] sm:$0xff]
          %v426 = vsel %vm424, %v425, 0.0
          %v427 = vmul.f32 %v426, %v426
          %vm430 = vcmp.eq.s32.totalorder %v418, %v415
          %v431 = vsel %vm430, 0.0, %v427
          %v432 = vadd.f32 %v411, %v431
          %v433 = vadd.f32 %v412, %v427
          %s434 = scalar_lea.vmem %s419, 8
          %v435 = vld [vmem:[%s434] sm:$0xff]
          %v436 = vsel %vm424, %v435, 0.0
          %v437 = vmul.f32 %v436, %v436
          %v439 = vadd.s32 %v418, 8
          %vm440 = vcmp.eq.s32.totalorder %v439, %v415
          %v441 = vsel %vm440, 0.0, %v437
          %v442 = vadd.f32 %v432, %v441
          %v443 = vadd.f32 %v433, %v437
          %444 = vadd.xlane.f32.xlu0 %v443
          %v445 = vpop.xlane.xlu0 %444
          %v446 = vrot.slane %v445, 4
          %v447 = vadd.f32 %v445, %v446
          %v448 = vrot.slane %v447, 2
          %v449 = vadd.f32 %v447, %v448
          %v450 = vrot.slane %v449, 1
          %v451 = vadd.f32 %v449, %v450
          %452 = vadd.xlane.f32.xlu0 %v442
          %v453 = vpop.xlane.xlu0 %452
          %v454 = vrot.slane %v453, 4
          %v455 = vadd.f32 %v453, %v454
          %v456 = vrot.slane %v455, 2
          %v457 = vadd.f32 %v455, %v456
          %v458 = vrot.slane %v457, 1
          %v459 = vadd.f32 %v457, %v458
          %s460 = vtos %v459
          %s461 = vtos %v451
          %s462 = smul.f32 1e-10, %s461
          %p463 = scmp.le.f32.partialorder %s460, %s462
          %p464 = scmp.ge.s32.totalorder %s337, 15
          %p465 = por %p463, %p464
        $region99: #{custom-call.22} parent=95 // loop_header_branch
          %1237 = sbr.rel (%p465) target = $region103
        $region100: #{custom-call.22} parent=95 // loop_body
          loop: start=0, step=1, limit=31
          $region104: #{custom-call.22} parent=100 // loop_pre_header
            _
          $region105: #{custom-call.22} parent=100 // loop_header
            %s467 = sphi 0, %s471
            %p468 = scmp.ge.s32.totalorder %s467, 31
          $region106: #{custom-call.22} parent=100 // loop_header_branch
            %470 = sbr.rel (%p468) target = $region110
          $region107: #{custom-call.22} parent=100 // loop_body
            #allocation16 [shape = 'f32[1024]{0}', space=vmem, size = 0x1000, scoped, tag = 'a_tl_diag vmem']
            #allocation17 [shape = 'f32[1024]{0}', space=vmem, size = 0x1000, scoped, tag = 'a_tr_diag vmem']
            #allocation18 [shape = 'f32[1024]{0}', space=vmem, size = 0x1000, scoped, tag = 'a_br_diag vmem']
            #allocation19 [shape = 'f32[1024]{0}', space=vmem, size = 0x1000, scoped, tag = 'rt1 vmem']
            #allocation20 [shape = 'f32[1024]{0}', space=vmem, size = 0x1000, scoped, tag = 'rt2 vmem']
            #allocation21 [shape = 'f32[1024]{0}', space=vmem, size = 0x1000, scoped, tag = 'c vmem']
            #allocation22 [shape = 'f32[1024]{0}', space=vmem, size = 0x1000, scoped, tag = 's vmem']
            #allocation23 [shape = 'f32[8192]{0}', space=vmem, size = 0x8000, scoped, tag = 'c broadcast']
            #allocation24 [shape = 'f32[8192]{0}', space=vmem, size = 0x8000, scoped, tag = 's broadcast']
            %s472 = smov [#allocation12]
            %s473 = smov [#allocation16]
            %v474 = vlaneseq
            %v475 = vand.u32 %v474, 127
            %v476 = vmov %v475
            %v477 = vlaneseq
            %v478 = vshrl.u32 %v477, 7
            %v479 = vmov %v478
            %v480 = vld [vmem:[%s472] sm:$0xff]
            %vm483 = vcmp.eq.s32.totalorder %v479, %v476
            %v484 = vsel %vm483, %v480, 0.0
            %s485 = scalar_lea.vmem %s472, 8
            %v486 = vld [vmem:[%s485] sm:$0xff]
            %v488 = vadd.s32 %v479, 8
            %vm489 = vcmp.eq.s32.totalorder %v488, %v476
            %v490 = vsel %vm489, %v486, %v484
            %v491 = vrot.slane %v490, 4
            %v492 = vadd.f32 %v490, %v491
            %v493 = vrot.slane %v492, 2
            %v494 = vadd.f32 %v492, %v493
            %v495 = vrot.slane %v494, 1
            %v496 = vadd.f32 %v494, %v495
            %497 = vst [vmem:[%s473] sm:$0x1] %v496
            %s498 = smov [#allocation13]
            %s499 = smov [#allocation17]
            %v500 = vlaneseq
            %v501 = vand.u32 %v500, 127
            %v502 = vmov %v501
            %v503 = vlaneseq
            %v504 = vshrl.u32 %v503, 7
            %v505 = vmov %v504
            %v506 = vld [vmem:[%s498] sm:$0xff]
            %vm509 = vcmp.eq.s32.totalorder %v505, %v502
            %v510 = vsel %vm509, %v506, 0.0
            %s511 = scalar_lea.vmem %s498, 8
            %v512 = vld [vmem:[%s511] sm:$0xff]
            %v514 = vadd.s32 %v505, 8
            %vm515 = vcmp.eq.s32.totalorder %v514, %v502
            %v516 = vsel %vm515, %v512, %v510
            %v517 = vrot.slane %v516, 4
            %v518 = vadd.f32 %v516, %v517
            %v519 = vrot.slane %v518, 2
            %v520 = vadd.f32 %v518, %v519
            %v521 = vrot.slane %v520, 1
            %v522 = vadd.f32 %v520, %v521
            %523 = vst [vmem:[%s499] sm:$0x1] %v522
            %s524 = smov [#allocation15]
            %s525 = smov [#allocation18]
            %v526 = vlaneseq
            %v527 = vand.u32 %v526, 127
            %v528 = vmov %v527
            %v529 = vlaneseq
            %v530 = vshrl.u32 %v529, 7
            %v531 = vmov %v530
            %v532 = vld [vmem:[%s524] sm:$0xff]
            %vm535 = vcmp.eq.s32.totalorder %v531, %v528
            %v536 = vsel %vm535, %v532, 0.0
            %s537 = scalar_lea.vmem %s524, 8
            %v538 = vld [vmem:[%s537] sm:$0xff]
            %v540 = vadd.s32 %v531, 8
            %vm541 = vcmp.eq.s32.totalorder %v540, %v528
            %v542 = vsel %vm541, %v538, %v536
            %v543 = vrot.slane %v542, 4
            %v544 = vadd.f32 %v542, %v543
            %v545 = vrot.slane %v544, 2
            %v546 = vadd.f32 %v544, %v545
            %v547 = vrot.slane %v546, 1
            %v548 = vadd.f32 %v546, %v547
            %549 = vst [vmem:[%s525] sm:$0x1] %v548
            %s550 = smov [#allocation21]
            %s551 = smov [#allocation22]
            %s552 = smov [#allocation16]
            %v553 = vld [vmem:[%s552] sm:$0xff]
            %s554 = smov [#allocation17]
            %v555 = vld [vmem:[%s554] sm:$0xff]
            %s556 = smov [#allocation18]
            %v557 = vld [vmem:[%s556] sm:$0xff]
            %v558 = vsub.f32 %v557, %v553
            %v559 = vmul.f32 2.0, %v555
            %v560 = vrcp.pop %v559
            %v561 = vmul.f32 %v558, %v560
            %vm562 = vcmp.ge.f32.partialorder %v561, 0.0
            %v563 = vmul.f32 %v561, %v561
            %v564 = vadd.f32 1.0, %v563
            %v565 = vrsqrt.pop %v564
            %v566 = vmul.f32 %v564, %v565
            %vm567 = vcmp.eq.f32.partialorder %v564, inf
            %v568 = vsel %vm567, %v564, %v566
            %vm569 = vcmp.eq.f32.partialorder %v564, 0.0
            %v570 = vand.u32 %v564, 2147483648
            %v571 = vsel %vm569, %v570, %v568
            %v572 = vxor.u32 %v571, 2147483648
            %v573 = vsel %vm562, %v571, %v572
            %v574 = vadd.f32 %v561, %v573
            %v575 = vrcp.pop %v574
            %v576 = vand.u32 2147483647, %v553
            %v577 = vand.u32 2147483647, %v555
            %v578 = vand.u32 2147483647, %v557
            %v579 = vmin.f32 %v576, %v578
            %v580 = vmul.f32 1.1920929e-08, %v579
            %vm581 = vcmp.le.f32.partialorder %v577, %v580
            %v582 = vsel %vm581, 0.0, %v575
            %v583 = vmul.f32 %v582, %v582
            %v584 = vadd.f32 1.0, %v583
            %v585 = vrsqrt.pop %v584
            %v586 = vmul.f32 %v582, %v585
            %v587 = vmul.f32 %v582, %v555
            %v588 = vsub.f32 %v553, %v587
            %v589 = vmul.f32 %v582, %v555
            %v590 = vadd.f32 %v557, %v589
            %s591 = smov [#allocation19]
            %592 = vst [vmem:[%s591] sm:$0xff] %v588
            %s593 = smov [#allocation20]
            %594 = vst [vmem:[%s593] sm:$0xff] %v590
            %s595 = smov %s550
            %596 = vst [vmem:[%s595] sm:$0xff] %v585
            %s597 = smov %s551
            %598 = vst [vmem:[%s597] sm:$0xff] %v586
            %s599 = smov [#allocation21]
            %v600 = vld [vmem:[%s599] ss:$0 sm:$0xff]
            %v601 = vlaneseq
            %v602 = vand.u32 %v601, 127
            %v603 = vmov %v602
            %v604 = vlaneseq
            %v605 = vshrl.u32 %v604, 7
            %v606 = vmov %v605
            %vm608 = vcmp.eq.s32.totalorder %v606, %v603
            %v609 = vsel %vm608, %v600, 0.0
            %610 = vadd.xlane.f32.xlu0 %v609
            %v611 = vpop.xlane.xlu0 %610
            %s612 = smov [#allocation23]
            %613 = vst [vmem:[%s612] sm:$0xff] %v611
            %s614 = smov [#allocation21]
            %v615 = vld [vmem:[%s614] ss:$0 sm:$0xff]
            %v616 = vlaneseq
            %v617 = vand.u32 %v616, 127
            %v618 = vmov %v617
            %v619 = vlaneseq
            %v620 = vshrl.u32 %v619, 7
            %v621 = vmov %v620
            %v622 = vadd.s32 %v621, 8
            %vm623 = vcmp.eq.s32.totalorder %v622, %v618
            %v624 = vsel %vm623, %v615, 0.0
            %625 = vadd.xlane.f32.xlu0 %v624
            %v626 = vpop.xlane.xlu0 %625
            %s627 = smov [#allocation23]
            %s628 = scalar_lea.vmem %s627, 8
            %629 = vst [vmem:[%s628] sm:$0xff] %v626
            %s630 = smov [#allocation22]
            %v631 = vld [vmem:[%s630] ss:$0 sm:$0xff]
            %v632 = vlaneseq
            %v633 = vand.u32 %v632, 127
            %v634 = vmov %v633
            %v635 = vlaneseq
            %v636 = vshrl.u32 %v635, 7
            %v637 = vmov %v636
            %vm639 = vcmp.eq.s32.totalorder %v637, %v634
            %v640 = vsel %vm639, %v631, 0.0
            %641 = vadd.xlane.f32.xlu0 %v640
            %v642 = vpop.xlane.xlu0 %641
            %s643 = smov [#allocation24]
            %644 = vst [vmem:[%s643] sm:$0xff] %v642
            %s645 = smov [#allocation22]
            %v646 = vld [vmem:[%s645] ss:$0 sm:$0xff]
            %v647 = vlaneseq
            %v648 = vand.u32 %v647, 127
            %v649 = vmov %v648
            %v650 = vlaneseq
            %v651 = vshrl.u32 %v650, 7
            %v652 = vmov %v651
            %v653 = vadd.s32 %v652, 8
            %vm654 = vcmp.eq.s32.totalorder %v653, %v649
            %v655 = vsel %vm654, %v646, 0.0
            %656 = vadd.xlane.f32.xlu0 %v655
            %v657 = vpop.xlane.xlu0 %656
            %s658 = smov [#allocation24]
            %s659 = scalar_lea.vmem %s658, 8
            %660 = vst [vmem:[%s659] sm:$0xff] %v657
            %s661 = smov [#allocation23]
            %v662 = vld [vmem:[%s661] sm:$0xff]
            %s663 = smov [#allocation24]
            %v664 = vld [vmem:[%s663] sm:$0xff]
            %s665 = smov [#allocation12]
            %s666 = smov [#allocation13]
            %s667 = smov [#allocation14]
            %s668 = smov [#allocation15]
            %v669 = vld [vmem:[%s665] sm:$0xff]
            %v670 = vld [vmem:[%s666] sm:$0xff]
            %v671 = vld [vmem:[%s667] sm:$0xff]
            %v672 = vld [vmem:[%s668] sm:$0xff]
            %v673 = vmul.f32 %v662, %v669
            %v674 = vmul.f32 %v664, %v671
            %v675 = vsub.f32 %v673, %v674
            %v676 = vmul.f32 %v662, %v670
            %v677 = vmul.f32 %v664, %v672
            %v678 = vsub.f32 %v676, %v677
            %v679 = vmul.f32 %v664, %v669
            %v680 = vmul.f32 %v662, %v671
            %v681 = vadd.f32 %v679, %v680
            %v682 = vmul.f32 %v664, %v670
            %v683 = vmul.f32 %v662, %v672
            %v684 = vadd.f32 %v682, %v683
            %685 = vst [vmem:[%s665] sm:$0xff] %v675
            %686 = vst [vmem:[%s666] sm:$0xff] %v678
            %687 = vst [vmem:[%s667] sm:$0xff] %v681
            %688 = vst [vmem:[%s668] sm:$0xff] %v684
            %s689 = smov [#allocation23]
            %s690 = scalar_lea.vmem %s689, 8
            %v691 = vld [vmem:[%s690] sm:$0xff]
            %s692 = smov [#allocation24]
            %s693 = scalar_lea.vmem %s692, 8
            %v694 = vld [vmem:[%s693] sm:$0xff]
            %s695 = smov [#allocation12]
            %s696 = scalar_lea.vmem %s695, 8
            %s697 = smov [#allocation13]
            %s698 = scalar_lea.vmem %s697, 8
            %s699 = smov [#allocation14]
            %s700 = scalar_lea.vmem %s699, 8
            %s701 = smov [#allocation15]
            %s702 = scalar_lea.vmem %s701, 8
            %v703 = vld [vmem:[%s696] sm:$0xff]
            %v704 = vld [vmem:[%s698] sm:$0xff]
            %v705 = vld [vmem:[%s700] sm:$0xff]
            %v706 = vld [vmem:[%s702] sm:$0xff]
            %v707 = vmul.f32 %v691, %v703
            %v708 = vmul.f32 %v694, %v705
            %v709 = vsub.f32 %v707, %v708
            %v710 = vmul.f32 %v691, %v704
            %v711 = vmul.f32 %v694, %v706
            %v712 = vsub.f32 %v710, %v711
            %v713 = vmul.f32 %v694, %v703
            %v714 = vmul.f32 %v691, %v705
            %v715 = vadd.f32 %v713, %v714
            %v716 = vmul.f32 %v694, %v704
            %v717 = vmul.f32 %v691, %v706
            %v718 = vadd.f32 %v716, %v717
            %719 = vst [vmem:[%s696] sm:$0xff] %v709
            %720 = vst [vmem:[%s698] sm:$0xff] %v712
            %721 = vst [vmem:[%s700] sm:$0xff] %v715
            %722 = vst [vmem:[%s702] sm:$0xff] %v718
            %s723 = smov [#allocation21]
            %v724 = vld [vmem:[%s723] ss:$0 sm:$0xff]
            %s725 = smov [#allocation22]
            %v726 = vld [vmem:[%s725] ss:$0 sm:$0xff]
            %s727 = smov [#allocation12]
            %s728 = smov [#allocation13]
            %s729 = smov [#allocation14]
            %s730 = smov [#allocation15]
            %v731 = vld [vmem:[%s727] sm:$0xff]
            %v732 = vld [vmem:[%s728] sm:$0xff]
            %v733 = vld [vmem:[%s729] sm:$0xff]
            %v734 = vld [vmem:[%s730] sm:$0xff]
            %v735 = vmul.f32 %v724, %v731
            %v736 = vmul.f32 %v726, %v732
            %v737 = vsub.f32 %v735, %v736
            %v738 = vmul.f32 %v726, %v731
            %v739 = vmul.f32 %v724, %v732
            %v740 = vadd.f32 %v738, %v739
            %v741 = vmul.f32 %v724, %v733
            %v742 = vmul.f32 %v726, %v734
            %v743 = vsub.f32 %v741, %v742
            %v744 = vmul.f32 %v726, %v733
            %v745 = vmul.f32 %v724, %v734
            %v746 = vadd.f32 %v744, %v745
            %747 = vst [vmem:[%s727] sm:$0xff] %v737
            %748 = vst [vmem:[%s728] sm:$0xff] %v740
            %749 = vst [vmem:[%s729] sm:$0xff] %v743
            %750 = vst [vmem:[%s730] sm:$0xff] %v746
            %s751 = smov [#allocation12]
            %s752 = scalar_lea.vmem %s751, 8
            %s753 = smov [#allocation13]
            %s754 = scalar_lea.vmem %s753, 8
            %s755 = smov [#allocation14]
            %s756 = scalar_lea.vmem %s755, 8
            %s757 = smov [#allocation15]
            %s758 = scalar_lea.vmem %s757, 8
            %v759 = vld [vmem:[%s752] sm:$0xff]
            %v760 = vld [vmem:[%s754] sm:$0xff]
            %v761 = vld [vmem:[%s756] sm:$0xff]
            %v762 = vld [vmem:[%s758] sm:$0xff]
            %v763 = vmul.f32 %v724, %v759
            %v764 = vmul.f32 %v726, %v760
            %v765 = vsub.f32 %v763, %v764
            %v766 = vmul.f32 %v726, %v759
            %v767 = vmul.f32 %v724, %v760
            %v768 = vadd.f32 %v766, %v767
            %v769 = vmul.f32 %v724, %v761
            %v770 = vmul.f32 %v726, %v762
            %v771 = vsub.f32 %v769, %v770
            %v772 = vmul.f32 %v726, %v761
            %v773 = vmul.f32 %v724, %v762
            %v774 = vadd.f32 %v772, %v773
            %775 = vst [vmem:[%s752] sm:$0xff] %v765
            %776 = vst [vmem:[%s754] sm:$0xff] %v768
            %777 = vst [vmem:[%s756] sm:$0xff] %v771
            %778 = vst [vmem:[%s758] sm:$0xff] %v774
            %s779 = smov [#allocation12]
            %s780 = smov [#allocation19]
            %v781 = vlaneseq
            %v782 = vand.u32 %v781, 127
            %v783 = vmov %v782
            %v784 = vlaneseq
            %v785 = vshrl.u32 %v784, 7
            %v786 = vmov %v785
            %v787 = vld [vmem:[%s780] ss:$0 sm:$0xff]
            %v788 = vld [vmem:[%s779] sm:$0xff]
            %vm791 = vcmp.eq.s32.totalorder %v786, %v783
            %v792 = vsel %vm791, %v787, %v788
            %793 = vst [vmem:[%s779] sm:$0xff] %v792
            %v794 = vld [vmem:[%s780] ss:$0 sm:$0xff]
            %s795 = scalar_lea.vmem %s779, 8
            %v796 = vld [vmem:[%s795] sm:$0xff]
            %v798 = vadd.s32 %v786, 8
            %vm799 = vcmp.eq.s32.totalorder %v798, %v783
            %v800 = vsel %vm799, %v794, %v796
            %801 = vst [vmem:[%s795] sm:$0xff] %v800
            %s802 = smov [#allocation13]
            %v803 = vlaneseq
            %v804 = vand.u32 %v803, 127
            %v805 = vmov %v804
            %v806 = vlaneseq
            %v807 = vshrl.u32 %v806, 7
            %v808 = vmov %v807
            %v809 = vld [vmem:[%s802] sm:$0xff]
            %vm812 = vcmp.eq.s32.totalorder %v808, %v805
            %v813 = vsel %vm812, 0.0, %v809
            %814 = vst [vmem:[%s802] sm:$0xff] %v813
            %s815 = scalar_lea.vmem %s802, 8
            %v816 = vld [vmem:[%s815] sm:$0xff]
            %v818 = vadd.s32 %v808, 8
            %vm819 = vcmp.eq.s32.totalorder %v818, %v805
            %v820 = vsel %vm819, 0.0, %v816
            %821 = vst [vmem:[%s815] sm:$0xff] %v820
            %s822 = smov [#allocation14]
            %v823 = vlaneseq
            %v824 = vand.u32 %v823, 127
            %v825 = vmov %v824
            %v826 = vlaneseq
            %v827 = vshrl.u32 %v826, 7
            %v828 = vmov %v827
            %v829 = vld [vmem:[%s822] sm:$0xff]
            %vm832 = vcmp.eq.s32.totalorder %v828, %v825
            %v833 = vsel %vm832, 0.0, %v829
            %834 = vst [vmem:[%s822] sm:$0xff] %v833
            %s835 = scalar_lea.vmem %s822, 8
            %v836 = vld [vmem:[%s835] sm:$0xff]
            %v838 = vadd.s32 %v828, 8
            %vm839 = vcmp.eq.s32.totalorder %v838, %v825
            %v840 = vsel %vm839, 0.0, %v836
            %841 = vst [vmem:[%s835] sm:$0xff] %v840
            %s842 = smov [#allocation15]
            %s843 = smov [#allocation20]
            %v844 = vlaneseq
            %v845 = vand.u32 %v844, 127
            %v846 = vmov %v845
            %v847 = vlaneseq
            %v848 = vshrl.u32 %v847, 7
            %v849 = vmov %v848
            %v850 = vld [vmem:[%s843] ss:$0 sm:$0xff]
            %v851 = vld [vmem:[%s842] sm:$0xff]
            %vm854 = vcmp.eq.s32.totalorder %v849, %v846
            %v855 = vsel %vm854, %v850, %v851
            %856 = vst [vmem:[%s842] sm:$0xff] %v855
            %v857 = vld [vmem:[%s843] ss:$0 sm:$0xff]
            %s858 = scalar_lea.vmem %s842, 8
            %v859 = vld [vmem:[%s858] sm:$0xff]
            %v861 = vadd.s32 %v849, 8
            %vm862 = vcmp.eq.s32.totalorder %v861, %v846
            %v863 = vsel %vm862, %v857, %v859
            %864 = vst [vmem:[%s858] sm:$0xff] %v863
            %s865 = smov [#allocation12]
            %s866 = smov [#allocation13]
            %v867 = vld [vmem:[%s866] sm:$0xff]
            %868 = vrot.lane.b32.xlu0 %v867, 1
            %v869 = vpop.permute.xlu0 %868
            %v870 = vld [vmem:[%s865] sm:$0xff]
            %v871 = vld [vmem:[%s865] sm:$0xff]
            %872 = vrot.lane.b32.xlu0 %v871, 1
            %v873 = vpop.permute.xlu0 %872
            %v874 = vlaneseq
            %v875 = vand.u32 %v874, 127
            %vm876 = vcmp.eq.s32.totalorder %v875, 0
            %v877 = vsel %vm876, %v871, %v873
            %v878 = vlaneseq
            %v879 = vand.u32 %v878, 127
            %vm880 = vcmp.eq.s32.totalorder %v879, 1
            %v881 = vsel %vm880, %v869, %v877
            %v882 = vlaneseq
            %v883 = vand.u32 %v882, 127
            %vm884 = vcmp.ge.s32.totalorder %v883, 0
            %vm885 = vcmp.lt.s32.totalorder %v883, 16
            %vm886 = vmand %vm884, %vm885
            %v887 = vsel %vm886, %v881, 0.0
            %v888 = vld [vmem:[%s866] sm:$0xff]
            %889 = vrot.lane.b32.xlu0 %v888, 127
            %v890 = vpop.permute.xlu0 %889
            %v891 = vlaneseq
            %v892 = vand.u32 %v891, 127
            %vm893 = vcmp.eq.s32.totalorder %v892, 15
            %v894 = vsel %vm893, %v870, %v890
            %s895 = smov [#allocation12]
            %s896 = scalar_lea.vmem %s895, 8
            %s897 = smov [#allocation13]
            %s898 = scalar_lea.vmem %s897, 8
            %v899 = vld [vmem:[%s898] sm:$0xff]
            %900 = vrot.lane.b32.xlu0 %v899, 1
            %v901 = vpop.permute.xlu0 %900
            %v902 = vld [vmem:[%s896] sm:$0xff]
            %v903 = vld [vmem:[%s896] sm:$0xff]
            %904 = vrot.lane.b32.xlu0 %v903, 1
            %v905 = vpop.permute.xlu0 %904
            %v906 = vlaneseq
            %v907 = vand.u32 %v906, 127
            %vm908 = vcmp.eq.s32.totalorder %v907, 0
            %v909 = vsel %vm908, %v903, %v905
            %v910 = vlaneseq
            %v911 = vand.u32 %v910, 127
            %vm912 = vcmp.eq.s32.totalorder %v911, 1
            %v913 = vsel %vm912, %v901, %v909
            %v914 = vlaneseq
            %v915 = vand.u32 %v914, 127
            %vm916 = vcmp.ge.s32.totalorder %v915, 0
            %vm917 = vcmp.lt.s32.totalorder %v915, 16
            %vm918 = vmand %vm916, %vm917
            %v919 = vsel %vm918, %v913, 0.0
            %v920 = vld [vmem:[%s898] sm:$0xff]
            %921 = vrot.lane.b32.xlu0 %v920, 127
            %v922 = vpop.permute.xlu0 %921
            %v923 = vlaneseq
            %v924 = vand.u32 %v923, 127
            %vm925 = vcmp.eq.s32.totalorder %v924, 15
            %v926 = vsel %vm925, %v902, %v922
            %927 = vst [vmem:[%s865] sm:$0xff] %v887
            %928 = vst [vmem:[%s866] sm:$0xff] %v894
            %929 = vst [vmem:[%s896] sm:$0xff] %v919
            %930 = vst [vmem:[%s898] sm:$0xff] %v926
            %s931 = smov [#allocation14]
            %s932 = smov [#allocation15]
            %v933 = vld [vmem:[%s932] sm:$0xff]
            %934 = vrot.lane.b32.xlu0 %v933, 1
            %v935 = vpop.permute.xlu0 %934
            %v936 = vld [vmem:[%s931] sm:$0xff]
            %v937 = vld [vmem:[%s931] sm:$0xff]
            %938 = vrot.lane.b32.xlu0 %v937, 1
            %v939 = vpop.permute.xlu0 %938
            %v940 = vlaneseq
            %v941 = vand.u32 %v940, 127
            %vm942 = vcmp.eq.s32.totalorder %v941, 0
            %v943 = vsel %vm942, %v937, %v939
            %v944 = vlaneseq
            %v945 = vand.u32 %v944, 127
            %vm946 = vcmp.eq.s32.totalorder %v945, 1
            %v947 = vsel %vm946, %v935, %v943
            %v948 = vlaneseq
            %v949 = vand.u32 %v948, 127
            %vm950 = vcmp.ge.s32.totalorder %v949, 0
            %vm951 = vcmp.lt.s32.totalorder %v949, 16
            %vm952 = vmand %vm950, %vm951
            %v953 = vsel %vm952, %v947, 0.0
            %v954 = vld [vmem:[%s932] sm:$0xff]
            %955 = vrot.lane.b32.xlu0 %v954, 127
            %v956 = vpop.permute.xlu0 %955
            %v957 = vlaneseq
            %v958 = vand.u32 %v957, 127
            %vm959 = vcmp.eq.s32.totalorder %v958, 15
            %v960 = vsel %vm959, %v936, %v956
            %s961 = smov [#allocation14]
            %s962 = scalar_lea.vmem %s961, 8
            %s963 = smov [#allocation15]
            %s964 = scalar_lea.vmem %s963, 8
            %v965 = vld [vmem:[%s964] sm:$0xff]
            %966 = vrot.lane.b32.xlu0 %v965, 1
            %v967 = vpop.permute.xlu0 %966
            %v968 = vld [vmem:[%s962] sm:$0xff]
            %v969 = vld [vmem:[%s962] sm:$0xff]
            %970 = vrot.lane.b32.xlu0 %v969, 1
            %v971 = vpop.permute.xlu0 %970
            %v972 = vlaneseq
            %v973 = vand.u32 %v972, 127
            %vm974 = vcmp.eq.s32.totalorder %v973, 0
            %v975 = vsel %vm974, %v969, %v971
            %v976 = vlaneseq
            %v977 = vand.u32 %v976, 127
            %vm978 = vcmp.eq.s32.totalorder %v977, 1
            %v979 = vsel %vm978, %v967, %v975
            %v980 = vlaneseq
            %v981 = vand.u32 %v980, 127
            %vm982 = vcmp.ge.s32.totalorder %v981, 0
            %vm983 = vcmp.lt.s32.totalorder %v981, 16
            %vm984 = vmand %vm982, %vm983
            %v985 = vsel %vm984, %v979, 0.0
            %v986 = vld [vmem:[%s964] sm:$0xff]
            %987 = vrot.lane.b32.xlu0 %v986, 127
            %v988 = vpop.permute.xlu0 %987
            %v989 = vlaneseq
            %v990 = vand.u32 %v989, 127
            %vm991 = vcmp.eq.s32.totalorder %v990, 15
            %v992 = vsel %vm991, %v968, %v988
            %993 = vst [vmem:[%s931] sm:$0xff] %v953
            %994 = vst [vmem:[%s932] sm:$0xff] %v960
            %995 = vst [vmem:[%s962] sm:$0xff] %v985
            %996 = vst [vmem:[%s964] sm:$0xff] %v992
            %s997 = smov [#allocation12]
            %s998 = smov [#allocation14]
            %v999 = vld [vmem:[%s997] ss:$0 sm:$0xff]
            %s1001 = scalar_lea.vmem %s997, 4294967295
            %v1002 = vld [vmem:[%s1001] sm:$0xfe]
            %v1003 = vlaneseq
            %v1004 = vshrl.u32 %v1003, 7
            %vm1005 = vcmp.eq.s32.totalorder %v1004, 0
            %v1006 = vsel %vm1005, %v999, %v1002
            %s1007 = scalar_lea.vmem %s997, 7
            %v1008 = vld [vmem:[%s1007] ss:$0 sm:$0xff]
            %1009 = vst [vmem:[%s997] sm:$0xff] %v1006
            %s1010 = scalar_lea.vmem %s997, 8
            %s1012 = scalar_lea.vmem %s1010, 4294967295
            %v1013 = vld [vmem:[%s1012] sm:$0xfe]
            %v1014 = vlaneseq
            %v1015 = vshrl.u32 %v1014, 7
            %vm1016 = vcmp.eq.s32.totalorder %v1015, 0
            %v1017 = vsel %vm1016, %v1008, %v1013
            %s1018 = scalar_lea.vmem %s1010, 7
            %v1019 = vld [vmem:[%s1018] ss:$0 sm:$0xff]
            %1020 = vst [vmem:[%s1010] sm:$0xff] %v1017
            %v1021 = vld [vmem:[%s998] ss:$0 sm:$0xff]
            %s1022 = scalar_lea.vmem %s997, 1
            %1023 = vst [vmem:[%s1022] sm:$0x1] %v1021
            %s1024 = scalar_lea.vmem %s998, 8
            %s1025 = scalar_lea.vmem %s1024, 1
            %v1026 = vld [vmem:[%s1025] sm:$0x7f]
            %v1027 = vlaneseq
            %v1028 = vshrl.u32 %v1027, 7
            %vm1029 = vcmp.eq.s32.totalorder %v1028, 7
            %v1030 = vsel %vm1029, %v1019, %v1026
            %v1031 = vld [vmem:[%s1024] ss:$0 sm:$0xff]
            %1032 = vst [vmem:[%s1024] sm:$0xff] %v1030
            %s1033 = scalar_lea.vmem %s998, 1
            %v1034 = vld [vmem:[%s1033] sm:$0x7f]
            %v1035 = vlaneseq
            %v1036 = vshrl.u32 %v1035, 7
            %vm1037 = vcmp.eq.s32.totalorder %v1036, 7
            %v1038 = vsel %vm1037, %v1031, %v1034
            %v1039 = vld [vmem:[%s998] ss:$0 sm:$0xff]
            %1040 = vst [vmem:[%s998] sm:$0xff] %v1038
            %s1041 = smov [#allocation13]
            %s1042 = smov [#allocation15]
            %v1043 = vld [vmem:[%s1041] ss:$0 sm:$0xff]
            %s1045 = scalar_lea.vmem %s1041, 4294967295
            %v1046 = vld [vmem:[%s1045] sm:$0xfe]
            %v1047 = vlaneseq
            %v1048 = vshrl.u32 %v1047, 7
            %vm1049 = vcmp.eq.s32.totalorder %v1048, 0
            %v1050 = vsel %vm1049, %v1043, %v1046
            %s1051 = scalar_lea.vmem %s1041, 7
            %v1052 = vld [vmem:[%s1051] ss:$0 sm:$0xff]
            %1053 = vst [vmem:[%s1041] sm:$0xff] %v1050
            %s1054 = scalar_lea.vmem %s1041, 8
            %s1056 = scalar_lea.vmem %s1054, 4294967295
            %v1057 = vld [vmem:[%s1056] sm:$0xfe]
            %v1058 = vlaneseq
            %v1059 = vshrl.u32 %v1058, 7
            %vm1060 = vcmp.eq.s32.totalorder %v1059, 0
            %v1061 = vsel %vm1060, %v1052, %v1057
            %s1062 = scalar_lea.vmem %s1054, 7
            %v1063 = vld [vmem:[%s1062] ss:$0 sm:$0xff]
            %1064 = vst [vmem:[%s1054] sm:$0xff] %v1061
            %v1065 = vld [vmem:[%s1042] ss:$0 sm:$0xff]
            %s1066 = scalar_lea.vmem %s1041, 1
            %1067 = vst [vmem:[%s1066] sm:$0x1] %v1065
            %s1068 = scalar_lea.vmem %s1042, 8
            %s1069 = scalar_lea.vmem %s1068, 1
            %v1070 = vld [vmem:[%s1069] sm:$0x7f]
            %v1071 = vlaneseq
            %v1072 = vshrl.u32 %v1071, 7
            %vm1073 = vcmp.eq.s32.totalorder %v1072, 7
            %v1074 = vsel %vm1073, %v1063, %v1070
            %v1075 = vld [vmem:[%s1068] ss:$0 sm:$0xff]
            %1076 = vst [vmem:[%s1068] sm:$0xff] %v1074
            %s1077 = scalar_lea.vmem %s1042, 1
            %v1078 = vld [vmem:[%s1077] sm:$0x7f]
            %v1079 = vlaneseq
            %v1080 = vshrl.u32 %v1079, 7
            %vm1081 = vcmp.eq.s32.totalorder %v1080, 7
            %v1082 = vsel %vm1081, %v1075, %v1078
            %v1083 = vld [vmem:[%s1042] ss:$0 sm:$0xff]
            %1084 = vst [vmem:[%s1042] sm:$0xff] %v1082
            %s1085 = smov [#allocation23]
            %v1086 = vld [vmem:[%s1085] sm:$0xff]
            %s1087 = smov [#allocation24]
            %v1088 = vld [vmem:[%s1087] sm:$0xff]
            %s1089 = smov %s241
            %s1090 = smov %s245
            %s1091 = smov %s249
            %s1092 = smov %s253
            %v1093 = vld [vmem:[%s1089] sm:$0xff]
            %v1094 = vld [vmem:[%s1090] sm:$0xff]
            %v1095 = vld [vmem:[%s1091] sm:$0xff]
            %v1096 = vld [vmem:[%s1092] sm:$0xff]
            %v1097 = vmul.f32 %v1086, %v1093
            %v1098 = vmul.f32 %v1088, %v1095
            %v1099 = vsub.f32 %v1097, %v1098
            %v1100 = vmul.f32 %v1086, %v1094
            %v1101 = vmul.f32 %v1088, %v1096
            %v1102 = vsub.f32 %v1100, %v1101
            %v1103 = vmul.f32 %v1088, %v1093
            %v1104 = vmul.f32 %v1086, %v1095
            %v1105 = vadd.f32 %v1103, %v1104
            %v1106 = vmul.f32 %v1088, %v1094
            %v1107 = vmul.f32 %v1086, %v1096
            %v1108 = vadd.f32 %v1106, %v1107
            %1109 = vst [vmem:[%s1089] sm:$0xff] %v1099
            %1110 = vst [vmem:[%s1090] sm:$0xff] %v1102
            %1111 = vst [vmem:[%s1091] sm:$0xff] %v1105
            %1112 = vst [vmem:[%s1092] sm:$0xff] %v1108
            %s1113 = smov [#allocation23]
            %s1114 = scalar_lea.vmem %s1113, 8
            %v1115 = vld [vmem:[%s1114] sm:$0xff]
            %s1116 = smov [#allocation24]
            %s1117 = scalar_lea.vmem %s1116, 8
            %v1118 = vld [vmem:[%s1117] sm:$0xff]
            %s1119 = smov %s241
            %s1120 = scalar_lea.vmem %s1119, 8
            %s1121 = smov %s245
            %s1122 = scalar_lea.vmem %s1121, 8
            %s1123 = smov %s249
            %s1124 = scalar_lea.vmem %s1123, 8
            %s1125 = smov %s253
            %s1126 = scalar_lea.vmem %s1125, 8
            %v1127 = vld [vmem:[%s1120] sm:$0xff]
            %v1128 = vld [vmem:[%s1122] sm:$0xff]
            %v1129 = vld [vmem:[%s1124] sm:$0xff]
            %v1130 = vld [vmem:[%s1126] sm:$0xff]
            %v1131 = vmul.f32 %v1115, %v1127
            %v1132 = vmul.f32 %v1118, %v1129
            %v1133 = vsub.f32 %v1131, %v1132
            %v1134 = vmul.f32 %v1115, %v1128
            %v1135 = vmul.f32 %v1118, %v1130
            %v1136 = vsub.f32 %v1134, %v1135
            %v1137 = vmul.f32 %v1118, %v1127
            %v1138 = vmul.f32 %v1115, %v1129
            %v1139 = vadd.f32 %v1137, %v1138
            %v1140 = vmul.f32 %v1118, %v1128
            %v1141 = vmul.f32 %v1115, %v1130
            %v1142 = vadd.f32 %v1140, %v1141
            %1143 = vst [vmem:[%s1120] sm:$0xff] %v1133
            %1144 = vst [vmem:[%s1122] sm:$0xff] %v1136
            %1145 = vst [vmem:[%s1124] sm:$0xff] %v1139
            %1146 = vst [vmem:[%s1126] sm:$0xff] %v1142
            %s1147 = smov %s241
            %s1148 = smov %s249
            %v1149 = vld [vmem:[%s1147] ss:$0 sm:$0xff]
            %s1151 = scalar_lea.vmem %s1147, 4294967295
            %v1152 = vld [vmem:[%s1151] sm:$0xfe]
            %v1153 = vlaneseq
            %v1154 = vshrl.u32 %v1153, 7
            %vm1155 = vcmp.eq.s32.totalorder %v1154, 0
            %v1156 = vsel %vm1155, %v1149, %v1152
            %s1157 = scalar_lea.vmem %s1147, 7
            %v1158 = vld [vmem:[%s1157] ss:$0 sm:$0xff]
            %1159 = vst [vmem:[%s1147] sm:$0xff] %v1156
            %s1160 = scalar_lea.vmem %s1147, 8
            %s1162 = scalar_lea.vmem %s1160, 4294967295
            %v1163 = vld [vmem:[%s1162] sm:$0xfe]
            %v1164 = vlaneseq
            %v1165 = vshrl.u32 %v1164, 7
            %vm1166 = vcmp.eq.s32.totalorder %v1165, 0
            %v1167 = vsel %vm1166, %v1158, %v1163
            %s1168 = scalar_lea.vmem %s1160, 7
            %v1169 = vld [vmem:[%s1168] ss:$0 sm:$0xff]
            %1170 = vst [vmem:[%s1160] sm:$0xff] %v1167
            %v1171 = vld [vmem:[%s1148] ss:$0 sm:$0xff]
            %s1172 = scalar_lea.vmem %s1147, 1
            %1173 = vst [vmem:[%s1172] sm:$0x1] %v1171
            %s1174 = scalar_lea.vmem %s1148, 8
            %s1175 = scalar_lea.vmem %s1174, 1
            %v1176 = vld [vmem:[%s1175] sm:$0x7f]
            %v1177 = vlaneseq
            %v1178 = vshrl.u32 %v1177, 7
            %vm1179 = vcmp.eq.s32.totalorder %v1178, 7
            %v1180 = vsel %vm1179, %v1169, %v1176
            %v1181 = vld [vmem:[%s1174] ss:$0 sm:$0xff]
            %1182 = vst [vmem:[%s1174] sm:$0xff] %v1180
            %s1183 = scalar_lea.vmem %s1148, 1
            %v1184 = vld [vmem:[%s1183] sm:$0x7f]
            %v1185 = vlaneseq
            %v1186 = vshrl.u32 %v1185, 7
            %vm1187 = vcmp.eq.s32.totalorder %v1186, 7
            %v1188 = vsel %vm1187, %v1181, %v1184
            %v1189 = vld [vmem:[%s1148] ss:$0 sm:$0xff]
            %1190 = vst [vmem:[%s1148] sm:$0xff] %v1188
            %s1191 = smov %s245
            %s1192 = smov %s253
            %v1193 = vld [vmem:[%s1191] ss:$0 sm:$0xff]
            %s1195 = scalar_lea.vmem %s1191, 4294967295
            %v1196 = vld [vmem:[%s1195] sm:$0xfe]
            %v1197 = vlaneseq
            %v1198 = vshrl.u32 %v1197, 7
            %vm1199 = vcmp.eq.s32.totalorder %v1198, 0
            %v1200 = vsel %vm1199, %v1193, %v1196
            %s1201 = scalar_lea.vmem %s1191, 7
            %v1202 = vld [vmem:[%s1201] ss:$0 sm:$0xff]
            %1203 = vst [vmem:[%s1191] sm:$0xff] %v1200
            %s1204 = scalar_lea.vmem %s1191, 8
            %s1206 = scalar_lea.vmem %s1204, 4294967295
            %v1207 = vld [vmem:[%s1206] sm:$0xfe]
            %v1208 = vlaneseq
            %v1209 = vshrl.u32 %v1208, 7
            %vm1210 = vcmp.eq.s32.totalorder %v1209, 0
            %v1211 = vsel %vm1210, %v1202, %v1207
            %s1212 = scalar_lea.vmem %s1204, 7
            %v1213 = vld [vmem:[%s1212] ss:$0 sm:$0xff]
            %1214 = vst [vmem:[%s1204] sm:$0xff] %v1211
            %v1215 = vld [vmem:[%s1192] ss:$0 sm:$0xff]
            %s1216 = scalar_lea.vmem %s1191, 1
            %1217 = vst [vmem:[%s1216] sm:$0x1] %v1215
            %s1218 = scalar_lea.vmem %s1192, 8
            %s1219 = scalar_lea.vmem %s1218, 1
            %v1220 = vld [vmem:[%s1219] sm:$0x7f]
            %v1221 = vlaneseq
            %v1222 = vshrl.u32 %v1221, 7
            %vm1223 = vcmp.eq.s32.totalorder %v1222, 7
            %v1224 = vsel %vm1223, %v1213, %v1220
            %v1225 = vld [vmem:[%s1218] ss:$0 sm:$0xff]
            %1226 = vst [vmem:[%s1218] sm:$0xff] %v1224
            %s1227 = scalar_lea.vmem %s1192, 1
            %v1228 = vld [vmem:[%s1227] sm:$0x7f]
            %v1229 = vlaneseq
            %v1230 = vshrl.u32 %v1229, 7
            %vm1231 = vcmp.eq.s32.totalorder %v1230, 7
            %v1232 = vsel %vm1231, %v1225, %v1228
            %v1233 = vld [vmem:[%s1192] ss:$0 sm:$0xff]
            %1234 = vst [vmem:[%s1192] sm:$0xff] %v1232
          $region108: #{custom-call.22} parent=100 // loop_footer
            %s471 = sadd.s32 1, %s467
          $region109: #{custom-call.22} parent=100 // loop_footer_branch
            %466 = sbr.rel target = $region105
          $region110: #{custom-call.22} parent=100 // loop_exit
            _
          %s1235 = sadd.s32 %s337, 1
        $region101: #{custom-call.22} parent=95 // loop_footer
          _
        $region102: #{custom-call.22} parent=95 // loop_footer_branch
          %336 = sbr.rel target = $region98
        $region103: #{custom-call.22} parent=95 // loop_exit
          _
        %s1238 = sand.u32 %s17, 7
        %s1239 = scalar_lea.vmem [#allocation4], %s1238
        %s1240 = sand.u32 %s17, 7
        %s1241 = scalar_lea.vmem [#allocation6], %s1240
        %s1242 = smov [#allocation12]
        %s1243 = smov %s1239
        %v1244 = vlaneseq
        %v1245 = vand.u32 %v1244, 127
        %v1246 = vmov %v1245
        %v1247 = vlaneseq
        %v1248 = vshrl.u32 %v1247, 7
        %v1249 = vmov %v1248
        %v1250 = vld [vmem:[%s1242] sm:$0xff]
        %vm1253 = vcmp.eq.s32.totalorder %v1249, %v1246
        %v1254 = vsel %vm1253, %v1250, 0.0
        %s1255 = scalar_lea.vmem %s1242, 8
        %v1256 = vld [vmem:[%s1255] sm:$0xff]
        %v1258 = vadd.s32 %v1249, 8
        %vm1259 = vcmp.eq.s32.totalorder %v1258, %v1246
        %v1260 = vsel %vm1259, %v1256, %v1254
        %v1261 = vrot.slane %v1260, 4
        %v1262 = vadd.f32 %v1260, %v1261
        %v1263 = vrot.slane %v1262, 2
        %v1264 = vadd.f32 %v1262, %v1263
        %v1265 = vrot.slane %v1264, 1
        %v1266 = vadd.f32 %v1264, %v1265
        %1267 = vst [vmem:[%s1243] sm:$0x1] %v1266
        %s1268 = smov [#allocation15]
        %s1269 = smov %s1241
        %v1270 = vlaneseq
        %v1271 = vand.u32 %v1270, 127
        %v1272 = vmov %v1271
        %v1273 = vlaneseq
        %v1274 = vshrl.u32 %v1273, 7
        %v1275 = vmov %v1274
        %v1276 = vld [vmem:[%s1268] sm:$0xff]
        %vm1279 = vcmp.eq.s32.totalorder %v1275, %v1272
        %v1280 = vsel %vm1279, %v1276, 0.0
        %s1281 = scalar_lea.vmem %s1268, 8
        %v1282 = vld [vmem:[%s1281] sm:$0xff]
        %v1284 = vadd.s32 %v1275, 8
        %vm1285 = vcmp.eq.s32.totalorder %v1284, %v1272
        %v1286 = vsel %vm1285, %v1282, %v1280
        %v1287 = vrot.slane %v1286, 4
        %v1288 = vadd.f32 %v1286, %v1287
        %v1289 = vrot.slane %v1288, 2
        %v1290 = vadd.f32 %v1288, %v1289
        %v1291 = vrot.slane %v1290, 1
        %v1292 = vadd.f32 %v1290, %v1291
        %1293 = vst [vmem:[%s1269] sm:$0x1] %v1292
        %s1295 = sshllo.u32 0, 2
        %v1297 = vld [vmem:[#allocation4] sm:%s1295]
        %s1298 = sshllo.u32 0, 2
        %1299 = vst [vmem:[%s231] sm:%s1298] %v1297
        %s1301 = sshllo.u32 0, 2
        %v1303 = vld [vmem:[#allocation6] sm:%s1301]
        %s1304 = sshllo.u32 0, 2
        %1305 = vst [vmem:[%s237] sm:%s1304] %v1303
        %s1306 = sand.u32 %s27, 1
        %s1307 = sand.u32 %s27, 1
        %s1308 = smul.addr %s1307, 2
        %s1309 = scalar_lea.vmem [#allocation5], %s1308
        %s1310 = sand.u32 %s55, 1
        %s1311 = sand.u32 %s55, 1
        %s1312 = smul.addr %s1311, 2
        %s1313 = scalar_lea.vmem [#allocation7], %s1312
        %s1314 = sand.u32 %s17, 1
        %s1315 = sand.u32 %s17, 1
        %s1316 = smul.addr %s1315, 16
        %s1317 = scalar_lea.vmem [#allocation8], %s1316
        %s1318 = sand.u32 %s17, 1
        %s1319 = sand.u32 %s17, 1
        %s1320 = smul.addr %s1319, 16
        %s1321 = scalar_lea.vmem [#allocation9], %s1320
        %s1322 = sand.u32 %s17, 1
        %s1323 = sand.u32 %s17, 1
        %s1324 = smul.addr %s1323, 16
        %s1325 = scalar_lea.vmem [#allocation10], %s1324
        %s1326 = sand.u32 %s17, 1
        %s1327 = sand.u32 %s17, 1
        %s1328 = smul.addr %s1327, 16
        %s1329 = scalar_lea.vmem [#allocation11], %s1328
        // Predicated region
        $region111: #{custom-call.22} parent=95 // pred_check
          %p1330 = pneg %p37
        $region112: #{custom-call.22} parent=95 // pred_check_branch
          %1332 = sbr.rel (%p1330) target = $region114
        $region113: #{custom-call.22} parent=95 // pred_region
          %s1333 = sshrl.u32 %s17, 3
          %s1334 = smul.addr %s1333, 2
          %s1335 = scalar_lea.vmem %s4, %s1334
          // Predicated region
          $region115: #{custom-call.22} parent=113 // pred_check
            _
          $region116: #{custom-call.22} parent=113 // pred_check_branch
            %1337 = sbr.rel (0) target = $region118
          $region117: #{custom-call.22} parent=113 // pred_region
            // Predicated region
            $region119: #{custom-call.22} parent=117 // pred_check
              _
            $region120: #{custom-call.22} parent=117 // pred_check_branch
              %1339 = sbr.rel target = $region122
            $region121: #{custom-call.22} parent=117 // pred_region
              // Predicated region
              $region134: #{custom-call.22} parent=121 // pred_check
                _
              $region135: #{custom-call.22} parent=121 // pred_check_branch
                %1354 = sbr.rel (0) target = $region137
              $region136: #{custom-call.22} parent=121 // pred_region
                loop: start=0, step=1, limit=1
                $region138: #{custom-call.22} parent=136 // loop_pre_header
                  _
                $region139: #{custom-call.22} parent=136 // loop_header
                  %s1357 = sphi 0, %s1361
                  %p1358 = scmp.ge.s32.totalorder %s1357, 1
                  %s1362 = sphi %s1309, %s1309
                  %s1363 = sphi %s1335, %s1335
                $region140: #{custom-call.22} parent=136 // loop_header_branch
                  %1360 = sbr.rel (%p1358) target = $region144
                $region141: #{custom-call.22} parent=136 // loop_body
                  %v1364 = vld [vmem:[%s1362] sm:$0x3]
                  %1365 = vst [vmem:[%s1363] sm:$0x3] %v1364
                $region142: #{custom-call.22} parent=136 // loop_footer
                  %s1361 = sadd.s32 1, %s1357
                $region143: #{custom-call.22} parent=136 // loop_footer_branch
                  %1356 = sbr.rel target = $region139
                $region144: #{custom-call.22} parent=136 // loop_exit
                  _
              $region137: #{custom-call.22} parent=121 // pred_fallthru
                _
            $region122: #{custom-call.22} parent=117 // pred_fallthru
              _
            // Predicated region
            $region123: #{custom-call.22} parent=117 // pred_check
              _
            $region124: #{custom-call.22} parent=117 // pred_check_branch
              %1341 = sbr.rel (0) target = $region126
            $region125: #{custom-call.22} parent=117 // pred_region
              loop: start=0, step=1, limit=1
              $region127: #{custom-call.22} parent=125 // loop_pre_header
                _
              $region128: #{custom-call.22} parent=125 // loop_header
                %s1344 = sphi 0, %s1348
                %p1345 = scmp.ge.s32.totalorder %s1344, 1
                %s1349 = sphi %s1309, %s1309
                %s1350 = sphi %s1335, %s1335
              $region129: #{custom-call.22} parent=125 // loop_header_branch
                %1347 = sbr.rel (%p1345) target = $region133
              $region130: #{custom-call.22} parent=125 // loop_body
                %v1351 = vld [vmem:[%s1349] sm:$0x3]
                %1352 = vst [vmem:[%s1350] sm:$0x3] %v1351
              $region131: #{custom-call.22} parent=125 // loop_footer
                %s1348 = sadd.s32 1, %s1344
              $region132: #{custom-call.22} parent=125 // loop_footer_branch
                %1343 = sbr.rel target = $region128
              $region133: #{custom-call.22} parent=125 // loop_exit
                _
            $region126: #{custom-call.22} parent=117 // pred_fallthru
              _
          $region118: #{custom-call.22} parent=113 // pred_fallthru
            _
          %1366 = vnop
        $region114: #{custom-call.22} parent=95 // pred_fallthru
          _
        // Predicated region
        $region145: #{custom-call.22} parent=95 // pred_check
          %p1367 = pneg %p65
        $region146: #{custom-call.22} parent=95 // pred_check_branch
          %1369 = sbr.rel (%p1367) target = $region148
        $region147: #{custom-call.22} parent=95 // pred_region
          %s1370 = sshrl.u32 %s17, 3
          %s1371 = smul.addr %s1370, 2
          %s1372 = scalar_lea.vmem %s5, %s1371
          // Predicated region
          $region149: #{custom-call.22} parent=147 // pred_check
            _
          $region150: #{custom-call.22} parent=147 // pred_check_branch
            %1374 = sbr.rel (0) target = $region152
          $region151: #{custom-call.22} parent=147 // pred_region
            // Predicated region
            $region153: #{custom-call.22} parent=151 // pred_check
              _
            $region154: #{custom-call.22} parent=151 // pred_check_branch
              %1376 = sbr.rel target = $region156
            $region155: #{custom-call.22} parent=151 // pred_region
              // Predicated region
              $region168: #{custom-call.22} parent=155 // pred_check
                _
              $region169: #{custom-call.22} parent=155 // pred_check_branch
                %1391 = sbr.rel (0) target = $region171
              $region170: #{custom-call.22} parent=155 // pred_region
                loop: start=0, step=1, limit=1
                $region172: #{custom-call.22} parent=170 // loop_pre_header
                  _
                $region173: #{custom-call.22} parent=170 // loop_header
                  %s1394 = sphi 0, %s1398
                  %p1395 = scmp.ge.s32.totalorder %s1394, 1
                  %s1399 = sphi %s1313, %s1313
                  %s1400 = sphi %s1372, %s1372
                $region174: #{custom-call.22} parent=170 // loop_header_branch
                  %1397 = sbr.rel (%p1395) target = $region178
                $region175: #{custom-call.22} parent=170 // loop_body
                  %v1401 = vld [vmem:[%s1399] sm:$0x3]
                  %1402 = vst [vmem:[%s1400] sm:$0x3] %v1401
                $region176: #{custom-call.22} parent=170 // loop_footer
                  %s1398 = sadd.s32 1, %s1394
                $region177: #{custom-call.22} parent=170 // loop_footer_branch
                  %1393 = sbr.rel target = $region173
                $region178: #{custom-call.22} parent=170 // loop_exit
                  _
              $region171: #{custom-call.22} parent=155 // pred_fallthru
                _
            $region156: #{custom-call.22} parent=151 // pred_fallthru
              _
            // Predicated region
            $region157: #{custom-call.22} parent=151 // pred_check
              _
            $region158: #{custom-call.22} parent=151 // pred_check_branch
              %1378 = sbr.rel (0) target = $region160
            $region159: #{custom-call.22} parent=151 // pred_region
              loop: start=0, step=1, limit=1
              $region161: #{custom-call.22} parent=159 // loop_pre_header
                _
              $region162: #{custom-call.22} parent=159 // loop_header
                %s1381 = sphi 0, %s1385
                %p1382 = scmp.ge.s32.totalorder %s1381, 1
                %s1386 = sphi %s1313, %s1313
                %s1387 = sphi %s1372, %s1372
              $region163: #{custom-call.22} parent=159 // loop_header_branch
                %1384 = sbr.rel (%p1382) target = $region167
              $region164: #{custom-call.22} parent=159 // loop_body
                %v1388 = vld [vmem:[%s1386] sm:$0x3]
                %1389 = vst [vmem:[%s1387] sm:$0x3] %v1388
              $region165: #{custom-call.22} parent=159 // loop_footer
                %s1385 = sadd.s32 1, %s1381
              $region166: #{custom-call.22} parent=159 // loop_footer_branch
                %1380 = sbr.rel target = $region162
              $region167: #{custom-call.22} parent=159 // loop_exit
                _
            $region160: #{custom-call.22} parent=151 // pred_fallthru
              _
          $region152: #{custom-call.22} parent=147 // pred_fallthru
            _
          %1403 = vnop
        $region148: #{custom-call.22} parent=95 // pred_fallthru
          _
        %s1404 = smul.addr %s17, 16
        %s1405 = scalar_lea.vmem %s6, %s1404
        // Predicated region
        $region179: #{custom-call.22} parent=95 // pred_check
          _
        $region180: #{custom-call.22} parent=95 // pred_check_branch
          %1407 = sbr.rel (0) target = $region182
        $region181: #{custom-call.22} parent=95 // pred_region
          // Predicated region
          $region183: #{custom-call.22} parent=181 // pred_check
            _
          $region184: #{custom-call.22} parent=181 // pred_check_branch
            %1409 = sbr.rel (0) target = $region186
          $region185: #{custom-call.22} parent=181 // pred_region
            loop: start=0, step=1, limit=1
            $region187: #{custom-call.22} parent=185 // loop_pre_header
              _
            $region188: #{custom-call.22} parent=185 // loop_header
              %s1411 = sphi 0, %s1415
              %p1412 = scmp.ge.s32.totalorder %s1411, 1
              %s1416 = sphi %s1317, %s1317
              %s1417 = sphi %s1405, %s1405
            $region189: #{custom-call.22} parent=185 // loop_header_branch
              %1414 = sbr.rel (%p1412) target = $region193
            $region190: #{custom-call.22} parent=185 // loop_body
              %v1418 = vld [vmem:[%s1416] sm:$0xff]
              %1419 = vst [vmem:[%s1417] sm:$0xff] %v1418
              %v1420 = vld [vmem:[%s1416 + $0x8] sm:$0xff]
              %1421 = vst [vmem:[%s1417 + $0x8] sm:$0xff] %v1420
            $region191: #{custom-call.22} parent=185 // loop_footer
              %s1415 = sadd.s32 1, %s1411
            $region192: #{custom-call.22} parent=185 // loop_footer_branch
              %1410 = sbr.rel target = $region188
            $region193: #{custom-call.22} parent=185 // loop_exit
              _
          $region186: #{custom-call.22} parent=181 // pred_fallthru
            _
          // Predicated region
          $region194: #{custom-call.22} parent=181 // pred_check
            _
          $region195: #{custom-call.22} parent=181 // pred_check_branch
            %1423 = sbr.rel target = $region197
          $region196: #{custom-call.22} parent=181 // pred_region
            _
          $region197: #{custom-call.22} parent=181 // pred_fallthru
            _
        $region182: #{custom-call.22} parent=95 // pred_fallthru
          _
        %1424 = vnop
        %s1425 = smul.addr %s17, 16
        %s1426 = scalar_lea.vmem %s7, %s1425
        // Predicated region
        $region198: #{custom-call.22} parent=95 // pred_check
          _
        $region199: #{custom-call.22} parent=95 // pred_check_branch
          %1428 = sbr.rel (0) target = $region201
        $region200: #{custom-call.22} parent=95 // pred_region
          // Predicated region
          $region202: #{custom-call.22} parent=200 // pred_check
            _
          $region203: #{custom-call.22} parent=200 // pred_check_branch
            %1430 = sbr.rel (0) target = $region205
          $region204: #{custom-call.22} parent=200 // pred_region
            loop: start=0, step=1, limit=1
            $region206: #{custom-call.22} parent=204 // loop_pre_header
              _
            $region207: #{custom-call.22} parent=204 // loop_header
              %s1432 = sphi 0, %s1436
              %p1433 = scmp.ge.s32.totalorder %s1432, 1
              %s1437 = sphi %s1321, %s1321
              %s1438 = sphi %s1426, %s1426
            $region208: #{custom-call.22} parent=204 // loop_header_branch
              %1435 = sbr.rel (%p1433) target = $region212
            $region209: #{custom-call.22} parent=204 // loop_body
              %v1439 = vld [vmem:[%s1437] sm:$0xff]
              %1440 = vst [vmem:[%s1438] sm:$0xff] %v1439
              %v1441 = vld [vmem:[%s1437 + $0x8] sm:$0xff]
              %1442 = vst [vmem:[%s1438 + $0x8] sm:$0xff] %v1441
            $region210: #{custom-call.22} parent=204 // loop_footer
              %s1436 = sadd.s32 1, %s1432
            $region211: #{custom-call.22} parent=204 // loop_footer_branch
              %1431 = sbr.rel target = $region207
            $region212: #{custom-call.22} parent=204 // loop_exit
              _
          $region205: #{custom-call.22} parent=200 // pred_fallthru
            _
          // Predicated region
          $region213: #{custom-call.22} parent=200 // pred_check
            _
          $region214: #{custom-call.22} parent=200 // pred_check_branch
            %1444 = sbr.rel target = $region216
          $region215: #{custom-call.22} parent=200 // pred_region
            _
          $region216: #{custom-call.22} parent=200 // pred_fallthru
            _
        $region201: #{custom-call.22} parent=95 // pred_fallthru
          _
        %1445 = vnop
        %s1446 = smul.addr %s17, 16
        %s1447 = scalar_lea.vmem %s8, %s1446
        // Predicated region
        $region217: #{custom-call.22} parent=95 // pred_check
          _
        $region218: #{custom-call.22} parent=95 // pred_check_branch
          %1449 = sbr.rel (0) target = $region220
        $region219: #{custom-call.22} parent=95 // pred_region
          // Predicated region
          $region221: #{custom-call.22} parent=219 // pred_check
            _
          $region222: #{custom-call.22} parent=219 // pred_check_branch
            %1451 = sbr.rel (0) target = $region224
          $region223: #{custom-call.22} parent=219 // pred_region
            loop: start=0, step=1, limit=1
            $region225: #{custom-call.22} parent=223 // loop_pre_header
              _
            $region226: #{custom-call.22} parent=223 // loop_header
              %s1453 = sphi 0, %s1457
              %p1454 = scmp.ge.s32.totalorder %s1453, 1
              %s1458 = sphi %s1325, %s1325
              %s1459 = sphi %s1447, %s1447
            $region227: #{custom-call.22} parent=223 // loop_header_branch
              %1456 = sbr.rel (%p1454) target = $region231
            $region228: #{custom-call.22} parent=223 // loop_body
              %v1460 = vld [vmem:[%s1458] sm:$0xff]
              %1461 = vst [vmem:[%s1459] sm:$0xff] %v1460
              %v1462 = vld [vmem:[%s1458 + $0x8] sm:$0xff]
              %1463 = vst [vmem:[%s1459 + $0x8] sm:$0xff] %v1462
            $region229: #{custom-call.22} parent=223 // loop_footer
              %s1457 = sadd.s32 1, %s1453
            $region230: #{custom-call.22} parent=223 // loop_footer_branch
              %1452 = sbr.rel target = $region226
            $region231: #{custom-call.22} parent=223 // loop_exit
              _
          $region224: #{custom-call.22} parent=219 // pred_fallthru
            _
          // Predicated region
          $region232: #{custom-call.22} parent=219 // pred_check
            _
          $region233: #{custom-call.22} parent=219 // pred_check_branch
            %1465 = sbr.rel target = $region235
          $region234: #{custom-call.22} parent=219 // pred_region
            _
          $region235: #{custom-call.22} parent=219 // pred_fallthru
            _
        $region220: #{custom-call.22} parent=95 // pred_fallthru
          _
        %1466 = vnop
        %s1467 = smul.addr %s17, 16
        %s1468 = scalar_lea.vmem %s9, %s1467
        // Predicated region
        $region236: #{custom-call.22} parent=95 // pred_check
          _
        $region237: #{custom-call.22} parent=95 // pred_check_branch
          %1470 = sbr.rel (0) target = $region239
        $region238: #{custom-call.22} parent=95 // pred_region
          // Predicated region
          $region240: #{custom-call.22} parent=238 // pred_check
            _
          $region241: #{custom-call.22} parent=238 // pred_check_branch
            %1472 = sbr.rel (0) target = $region243
          $region242: #{custom-call.22} parent=238 // pred_region
            loop: start=0, step=1, limit=1
            $region244: #{custom-call.22} parent=242 // loop_pre_header
              _
            $region245: #{custom-call.22} parent=242 // loop_header
              %s1474 = sphi 0, %s1478
              %p1475 = scmp.ge.s32.totalorder %s1474, 1
              %s1479 = sphi %s1329, %s1329
              %s1480 = sphi %s1468, %s1468
            $region246: #{custom-call.22} parent=242 // loop_header_branch
              %1477 = sbr.rel (%p1475) target = $region250
            $region247: #{custom-call.22} parent=242 // loop_body
              %v1481 = vld [vmem:[%s1479] sm:$0xff]
              %1482 = vst [vmem:[%s1480] sm:$0xff] %v1481
              %v1483 = vld [vmem:[%s1479 + $0x8] sm:$0xff]
              %1484 = vst [vmem:[%s1480 + $0x8] sm:$0xff] %v1483
            $region248: #{custom-call.22} parent=242 // loop_footer
              %s1478 = sadd.s32 1, %s1474
            $region249: #{custom-call.22} parent=242 // loop_footer_branch
              %1473 = sbr.rel target = $region245
            $region250: #{custom-call.22} parent=242 // loop_exit
              _
          $region243: #{custom-call.22} parent=238 // pred_fallthru
            _
          // Predicated region
          $region251: #{custom-call.22} parent=238 // pred_check
            _
          $region252: #{custom-call.22} parent=238 // pred_check_branch
            %1486 = sbr.rel target = $region254
          $region253: #{custom-call.22} parent=238 // pred_region
            _
          $region254: #{custom-call.22} parent=238 // pred_fallthru
            _
        $region239: #{custom-call.22} parent=95 // pred_fallthru
          _
        %1487 = vnop
      $region96: #{custom-call.22} parent=5 // pred_fallthru
        _
      %p1488 = scmp.le.s32.totalorder 2, %s12
      // Predicated region
      $region255: #{custom-call.22} parent=5 // pred_check
        %p1489 = pneg %p1488
      $region256: #{custom-call.22} parent=5 // pred_check_branch
        %1491 = sbr.rel (%p1489) target = $region258
      $region257: #{custom-call.22} parent=5 // pred_region
        %s1492 = ssub.s32 %s12, 2
        // Predicated region
        $region259: #{custom-call.22} parent=257 // pred_check
          %p1493 = pneg %p43
        $region260: #{custom-call.22} parent=257 // pred_check_branch
          %1495 = sbr.rel (%p1493) target = $region262
        $region261: #{custom-call.22} parent=257 // pred_region
          %s1496 = sand.u32 %s28, 1
          %s1497 = sand.u32 %s28, 1
          %s1498 = smul.addr %s1497, 2
          %s1499 = scalar_lea.vmem [#allocation5], %s1498
        $region262: #{custom-call.22} parent=257 // pred_fallthru
          _
        // Predicated region
        $region263: #{custom-call.22} parent=257 // pred_check
          %p1500 = pneg %p71
        $region264: #{custom-call.22} parent=257 // pred_check_branch
          %1502 = sbr.rel (%p1500) target = $region266
        $region265: #{custom-call.22} parent=257 // pred_region
          %s1503 = sand.u32 %s56, 1
          %s1504 = sand.u32 %s56, 1
          %s1505 = smul.addr %s1504, 2
          %s1506 = scalar_lea.vmem [#allocation7], %s1505
        $region266: #{custom-call.22} parent=257 // pred_fallthru
          _
        %s1507 = sand.u32 %s18, 1
        %s1508 = sand.u32 %s18, 1
        %s1509 = smul.addr %s1508, 16
        %s1510 = scalar_lea.vmem [#allocation8], %s1509
        %s1511 = sand.u32 %s18, 1
        %s1512 = sand.u32 %s18, 1
        %s1513 = smul.addr %s1512, 16
        %s1514 = scalar_lea.vmem [#allocation9], %s1513
        %s1515 = sand.u32 %s18, 1
        %s1516 = sand.u32 %s18, 1
        %s1517 = smul.addr %s1516, 16
        %s1518 = scalar_lea.vmem [#allocation10], %s1517
        %s1519 = sand.u32 %s18, 1
        %s1520 = sand.u32 %s18, 1
        %s1521 = smul.addr %s1520, 16
        %s1522 = scalar_lea.vmem [#allocation11], %s1521
      $region258: #{custom-call.22} parent=5 // pred_fallthru
        _
    $region6: #{custom-call.22} parent=1 // loop_footer
      %s16 = sadd.s32 1, %s12
    $region7: #{custom-call.22} parent=1 // loop_footer_branch
      %11 = sbr.rel target = $region3
    $region8: #{custom-call.22} parent=1 // loop_exit
      _

// kernel: reverse
$region0: #{reverse}
  %s0 = inlined_call_operand.vmem [shape: f32[2,32], index: 0, kind: input, shape index: {}]
  %s1 = inlined_call_operand.vmem [shape: f32[2,32], index: 1, kind: output, shape index: {}]
  %v2 = vlaneseq
  %v3 = vsub.s32 31, %v2
  %4 = vset.pattern.permute.xlu0 %v3
  $region1: #{reverse} parent=0
    #allocation0 [shape = 'u8[4096]{0}', space=vmem, size = 0x1000, scoped, tag = 'operand span for operand 0']
    #allocation1 [shape = 'u8[1024]{0}', space=vmem, size = 0x400, scoped, tag = 'packed  for operand 0']
    #allocation2 [shape = 'u8[4096]{0}', space=vmem, size = 0x1000, scoped, tag = 'operand span for operand 1']
    #allocation3 [shape = 'u8[1024]{0}', space=vmem, size = 0x400, scoped, tag = 'packed  for operand 1']
    // Predicated region
    $region2: #{reverse} parent=1 // pred_check
      _
    $region3: #{reverse} parent=1 // pred_check_branch
      %6 = sbr.rel (0) target = $region5
    $region4: #{reverse} parent=1 // pred_region
      // Predicated region
      $region6: #{reverse} parent=4 // pred_check
        _
      $region7: #{reverse} parent=4 // pred_check_branch
        %8 = sbr.rel target = $region9
      $region8: #{reverse} parent=4 // pred_region
        // Predicated region
        $region21: #{reverse} parent=8 // pred_check
          _
        $region22: #{reverse} parent=8 // pred_check_branch
          %23 = sbr.rel (0) target = $region24
        $region23: #{reverse} parent=8 // pred_region
          loop: start=0, step=1, limit=1
          $region25: #{reverse} parent=23 // loop_pre_header
            _
          $region26: #{reverse} parent=23 // loop_header
            %s26 = sphi 0, %s30
            %p27 = scmp.ge.s32.totalorder %s26, 1
            %s31 = sphi %s0, %s0
            %s32 = sphi [#allocation1], [#allocation1]
          $region27: #{reverse} parent=23 // loop_header_branch
            %29 = sbr.rel (%p27) target = $region31
          $region28: #{reverse} parent=23 // loop_body
            %v33 = vld [vmem:[%s31] sm:$0x3]
            %34 = vst [vmem:[%s32] sm:$0x3] %v33
          $region29: #{reverse} parent=23 // loop_footer
            %s30 = sadd.s32 1, %s26
          $region30: #{reverse} parent=23 // loop_footer_branch
            %25 = sbr.rel target = $region26
          $region31: #{reverse} parent=23 // loop_exit
            _
        $region24: #{reverse} parent=8 // pred_fallthru
          _
      $region9: #{reverse} parent=4 // pred_fallthru
        _
      // Predicated region
      $region10: #{reverse} parent=4 // pred_check
        _
      $region11: #{reverse} parent=4 // pred_check_branch
        %10 = sbr.rel (0) target = $region13
      $region12: #{reverse} parent=4 // pred_region
        loop: start=0, step=1, limit=1
        $region14: #{reverse} parent=12 // loop_pre_header
          _
        $region15: #{reverse} parent=12 // loop_header
          %s13 = sphi 0, %s17
          %p14 = scmp.ge.s32.totalorder %s13, 1
          %s18 = sphi %s0, %s0
          %s19 = sphi [#allocation1], [#allocation1]
        $region16: #{reverse} parent=12 // loop_header_branch
          %16 = sbr.rel (%p14) target = $region20
        $region17: #{reverse} parent=12 // loop_body
          %v20 = vld [vmem:[%s18] sm:$0x3]
          %21 = vst [vmem:[%s19] sm:$0x3] %v20
        $region18: #{reverse} parent=12 // loop_footer
          %s17 = sadd.s32 1, %s13
        $region19: #{reverse} parent=12 // loop_footer_branch
          %12 = sbr.rel target = $region15
        $region20: #{reverse} parent=12 // loop_exit
          _
      $region13: #{reverse} parent=4 // pred_fallthru
        _
    $region5: #{reverse} parent=1 // pred_fallthru
      _
    %35 = vnop
    %s37 = sshllo.u32 0, 2
    %v38 = vld [vmem:[#allocation1] sm:%s37]
    %39 = vst [vmem:[#allocation0] sm:%s37] %v38
    %v40 = vld [vmem:[#allocation0] sm:$0xff]
    %41 = vperm.xlu0 %4, %v40
    %v42 = vpop.permute.xlu0 %41
    %43 = vst [vmem:[#allocation2] sm:$0xff] %v42
    %s45 = sshllo.u32 0, 2
    %v47 = vld [vmem:[#allocation2] sm:%s45]
    %s48 = sshllo.u32 0, 2
    %49 = vst [vmem:[#allocation3] sm:%s48] %v47
    // Predicated region
    $region32: #{reverse} parent=1 // pred_check
      _
    $region33: #{reverse} parent=1 // pred_check_branch
      %51 = sbr.rel (0) target = $region35
    $region34: #{reverse} parent=1 // pred_region
      // Predicated region
      $region36: #{reverse} parent=34 // pred_check
        _
      $region37: #{reverse} parent=34 // pred_check_branch
        %53 = sbr.rel target = $region39
      $region38: #{reverse} parent=34 // pred_region
        // Predicated region
        $region51: #{reverse} parent=38 // pred_check
          _
        $region52: #{reverse} parent=38 // pred_check_branch
          %68 = sbr.rel (0) target = $region54
        $region53: #{reverse} parent=38 // pred_region
          loop: start=0, step=1, limit=1
          $region55: #{reverse} parent=53 // loop_pre_header
            _
          $region56: #{reverse} parent=53 // loop_header
            %s71 = sphi 0, %s75
            %p72 = scmp.ge.s32.totalorder %s71, 1
            %s76 = sphi [#allocation3], [#allocation3]
            %s77 = sphi %s1, %s1
          $region57: #{reverse} parent=53 // loop_header_branch
            %74 = sbr.rel (%p72) target = $region61
          $region58: #{reverse} parent=53 // loop_body
            %v78 = vld [vmem:[%s76] sm:$0x3]
            %79 = vst [vmem:[%s77] sm:$0x3] %v78
          $region59: #{reverse} parent=53 // loop_footer
            %s75 = sadd.s32 1, %s71
          $region60: #{reverse} parent=53 // loop_footer_branch
            %70 = sbr.rel target = $region56
          $region61: #{reverse} parent=53 // loop_exit
            _
        $region54: #{reverse} parent=38 // pred_fallthru
          _
      $region39: #{reverse} parent=34 // pred_fallthru
        _
      // Predicated region
      $region40: #{reverse} parent=34 // pred_check
        _
      $region41: #{reverse} parent=34 // pred_check_branch
        %55 = sbr.rel (0) target = $region43
      $region42: #{reverse} parent=34 // pred_region
        loop: start=0, step=1, limit=1
        $region44: #{reverse} parent=42 // loop_pre_header
          _
        $region45: #{reverse} parent=42 // loop_header
          %s58 = sphi 0, %s62
          %p59 = scmp.ge.s32.totalorder %s58, 1
          %s63 = sphi [#allocation3], [#allocation3]
          %s64 = sphi %s1, %s1
        $region46: #{reverse} parent=42 // loop_header_branch
          %61 = sbr.rel (%p59) target = $region50
        $region47: #{reverse} parent=42 // loop_body
          %v65 = vld [vmem:[%s63] sm:$0x3]
          %66 = vst [vmem:[%s64] sm:$0x3] %v65
        $region48: #{reverse} parent=42 // loop_footer
          %s62 = sadd.s32 1, %s58
        $region49: #{reverse} parent=42 // loop_footer_branch
          %57 = sbr.rel target = $region45
        $region50: #{reverse} parent=42 // loop_exit
          _
      $region43: #{reverse} parent=34 // pred_fallthru
        _
    $region35: #{reverse} parent=1 // pred_fallthru
      _
    %80 = vnop

// kernel: custom-call.16
$region0: #{custom-call.16}
  %s0 = inlined_call_operand.vmem [shape: f32[2,32,32], index: 0, kind: input, shape index: {}]
  %s1 = inlined_call_operand.vmem [shape: f32[2,32,32], index: 1, kind: output, shape index: {0}]
  %s2 = inlined_call_operand.vmem [shape: f32[2,32], index: 2, kind: output, shape index: {1}]
  %3 = xla_tuple %s1, %s2
  $region1: #{custom-call.16} parent=0
    #allocation0 [shape = 'u8[32768]{0}', space=vmem, size = 0x8000, scoped, tag = 'operand span for operand 0']
    #allocation1 [shape = 'u8[32768]{0}', space=vmem, size = 0x8000, scoped, tag = 'operand span for operand 1']
    #allocation2 [shape = 'u8[4096]{0}', space=vmem, size = 0x1000, scoped, tag = 'operand span for operand 2']
    #allocation3 [shape = 'u8[2048]{0}', space=vmem, size = 0x800, scoped, tag = 'packed  for operand 2']
    loop: start=0, step=1, limit=4
    $region2: #{custom-call.16} parent=1 // loop_pre_header
      _
    $region3: #{custom-call.16} parent=1 // loop_header
      %s5 = sphi 0, %s9
      %p6 = scmp.ge.s32.totalorder %s5, 4
      %s12 = sphi 0, %s31
      %s13 = sphi 0, %s27
      %s14 = sphi 0, %s23
      %s15 = sphi 0, %s12
      %s16 = sphi 0, %s13
      %s17 = sphi 0, %s14
      %s18 = sphi 0, %s15
      %s19 = sphi 0, %s16
      %s20 = sphi 0, %s17
      %s46 = sphi 0, %s48
      %s49 = sphi 0, %s46
      %s50 = sphi 0, %s49
      %s66 = sphi 0, %s50
    $region4: #{custom-call.16} parent=1 // loop_header_branch
      %8 = sbr.rel (%p6) target = $region8
    $region5: #{custom-call.16} parent=1 // loop_body
      %s10 = ssub.s32 %s5, 1
      %s11 = ssub.s32 %s5, 2
      %s21 = sadd.s32 1, %s14
      %p22 = scmp.ge.s32.totalorder %s21, 1
      %s23 = scalar_select %p22, 0, %s21
      %s24 = sadd.s32 1, %s13
      %s25 = scalar_select %p22, %s24, %s13
      %p26 = scmp.ge.s32.totalorder %s25, 1
      %s27 = scalar_select %p26, 0, %s25
      %s28 = sadd.s32 1, %s12
      %s29 = scalar_select %p26, %s28, %s12
      %p30 = scmp.ge.s32.totalorder %s29, 2
      %s31 = scalar_select %p30, 0, %s29
      %p32 = scmp.lt.s32.totalorder %s12, 0
      %s33 = ssub.s32 0, %s12
      %s34 = scalar_select %p32, %s33, %s12
      %s35 = sshrl.u32 %s34, 3
      %s36 = ssub.s32 0, %s35
      %s37 = scalar_select %p32, %s36, %s35
      %p38 = scmp.lt.s32.totalorder %s31, 0
      %s39 = ssub.s32 0, %s31
      %s40 = scalar_select %p38, %s39, %s31
      %s41 = sshrl.u32 %s40, 3
      %s42 = ssub.s32 0, %s41
      %s43 = scalar_select %p38, %s42, %s41
      %s44 = ssub.s32 %s37, %s43
      %p45 = scmp.eq.s32.totalorder %s44, 0
      %s47 = sadd.s32 %s46, 1
      %s48 = scalar_select %p45, %s46, %s47
      %p51 = pneg %p45
      %p52 = scmp.eq.s32.totalorder %s5, 1
      %p53 = por %p51, %p52
      %p54 = scmp.ne.s32.totalorder %s46, %s49
      %p55 = scmp.eq.s32.totalorder %s5, 0
      %p56 = por %p54, %p55
      %p57 = scmp.ne.s32.totalorder %s46, %s49
      %p58 = scmp.eq.s32.totalorder %s10, 1
      %p59 = por %p57, %p58
      %p60 = scmp.ne.s32.totalorder %s49, %s50
      %p61 = scmp.eq.s32.totalorder %s10, 0
      %p62 = por %p60, %p61
      %p63 = scmp.ne.s32.totalorder %s49, %s50
      %p64 = scmp.eq.s32.totalorder %s11, 1
      %p65 = por %p63, %p64
      %p67 = scmp.ne.s32.totalorder %s50, %s66
      %p68 = scmp.eq.s32.totalorder %s11, 0
      %p69 = por %p67, %p68
      %p70 = scmp.le.s32.totalorder 1, %s5
      %p71 = scmp.lt.s32.totalorder %s5, 3
      %p72 = pnand %p70, %p71
      %p73 = pneg %p72
      // Predicated region
      $region9: #{custom-call.16} parent=5 // pred_check
        _
      $region10: #{custom-call.16} parent=5 // pred_check_branch
        %75 = sbr.rel (%p72) target = $region12
      $region11: #{custom-call.16} parent=5 // pred_region
        %s76 = ssub.s32 %s5, 1
      $region12: #{custom-call.16} parent=5 // pred_fallthru
        _
      %p77 = scmp.lt.s32.totalorder %s5, 2
      // Predicated region
      $region13: #{custom-call.16} parent=5 // pred_check
        %p78 = pneg %p77
      $region14: #{custom-call.16} parent=5 // pred_check_branch
        %80 = sbr.rel (%p78) target = $region16
      $region15: #{custom-call.16} parent=5 // pred_region
        %s81 = sand.u32 %s5, 1
        %s82 = sand.u32 %s5, 1
        %s83 = smul.addr %s82, 32
        %s84 = scalar_lea.vmem [#allocation0], %s83
        %s85 = smul.u32 4, %s13
        %s86 = sadd.s32 %s14, %s85
        %s87 = smul.addr %s12, 4
        %s88 = sadd.s32 %s86, %s87
        %s89 = smul.addr %s88, 8
        %s90 = scalar_lea.vmem %s0, %s89
        // Predicated region
        $region17: #{custom-call.16} parent=15 // pred_check
          _
        $region18: #{custom-call.16} parent=15 // pred_check_branch
          %92 = sbr.rel (0) target = $region20
        $region19: #{custom-call.16} parent=15 // pred_region
          // Predicated region
          $region21: #{custom-call.16} parent=19 // pred_check
            _
          $region22: #{custom-call.16} parent=19 // pred_check_branch
            %94 = sbr.rel (0) target = $region24
          $region23: #{custom-call.16} parent=19 // pred_region
            // Predicated region
            $region36: #{custom-call.16} parent=23 // pred_check
              _
            $region37: #{custom-call.16} parent=23 // pred_check_branch
              %115 = sbr.rel (0) target = $region39
            $region38: #{custom-call.16} parent=23 // pred_region
              loop: start=0, step=1, limit=1
              $region40: #{custom-call.16} parent=38 // loop_pre_header
                _
              $region41: #{custom-call.16} parent=38 // loop_header
                %s117 = sphi 0, %s121
                %p118 = scmp.ge.s32.totalorder %s117, 1
                %s122 = sphi %s90, %s90
                %s123 = sphi %s84, %s84
              $region42: #{custom-call.16} parent=38 // loop_header_branch
                %120 = sbr.rel (%p118) target = $region46
              $region43: #{custom-call.16} parent=38 // loop_body
                %v124 = vld [vmem:[%s122] sm:$0xff]
                %125 = vst [vmem:[%s123] sm:$0xff] %v124
                %v126 = vld [vmem:[%s122 + $0x8] sm:$0xff]
                %127 = vst [vmem:[%s123 + $0x8] sm:$0xff] %v126
                %v128 = vld [vmem:[%s122 + $0x10] sm:$0xff]
                %129 = vst [vmem:[%s123 + $0x10] sm:$0xff] %v128
                %v130 = vld [vmem:[%s122 + $0x18] sm:$0xff]
                %131 = vst [vmem:[%s123 + $0x18] sm:$0xff] %v130
              $region44: #{custom-call.16} parent=38 // loop_footer
                %s121 = sadd.s32 1, %s117
              $region45: #{custom-call.16} parent=38 // loop_footer_branch
                %116 = sbr.rel target = $region41
              $region46: #{custom-call.16} parent=38 // loop_exit
                _
            $region39: #{custom-call.16} parent=23 // pred_fallthru
              _
            // Predicated region
            $region47: #{custom-call.16} parent=23 // pred_check
              _
            $region48: #{custom-call.16} parent=23 // pred_check_branch
              %133 = sbr.rel target = $region50
            $region49: #{custom-call.16} parent=23 // pred_region
              _
            $region50: #{custom-call.16} parent=23 // pred_fallthru
              _
          $region24: #{custom-call.16} parent=19 // pred_fallthru
            _
          // Predicated region
          $region25: #{custom-call.16} parent=19 // pred_check
            _
          $region26: #{custom-call.16} parent=19 // pred_check_branch
            %96 = sbr.rel target = $region28
          $region27: #{custom-call.16} parent=19 // pred_region
            loop: start=0, step=1, limit=1
            $region29: #{custom-call.16} parent=27 // loop_pre_header
              _
            $region30: #{custom-call.16} parent=27 // loop_header
              %s99 = sphi 0, %s103
              %p100 = scmp.ge.s32.totalorder %s99, 1
              %s104 = sphi %s90, %s90
              %s105 = sphi %s84, %s84
            $region31: #{custom-call.16} parent=27 // loop_header_branch
              %102 = sbr.rel (%p100) target = $region35
            $region32: #{custom-call.16} parent=27 // loop_body
              %v106 = vld [vmem:[%s104] sm:$0xff]
              %107 = vst [vmem:[%s105] sm:$0xff] %v106
              %v108 = vld [vmem:[%s104 + $0x8] sm:$0xff]
              %109 = vst [vmem:[%s105 + $0x8] sm:$0xff] %v108
              %v110 = vld [vmem:[%s104 + $0x10] sm:$0xff]
              %111 = vst [vmem:[%s105 + $0x10] sm:$0xff] %v110
              %v112 = vld [vmem:[%s104 + $0x18] sm:$0xff]
              %113 = vst [vmem:[%s105 + $0x18] sm:$0xff] %v112
            $region33: #{custom-call.16} parent=27 // loop_footer
              %s103 = sadd.s32 1, %s99
            $region34: #{custom-call.16} parent=27 // loop_footer_branch
              %98 = sbr.rel target = $region30
            $region35: #{custom-call.16} parent=27 // loop_exit
              _
          $region28: #{custom-call.16} parent=19 // pred_fallthru
            _
        $region20: #{custom-call.16} parent=15 // pred_fallthru
          _
        %134 = vnop
      $region16: #{custom-call.16} parent=5 // pred_fallthru
        _
      %p135 = scmp.le.s32.totalorder 1, %s5
      %p136 = scmp.lt.s32.totalorder %s5, 3
      %p137 = pnand %p135, %p136
      %p138 = pneg %p137
      // Predicated region
      $region51: #{custom-call.16} parent=5 // pred_check
        _
      $region52: #{custom-call.16} parent=5 // pred_check_branch
        %140 = sbr.rel (%p137) target = $region54
      $region53: #{custom-call.16} parent=5 // pred_region
        #allocation4 [shape = 'f32[32,128]{1,0}', space=vmem, size = 0x4000, scoped, tag = 'scratch for Householder reflectors']
        %s141 = ssub.s32 %s5, 1
        %s142 = sand.u32 %s10, 1
        %s143 = sand.u32 %s10, 1
        %s144 = smul.addr %s143, 32
        %s145 = scalar_lea.vmem [#allocation0], %s144
        %s146 = sand.u32 %s10, 1
        %s147 = sand.u32 %s10, 1
        %s148 = smul.addr %s147, 32
        %s149 = scalar_lea.vmem [#allocation0], %s148
        %s150 = sand.u32 %s10, 1
        %s151 = sand.u32 %s10, 1
        %s152 = smul.addr %s151, 32
        %s153 = scalar_lea.vmem [#allocation1], %s152
        %p154 = pneg %p62
        %p155 = pneg %p59
        %s156 = sand.u32 %s49, 1
        %s157 = sand.u32 %s49, 1
        %s158 = smul.addr %s157, 2
        %s159 = scalar_lea.vmem [#allocation3], %s158
        %s160 = smul.u32 4, %s16
        %s161 = smul.u32 4, %s16
        %p162 = scmp.lt.s32.totalorder %s15, 0
        %s163 = ssub.s32 0, %s15
        %s164 = scalar_select %p162, %s163, %s15
        %s165 = sshrl.u32 %s164, 3
        %s166 = ssub.s32 0, %s165
        %s167 = scalar_select %p162, %s166, %s165
        %s168 = sand.u32 %s15, 7
        %s169 = scalar_lea.vmem [#allocation2], %s168
        %v170 = vld [vmem:[%s145] sm:$0xff]
        %171 = vst [vmem:[%s153] sm:$0xff] %v170
        %s172 = scalar_lea.vmem %s153, 8 [#allocation1]
        %s173 = scalar_lea.vmem %s145, 8 [#allocation0]
        %v174 = vld [vmem:[%s173] sm:$0xff]
        %175 = vst [vmem:[%s172] sm:$0xff] %v174
        %s176 = scalar_lea.vmem %s153, 16 [#allocation1]
        %s177 = scalar_lea.vmem %s145, 16 [#allocation0]
        %v178 = vld [vmem:[%s177] sm:$0xff]
        %179 = vst [vmem:[%s176] sm:$0xff] %v178
        %s180 = scalar_lea.vmem %s153, 24 [#allocation1]
        %s181 = scalar_lea.vmem %s145, 24 [#allocation0]
        %v182 = vld [vmem:[%s181] sm:$0xff]
        %183 = vst [vmem:[%s180] sm:$0xff] %v182
        %184 = vst [vmem:[%s169] sm:$0x1] 0.0
        loop: start=0, step=1, limit=32
        $region55: #{custom-call.16} parent=53 // loop_pre_header
          _
        $region56: #{custom-call.16} parent=53 // loop_header
          %s186 = sphi 0, %s190
          %p187 = scmp.ge.s32.totalorder %s186, 32
        $region57: #{custom-call.16} parent=53 // loop_header_branch
          %189 = sbr.rel (%p187) target = $region61
        $region58: #{custom-call.16} parent=53 // loop_body
          %v191 = vld [vmem:[%s153] sm:$0xff]
          %v192 = vlaneseq
          %v193 = vshrl.u32 %v192, 7
          %v195 = vstv %s186
          %vm196 = vcmp.gt.s32.totalorder %v193, %v195
          %v197 = vsel %vm196, %v191, 0.0
          %v198 = vmul.f32 %v197, %v197
          %s199 = scalar_lea.vmem %s153, 8 [#allocation1]
          %v200 = vld [vmem:[%s199] sm:$0xff]
          %v201 = vlaneseq
          %v202 = vshrl.u32 %v201, 7
          %v203 = vadd.s32 %v202, 8
          %v204 = vstv %s186
          %vm205 = vcmp.gt.s32.totalorder %v203, %v204
          %v206 = vsel %vm205, %v200, 0.0
          %v207 = vmul.f32 %v206, %v206
          %v208 = vadd.f32 %v198, %v207
          %s209 = scalar_lea.vmem %s153, 16 [#allocation1]
          %v210 = vld [vmem:[%s209] sm:$0xff]
          %v211 = vlaneseq
          %v212 = vshrl.u32 %v211, 7
          %v213 = vadd.s32 %v212, 16
          %v214 = vstv %s186
          %vm215 = vcmp.gt.s32.totalorder %v213, %v214
          %v216 = vsel %vm215, %v210, 0.0
          %v217 = vmul.f32 %v216, %v216
          %v218 = vadd.f32 %v208, %v217
          %s219 = scalar_lea.vmem %s153, 24 [#allocation1]
          %v220 = vld [vmem:[%s219] sm:$0xff]
          %v221 = vlaneseq
          %v222 = vshrl.u32 %v221, 7
          %v223 = vadd.s32 %v222, 24
          %v224 = vstv %s186
          %vm225 = vcmp.gt.s32.totalorder %v223, %v224
          %vm226 = vcmp.lt.s32.totalorder %v223, 32
          %vm227 = vmand %vm225, %vm226
          %v228 = vsel %vm227, %v220, 0.0
          %v229 = vmul.f32 %v228, %v228
          %v230 = vadd.f32 %v218, %v229
          %v231 = vrot.slane %v230, 4
          %v232 = vadd.f32 %v230, %v231
          %v233 = vrot.slane %v232, 2
          %v234 = vadd.f32 %v232, %v233
          %v235 = vrot.slane %v234, 1
          %v236 = vadd.f32 %v234, %v235
          %v237 = vrsqrt.pop %v236
          %v238 = vmul.f32 %v236, %v237
          %vm239 = vcmp.eq.f32.partialorder %v236, inf
          %v240 = vsel %vm239, %v236, %v238
          %vm241 = vcmp.eq.f32.partialorder %v236, 0.0
          %v242 = vand.u32 %v236, 2147483648
          %v243 = vsel %vm241, %v242, %v240
          %vm244 = vcmp.eq.f32.partialorder %v236, 0.0
          %s245 = sshrl.u32 %s186, 3
          %s246 = sand.u32 %s186, 7
          %s247 = smul.addr %s245, 8
          %s248 = sadd.s32 %s246, %s247
          %s249 = scalar_lea.vmem %s153, %s248 [#allocation1]
          %v250 = vld [vmem:[%s249] ss:$0 sm:$0xff]
          %v251 = vand.u32 2147483647, %v250
          %v252 = vmax.f32 %v251, 0.0
          %v253 = vand.u32 2147483647, %v243
          %v254 = vmax.f32 %v252, %v253
          %v255 = vrcp.pop %v254
          %v256 = vmul.f32 %v251, %v255
          %v257 = vmul.f32 %v256, %v256
          %v258 = vrcp.pop %v254
          %v259 = vmul.f32 0.0, %v258
          %v260 = vmul.f32 %v259, %v259
          %v261 = vadd.f32 %v257, %v260
          %v262 = vrcp.pop %v254
          %v263 = vmul.f32 %v253, %v262
          %v264 = vmul.f32 %v263, %v263
          %v265 = vadd.f32 %v261, %v264
          %vm266 = vcmp.eq.f32.partialorder %v254, 0.0
          %v267 = vrsqrt.pop %v265
          %v268 = vmul.f32 %v265, %v267
          %vm269 = vcmp.eq.f32.partialorder %v265, inf
          %v270 = vsel %vm269, %v265, %v268
          %vm271 = vcmp.eq.f32.partialorder %v265, 0.0
          %v272 = vand.u32 %v265, 2147483648
          %v273 = vsel %vm271, %v272, %v270
          %v274 = vmul.f32 %v254, %v273
          %v275 = vsel %vm266, 0.0, %v274
          %vm276 = vcmp.lt.f32.partialorder %v250, 0.0
          %v277 = vxor.u32 %v275, 2147483648
          %v278 = vsel %vm276, %v275, %v277
          %v279 = vsub.f32 %v278, %v250
          %v280 = vrcp.pop %v278
          %v281 = vmul.f32 %v279, %v280
          %v282 = vsel %vm244, %v250, %v278
          %v283 = vsel %vm244, 0.0, %v281
          %v284 = vsub.f32 %v250, %v282
          %s285 = smov %s153
          %v286 = vlaneseq
          %v287 = vshrl.u32 %v286, 7
          %v288 = vmov %v287
          %v289 = vld [vmem:[%s285] sm:$0xff]
          %v291 = vstv %s186
          %vm292 = vcmp.gt.s32.totalorder %v288, %v291
          %v293 = vsel %vm292, %v289, 0.0
          %v294 = vrcp.pop %v284
          %v295 = vmul.f32 %v293, %v294
          %v296 = vsel %vm244, 0.0, %v295
          %v297 = vstv %s186
          %v298 = vlaneseq
          %v299 = vand.u32 %v298, 127
          %vm300 = vcmp.eq.s32.totalorder %v299, %v297
          %v301 = vsel %vm300, %v296, 0.0
          %302 = vadd.xlane.f32.xlu0 %v301
          %v303 = vpop.xlane.xlu0 %302
          %304 = vst [vmem:[#allocation4] sm:$0xff] %v303
          %s305 = scalar_lea.vmem %s285, 8
          %v306 = vld [vmem:[%s305] sm:$0xff]
          %v307 = vadd.s32 %v288, 8
          %v308 = vstv %s186
          %vm309 = vcmp.gt.s32.totalorder %v307, %v308
          %v310 = vsel %vm309, %v306, 0.0
          %v311 = vrcp.pop %v284
          %v312 = vmul.f32 %v310, %v311
          %v313 = vsel %vm244, 0.0, %v312
          %v314 = vstv %s186
          %v315 = vlaneseq
          %v316 = vand.u32 %v315, 127
          %vm317 = vcmp.eq.s32.totalorder %v316, %v314
          %v318 = vsel %vm317, %v313, 0.0
          %319 = vadd.xlane.f32.xlu0 %v318
          %v320 = vpop.xlane.xlu0 %319
          %s321 = scalar_lea.vmem [#allocation4], 8
          %322 = vst [vmem:[%s321] sm:$0xff] %v320
          %s323 = scalar_lea.vmem %s285, 16
          %v324 = vld [vmem:[%s323] sm:$0xff]
          %v325 = vadd.s32 %v288, 16
          %v326 = vstv %s186
          %vm327 = vcmp.gt.s32.totalorder %v325, %v326
          %v328 = vsel %vm327, %v324, 0.0
          %v329 = vrcp.pop %v284
          %v330 = vmul.f32 %v328, %v329
          %v331 = vsel %vm244, 0.0, %v330
          %v332 = vstv %s186
          %v333 = vlaneseq
          %v334 = vand.u32 %v333, 127
          %vm335 = vcmp.eq.s32.totalorder %v334, %v332
          %v336 = vsel %vm335, %v331, 0.0
          %337 = vadd.xlane.f32.xlu0 %v336
          %v338 = vpop.xlane.xlu0 %337
          %s339 = scalar_lea.vmem [#allocation4], 16
          %340 = vst [vmem:[%s339] sm:$0xff] %v338
          %s341 = scalar_lea.vmem %s285, 24
          %v342 = vld [vmem:[%s341] sm:$0xff]
          %v343 = vadd.s32 %v288, 24
          %v344 = vstv %s186
          %vm345 = vcmp.gt.s32.totalorder %v343, %v344
          %vm346 = vcmp.lt.s32.totalorder %v343, 32
          %vm347 = vmand %vm345, %vm346
          %v348 = vsel %vm347, %v342, 0.0
          %v349 = vrcp.pop %v284
          %v350 = vmul.f32 %v348, %v349
          %v351 = vsel %vm244, 0.0, %v350
          %v352 = vstv %s186
          %v353 = vlaneseq
          %v354 = vand.u32 %v353, 127
          %vm355 = vcmp.eq.s32.totalorder %v354, %v352
          %v356 = vsel %vm355, %v351, 0.0
          %357 = vadd.xlane.f32.xlu0 %v356
          %v358 = vpop.xlane.xlu0 %357
          %s359 = scalar_lea.vmem [#allocation4], 24
          %360 = vst [vmem:[%s359] sm:$0xff] %v358
          %s361 = scalar_lea.vmem [#allocation4], %s186
          %362 = vst [vmem:[%s361] sm:$0x1] 1.0
          %v363 = vstv %s186
          %v364 = vlaneseq
          %v365 = vand.u32 %v364, 127
          %vm366 = vcmp.eq.s32.totalorder %v365, %v363
          %v367 = vsel %vm366, %v283, 0.0
          %368 = vadd.xlane.f32.xlu0 %v367
          %v369 = vpop.xlane.xlu0 %368
          %v370 = vstv %s186
          %v371 = vlaneseq
          %v372 = vand.u32 %v371, 127
          %vm373 = vcmp.eq.s32.totalorder %v372, %v370
          %v374 = vld [vmem:[%s169] ss:$0 sm:$0xff]
          %v375 = vsel %vm373, %v369, %v374
          %376 = vst [vmem:[%s169] sm:$0x1] %v375
          %s377 = smov %s153
          %s378 = smov [#allocation4]
          %v379 = vlaneseq
          %v380 = vshrl.u32 %v379, 7
          %v381 = vmov %v380
          %v383 = vld [vmem:[%s378] sm:$0xff]
          %v384 = vld [vmem:[%s377] sm:$0xff]
          %v385 = vmul.f32 %v383, %v384
          %v386 = vadd.s32 %v381, 8
          %s387 = scalar_lea.vmem %s378, 8
          %v388 = vld [vmem:[%s387] sm:$0xff]
          %s389 = scalar_lea.vmem %s377, 8
          %v390 = vld [vmem:[%s389] sm:$0xff]
          %v391 = vmul.f32 %v388, %v390
          %v392 = vadd.f32 %v385, %v391
          %v393 = vadd.s32 %v381, 16
          %s394 = scalar_lea.vmem %s378, 16
          %v395 = vld [vmem:[%s394] sm:$0xff]
          %s396 = scalar_lea.vmem %s377, 16
          %v397 = vld [vmem:[%s396] sm:$0xff]
          %v398 = vmul.f32 %v395, %v397
          %v399 = vadd.f32 %v392, %v398
          %v400 = vadd.s32 %v381, 24
          %s401 = scalar_lea.vmem %s378, 24
          %v402 = vld [vmem:[%s401] sm:$0xff]
          %s403 = scalar_lea.vmem %s377, 24
          %v404 = vld [vmem:[%s403] sm:$0xff]
          %v405 = vmul.f32 %v402, %v404
          %vm406 = vcmp.lt.s32.totalorder %v400, 32
          %v407 = vsel %vm406, %v405, 0.0
          %v408 = vadd.f32 %v399, %v407
          %v409 = vrot.slane %v408, 4
          %v410 = vadd.f32 %v408, %v409
          %v411 = vrot.slane %v410, 2
          %v412 = vadd.f32 %v410, %v411
          %v413 = vrot.slane %v412, 1
          %v414 = vadd.f32 %v412, %v413
          %s415 = smov %s377
          %s416 = smov %s378
          %v417 = vlaneseq
          %v418 = vshrl.u32 %v417, 7
          %v419 = vmov %v418
          %v420 = vmul.f32 %v414, %v369
          %v422 = vlaneseq
          %v423 = vand.u32 %v422, 127
          %v424 = vld [vmem:[%s416] sm:$0xff]
          %v425 = vmul.f32 %v424, %v420
          %v426 = vld [vmem:[%s415] sm:$0xff]
          %v427 = vstv %s186
          %vm428 = vcmp.gt.s32.totalorder %v423, %v427
          %v429 = vsub.f32 %v426, %v425
          %v430 = vsel %vm428, %v429, %v426
          %v431 = vstv %s186
          %v432 = vlaneseq
          %v433 = vand.u32 %v432, 127
          %vm434 = vcmp.eq.s32.totalorder %v433, %v431
          %v435 = vstv %s186
          %vm436 = vcmp.ge.s32.totalorder %v419, %v435
          %vm437 = vmand %vm434, %vm436
          %v438 = vsel %vm437, %v424, %v430
          %439 = vst [vmem:[%s415] sm:$0xff] %v438
          %v440 = vadd.s32 %v419, 8
          %v441 = vlaneseq
          %v442 = vand.u32 %v441, 127
          %s443 = scalar_lea.vmem %s416, 8
          %v444 = vld [vmem:[%s443] sm:$0xff]
          %v445 = vmul.f32 %v444, %v420
          %s446 = scalar_lea.vmem %s415, 8
          %v447 = vld [vmem:[%s446] sm:$0xff]
          %v448 = vstv %s186
          %vm449 = vcmp.gt.s32.totalorder %v442, %v448
          %v450 = vsub.f32 %v447, %v445
          %v451 = vsel %vm449, %v450, %v447
          %v452 = vstv %s186
          %v453 = vlaneseq
          %v454 = vand.u32 %v453, 127
          %vm455 = vcmp.eq.s32.totalorder %v454, %v452
          %v456 = vstv %s186
          %vm457 = vcmp.ge.s32.totalorder %v440, %v456
          %vm458 = vmand %vm455, %vm457
          %v459 = vsel %vm458, %v444, %v451
          %460 = vst [vmem:[%s446] sm:$0xff] %v459
          %v461 = vadd.s32 %v419, 16
          %v462 = vlaneseq
          %v463 = vand.u32 %v462, 127
          %s464 = scalar_lea.vmem %s416, 16
          %v465 = vld [vmem:[%s464] sm:$0xff]
          %v466 = vmul.f32 %v465, %v420
          %s467 = scalar_lea.vmem %s415, 16
          %v468 = vld [vmem:[%s467] sm:$0xff]
          %v469 = vstv %s186
          %vm470 = vcmp.gt.s32.totalorder %v463, %v469
          %v471 = vsub.f32 %v468, %v466
          %v472 = vsel %vm470, %v471, %v468
          %v473 = vstv %s186
          %v474 = vlaneseq
          %v475 = vand.u32 %v474, 127
          %vm476 = vcmp.eq.s32.totalorder %v475, %v473
          %v477 = vstv %s186
          %vm478 = vcmp.ge.s32.totalorder %v461, %v477
          %vm479 = vmand %vm476, %vm478
          %v480 = vsel %vm479, %v465, %v472
          %481 = vst [vmem:[%s467] sm:$0xff] %v480
          %v482 = vadd.s32 %v419, 24
          %v483 = vlaneseq
          %v484 = vand.u32 %v483, 127
          %s485 = scalar_lea.vmem %s416, 24
          %v486 = vld [vmem:[%s485] sm:$0xff]
          %v487 = vmul.f32 %v486, %v420
          %s488 = scalar_lea.vmem %s415, 24
          %v489 = vld [vmem:[%s488] sm:$0xff]
          %v490 = vstv %s186
          %vm491 = vcmp.gt.s32.totalorder %v484, %v490
          %v492 = vsub.f32 %v489, %v487
          %v493 = vsel %vm491, %v492, %v489
          %v494 = vstv %s186
          %v495 = vlaneseq
          %v496 = vand.u32 %v495, 127
          %vm497 = vcmp.eq.s32.totalorder %v496, %v494
          %v498 = vstv %s186
          %vm499 = vcmp.ge.s32.totalorder %v482, %v498
          %vm500 = vmand %vm497, %vm499
          %v501 = vsel %vm500, %v486, %v493
          %502 = vst [vmem:[%s488] sm:$0xff] %v501
          %s503 = scalar_lea.vmem %s415, %s186
          %v504 = vld [vmem:[%s503] ss:$0 sm:$0xff]
          %v505 = vstv %s186
          %v506 = vlaneseq
          %v507 = vand.u32 %v506, 127
          %vm508 = vcmp.eq.s32.totalorder %v507, %v505
          %v509 = vsel %vm508, %v282, %v504
          %510 = vst [vmem:[%s503] sm:$0x1] %v509
        $region59: #{custom-call.16} parent=53 // loop_footer
          %s190 = sadd.s32 1, %s186
        $region60: #{custom-call.16} parent=53 // loop_footer_branch
          %185 = sbr.rel target = $region56
        $region61: #{custom-call.16} parent=53 // loop_exit
          _
        %s512 = sshllo.u32 0, 2
        %v514 = vld [vmem:[#allocation2] sm:%s512]
        %s515 = sshllo.u32 0, 2
        %516 = vst [vmem:[%s159] sm:%s515] %v514
        %s517 = sand.u32 %s10, 1
        %s518 = sand.u32 %s10, 1
        %s519 = smul.addr %s518, 32
        %s520 = scalar_lea.vmem [#allocation1], %s519
        %s521 = sand.u32 %s49, 1
        %s522 = sand.u32 %s49, 1
        %s523 = smul.addr %s522, 2
        %s524 = scalar_lea.vmem [#allocation3], %s523
        %s525 = smul.u32 4, %s16
        %s526 = sadd.s32 %s17, %s525
        %s527 = smul.addr %s15, 4
        %s528 = sadd.s32 %s526, %s527
        %s529 = smul.addr %s528, 8
        %s530 = scalar_lea.vmem %s1, %s529
        // Predicated region
        $region62: #{custom-call.16} parent=53 // pred_check
          _
        $region63: #{custom-call.16} parent=53 // pred_check_branch
          %532 = sbr.rel (0) target = $region65
        $region64: #{custom-call.16} parent=53 // pred_region
          // Predicated region
          $region66: #{custom-call.16} parent=64 // pred_check
            _
          $region67: #{custom-call.16} parent=64 // pred_check_branch
            %534 = sbr.rel (0) target = $region69
          $region68: #{custom-call.16} parent=64 // pred_region
            // Predicated region
            $region81: #{custom-call.16} parent=68 // pred_check
              _
            $region82: #{custom-call.16} parent=68 // pred_check_branch
              %555 = sbr.rel (0) target = $region84
            $region83: #{custom-call.16} parent=68 // pred_region
              loop: start=0, step=1, limit=1
              $region85: #{custom-call.16} parent=83 // loop_pre_header
                _
              $region86: #{custom-call.16} parent=83 // loop_header
                %s557 = sphi 0, %s561
                %p558 = scmp.ge.s32.totalorder %s557, 1
                %s562 = sphi %s520, %s520
                %s563 = sphi %s530, %s530
              $region87: #{custom-call.16} parent=83 // loop_header_branch
                %560 = sbr.rel (%p558) target = $region91
              $region88: #{custom-call.16} parent=83 // loop_body
                %v564 = vld [vmem:[%s562] sm:$0xff]
                %565 = vst [vmem:[%s563] sm:$0xff] %v564
                %v566 = vld [vmem:[%s562 + $0x8] sm:$0xff]
                %567 = vst [vmem:[%s563 + $0x8] sm:$0xff] %v566
                %v568 = vld [vmem:[%s562 + $0x10] sm:$0xff]
                %569 = vst [vmem:[%s563 + $0x10] sm:$0xff] %v568
                %v570 = vld [vmem:[%s562 + $0x18] sm:$0xff]
                %571 = vst [vmem:[%s563 + $0x18] sm:$0xff] %v570
              $region89: #{custom-call.16} parent=83 // loop_footer
                %s561 = sadd.s32 1, %s557
              $region90: #{custom-call.16} parent=83 // loop_footer_branch
                %556 = sbr.rel target = $region86
              $region91: #{custom-call.16} parent=83 // loop_exit
                _
            $region84: #{custom-call.16} parent=68 // pred_fallthru
              _
            // Predicated region
            $region92: #{custom-call.16} parent=68 // pred_check
              _
            $region93: #{custom-call.16} parent=68 // pred_check_branch
              %573 = sbr.rel target = $region95
            $region94: #{custom-call.16} parent=68 // pred_region
              _
            $region95: #{custom-call.16} parent=68 // pred_fallthru
              _
          $region69: #{custom-call.16} parent=64 // pred_fallthru
            _
          // Predicated region
          $region70: #{custom-call.16} parent=64 // pred_check
            _
          $region71: #{custom-call.16} parent=64 // pred_check_branch
            %536 = sbr.rel target = $region73
          $region72: #{custom-call.16} parent=64 // pred_region
            loop: start=0, step=1, limit=1
            $region74: #{custom-call.16} parent=72 // loop_pre_header
              _
            $region75: #{custom-call.16} parent=72 // loop_header
              %s539 = sphi 0, %s543
              %p540 = scmp.ge.s32.totalorder %s539, 1
              %s544 = sphi %s520, %s520
              %s545 = sphi %s530, %s530
            $region76: #{custom-call.16} parent=72 // loop_header_branch
              %542 = sbr.rel (%p540) target = $region80
            $region77: #{custom-call.16} parent=72 // loop_body
              %v546 = vld [vmem:[%s544] sm:$0xff]
              %547 = vst [vmem:[%s545] sm:$0xff] %v546
              %v548 = vld [vmem:[%s544 + $0x8] sm:$0xff]
              %549 = vst [vmem:[%s545 + $0x8] sm:$0xff] %v548
              %v550 = vld [vmem:[%s544 + $0x10] sm:$0xff]
              %551 = vst [vmem:[%s545 + $0x10] sm:$0xff] %v550
              %v552 = vld [vmem:[%s544 + $0x18] sm:$0xff]
              %553 = vst [vmem:[%s545 + $0x18] sm:$0xff] %v552
            $region78: #{custom-call.16} parent=72 // loop_footer
              %s543 = sadd.s32 1, %s539
            $region79: #{custom-call.16} parent=72 // loop_footer_branch
              %538 = sbr.rel target = $region75
            $region80: #{custom-call.16} parent=72 // loop_exit
              _
          $region73: #{custom-call.16} parent=64 // pred_fallthru
            _
        $region65: #{custom-call.16} parent=53 // pred_fallthru
          _
        %574 = vnop
        // Predicated region
        $region96: #{custom-call.16} parent=53 // pred_check
          %p575 = pneg %p59
        $region97: #{custom-call.16} parent=53 // pred_check_branch
          %577 = sbr.rel (%p575) target = $region99
        $region98: #{custom-call.16} parent=53 // pred_region
          %p578 = scmp.lt.s32.totalorder %s15, 0
          %s579 = ssub.s32 0, %s15
          %s580 = scalar_select %p578, %s579, %s15
          %s581 = sshrl.u32 %s580, 3
          %s582 = ssub.s32 0, %s581
          %s583 = scalar_select %p578, %s582, %s581
          %s584 = smul.addr %s583, 2
          %s585 = scalar_lea.vmem %s2, %s584
          // Predicated region
          $region100: #{custom-call.16} parent=98 // pred_check
            _
          $region101: #{custom-call.16} parent=98 // pred_check_branch
            %587 = sbr.rel (0) target = $region103
          $region102: #{custom-call.16} parent=98 // pred_region
            // Predicated region
            $region104: #{custom-call.16} parent=102 // pred_check
              _
            $region105: #{custom-call.16} parent=102 // pred_check_branch
              %589 = sbr.rel target = $region107
            $region106: #{custom-call.16} parent=102 // pred_region
              // Predicated region
              $region119: #{custom-call.16} parent=106 // pred_check
                _
              $region120: #{custom-call.16} parent=106 // pred_check_branch
                %604 = sbr.rel (0) target = $region122
              $region121: #{custom-call.16} parent=106 // pred_region
                loop: start=0, step=1, limit=1
                $region123: #{custom-call.16} parent=121 // loop_pre_header
                  _
                $region124: #{custom-call.16} parent=121 // loop_header
                  %s607 = sphi 0, %s611
                  %p608 = scmp.ge.s32.totalorder %s607, 1
                  %s612 = sphi %s524, %s524
                  %s613 = sphi %s585, %s585
                $region125: #{custom-call.16} parent=121 // loop_header_branch
                  %610 = sbr.rel (%p608) target = $region129
                $region126: #{custom-call.16} parent=121 // loop_body
                  %v614 = vld [vmem:[%s612] sm:$0x3]
                  %615 = vst [vmem:[%s613] sm:$0x3] %v614
                $region127: #{custom-call.16} parent=121 // loop_footer
                  %s611 = sadd.s32 1, %s607
                $region128: #{custom-call.16} parent=121 // loop_footer_branch
                  %606 = sbr.rel target = $region124
                $region129: #{custom-call.16} parent=121 // loop_exit
                  _
              $region122: #{custom-call.16} parent=106 // pred_fallthru
                _
            $region107: #{custom-call.16} parent=102 // pred_fallthru
              _
            // Predicated region
            $region108: #{custom-call.16} parent=102 // pred_check
              _
            $region109: #{custom-call.16} parent=102 // pred_check_branch
              %591 = sbr.rel (0) target = $region111
            $region110: #{custom-call.16} parent=102 // pred_region
              loop: start=0, step=1, limit=1
              $region112: #{custom-call.16} parent=110 // loop_pre_header
                _
              $region113: #{custom-call.16} parent=110 // loop_header
                %s594 = sphi 0, %s598
                %p595 = scmp.ge.s32.totalorder %s594, 1
                %s599 = sphi %s524, %s524
                %s600 = sphi %s585, %s585
              $region114: #{custom-call.16} parent=110 // loop_header_branch
                %597 = sbr.rel (%p595) target = $region118
              $region115: #{custom-call.16} parent=110 // loop_body
                %v601 = vld [vmem:[%s599] sm:$0x3]
                %602 = vst [vmem:[%s600] sm:$0x3] %v601
              $region116: #{custom-call.16} parent=110 // loop_footer
                %s598 = sadd.s32 1, %s594
              $region117: #{custom-call.16} parent=110 // loop_footer_branch
                %593 = sbr.rel target = $region113
              $region118: #{custom-call.16} parent=110 // loop_exit
                _
            $region111: #{custom-call.16} parent=102 // pred_fallthru
              _
          $region103: #{custom-call.16} parent=98 // pred_fallthru
            _
          %616 = vnop
        $region99: #{custom-call.16} parent=53 // pred_fallthru
          _
      $region54: #{custom-call.16} parent=5 // pred_fallthru
        _
      %p617 = scmp.le.s32.totalorder 2, %s5
      // Predicated region
      $region130: #{custom-call.16} parent=5 // pred_check
        %p618 = pneg %p617
      $region131: #{custom-call.16} parent=5 // pred_check_branch
        %620 = sbr.rel (%p618) target = $region133
      $region132: #{custom-call.16} parent=5 // pred_region
        %s621 = ssub.s32 %s5, 2
        %s622 = sand.u32 %s11, 1
        %s623 = sand.u32 %s11, 1
        %s624 = smul.addr %s623, 32
        %s625 = scalar_lea.vmem [#allocation1], %s624
        // Predicated region
        $region134: #{custom-call.16} parent=132 // pred_check
          %p626 = pneg %p65
        $region135: #{custom-call.16} parent=132 // pred_check_branch
          %628 = sbr.rel (%p626) target = $region137
        $region136: #{custom-call.16} parent=132 // pred_region
          %s629 = sand.u32 %s50, 1
          %s630 = sand.u32 %s50, 1
          %s631 = smul.addr %s630, 2
          %s632 = scalar_lea.vmem [#allocation3], %s631
        $region137: #{custom-call.16} parent=132 // pred_fallthru
          _
      $region133: #{custom-call.16} parent=5 // pred_fallthru
        _
    $region6: #{custom-call.16} parent=1 // loop_footer
      %s9 = sadd.s32 1, %s5
    $region7: #{custom-call.16} parent=1 // loop_footer_branch
      %4 = sbr.rel target = $region3
    $region8: #{custom-call.16} parent=1 // loop_exit
      _

// kernel: svd_noise_unet_forward.1
$region0: #{svd_noise_unet_forward.1}
  #allocation0 [shape = 'u32[]', space=smem, size = 0x4, offset = 0x4, fixed_abs, tag = 'smem constant byte address 0x4 - core index']
  #allocation1 [shape = 'u32[144,128]{1,0:T(1,128)}', space=vmem, size = 0x12000, scoped, tag = 'internal scratch']
  %s0 = inlined_call_operand.vmem [shape: bf16[64,64], index: 0, kind: input, shape index: {}]
  %s1 = inlined_call_operand.vmem [shape: bf16[2,32,32], index: 1, kind: input, shape index: {}]
  %s2 = inlined_call_operand.vmem [shape: bf16[2,32,32], index: 2, kind: input, shape index: {}]
  %s3 = inlined_call_operand.vmem [shape: f32[2,32], index: 3, kind: input, shape index: {}]
  %s4 = inlined_call_operand.vmem [shape: bf16[8,1,32], index: 4, kind: input, shape index: {}]
  %s5 = inlined_call_operand.vmem [shape: bf16[64,128], index: 5, kind: input, shape index: {}]
  %s6 = inlined_call_operand.vmem [shape: f32[1,128], index: 6, kind: input, shape index: {}]
  %s7 = inlined_call_operand.vmem [shape: bf16[128,32], index: 7, kind: input, shape index: {}]
  %s8 = inlined_call_operand.vmem [shape: f32[1,32], index: 8, kind: input, shape index: {}]
  %s9 = inlined_call_operand.vmem [shape: bf16[32,32], index: 9, kind: input, shape index: {}]
  %s10 = inlined_call_operand.vmem [shape: f32[1,32], index: 10, kind: input, shape index: {}]
  %s11 = inlined_call_operand.vmem [shape: bf16[32,32], index: 11, kind: input, shape index: {}]
  %s12 = inlined_call_operand.vmem [shape: bf16[32,32], index: 12, kind: input, shape index: {}]
  %s13 = inlined_call_operand.vmem [shape: bf16[32,32], index: 13, kind: input, shape index: {}]
  %s14 = inlined_call_operand.vmem [shape: bf16[32,32], index: 14, kind: input, shape index: {}]
  %s15 = inlined_call_operand.vmem [shape: f32[1,32], index: 15, kind: input, shape index: {}]
  %s16 = inlined_call_operand.vmem [shape: bf16[32,1024], index: 16, kind: input, shape index: {}]
  %s17 = inlined_call_operand.vmem [shape: f32[1,1024], index: 17, kind: input, shape index: {}]
  %s18 = inlined_call_operand.vmem [shape: bf16[1024,32], index: 18, kind: input, shape index: {}]
  %s19 = inlined_call_operand.vmem [shape: f32[1,32], index: 19, kind: input, shape index: {}]
  %s20 = inlined_call_operand.vmem [shape: f32[2,32,32], index: 20, kind: output, shape index: {}]
  %s21 = sld [smem:[#allocation0]]
  $region90: #{svd_noise_unet_forward.1} parent=0
    _
  %s23 = ssub.s32 1, %s21
  %s24 = scalar_select 0, %s23, %s21
  // Predicated region
  $region2: #{svd_noise_unet_forward.1} parent=0 // pred_check
    _
  $region3: #{svd_noise_unet_forward.1} parent=0 // pred_check_branch
    %26 = sbr.rel (0) target = $region5
  $region4: #{svd_noise_unet_forward.1} parent=0 // pred_region
    _
  $region5: #{svd_noise_unet_forward.1} parent=0 // pred_fallthru
    _
  // Predicated region
  $region6: #{svd_noise_unet_forward.1} parent=0 // pred_check
    _
  $region7: #{svd_noise_unet_forward.1} parent=0 // pred_check_branch
    %28 = sbr.rel (0) target = $region9
  $region8: #{svd_noise_unet_forward.1} parent=0 // pred_region
    _
  $region9: #{svd_noise_unet_forward.1} parent=0 // pred_fallthru
    _
  // Predicated region
  $region10: #{svd_noise_unet_forward.1} parent=0 // pred_check
    _
  $region11: #{svd_noise_unet_forward.1} parent=0 // pred_check_branch
    %30 = sbr.rel (0) target = $region13
  $region12: #{svd_noise_unet_forward.1} parent=0 // pred_region
    _
  $region13: #{svd_noise_unet_forward.1} parent=0 // pred_fallthru
    _
  // Predicated region
  $region14: #{svd_noise_unet_forward.1} parent=0 // pred_check
    _
  $region15: #{svd_noise_unet_forward.1} parent=0 // pred_check_branch
    %32 = sbr.rel (0) target = $region17
  $region16: #{svd_noise_unet_forward.1} parent=0 // pred_region
    _
  $region17: #{svd_noise_unet_forward.1} parent=0 // pred_fallthru
    _
  // Predicated region
  $region18: #{svd_noise_unet_forward.1} parent=0 // pred_check
    _
  $region19: #{svd_noise_unet_forward.1} parent=0 // pred_check_branch
    %34 = sbr.rel (0) target = $region21
  $region20: #{svd_noise_unet_forward.1} parent=0 // pred_region
    _
  $region21: #{svd_noise_unet_forward.1} parent=0 // pred_fallthru
    _
  // Predicated region
  $region22: #{svd_noise_unet_forward.1} parent=0 // pred_check
    _
  $region23: #{svd_noise_unet_forward.1} parent=0 // pred_check_branch
    %36 = sbr.rel (0) target = $region25
  $region24: #{svd_noise_unet_forward.1} parent=0 // pred_region
    _
  $region25: #{svd_noise_unet_forward.1} parent=0 // pred_fallthru
    _
  // Predicated region
  $region26: #{svd_noise_unet_forward.1} parent=0 // pred_check
    _
  $region27: #{svd_noise_unet_forward.1} parent=0 // pred_check_branch
    %38 = sbr.rel (0) target = $region29
  $region28: #{svd_noise_unet_forward.1} parent=0 // pred_region
    _
  $region29: #{svd_noise_unet_forward.1} parent=0 // pred_fallthru
    _
  // Predicated region
  $region30: #{svd_noise_unet_forward.1} parent=0 // pred_check
    _
  $region31: #{svd_noise_unet_forward.1} parent=0 // pred_check_branch
    %40 = sbr.rel (0) target = $region33
  $region32: #{svd_noise_unet_forward.1} parent=0 // pred_region
    _
  $region33: #{svd_noise_unet_forward.1} parent=0 // pred_fallthru
    _
  // Predicated region
  $region34: #{svd_noise_unet_forward.1} parent=0 // pred_check
    _
  $region35: #{svd_noise_unet_forward.1} parent=0 // pred_check_branch
    %42 = sbr.rel (0) target = $region37
  $region36: #{svd_noise_unet_forward.1} parent=0 // pred_region
    _
  $region37: #{svd_noise_unet_forward.1} parent=0 // pred_fallthru
    _
  // Predicated region
  $region38: #{svd_noise_unet_forward.1} parent=0 // pred_check
    _
  $region39: #{svd_noise_unet_forward.1} parent=0 // pred_check_branch
    %44 = sbr.rel (0) target = $region41
  $region40: #{svd_noise_unet_forward.1} parent=0 // pred_region
    _
  $region41: #{svd_noise_unet_forward.1} parent=0 // pred_fallthru
    _
  // Predicated region
  $region42: #{svd_noise_unet_forward.1} parent=0 // pred_check
    _
  $region43: #{svd_noise_unet_forward.1} parent=0 // pred_check_branch
    %46 = sbr.rel (0) target = $region45
  $region44: #{svd_noise_unet_forward.1} parent=0 // pred_region
    _
  $region45: #{svd_noise_unet_forward.1} parent=0 // pred_fallthru
    _
  // Predicated region
  $region46: #{svd_noise_unet_forward.1} parent=0 // pred_check
    _
  $region47: #{svd_noise_unet_forward.1} parent=0 // pred_check_branch
    %48 = sbr.rel (0) target = $region49
  $region48: #{svd_noise_unet_forward.1} parent=0 // pred_region
    _
  $region49: #{svd_noise_unet_forward.1} parent=0 // pred_fallthru
    _
  // Predicated region
  $region50: #{svd_noise_unet_forward.1} parent=0 // pred_check
    _
  $region51: #{svd_noise_unet_forward.1} parent=0 // pred_check_branch
    %50 = sbr.rel (0) target = $region53
  $region52: #{svd_noise_unet_forward.1} parent=0 // pred_region
    _
  $region53: #{svd_noise_unet_forward.1} parent=0 // pred_fallthru
    _
  // Predicated region
  $region54: #{svd_noise_unet_forward.1} parent=0 // pred_check
    _
  $region55: #{svd_noise_unet_forward.1} parent=0 // pred_check_branch
    %52 = sbr.rel (0) target = $region57
  $region56: #{svd_noise_unet_forward.1} parent=0 // pred_region
    _
  $region57: #{svd_noise_unet_forward.1} parent=0 // pred_fallthru
    _
  // Predicated region
  $region58: #{svd_noise_unet_forward.1} parent=0 // pred_check
    _
  $region59: #{svd_noise_unet_forward.1} parent=0 // pred_check_branch
    %54 = sbr.rel (0) target = $region61
  $region60: #{svd_noise_unet_forward.1} parent=0 // pred_region
    _
  $region61: #{svd_noise_unet_forward.1} parent=0 // pred_fallthru
    _
  // Predicated region
  $region62: #{svd_noise_unet_forward.1} parent=0 // pred_check
    _
  $region63: #{svd_noise_unet_forward.1} parent=0 // pred_check_branch
    %56 = sbr.rel (0) target = $region65
  $region64: #{svd_noise_unet_forward.1} parent=0 // pred_region
    _
  $region65: #{svd_noise_unet_forward.1} parent=0 // pred_fallthru
    _
  // Predicated region
  $region66: #{svd_noise_unet_forward.1} parent=0 // pred_check
    _
  $region67: #{svd_noise_unet_forward.1} parent=0 // pred_check_branch
    %58 = sbr.rel (0) target = $region69
  $region68: #{svd_noise_unet_forward.1} parent=0 // pred_region
    _
  $region69: #{svd_noise_unet_forward.1} parent=0 // pred_fallthru
    _
  // Predicated region
  $region70: #{svd_noise_unet_forward.1} parent=0 // pred_check
    _
  $region71: #{svd_noise_unet_forward.1} parent=0 // pred_check_branch
    %60 = sbr.rel (0) target = $region73
  $region72: #{svd_noise_unet_forward.1} parent=0 // pred_region
    _
  $region73: #{svd_noise_unet_forward.1} parent=0 // pred_fallthru
    _
  // Predicated region
  $region74: #{svd_noise_unet_forward.1} parent=0 // pred_check
    _
  $region75: #{svd_noise_unet_forward.1} parent=0 // pred_check_branch
    %62 = sbr.rel (0) target = $region77
  $region76: #{svd_noise_unet_forward.1} parent=0 // pred_region
    _
  $region77: #{svd_noise_unet_forward.1} parent=0 // pred_fallthru
    _
  // Predicated region
  $region78: #{svd_noise_unet_forward.1} parent=0 // pred_check
    _
  $region79: #{svd_noise_unet_forward.1} parent=0 // pred_check_branch
    %64 = sbr.rel (0) target = $region81
  $region80: #{svd_noise_unet_forward.1} parent=0 // pred_region
    _
  $region81: #{svd_noise_unet_forward.1} parent=0 // pred_fallthru
    _
  %v66 = vld [vmem:[%s0] sm:$0xf]
  %v67 = vld [vmem:[%s0 + $0x4] sm:$0xf]
  %v68 = vld [vmem:[%s0 + $0x8] sm:$0xf]
  %v69 = vld [vmem:[%s0 + $0xc] sm:$0xf]
  %v70 = vld [vmem:[%s0 + $0x10] sm:$0xf]
  %v71 = vld [vmem:[%s0 + $0x14] sm:$0xf]
  %v72 = vld [vmem:[%s0 + $0x18] sm:$0xf]
  %v73 = vld [vmem:[%s0 + $0x1c] sm:$0xf]
  %v74 = vld [vmem:[%s5] sm:$0xf]
  %v75 = vld [vmem:[%s5 + $0x4] sm:$0xf]
  %v76 = vld [vmem:[%s5 + $0x8] sm:$0xf]
  %v77 = vld [vmem:[%s5 + $0xc] sm:$0xf]
  %v78 = vld [vmem:[%s5 + $0x10] sm:$0xf]
  %v79 = vld [vmem:[%s5 + $0x14] sm:$0xf]
  %v80 = vld [vmem:[%s5 + $0x18] sm:$0xf]
  %v81 = vld [vmem:[%s5 + $0x1c] sm:$0xf]
  %v82 = vld [vmem:[%s6] sm:$0x1]
  %v84 = vlaneseq
  %v85 = vshrl.u32 %v84, 7
  %v86 = vsub.s32 0, %v85
  %v87 = vrot.slane %v82, %v86
  %v97 = vunpack.c.l.b16 %v66
  %v98 = vunpack.c.l.b16 %v67
  %v99 = vunpack.c.l.b16 %v68
  %v100 = vunpack.c.l.b16 %v69
  %v101 = vunpack.c.l.b16 %v70
  %v102 = vunpack.c.l.b16 %v71
  %v103 = vunpack.c.l.b16 %v72
  %v104 = vunpack.c.l.b16 %v73
  %v105 = vpack.c.b16 %v98, %v97
  %v106 = vpack.c.b16 %v100, %v99
  %v107 = vpack.c.b16 %v102, %v101
  %v108 = vpack.c.b16 %v104, %v103
  %v117 = vunpack.c.l.b16 %v74
  %v118 = vunpack.c.l.b16 %v75
  %v119 = vunpack.c.l.b16 %v76
  %v120 = vunpack.c.l.b16 %v77
  %v121 = vunpack.c.l.b16 %v78
  %v122 = vunpack.c.l.b16 %v79
  %v123 = vunpack.c.l.b16 %v80
  %v124 = vunpack.c.l.b16 %v81
  %v125 = vpack.c.b16 %v118, %v117
  %v126 = vpack.c.b16 %v120, %v119
  %v127 = vpack.c.b16 %v122, %v121
  %v128 = vpack.c.b16 %v124, %v123
  %vm133 = vcmask 523264
  %v135 = vsel %vm133, %v105, 0
  %v138 = vsel %vm133, %v106, 0
  %v141 = vsel %vm133, %v107, 0
  %v144 = vsel %vm133, %v108, 0
  %146 = vmatprep.subr.bf16.mxu0 0
  %147 = vmatpush1.bf16.msra.mxu0 %v125
  %148 = vmatprep.subr.bf16.mxu0 0
  %149 = vmatpush1.bf16.msra.mxu0 %v126
  %150 = vmatprep.subr.bf16.mxu0 0
  %151 = vmatpush1.bf16.msra.mxu0 %v127
  %152 = vmatprep.subr.bf16.mxu0 0
  %153 = vmatpush1.bf16.msra.mxu0 %v128
  %154 = vmatprep.subr.bf16.mxu0 0
  %155 = vmatpush1.bf16.msra.mxu0 0
  %156 = vmatprep.subr.bf16.mxu0 0
  %157 = vmatpush1.bf16.msra.mxu0 0
  %158 = vmatprep.subr.bf16.mxu0 0
  %159 = vmatpush1.bf16.msra.mxu0 0
  %160 = vmatprep.subr.bf16.mxu0 0
  %161 = vmatpush1.bf16.msra.mxu0 0
  %162 = vmatprep.subr.bf16.mxu0 0
  %163 = vmatpush1.bf16.msra.mxu0 0
  %164 = vmatprep.subr.bf16.mxu0 0
  %165 = vmatpush1.bf16.msra.mxu0 0
  %166 = vmatprep.subr.bf16.mxu0 0
  %167 = vmatpush1.bf16.msra.mxu0 0
  %168 = vmatprep.subr.bf16.mxu0 0
  %169 = vmatpush1.bf16.msra.mxu0 0
  %170 = vmatprep.subr.bf16.mxu0 0
  %171 = vmatpush1.bf16.msra.mxu0 0
  %172 = vmatprep.subr.bf16.mxu0 0
  %173 = vmatpush1.bf16.msra.mxu0 0
  %174 = vmatprep.subr.bf16.mxu0 0
  %175 = vmatpush1.bf16.msra.mxu0 0
  %176 = vmatprep.subr.bf16.mxu0 0
  %177 = vmatpush1.bf16.msra.mxu0 0
  %178 = vmatprep.mubr.bf16.mxu0 0
  %179 = vmatmul.mubr.bf16.gmra.mrb[0].mxu0 %v135
  %v180 = vpop.f32.mrb[0].mxu0
  %v181 = vadd.f32 %v87, %v180
  %v182 = vpop.f32.mrb[0].mxu0
  %v183 = vpop.f32.mrb[0].mxu0
  %v184 = vadd.f32 %v87, %v183
  %v185 = vpop.f32.mrb[0].mxu0
  %186 = vmatprep.mubr.bf16.mxu0 0
  %187 = vmatmul.mubr.bf16.gmra.mrb[0].mxu0 %v138
  %v188 = vpop.f32.mrb[0].mxu0
  %v189 = vadd.f32 %v87, %v188
  %v190 = vpop.f32.mrb[0].mxu0
  %v191 = vpop.f32.mrb[0].mxu0
  %v192 = vadd.f32 %v87, %v191
  %v193 = vpop.f32.mrb[0].mxu0
  %194 = vmatprep.mubr.bf16.mxu0 0
  %195 = vmatmul.mubr.bf16.gmra.mrb[0].mxu0 %v141
  %v196 = vpop.f32.mrb[0].mxu0
  %v197 = vadd.f32 %v87, %v196
  %v198 = vpop.f32.mrb[0].mxu0
  %v199 = vpop.f32.mrb[0].mxu0
  %v200 = vadd.f32 %v87, %v199
  %v201 = vpop.f32.mrb[0].mxu0
  %202 = vmatprep.mubr.bf16.mxu0 0
  %203 = vmatmul.mubr.bf16.gmra.mrb[0].mxu0 %v144
  %v204 = vpop.f32.mrb[0].mxu0
  %v205 = vadd.f32 %v87, %v204
  %v206 = vpop.f32.mrb[0].mxu0
  %v207 = vpop.f32.mrb[0].mxu0
  %v208 = vadd.f32 %v87, %v207
  %v209 = vpop.f32.mrb[0].mxu0
  %210 = vdwg.mxu0
  %v211 = vmax.f32 %v181, 0.0
  %v212 = vmax.f32 %v184, 0.0
  %v213 = vmax.f32 %v189, 0.0
  %v214 = vmax.f32 %v192, 0.0
  %v215 = vmax.f32 %v197, 0.0
  %v216 = vmax.f32 %v200, 0.0
  %v217 = vmax.f32 %v205, 0.0
  %v218 = vmax.f32 %v208, 0.0
  %v219 = vpack.c.bf16 %v212, %v211
  %v220 = vpack.c.bf16 %v214, %v213
  %v221 = vpack.c.bf16 %v216, %v215
  %v222 = vpack.c.bf16 %v218, %v217
  %v223 = vld [vmem:[%s7] sm:$0xf]
  %v224 = vld [vmem:[%s7 + $0x4] sm:$0xf]
  %v225 = vld [vmem:[%s7 + $0x8] sm:$0xf]
  %v226 = vld [vmem:[%s7 + $0xc] sm:$0xf]
  %v227 = vld [vmem:[%s7 + $0x10] sm:$0xf]
  %v228 = vld [vmem:[%s7 + $0x14] sm:$0xf]
  %v229 = vld [vmem:[%s7 + $0x18] sm:$0xf]
  %v230 = vld [vmem:[%s7 + $0x1c] sm:$0xf]
  %v231 = vld [vmem:[%s7 + $0x20] sm:$0xf]
  %v232 = vld [vmem:[%s7 + $0x24] sm:$0xf]
  %v233 = vld [vmem:[%s7 + $0x28] sm:$0xf]
  %v234 = vld [vmem:[%s7 + $0x2c] sm:$0xf]
  %v235 = vld [vmem:[%s7 + $0x30] sm:$0xf]
  %v236 = vld [vmem:[%s7 + $0x34] sm:$0xf]
  %v237 = vld [vmem:[%s7 + $0x38] sm:$0xf]
  %v238 = vld [vmem:[%s7 + $0x3c] sm:$0xf]
  %v239 = vld [vmem:[%s8] sm:$0x1]
  %v241 = vlaneseq
  %v242 = vshrl.u32 %v241, 7
  %v243 = vsub.s32 0, %v242
  %v244 = vrot.slane %v239, %v243
  %v262 = vunpack.c.l.b16 %v223
  %v263 = vunpack.c.l.b16 %v224
  %v264 = vunpack.c.l.b16 %v225
  %v265 = vunpack.c.l.b16 %v226
  %v266 = vunpack.c.l.b16 %v227
  %v267 = vunpack.c.l.b16 %v228
  %v268 = vunpack.c.l.b16 %v229
  %v269 = vunpack.c.l.b16 %v230
  %v270 = vunpack.c.l.b16 %v231
  %v271 = vunpack.c.l.b16 %v232
  %v272 = vunpack.c.l.b16 %v233
  %v273 = vunpack.c.l.b16 %v234
  %v274 = vunpack.c.l.b16 %v235
  %v275 = vunpack.c.l.b16 %v236
  %v276 = vunpack.c.l.b16 %v237
  %v277 = vunpack.c.l.b16 %v238
  %v278 = vpack.c.b16 %v263, %v262
  %v279 = vpack.c.b16 %v265, %v264
  %v280 = vpack.c.b16 %v267, %v266
  %v281 = vpack.c.b16 %v269, %v268
  %v282 = vpack.c.b16 %v271, %v270
  %v283 = vpack.c.b16 %v273, %v272
  %v284 = vpack.c.b16 %v275, %v274
  %v285 = vpack.c.b16 %v277, %v276
  %294 = vmatprep.subr.bf16.mxu0 0
  %295 = vmatpush1.bf16.msra.mxu0 %v278
  %296 = vmatprep.subr.bf16.mxu0 0
  %297 = vmatpush1.bf16.msra.mxu0 %v279
  %298 = vmatprep.subr.bf16.mxu0 0
  %299 = vmatpush1.bf16.msra.mxu0 %v280
  %300 = vmatprep.subr.bf16.mxu0 0
  %301 = vmatpush1.bf16.msra.mxu0 %v281
  %302 = vmatprep.subr.bf16.mxu0 0
  %303 = vmatpush1.bf16.msra.mxu0 %v282
  %304 = vmatprep.subr.bf16.mxu0 0
  %305 = vmatpush1.bf16.msra.mxu0 %v283
  %306 = vmatprep.subr.bf16.mxu0 0
  %307 = vmatpush1.bf16.msra.mxu0 %v284
  %308 = vmatprep.subr.bf16.mxu0 0
  %309 = vmatpush1.bf16.msra.mxu0 %v285
  %310 = vmatprep.subr.bf16.mxu0 0
  %311 = vmatpush1.bf16.msra.mxu0 0
  %312 = vmatprep.subr.bf16.mxu0 0
  %313 = vmatpush1.bf16.msra.mxu0 0
  %314 = vmatprep.subr.bf16.mxu0 0
  %315 = vmatpush1.bf16.msra.mxu0 0
  %316 = vmatprep.subr.bf16.mxu0 0
  %317 = vmatpush1.bf16.msra.mxu0 0
  %318 = vmatprep.subr.bf16.mxu0 0
  %319 = vmatpush1.bf16.msra.mxu0 0
  %320 = vmatprep.subr.bf16.mxu0 0
  %321 = vmatpush1.bf16.msra.mxu0 0
  %322 = vmatprep.subr.bf16.mxu0 0
  %323 = vmatpush1.bf16.msra.mxu0 0
  %324 = vmatprep.subr.bf16.mxu0 0
  %325 = vmatpush1.bf16.msra.mxu0 0
  %326 = vmatprep.mubr.bf16.mxu0 0
  %327 = vmatmul.mubr.bf16.gmra.mrb[0].mxu0 %v219
  %v328 = vpop.f32.mrb[0].mxu0
  %v329 = vadd.f32 %v244, %v328
  %v330 = vpop.f32.mrb[0].mxu0
  %v331 = vpop.f32.mrb[0].mxu0
  %v332 = vadd.f32 %v244, %v331
  %v333 = vpop.f32.mrb[0].mxu0
  %334 = vmatprep.mubr.bf16.mxu0 0
  %335 = vmatmul.mubr.bf16.gmra.mrb[0].mxu0 %v220
  %v336 = vpop.f32.mrb[0].mxu0
  %v337 = vadd.f32 %v244, %v336
  %v338 = vpop.f32.mrb[0].mxu0
  %v339 = vpop.f32.mrb[0].mxu0
  %v340 = vadd.f32 %v244, %v339
  %v341 = vpop.f32.mrb[0].mxu0
  %342 = vmatprep.mubr.bf16.mxu0 0
  %343 = vmatmul.mubr.bf16.gmra.mrb[0].mxu0 %v221
  %v344 = vpop.f32.mrb[0].mxu0
  %v345 = vadd.f32 %v244, %v344
  %v346 = vpop.f32.mrb[0].mxu0
  %v347 = vpop.f32.mrb[0].mxu0
  %v348 = vadd.f32 %v244, %v347
  %v349 = vpop.f32.mrb[0].mxu0
  %350 = vmatprep.mubr.bf16.mxu0 0
  %351 = vmatmul.mubr.bf16.gmra.mrb[0].mxu0 %v222
  %v352 = vpop.f32.mrb[0].mxu0
  %v353 = vadd.f32 %v244, %v352
  %v354 = vpop.f32.mrb[0].mxu0
  %v355 = vpop.f32.mrb[0].mxu0
  %v356 = vadd.f32 %v244, %v355
  %v357 = vpop.f32.mrb[0].mxu0
  %358 = vdwg.mxu0
  %v359 = vld [vmem:[%s3] sm:$0x3]
  %v360 = vpack.c.bf16 %v359, %v359
  %v361 = vld [vmem:[%s9] sm:$0xf]
  %v362 = vld [vmem:[%s9 + $0x4] sm:$0xf]
  %v363 = vld [vmem:[%s9 + $0x8] sm:$0xf]
  %v364 = vld [vmem:[%s9 + $0xc] sm:$0xf]
  %v365 = vld [vmem:[%s10] sm:$0x1]
  %v367 = vlaneseq
  %v368 = vshrl.u32 %v367, 7
  %v369 = vsub.s32 0, %v368
  %v370 = vrot.slane %v365, %v369
  %v376 = vunpack.c.l.b16 %v361
  %v377 = vunpack.c.l.b16 %v362
  %v378 = vunpack.c.l.b16 %v363
  %v379 = vunpack.c.l.b16 %v364
  %v380 = vpack.c.b16 %v377, %v376
  %v381 = vpack.c.b16 %v379, %v378
  %vm384 = vcmask 261120
  %v386 = vsel %vm384, %v360, 0
  %388 = vmatprep.subr.bf16.mxu0 0
  %389 = vmatpush1.bf16.msra.mxu0 %v380
  %390 = vmatprep.subr.bf16.mxu0 0
  %391 = vmatpush1.bf16.msra.mxu0 %v381
  %392 = vmatprep.subr.bf16.mxu0 0
  %393 = vmatpush1.bf16.msra.mxu0 0
  %394 = vmatprep.subr.bf16.mxu0 0
  %395 = vmatpush1.bf16.msra.mxu0 0
  %396 = vmatprep.subr.bf16.mxu0 0
  %397 = vmatpush1.bf16.msra.mxu0 0
  %398 = vmatprep.subr.bf16.mxu0 0
  %399 = vmatpush1.bf16.msra.mxu0 0
  %400 = vmatprep.subr.bf16.mxu0 0
  %401 = vmatpush1.bf16.msra.mxu0 0
  %402 = vmatprep.subr.bf16.mxu0 0
  %403 = vmatpush1.bf16.msra.mxu0 0
  %404 = vmatprep.subr.bf16.mxu0 0
  %405 = vmatpush1.bf16.msra.mxu0 0
  %406 = vmatprep.subr.bf16.mxu0 0
  %407 = vmatpush1.bf16.msra.mxu0 0
  %408 = vmatprep.subr.bf16.mxu0 0
  %409 = vmatpush1.bf16.msra.mxu0 0
  %410 = vmatprep.subr.bf16.mxu0 0
  %411 = vmatpush1.bf16.msra.mxu0 0
  %412 = vmatprep.subr.bf16.mxu0 0
  %413 = vmatpush1.bf16.msra.mxu0 0
  %414 = vmatprep.subr.bf16.mxu0 0
  %415 = vmatpush1.bf16.msra.mxu0 0
  %416 = vmatprep.subr.bf16.mxu0 0
  %417 = vmatpush1.bf16.msra.mxu0 0
  %418 = vmatprep.subr.bf16.mxu0 0
  %419 = vmatpush1.bf16.msra.mxu0 0
  %420 = vmatprep.mubr.bf16.mxu0 0
  %421 = vmatmul.mubr.bf16.gmra.mrb[0].mxu0 %v386
  %v422 = vpop.f32.mrb[0].mxu0
  %v423 = vadd.f32 %v370, %v422
  %v424 = vpop.f32.mrb[0].mxu0
  %v425 = vpop.f32.mrb[0].mxu0
  %v426 = vpop.f32.mrb[0].mxu0
  %427 = vdwg.mxu0
  %v430 = vunpack.c.l.s4 1966171168
  %v431 = vunpack.c.0.s8 %v430
  %v432 = vlaneseq
  %v433 = vshrl.u32 %v432, 7
  %v434 = vsub.s32 %v431, %v433
  %v435 = vrot.slane %v423, %v434
  %v436 = vcombine.high %v435, %v435
  %v438 = vunpack.c.l.s4 1966171168
  %v439 = vunpack.c.0.s8 %v438
  %v440 = vlaneseq
  %v441 = vshrl.u32 %v440, 7
  %v442 = vsub.s32 %v439, %v441
  %v443 = vrot.slane %v435, %v442
  %v445 = vunpack.c.l.s4 1966171168
  %v446 = vunpack.c.0.s8 %v445
  %v447 = vlaneseq
  %v448 = vshrl.u32 %v447, 7
  %v449 = vsub.s32 %v446, %v448
  %v450 = vrot.slane %v436, %v449
  %v451 = vlaneseq
  %v452 = vshrl.u32 %v451, 7
  %v453 = vsub.s32 0, %v452
  %v454 = vrot.slane %v443, %v453
  %v455 = vlaneseq
  %v456 = vshrl.u32 %v455, 7
  %v457 = vsub.s32 0, %v456
  %v458 = vrot.slane %v450, %v457
  %v461 = vadd.f32 %v329, %v454
  %v462 = vadd.f32 %v332, %v454
  %v463 = vadd.f32 %v337, %v454
  %v464 = vadd.f32 %v340, %v454
  %v465 = vadd.f32 %v345, %v458
  %v466 = vadd.f32 %v348, %v458
  %v467 = vadd.f32 %v353, %v458
  %v468 = vadd.f32 %v356, %v458
  %v469 = vpack.c.bf16 %v462, %v461
  %v470 = vpack.c.bf16 %v464, %v463
  %v471 = vpack.c.bf16 %v466, %v465
  %v472 = vpack.c.bf16 %v468, %v467
  %v473 = vld [vmem:[%s11] sm:$0xf]
  %v474 = vld [vmem:[%s11 + $0x4] sm:$0xf]
  %v475 = vld [vmem:[%s11 + $0x8] sm:$0xf]
  %v476 = vld [vmem:[%s11 + $0xc] sm:$0xf]
  %v481 = vunpack.c.l.b16 %v473
  %v482 = vunpack.c.l.b16 %v474
  %v483 = vunpack.c.l.b16 %v475
  %v484 = vunpack.c.l.b16 %v476
  %v485 = vpack.c.b16 %v482, %v481
  %v486 = vpack.c.b16 %v484, %v483
  %v490 = vsel %vm384, %v469, 0
  %v493 = vsel %vm384, %v470, 0
  %v496 = vsel %vm384, %v471, 0
  %v499 = vsel %vm384, %v472, 0
  %501 = vmatprep.subr.bf16.mxu0 0
  %502 = vmatpush1.bf16.msra.mxu0 %v485
  %503 = vmatprep.subr.bf16.mxu0 0
  %504 = vmatpush1.bf16.msra.mxu0 %v486
  %505 = vmatprep.subr.bf16.mxu0 0
  %506 = vmatpush1.bf16.msra.mxu0 0
  %507 = vmatprep.subr.bf16.mxu0 0
  %508 = vmatpush1.bf16.msra.mxu0 0
  %509 = vmatprep.subr.bf16.mxu0 0
  %510 = vmatpush1.bf16.msra.mxu0 0
  %511 = vmatprep.subr.bf16.mxu0 0
  %512 = vmatpush1.bf16.msra.mxu0 0
  %513 = vmatprep.subr.bf16.mxu0 0
  %514 = vmatpush1.bf16.msra.mxu0 0
  %515 = vmatprep.subr.bf16.mxu0 0
  %516 = vmatpush1.bf16.msra.mxu0 0
  %517 = vmatprep.subr.bf16.mxu0 0
  %518 = vmatpush1.bf16.msra.mxu0 0
  %519 = vmatprep.subr.bf16.mxu0 0
  %520 = vmatpush1.bf16.msra.mxu0 0
  %521 = vmatprep.subr.bf16.mxu0 0
  %522 = vmatpush1.bf16.msra.mxu0 0
  %523 = vmatprep.subr.bf16.mxu0 0
  %524 = vmatpush1.bf16.msra.mxu0 0
  %525 = vmatprep.subr.bf16.mxu0 0
  %526 = vmatpush1.bf16.msra.mxu0 0
  %527 = vmatprep.subr.bf16.mxu0 0
  %528 = vmatpush1.bf16.msra.mxu0 0
  %529 = vmatprep.subr.bf16.mxu0 0
  %530 = vmatpush1.bf16.msra.mxu0 0
  %531 = vmatprep.subr.bf16.mxu0 0
  %532 = vmatpush1.bf16.msra.mxu0 0
  %533 = vmatprep.mubr.bf16.mxu0 0
  %534 = vmatmul.mubr.bf16.gmra.mrb[0].mxu0 %v490
  %v535 = vpop.f32.mrb[0].mxu0
  %v536 = vadd.f32 0.0, %v535
  %v537 = vpop.f32.mrb[0].mxu0
  %v538 = vpop.f32.mrb[0].mxu0
  %v539 = vadd.f32 0.0, %v538
  %v540 = vpop.f32.mrb[0].mxu0
  %541 = vmatprep.mubr.bf16.mxu0 0
  %542 = vmatmul.mubr.bf16.gmra.mrb[0].mxu0 %v493
  %v543 = vpop.f32.mrb[0].mxu0
  %v544 = vadd.f32 0.0, %v543
  %v545 = vpop.f32.mrb[0].mxu0
  %v546 = vpop.f32.mrb[0].mxu0
  %v547 = vadd.f32 0.0, %v546
  %v548 = vpop.f32.mrb[0].mxu0
  %549 = vmatprep.mubr.bf16.mxu0 0
  %550 = vmatmul.mubr.bf16.gmra.mrb[0].mxu0 %v496
  %v551 = vpop.f32.mrb[0].mxu0
  %v552 = vadd.f32 0.0, %v551
  %v553 = vpop.f32.mrb[0].mxu0
  %v554 = vpop.f32.mrb[0].mxu0
  %v555 = vadd.f32 0.0, %v554
  %v556 = vpop.f32.mrb[0].mxu0
  %557 = vmatprep.mubr.bf16.mxu0 0
  %558 = vmatmul.mubr.bf16.gmra.mrb[0].mxu0 %v499
  %v559 = vpop.f32.mrb[0].mxu0
  %v560 = vadd.f32 0.0, %v559
  %v561 = vpop.f32.mrb[0].mxu0
  %v562 = vpop.f32.mrb[0].mxu0
  %v563 = vadd.f32 0.0, %v562
  %v564 = vpop.f32.mrb[0].mxu0
  %565 = vdwg.mxu0
  %v566 = vld [vmem:[%s12] sm:$0xf]
  %v567 = vld [vmem:[%s12 + $0x4] sm:$0xf]
  %v568 = vld [vmem:[%s12 + $0x8] sm:$0xf]
  %v569 = vld [vmem:[%s12 + $0xc] sm:$0xf]
  %v574 = vunpack.c.l.b16 %v566
  %v575 = vunpack.c.l.b16 %v567
  %v576 = vunpack.c.l.b16 %v568
  %v577 = vunpack.c.l.b16 %v569
  %v578 = vpack.c.b16 %v575, %v574
  %v579 = vpack.c.b16 %v577, %v576
  %582 = vmatprep.subr.bf16.mxu0 0
  %583 = vmatpush1.bf16.msra.mxu0 %v578
  %584 = vmatprep.subr.bf16.mxu0 0
  %585 = vmatpush1.bf16.msra.mxu0 %v579
  %586 = vmatprep.subr.bf16.mxu0 0
  %587 = vmatpush1.bf16.msra.mxu0 0
  %588 = vmatprep.subr.bf16.mxu0 0
  %589 = vmatpush1.bf16.msra.mxu0 0
  %590 = vmatprep.subr.bf16.mxu0 0
  %591 = vmatpush1.bf16.msra.mxu0 0
  %592 = vmatprep.subr.bf16.mxu0 0
  %593 = vmatpush1.bf16.msra.mxu0 0
  %594 = vmatprep.subr.bf16.mxu0 0
  %595 = vmatpush1.bf16.msra.mxu0 0
  %596 = vmatprep.subr.bf16.mxu0 0
  %597 = vmatpush1.bf16.msra.mxu0 0
  %598 = vmatprep.subr.bf16.mxu0 0
  %599 = vmatpush1.bf16.msra.mxu0 0
  %600 = vmatprep.subr.bf16.mxu0 0
  %601 = vmatpush1.bf16.msra.mxu0 0
  %602 = vmatprep.subr.bf16.mxu0 0
  %603 = vmatpush1.bf16.msra.mxu0 0
  %604 = vmatprep.subr.bf16.mxu0 0
  %605 = vmatpush1.bf16.msra.mxu0 0
  %606 = vmatprep.subr.bf16.mxu0 0
  %607 = vmatpush1.bf16.msra.mxu0 0
  %608 = vmatprep.subr.bf16.mxu0 0
  %609 = vmatpush1.bf16.msra.mxu0 0
  %610 = vmatprep.subr.bf16.mxu0 0
  %611 = vmatpush1.bf16.msra.mxu0 0
  %612 = vmatprep.subr.bf16.mxu0 0
  %613 = vmatpush1.bf16.msra.mxu0 0
  %614 = vmatprep.mubr.bf16.mxu0 0
  %615 = vmatmul.mubr.bf16.gmra.mrb[0].mxu0 %v490
  %v616 = vpop.f32.mrb[0].mxu0
  %v617 = vadd.f32 0.0, %v616
  %v618 = vpop.f32.mrb[0].mxu0
  %v619 = vpop.f32.mrb[0].mxu0
  %v620 = vadd.f32 0.0, %v619
  %v621 = vpop.f32.mrb[0].mxu0
  %622 = vmatprep.mubr.bf16.mxu0 0
  %623 = vmatmul.mubr.bf16.gmra.mrb[0].mxu0 %v493
  %v624 = vpop.f32.mrb[0].mxu0
  %v625 = vadd.f32 0.0, %v624
  %v626 = vpop.f32.mrb[0].mxu0
  %v627 = vpop.f32.mrb[0].mxu0
  %v628 = vadd.f32 0.0, %v627
  %v629 = vpop.f32.mrb[0].mxu0
  %630 = vmatprep.mubr.bf16.mxu0 0
  %631 = vmatmul.mubr.bf16.gmra.mrb[0].mxu0 %v496
  %v632 = vpop.f32.mrb[0].mxu0
  %v633 = vadd.f32 0.0, %v632
  %v634 = vpop.f32.mrb[0].mxu0
  %v635 = vpop.f32.mrb[0].mxu0
  %v636 = vadd.f32 0.0, %v635
  %v637 = vpop.f32.mrb[0].mxu0
  %638 = vmatprep.mubr.bf16.mxu0 0
  %639 = vmatmul.mubr.bf16.gmra.mrb[0].mxu0 %v499
  %v640 = vpop.f32.mrb[0].mxu0
  %v641 = vadd.f32 0.0, %v640
  %v642 = vpop.f32.mrb[0].mxu0
  %v643 = vpop.f32.mrb[0].mxu0
  %v644 = vadd.f32 0.0, %v643
  %v645 = vpop.f32.mrb[0].mxu0
  %646 = vdwg.mxu0
  %v647 = vld [vmem:[%s13] sm:$0xf]
  %v648 = vld [vmem:[%s13 + $0x4] sm:$0xf]
  %v649 = vld [vmem:[%s13 + $0x8] sm:$0xf]
  %v650 = vld [vmem:[%s13 + $0xc] sm:$0xf]
  %v655 = vunpack.c.l.b16 %v647
  %v656 = vunpack.c.l.b16 %v648
  %v657 = vunpack.c.l.b16 %v649
  %v658 = vunpack.c.l.b16 %v650
  %v659 = vpack.c.b16 %v656, %v655
  %v660 = vpack.c.b16 %v658, %v657
  %663 = vmatprep.subr.bf16.mxu0 0
  %664 = vmatpush1.bf16.msra.mxu0 %v659
  %665 = vmatprep.subr.bf16.mxu0 0
  %666 = vmatpush1.bf16.msra.mxu0 %v660
  %667 = vmatprep.subr.bf16.mxu0 0
  %668 = vmatpush1.bf16.msra.mxu0 0
  %669 = vmatprep.subr.bf16.mxu0 0
  %670 = vmatpush1.bf16.msra.mxu0 0
  %671 = vmatprep.subr.bf16.mxu0 0
  %672 = vmatpush1.bf16.msra.mxu0 0
  %673 = vmatprep.subr.bf16.mxu0 0
  %674 = vmatpush1.bf16.msra.mxu0 0
  %675 = vmatprep.subr.bf16.mxu0 0
  %676 = vmatpush1.bf16.msra.mxu0 0
  %677 = vmatprep.subr.bf16.mxu0 0
  %678 = vmatpush1.bf16.msra.mxu0 0
  %679 = vmatprep.subr.bf16.mxu0 0
  %680 = vmatpush1.bf16.msra.mxu0 0
  %681 = vmatprep.subr.bf16.mxu0 0
  %682 = vmatpush1.bf16.msra.mxu0 0
  %683 = vmatprep.subr.bf16.mxu0 0
  %684 = vmatpush1.bf16.msra.mxu0 0
  %685 = vmatprep.subr.bf16.mxu0 0
  %686 = vmatpush1.bf16.msra.mxu0 0
  %687 = vmatprep.subr.bf16.mxu0 0
  %688 = vmatpush1.bf16.msra.mxu0 0
  %689 = vmatprep.subr.bf16.mxu0 0
  %690 = vmatpush1.bf16.msra.mxu0 0
  %691 = vmatprep.subr.bf16.mxu0 0
  %692 = vmatpush1.bf16.msra.mxu0 0
  %693 = vmatprep.subr.bf16.mxu0 0
  %694 = vmatpush1.bf16.msra.mxu0 0
  %695 = vmatprep.mubr.bf16.mxu0 0
  %696 = vmatmul.mubr.bf16.gmra.mrb[0].mxu0 %v490
  %v697 = vpop.f32.mrb[0].mxu0
  %v698 = vadd.f32 0.0, %v697
  %v699 = vpop.f32.mrb[0].mxu0
  %v700 = vpop.f32.mrb[0].mxu0
  %v701 = vadd.f32 0.0, %v700
  %v702 = vpop.f32.mrb[0].mxu0
  %703 = vmatprep.mubr.bf16.mxu0 0
  %704 = vmatmul.mubr.bf16.gmra.mrb[0].mxu0 %v493
  %v705 = vpop.f32.mrb[0].mxu0
  %v706 = vadd.f32 0.0, %v705
  %v707 = vpop.f32.mrb[0].mxu0
  %v708 = vpop.f32.mrb[0].mxu0
  %v709 = vadd.f32 0.0, %v708
  %v710 = vpop.f32.mrb[0].mxu0
  %711 = vmatprep.mubr.bf16.mxu0 0
  %712 = vmatmul.mubr.bf16.gmra.mrb[0].mxu0 %v496
  %v713 = vpop.f32.mrb[0].mxu0
  %v714 = vadd.f32 0.0, %v713
  %v715 = vpop.f32.mrb[0].mxu0
  %v716 = vpop.f32.mrb[0].mxu0
  %v717 = vadd.f32 0.0, %v716
  %v718 = vpop.f32.mrb[0].mxu0
  %719 = vmatprep.mubr.bf16.mxu0 0
  %720 = vmatmul.mubr.bf16.gmra.mrb[0].mxu0 %v499
  %v721 = vpop.f32.mrb[0].mxu0
  %v722 = vadd.f32 0.0, %v721
  %v723 = vpop.f32.mrb[0].mxu0
  %v724 = vpop.f32.mrb[0].mxu0
  %v725 = vadd.f32 0.0, %v724
  %v726 = vpop.f32.mrb[0].mxu0
  %727 = vdwg.mxu0
  %v728 = vpack.c.bf16 %v539, %v536
  %v729 = vpack.c.bf16 %v547, %v544
  %v730 = vpack.c.bf16 %v555, %v552
  %v731 = vpack.c.bf16 %v563, %v560
  %v732 = vpack.c.bf16 %v620, %v617
  %v733 = vpack.c.bf16 %v628, %v625
  %v734 = vpack.c.bf16 %v636, %v633
  %v735 = vpack.c.bf16 %v644, %v641
  %v736 = vpack.c.bf16 %v701, %v698
  %v737 = vpack.c.bf16 %v709, %v706
  %v738 = vpack.c.bf16 %v717, %v714
  %v739 = vpack.c.bf16 %v725, %v722
  %v740 = vld [vmem:[%s4] sm:$0x1]
  %v741 = vld [vmem:[%s4 + $0x1] sm:$0x1]
  %v742 = vld [vmem:[%s4 + $0x2] sm:$0x1]
  %v743 = vld [vmem:[%s4 + $0x3] sm:$0x1]
  %v744 = vld [vmem:[%s4 + $0x4] sm:$0x1]
  %v745 = vld [vmem:[%s4 + $0x5] sm:$0x1]
  %v746 = vld [vmem:[%s4 + $0x6] sm:$0x1]
  %v747 = vld [vmem:[%s4 + $0x7] sm:$0x1]
  %v749 = vpack.i.b16 %v740, %v740
  %v751 = vlaneseq
  %v752 = vshrl.u32 %v751, 7
  %v753 = vsub.s32 0, %v752
  %v754 = vrot.slane %v749, %v753
  %v756 = vpack.i.b16 %v741, %v741
  %v758 = vlaneseq
  %v759 = vshrl.u32 %v758, 7
  %v760 = vsub.s32 0, %v759
  %v761 = vrot.slane %v756, %v760
  %v763 = vpack.i.b16 %v742, %v742
  %v765 = vlaneseq
  %v766 = vshrl.u32 %v765, 7
  %v767 = vsub.s32 0, %v766
  %v768 = vrot.slane %v763, %v767
  %v770 = vpack.i.b16 %v743, %v743
  %v772 = vlaneseq
  %v773 = vshrl.u32 %v772, 7
  %v774 = vsub.s32 0, %v773
  %v775 = vrot.slane %v770, %v774
  %v777 = vpack.i.b16 %v744, %v744
  %v779 = vlaneseq
  %v780 = vshrl.u32 %v779, 7
  %v781 = vsub.s32 0, %v780
  %v782 = vrot.slane %v777, %v781
  %v784 = vpack.i.b16 %v745, %v745
  %v786 = vlaneseq
  %v787 = vshrl.u32 %v786, 7
  %v788 = vsub.s32 0, %v787
  %v789 = vrot.slane %v784, %v788
  %v791 = vpack.i.b16 %v746, %v746
  %v793 = vlaneseq
  %v794 = vshrl.u32 %v793, 7
  %v795 = vsub.s32 0, %v794
  %v796 = vrot.slane %v791, %v795
  %v798 = vpack.i.b16 %v747, %v747
  %v800 = vlaneseq
  %v801 = vshrl.u32 %v800, 7
  %v802 = vsub.s32 0, %v801
  %v803 = vrot.slane %v798, %v802
  %v804 = vmul.bf16 %v728, %v754
  %v805 = vmul.bf16 %v729, %v754
  %v806 = vmul.bf16 %v728, %v761
  %v807 = vmul.bf16 %v729, %v761
  %v808 = vmul.bf16 %v728, %v768
  %v809 = vmul.bf16 %v729, %v768
  %v810 = vmul.bf16 %v728, %v775
  %v811 = vmul.bf16 %v729, %v775
  %v812 = vmul.bf16 %v728, %v782
  %v813 = vmul.bf16 %v729, %v782
  %v814 = vmul.bf16 %v728, %v789
  %v815 = vmul.bf16 %v729, %v789
  %v816 = vmul.bf16 %v728, %v796
  %v817 = vmul.bf16 %v729, %v796
  %v818 = vmul.bf16 %v728, %v803
  %v819 = vmul.bf16 %v729, %v803
  %v820 = vmul.bf16 %v730, %v754
  %v821 = vmul.bf16 %v731, %v754
  %v822 = vmul.bf16 %v730, %v761
  %v823 = vmul.bf16 %v731, %v761
  %v824 = vmul.bf16 %v730, %v768
  %v825 = vmul.bf16 %v731, %v768
  %v826 = vmul.bf16 %v730, %v775
  %v827 = vmul.bf16 %v731, %v775
  %v828 = vmul.bf16 %v730, %v782
  %v829 = vmul.bf16 %v731, %v782
  %v830 = vmul.bf16 %v730, %v789
  %v831 = vmul.bf16 %v731, %v789
  %v832 = vmul.bf16 %v730, %v796
  %v833 = vmul.bf16 %v731, %v796
  %v834 = vmul.bf16 %v730, %v803
  %v835 = vmul.bf16 %v731, %v803
  %v837 = vsel %vm384, %v804, 0
  %v840 = vsel %vm384, %v805, 0
  %v843 = vsel %vm384, %v806, 0
  %v846 = vsel %vm384, %v807, 0
  %v849 = vsel %vm384, %v808, 0
  %v852 = vsel %vm384, %v809, 0
  %v855 = vsel %vm384, %v810, 0
  %v858 = vsel %vm384, %v811, 0
  %v861 = vsel %vm384, %v812, 0
  %v864 = vsel %vm384, %v813, 0
  %v867 = vsel %vm384, %v814, 0
  %v870 = vsel %vm384, %v815, 0
  %v873 = vsel %vm384, %v816, 0
  %v876 = vsel %vm384, %v817, 0
  %v879 = vsel %vm384, %v818, 0
  %v882 = vsel %vm384, %v819, 0
  %v885 = vsel %vm384, %v732, 0
  %v888 = vsel %vm384, %v733, 0
  %890 = vmatprep.subr.bf16.mxu0 0
  %891 = vmatpush1.bf16.xpose.msra.mxu0 %v885
  %892 = vmatprep.subr.bf16.mxu0 0
  %893 = vmatpush1.bf16.xpose.msra.mxu0 %v888
  %894 = vmatprep.subr.bf16.mxu0 0
  %895 = vmatpush1.bf16.xpose.msra.mxu0 0
  %896 = vmatprep.subr.bf16.mxu0 0
  %897 = vmatpush1.bf16.xpose.msra.mxu0 0
  %898 = vmatprep.subr.bf16.mxu0 0
  %899 = vmatpush1.bf16.xpose.msra.mxu0 0
  %900 = vmatprep.subr.bf16.mxu0 0
  %901 = vmatpush1.bf16.xpose.msra.mxu0 0
  %902 = vmatprep.subr.bf16.mxu0 0
  %903 = vmatpush1.bf16.xpose.msra.mxu0 0
  %904 = vmatprep.subr.bf16.mxu0 0
  %905 = vmatpush1.bf16.xpose.msra.mxu0 0
  %906 = vmatprep.subr.bf16.mxu0 0
  %907 = vmatpush1.bf16.xpose.msra.mxu0 0
  %908 = vmatprep.subr.bf16.mxu0 0
  %909 = vmatpush1.bf16.xpose.msra.mxu0 0
  %910 = vmatprep.subr.bf16.mxu0 0
  %911 = vmatpush1.bf16.xpose.msra.mxu0 0
  %912 = vmatprep.subr.bf16.mxu0 0
  %913 = vmatpush1.bf16.xpose.msra.mxu0 0
  %914 = vmatprep.subr.bf16.mxu0 0
  %915 = vmatpush1.bf16.xpose.msra.mxu0 0
  %916 = vmatprep.subr.bf16.mxu0 0
  %917 = vmatpush1.bf16.xpose.msra.mxu0 0
  %918 = vmatprep.subr.bf16.mxu0 0
  %919 = vmatpush1.bf16.xpose.msra.mxu0 0
  %920 = vmatprep.subr.bf16.mxu0 0
  %921 = vmatpush1.bf16.xpose.msra.mxu0 0
  %922 = vmatprep.mubr.bf16.mxu0 0
  %923 = vmatmul.mubr.bf16.gmra.mrb[0].mxu0 %v837
  %v924 = vpop.f32.mrb[0].mxu0
  %v925 = vadd.f32 0.0, %v924
  %v926 = vpop.f32.mrb[0].mxu0
  %v927 = vpop.f32.mrb[0].mxu0
  %v928 = vadd.f32 0.0, %v927
  %v929 = vpop.f32.mrb[0].mxu0
  %930 = vmatprep.mubr.bf16.mxu0 0
  %931 = vmatmul.mubr.bf16.gmra.mrb[0].mxu0 %v840
  %v932 = vpop.f32.mrb[0].mxu0
  %v933 = vadd.f32 0.0, %v932
  %v934 = vpop.f32.mrb[0].mxu0
  %v935 = vpop.f32.mrb[0].mxu0
  %v936 = vadd.f32 0.0, %v935
  %v937 = vpop.f32.mrb[0].mxu0
  %938 = vmatprep.mubr.bf16.mxu0 0
  %939 = vmatmul.mubr.bf16.gmra.mrb[0].mxu0 %v843
  %v940 = vpop.f32.mrb[0].mxu0
  %v941 = vadd.f32 0.0, %v940
  %v942 = vpop.f32.mrb[0].mxu0
  %v943 = vpop.f32.mrb[0].mxu0
  %v944 = vadd.f32 0.0, %v943
  %v945 = vpop.f32.mrb[0].mxu0
  %946 = vmatprep.mubr.bf16.mxu0 0
  %947 = vmatmul.mubr.bf16.gmra.mrb[0].mxu0 %v846
  %v948 = vpop.f32.mrb[0].mxu0
  %v949 = vadd.f32 0.0, %v948
  %v950 = vpop.f32.mrb[0].mxu0
  %v951 = vpop.f32.mrb[0].mxu0
  %v952 = vadd.f32 0.0, %v951
  %v953 = vpop.f32.mrb[0].mxu0
  %954 = vmatprep.mubr.bf16.mxu0 0
  %955 = vmatmul.mubr.bf16.gmra.mrb[0].mxu0 %v849
  %v956 = vpop.f32.mrb[0].mxu0
  %v957 = vadd.f32 0.0, %v956
  %v958 = vpop.f32.mrb[0].mxu0
  %v959 = vpop.f32.mrb[0].mxu0
  %v960 = vadd.f32 0.0, %v959
  %v961 = vpop.f32.mrb[0].mxu0
  %962 = vmatprep.mubr.bf16.mxu0 0
  %963 = vmatmul.mubr.bf16.gmra.mrb[0].mxu0 %v852
  %v964 = vpop.f32.mrb[0].mxu0
  %v965 = vadd.f32 0.0, %v964
  %v966 = vpop.f32.mrb[0].mxu0
  %v967 = vpop.f32.mrb[0].mxu0
  %v968 = vadd.f32 0.0, %v967
  %v969 = vpop.f32.mrb[0].mxu0
  %970 = vmatprep.mubr.bf16.mxu0 0
  %971 = vmatmul.mubr.bf16.gmra.mrb[0].mxu0 %v855
  %v972 = vpop.f32.mrb[0].mxu0
  %v973 = vadd.f32 0.0, %v972
  %v974 = vpop.f32.mrb[0].mxu0
  %v975 = vpop.f32.mrb[0].mxu0
  %v976 = vadd.f32 0.0, %v975
  %v977 = vpop.f32.mrb[0].mxu0
  %978 = vmatprep.mubr.bf16.mxu0 0
  %979 = vmatmul.mubr.bf16.gmra.mrb[0].mxu0 %v858
  %v980 = vpop.f32.mrb[0].mxu0
  %v981 = vadd.f32 0.0, %v980
  %v982 = vpop.f32.mrb[0].mxu0
  %v983 = vpop.f32.mrb[0].mxu0
  %v984 = vadd.f32 0.0, %v983
  %v985 = vpop.f32.mrb[0].mxu0
  %986 = vmatprep.mubr.bf16.mxu0 0
  %987 = vmatmul.mubr.bf16.gmra.mrb[0].mxu0 %v861
  %v988 = vpop.f32.mrb[0].mxu0
  %v989 = vadd.f32 0.0, %v988
  %v990 = vpop.f32.mrb[0].mxu0
  %v991 = vpop.f32.mrb[0].mxu0
  %v992 = vadd.f32 0.0, %v991
  %v993 = vpop.f32.mrb[0].mxu0
  %994 = vmatprep.mubr.bf16.mxu0 0
  %995 = vmatmul.mubr.bf16.gmra.mrb[0].mxu0 %v864
  %v996 = vpop.f32.mrb[0].mxu0
  %v997 = vadd.f32 0.0, %v996
  %v998 = vpop.f32.mrb[0].mxu0
  %v999 = vpop.f32.mrb[0].mxu0
  %v1000 = vadd.f32 0.0, %v999
  %v1001 = vpop.f32.mrb[0].mxu0
  %1002 = vmatprep.mubr.bf16.mxu0 0
  %1003 = vmatmul.mubr.bf16.gmra.mrb[0].mxu0 %v867
  %v1004 = vpop.f32.mrb[0].mxu0
  %v1005 = vadd.f32 0.0, %v1004
  %v1006 = vpop.f32.mrb[0].mxu0
  %v1007 = vpop.f32.mrb[0].mxu0
  %v1008 = vadd.f32 0.0, %v1007
  %v1009 = vpop.f32.mrb[0].mxu0
  %1010 = vmatprep.mubr.bf16.mxu0 0
  %1011 = vmatmul.mubr.bf16.gmra.mrb[0].mxu0 %v870
  %v1012 = vpop.f32.mrb[0].mxu0
  %v1013 = vadd.f32 0.0, %v1012
  %v1014 = vpop.f32.mrb[0].mxu0
  %v1015 = vpop.f32.mrb[0].mxu0
  %v1016 = vadd.f32 0.0, %v1015
  %v1017 = vpop.f32.mrb[0].mxu0
  %1018 = vmatprep.mubr.bf16.mxu0 0
  %1019 = vmatmul.mubr.bf16.gmra.mrb[0].mxu0 %v873
  %v1020 = vpop.f32.mrb[0].mxu0
  %v1021 = vadd.f32 0.0, %v1020
  %v1022 = vpop.f32.mrb[0].mxu0
  %v1023 = vpop.f32.mrb[0].mxu0
  %v1024 = vadd.f32 0.0, %v1023
  %v1025 = vpop.f32.mrb[0].mxu0
  %1026 = vmatprep.mubr.bf16.mxu0 0
  %1027 = vmatmul.mubr.bf16.gmra.mrb[0].mxu0 %v876
  %v1028 = vpop.f32.mrb[0].mxu0
  %v1029 = vadd.f32 0.0, %v1028
  %v1030 = vpop.f32.mrb[0].mxu0
  %v1031 = vpop.f32.mrb[0].mxu0
  %v1032 = vadd.f32 0.0, %v1031
  %v1033 = vpop.f32.mrb[0].mxu0
  %1034 = vmatprep.mubr.bf16.mxu0 0
  %1035 = vmatmul.mubr.bf16.gmra.mrb[0].mxu0 %v879
  %v1036 = vpop.f32.mrb[0].mxu0
  %v1037 = vadd.f32 0.0, %v1036
  %v1038 = vpop.f32.mrb[0].mxu0
  %v1039 = vpop.f32.mrb[0].mxu0
  %v1040 = vadd.f32 0.0, %v1039
  %v1041 = vpop.f32.mrb[0].mxu0
  %1042 = vmatprep.mubr.bf16.mxu0 0
  %1043 = vmatmul.mubr.bf16.gmra.mrb[0].mxu0 %v882
  %v1044 = vpop.f32.mrb[0].mxu0
  %v1045 = vadd.f32 0.0, %v1044
  %v1046 = vpop.f32.mrb[0].mxu0
  %v1047 = vpop.f32.mrb[0].mxu0
  %v1048 = vadd.f32 0.0, %v1047
  %v1049 = vpop.f32.mrb[0].mxu0
  %1050 = vdwg.mxu0
  %v1052 = vsel %vm384, %v820, 0
  %v1055 = vsel %vm384, %v821, 0
  %v1058 = vsel %vm384, %v822, 0
  %v1061 = vsel %vm384, %v823, 0
  %v1064 = vsel %vm384, %v824, 0
  %v1067 = vsel %vm384, %v825, 0
  %v1070 = vsel %vm384, %v826, 0
  %v1073 = vsel %vm384, %v827, 0
  %v1076 = vsel %vm384, %v828, 0
  %v1079 = vsel %vm384, %v829, 0
  %v1082 = vsel %vm384, %v830, 0
  %v1085 = vsel %vm384, %v831, 0
  %v1088 = vsel %vm384, %v832, 0
  %v1091 = vsel %vm384, %v833, 0
  %v1094 = vsel %vm384, %v834, 0
  %v1097 = vsel %vm384, %v835, 0
  %v1100 = vsel %vm384, %v734, 0
  %v1103 = vsel %vm384, %v735, 0
  %1105 = vmatprep.subr.bf16.mxu0 0
  %1106 = vmatpush1.bf16.xpose.msra.mxu0 %v1100
  %1107 = vmatprep.subr.bf16.mxu0 0
  %1108 = vmatpush1.bf16.xpose.msra.mxu0 %v1103
  %1109 = vmatprep.subr.bf16.mxu0 0
  %1110 = vmatpush1.bf16.xpose.msra.mxu0 0
  %1111 = vmatprep.subr.bf16.mxu0 0
  %1112 = vmatpush1.bf16.xpose.msra.mxu0 0
  %1113 = vmatprep.subr.bf16.mxu0 0
  %1114 = vmatpush1.bf16.xpose.msra.mxu0 0
  %1115 = vmatprep.subr.bf16.mxu0 0
  %1116 = vmatpush1.bf16.xpose.msra.mxu0 0
  %1117 = vmatprep.subr.bf16.mxu0 0
  %1118 = vmatpush1.bf16.xpose.msra.mxu0 0
  %1119 = vmatprep.subr.bf16.mxu0 0
  %1120 = vmatpush1.bf16.xpose.msra.mxu0 0
  %1121 = vmatprep.subr.bf16.mxu0 0
  %1122 = vmatpush1.bf16.xpose.msra.mxu0 0
  %1123 = vmatprep.subr.bf16.mxu0 0
  %1124 = vmatpush1.bf16.xpose.msra.mxu0 0
  %1125 = vmatprep.subr.bf16.mxu0 0
  %1126 = vmatpush1.bf16.xpose.msra.mxu0 0
  %1127 = vmatprep.subr.bf16.mxu0 0
  %1128 = vmatpush1.bf16.xpose.msra.mxu0 0
  %1129 = vmatprep.subr.bf16.mxu0 0
  %1130 = vmatpush1.bf16.xpose.msra.mxu0 0
  %1131 = vmatprep.subr.bf16.mxu0 0
  %1132 = vmatpush1.bf16.xpose.msra.mxu0 0
  %1133 = vmatprep.subr.bf16.mxu0 0
  %1134 = vmatpush1.bf16.xpose.msra.mxu0 0
  %1135 = vmatprep.subr.bf16.mxu0 0
  %1136 = vmatpush1.bf16.xpose.msra.mxu0 0
  %1137 = vmatprep.mubr.bf16.mxu0 0
  %1138 = vmatmul.mubr.bf16.gmra.mrb[0].mxu0 %v1052
  %v1139 = vpop.f32.mrb[0].mxu0
  %v1140 = vadd.f32 0.0, %v1139
  %v1141 = vpop.f32.mrb[0].mxu0
  %v1142 = vpop.f32.mrb[0].mxu0
  %v1143 = vadd.f32 0.0, %v1142
  %v1144 = vpop.f32.mrb[0].mxu0
  %1145 = vmatprep.mubr.bf16.mxu0 0
  %1146 = vmatmul.mubr.bf16.gmra.mrb[0].mxu0 %v1055
  %v1147 = vpop.f32.mrb[0].mxu0
  %v1148 = vadd.f32 0.0, %v1147
  %v1149 = vpop.f32.mrb[0].mxu0
  %v1150 = vpop.f32.mrb[0].mxu0
  %v1151 = vadd.f32 0.0, %v1150
  %v1152 = vpop.f32.mrb[0].mxu0
  %1153 = vmatprep.mubr.bf16.mxu0 0
  %1154 = vmatmul.mubr.bf16.gmra.mrb[0].mxu0 %v1058
  %v1155 = vpop.f32.mrb[0].mxu0
  %v1156 = vadd.f32 0.0, %v1155
  %v1157 = vpop.f32.mrb[0].mxu0
  %v1158 = vpop.f32.mrb[0].mxu0
  %v1159 = vadd.f32 0.0, %v1158
  %v1160 = vpop.f32.mrb[0].mxu0
  %1161 = vmatprep.mubr.bf16.mxu0 0
  %1162 = vmatmul.mubr.bf16.gmra.mrb[0].mxu0 %v1061
  %v1163 = vpop.f32.mrb[0].mxu0
  %v1164 = vadd.f32 0.0, %v1163
  %v1165 = vpop.f32.mrb[0].mxu0
  %v1166 = vpop.f32.mrb[0].mxu0
  %v1167 = vadd.f32 0.0, %v1166
  %v1168 = vpop.f32.mrb[0].mxu0
  %1169 = vmatprep.mubr.bf16.mxu0 0
  %1170 = vmatmul.mubr.bf16.gmra.mrb[0].mxu0 %v1064
  %v1171 = vpop.f32.mrb[0].mxu0
  %v1172 = vadd.f32 0.0, %v1171
  %v1173 = vpop.f32.mrb[0].mxu0
  %v1174 = vpop.f32.mrb[0].mxu0
  %v1175 = vadd.f32 0.0, %v1174
  %v1176 = vpop.f32.mrb[0].mxu0
  %1177 = vmatprep.mubr.bf16.mxu0 0
  %1178 = vmatmul.mubr.bf16.gmra.mrb[0].mxu0 %v1067
  %v1179 = vpop.f32.mrb[0].mxu0
  %v1180 = vadd.f32 0.0, %v1179
  %v1181 = vpop.f32.mrb[0].mxu0
  %v1182 = vpop.f32.mrb[0].mxu0
  %v1183 = vadd.f32 0.0, %v1182
  %v1184 = vpop.f32.mrb[0].mxu0
  %1185 = vmatprep.mubr.bf16.mxu0 0
  %1186 = vmatmul.mubr.bf16.gmra.mrb[0].mxu0 %v1070
  %v1187 = vpop.f32.mrb[0].mxu0
  %v1188 = vadd.f32 0.0, %v1187
  %v1189 = vpop.f32.mrb[0].mxu0
  %v1190 = vpop.f32.mrb[0].mxu0
  %v1191 = vadd.f32 0.0, %v1190
  %v1192 = vpop.f32.mrb[0].mxu0
  %1193 = vmatprep.mubr.bf16.mxu0 0
  %1194 = vmatmul.mubr.bf16.gmra.mrb[0].mxu0 %v1073
  %v1195 = vpop.f32.mrb[0].mxu0
  %v1196 = vadd.f32 0.0, %v1195
  %v1197 = vpop.f32.mrb[0].mxu0
  %v1198 = vpop.f32.mrb[0].mxu0
  %v1199 = vadd.f32 0.0, %v1198
  %v1200 = vpop.f32.mrb[0].mxu0
  %1201 = vmatprep.mubr.bf16.mxu0 0
  %1202 = vmatmul.mubr.bf16.gmra.mrb[0].mxu0 %v1076
  %v1203 = vpop.f32.mrb[0].mxu0
  %v1204 = vadd.f32 0.0, %v1203
  %v1205 = vpop.f32.mrb[0].mxu0
  %v1206 = vpop.f32.mrb[0].mxu0
  %v1207 = vadd.f32 0.0, %v1206
  %v1208 = vpop.f32.mrb[0].mxu0
  %1209 = vmatprep.mubr.bf16.mxu0 0
  %1210 = vmatmul.mubr.bf16.gmra.mrb[0].mxu0 %v1079
  %v1211 = vpop.f32.mrb[0].mxu0
  %v1212 = vadd.f32 0.0, %v1211
  %v1213 = vpop.f32.mrb[0].mxu0
  %v1214 = vpop.f32.mrb[0].mxu0
  %v1215 = vadd.f32 0.0, %v1214
  %v1216 = vpop.f32.mrb[0].mxu0
  %1217 = vmatprep.mubr.bf16.mxu0 0
  %1218 = vmatmul.mubr.bf16.gmra.mrb[0].mxu0 %v1082
  %v1219 = vpop.f32.mrb[0].mxu0
  %v1220 = vadd.f32 0.0, %v1219
  %v1221 = vpop.f32.mrb[0].mxu0
  %v1222 = vpop.f32.mrb[0].mxu0
  %v1223 = vadd.f32 0.0, %v1222
  %v1224 = vpop.f32.mrb[0].mxu0
  %1225 = vmatprep.mubr.bf16.mxu0 0
  %1226 = vmatmul.mubr.bf16.gmra.mrb[0].mxu0 %v1085
  %v1227 = vpop.f32.mrb[0].mxu0
  %v1228 = vadd.f32 0.0, %v1227
  %v1229 = vpop.f32.mrb[0].mxu0
  %v1230 = vpop.f32.mrb[0].mxu0
  %v1231 = vadd.f32 0.0, %v1230
  %v1232 = vpop.f32.mrb[0].mxu0
  %1233 = vmatprep.mubr.bf16.mxu0 0
  %1234 = vmatmul.mubr.bf16.gmra.mrb[0].mxu0 %v1088
  %v1235 = vpop.f32.mrb[0].mxu0
  %v1236 = vadd.f32 0.0, %v1235
  %v1237 = vpop.f32.mrb[0].mxu0
  %v1238 = vpop.f32.mrb[0].mxu0
  %v1239 = vadd.f32 0.0, %v1238
  %v1240 = vpop.f32.mrb[0].mxu0
  %1241 = vmatprep.mubr.bf16.mxu0 0
  %1242 = vmatmul.mubr.bf16.gmra.mrb[0].mxu0 %v1091
  %v1243 = vpop.f32.mrb[0].mxu0
  %v1244 = vadd.f32 0.0, %v1243
  %v1245 = vpop.f32.mrb[0].mxu0
  %v1246 = vpop.f32.mrb[0].mxu0
  %v1247 = vadd.f32 0.0, %v1246
  %v1248 = vpop.f32.mrb[0].mxu0
  %1249 = vmatprep.mubr.bf16.mxu0 0
  %1250 = vmatmul.mubr.bf16.gmra.mrb[0].mxu0 %v1094
  %v1251 = vpop.f32.mrb[0].mxu0
  %v1252 = vadd.f32 0.0, %v1251
  %v1253 = vpop.f32.mrb[0].mxu0
  %v1254 = vpop.f32.mrb[0].mxu0
  %v1255 = vadd.f32 0.0, %v1254
  %v1256 = vpop.f32.mrb[0].mxu0
  %1257 = vmatprep.mubr.bf16.mxu0 0
  %1258 = vmatmul.mubr.bf16.gmra.mrb[0].mxu0 %v1097
  %v1259 = vpop.f32.mrb[0].mxu0
  %v1260 = vadd.f32 0.0, %v1259
  %v1261 = vpop.f32.mrb[0].mxu0
  %v1262 = vpop.f32.mrb[0].mxu0
  %v1263 = vadd.f32 0.0, %v1262
  %v1264 = vpop.f32.mrb[0].mxu0
  %1265 = vdwg.mxu0
  %v1266 = vsel %vm384, %v925, -inf
  %1267 = vmax.xlane.f32.xlu0 %v1266
  %v1268 = vpop.xlane.xlu0 %1267
  %v1269 = vsel %vm384, %v928, -inf
  %1270 = vmax.xlane.f32.xlu0 %v1269
  %v1271 = vpop.xlane.xlu0 %1270
  %v1272 = vsel %vm384, %v933, -inf
  %1273 = vmax.xlane.f32.xlu0 %v1272
  %v1274 = vpop.xlane.xlu0 %1273
  %v1275 = vsel %vm384, %v936, -inf
  %1276 = vmax.xlane.f32.xlu0 %v1275
  %v1277 = vpop.xlane.xlu0 %1276
  %v1278 = vsel %vm384, %v941, -inf
  %1279 = vmax.xlane.f32.xlu0 %v1278
  %v1280 = vpop.xlane.xlu0 %1279
  %v1281 = vsel %vm384, %v944, -inf
  %1282 = vmax.xlane.f32.xlu0 %v1281
  %v1283 = vpop.xlane.xlu0 %1282
  %v1284 = vsel %vm384, %v949, -inf
  %1285 = vmax.xlane.f32.xlu0 %v1284
  %v1286 = vpop.xlane.xlu0 %1285
  %v1287 = vsel %vm384, %v952, -inf
  %1288 = vmax.xlane.f32.xlu0 %v1287
  %v1289 = vpop.xlane.xlu0 %1288
  %v1290 = vsel %vm384, %v957, -inf
  %1291 = vmax.xlane.f32.xlu0 %v1290
  %v1292 = vpop.xlane.xlu0 %1291
  %v1293 = vsel %vm384, %v960, -inf
  %1294 = vmax.xlane.f32.xlu0 %v1293
  %v1295 = vpop.xlane.xlu0 %1294
  %v1296 = vsel %vm384, %v965, -inf
  %1297 = vmax.xlane.f32.xlu0 %v1296
  %v1298 = vpop.xlane.xlu0 %1297
  %v1299 = vsel %vm384, %v968, -inf
  %1300 = vmax.xlane.f32.xlu0 %v1299
  %v1301 = vpop.xlane.xlu0 %1300
  %v1302 = vsel %vm384, %v973, -inf
  %1303 = vmax.xlane.f32.xlu0 %v1302
  %v1304 = vpop.xlane.xlu0 %1303
  %v1305 = vsel %vm384, %v976, -inf
  %1306 = vmax.xlane.f32.xlu0 %v1305
  %v1307 = vpop.xlane.xlu0 %1306
  %v1308 = vsel %vm384, %v981, -inf
  %1309 = vmax.xlane.f32.xlu0 %v1308
  %v1310 = vpop.xlane.xlu0 %1309
  %v1311 = vsel %vm384, %v984, -inf
  %1312 = vmax.xlane.f32.xlu0 %v1311
  %v1313 = vpop.xlane.xlu0 %1312
  %v1314 = vsel %vm384, %v989, -inf
  %1315 = vmax.xlane.f32.xlu0 %v1314
  %v1316 = vpop.xlane.xlu0 %1315
  %v1317 = vsel %vm384, %v992, -inf
  %1318 = vmax.xlane.f32.xlu0 %v1317
  %v1319 = vpop.xlane.xlu0 %1318
  %v1320 = vsel %vm384, %v997, -inf
  %1321 = vmax.xlane.f32.xlu0 %v1320
  %v1322 = vpop.xlane.xlu0 %1321
  %v1323 = vsel %vm384, %v1000, -inf
  %1324 = vmax.xlane.f32.xlu0 %v1323
  %v1325 = vpop.xlane.xlu0 %1324
  %v1326 = vsel %vm384, %v1005, -inf
  %1327 = vmax.xlane.f32.xlu0 %v1326
  %v1328 = vpop.xlane.xlu0 %1327
  %v1329 = vsel %vm384, %v1008, -inf
  %1330 = vmax.xlane.f32.xlu0 %v1329
  %v1331 = vpop.xlane.xlu0 %1330
  %v1332 = vsel %vm384, %v1013, -inf
  %1333 = vmax.xlane.f32.xlu0 %v1332
  %v1334 = vpop.xlane.xlu0 %1333
  %v1335 = vsel %vm384, %v1016, -inf
  %1336 = vmax.xlane.f32.xlu0 %v1335
  %v1337 = vpop.xlane.xlu0 %1336
  %v1338 = vsel %vm384, %v1021, -inf
  %1339 = vmax.xlane.f32.xlu0 %v1338
  %v1340 = vpop.xlane.xlu0 %1339
  %v1341 = vsel %vm384, %v1024, -inf
  %1342 = vmax.xlane.f32.xlu0 %v1341
  %v1343 = vpop.xlane.xlu0 %1342
  %v1344 = vsel %vm384, %v1029, -inf
  %1345 = vmax.xlane.f32.xlu0 %v1344
  %v1346 = vpop.xlane.xlu0 %1345
  %v1347 = vsel %vm384, %v1032, -inf
  %1348 = vmax.xlane.f32.xlu0 %v1347
  %v1349 = vpop.xlane.xlu0 %1348
  %v1350 = vsel %vm384, %v1037, -inf
  %1351 = vmax.xlane.f32.xlu0 %v1350
  %v1352 = vpop.xlane.xlu0 %1351
  %v1353 = vsel %vm384, %v1040, -inf
  %1354 = vmax.xlane.f32.xlu0 %v1353
  %v1355 = vpop.xlane.xlu0 %1354
  %v1356 = vsel %vm384, %v1045, -inf
  %1357 = vmax.xlane.f32.xlu0 %v1356
  %v1358 = vpop.xlane.xlu0 %1357
  %v1359 = vsel %vm384, %v1048, -inf
  %1360 = vmax.xlane.f32.xlu0 %v1359
  %v1361 = vpop.xlane.xlu0 %1360
  %v1362 = vsel %vm384, %v1140, -inf
  %1363 = vmax.xlane.f32.xlu0 %v1362
  %v1364 = vpop.xlane.xlu0 %1363
  %v1365 = vsel %vm384, %v1143, -inf
  %1366 = vmax.xlane.f32.xlu0 %v1365
  %v1367 = vpop.xlane.xlu0 %1366
  %v1368 = vsel %vm384, %v1148, -inf
  %1369 = vmax.xlane.f32.xlu0 %v1368
  %v1370 = vpop.xlane.xlu0 %1369
  %v1371 = vsel %vm384, %v1151, -inf
  %1372 = vmax.xlane.f32.xlu0 %v1371
  %v1373 = vpop.xlane.xlu0 %1372
  %v1374 = vsel %vm384, %v1156, -inf
  %1375 = vmax.xlane.f32.xlu0 %v1374
  %v1376 = vpop.xlane.xlu0 %1375
  %v1377 = vsel %vm384, %v1159, -inf
  %1378 = vmax.xlane.f32.xlu0 %v1377
  %v1379 = vpop.xlane.xlu0 %1378
  %v1380 = vsel %vm384, %v1164, -inf
  %1381 = vmax.xlane.f32.xlu0 %v1380
  %v1382 = vpop.xlane.xlu0 %1381
  %v1383 = vsel %vm384, %v1167, -inf
  %1384 = vmax.xlane.f32.xlu0 %v1383
  %v1385 = vpop.xlane.xlu0 %1384
  %v1386 = vsel %vm384, %v1172, -inf
  %1387 = vmax.xlane.f32.xlu0 %v1386
  %v1388 = vpop.xlane.xlu0 %1387
  %v1389 = vsel %vm384, %v1175, -inf
  %1390 = vmax.xlane.f32.xlu0 %v1389
  %v1391 = vpop.xlane.xlu0 %1390
  %v1392 = vsel %vm384, %v1180, -inf
  %1393 = vmax.xlane.f32.xlu0 %v1392
  %v1394 = vpop.xlane.xlu0 %1393
  %v1395 = vsel %vm384, %v1183, -inf
  %1396 = vmax.xlane.f32.xlu0 %v1395
  %v1397 = vpop.xlane.xlu0 %1396
  %v1398 = vsel %vm384, %v1188, -inf
  %1399 = vmax.xlane.f32.xlu0 %v1398
  %v1400 = vpop.xlane.xlu0 %1399
  %v1401 = vsel %vm384, %v1191, -inf
  %1402 = vmax.xlane.f32.xlu0 %v1401
  %v1403 = vpop.xlane.xlu0 %1402
  %v1404 = vsel %vm384, %v1196, -inf
  %1405 = vmax.xlane.f32.xlu0 %v1404
  %v1406 = vpop.xlane.xlu0 %1405
  %v1407 = vsel %vm384, %v1199, -inf
  %1408 = vmax.xlane.f32.xlu0 %v1407
  %v1409 = vpop.xlane.xlu0 %1408
  %v1410 = vsel %vm384, %v1204, -inf
  %1411 = vmax.xlane.f32.xlu0 %v1410
  %v1412 = vpop.xlane.xlu0 %1411
  %v1413 = vsel %vm384, %v1207, -inf
  %1414 = vmax.xlane.f32.xlu0 %v1413
  %v1415 = vpop.xlane.xlu0 %1414
  %v1416 = vsel %vm384, %v1212, -inf
  %1417 = vmax.xlane.f32.xlu0 %v1416
  %v1418 = vpop.xlane.xlu0 %1417
  %v1419 = vsel %vm384, %v1215, -inf
  %1420 = vmax.xlane.f32.xlu0 %v1419
  %v1421 = vpop.xlane.xlu0 %1420
  %v1422 = vsel %vm384, %v1220, -inf
  %1423 = vmax.xlane.f32.xlu0 %v1422
  %v1424 = vpop.xlane.xlu0 %1423
  %v1425 = vsel %vm384, %v1223, -inf
  %1426 = vmax.xlane.f32.xlu0 %v1425
  %v1427 = vpop.xlane.xlu0 %1426
  %v1428 = vsel %vm384, %v1228, -inf
  %1429 = vmax.xlane.f32.xlu0 %v1428
  %v1430 = vpop.xlane.xlu0 %1429
  %v1431 = vsel %vm384, %v1231, -inf
  %1432 = vmax.xlane.f32.xlu0 %v1431
  %v1433 = vpop.xlane.xlu0 %1432
  %v1434 = vsel %vm384, %v1236, -inf
  %1435 = vmax.xlane.f32.xlu0 %v1434
  %v1436 = vpop.xlane.xlu0 %1435
  %v1437 = vsel %vm384, %v1239, -inf
  %1438 = vmax.xlane.f32.xlu0 %v1437
  %v1439 = vpop.xlane.xlu0 %1438
  %v1440 = vsel %vm384, %v1244, -inf
  %1441 = vmax.xlane.f32.xlu0 %v1440
  %v1442 = vpop.xlane.xlu0 %1441
  %v1443 = vsel %vm384, %v1247, -inf
  %1444 = vmax.xlane.f32.xlu0 %v1443
  %v1445 = vpop.xlane.xlu0 %1444
  %v1446 = vsel %vm384, %v1252, -inf
  %1447 = vmax.xlane.f32.xlu0 %v1446
  %v1448 = vpop.xlane.xlu0 %1447
  %v1449 = vsel %vm384, %v1255, -inf
  %1450 = vmax.xlane.f32.xlu0 %v1449
  %v1451 = vpop.xlane.xlu0 %1450
  %v1452 = vsel %vm384, %v1260, -inf
  %1453 = vmax.xlane.f32.xlu0 %v1452
  %v1454 = vpop.xlane.xlu0 %1453
  %v1455 = vsel %vm384, %v1263, -inf
  %1456 = vmax.xlane.f32.xlu0 %v1455
  %v1457 = vpop.xlane.xlu0 %1456
  %v1458 = vsub.f32 %v925, %v1268
  %v1459 = vsub.f32 %v928, %v1271
  %v1460 = vsub.f32 %v933, %v1274
  %v1461 = vsub.f32 %v936, %v1277
  %v1462 = vsub.f32 %v941, %v1280
  %v1463 = vsub.f32 %v944, %v1283
  %v1464 = vsub.f32 %v949, %v1286
  %v1465 = vsub.f32 %v952, %v1289
  %v1466 = vsub.f32 %v957, %v1292
  %v1467 = vsub.f32 %v960, %v1295
  %v1468 = vsub.f32 %v965, %v1298
  %v1469 = vsub.f32 %v968, %v1301
  %v1470 = vsub.f32 %v973, %v1304
  %v1471 = vsub.f32 %v976, %v1307
  %v1472 = vsub.f32 %v981, %v1310
  %v1473 = vsub.f32 %v984, %v1313
  %v1474 = vsub.f32 %v989, %v1316
  %v1475 = vsub.f32 %v992, %v1319
  %v1476 = vsub.f32 %v997, %v1322
  %v1477 = vsub.f32 %v1000, %v1325
  %v1478 = vsub.f32 %v1005, %v1328
  %v1479 = vsub.f32 %v1008, %v1331
  %v1480 = vsub.f32 %v1013, %v1334
  %v1481 = vsub.f32 %v1016, %v1337
  %v1482 = vsub.f32 %v1021, %v1340
  %v1483 = vsub.f32 %v1024, %v1343
  %v1484 = vsub.f32 %v1029, %v1346
  %v1485 = vsub.f32 %v1032, %v1349
  %v1486 = vsub.f32 %v1037, %v1352
  %v1487 = vsub.f32 %v1040, %v1355
  %v1488 = vsub.f32 %v1045, %v1358
  %v1489 = vsub.f32 %v1048, %v1361
  %v1490 = vsub.f32 %v1140, %v1364
  %v1491 = vsub.f32 %v1143, %v1367
  %v1492 = vsub.f32 %v1148, %v1370
  %v1493 = vsub.f32 %v1151, %v1373
  %v1494 = vsub.f32 %v1156, %v1376
  %v1495 = vsub.f32 %v1159, %v1379
  %v1496 = vsub.f32 %v1164, %v1382
  %v1497 = vsub.f32 %v1167, %v1385
  %v1498 = vsub.f32 %v1172, %v1388
  %v1499 = vsub.f32 %v1175, %v1391
  %v1500 = vsub.f32 %v1180, %v1394
  %v1501 = vsub.f32 %v1183, %v1397
  %v1502 = vsub.f32 %v1188, %v1400
  %v1503 = vsub.f32 %v1191, %v1403
  %v1504 = vsub.f32 %v1196, %v1406
  %v1505 = vsub.f32 %v1199, %v1409
  %v1506 = vsub.f32 %v1204, %v1412
  %v1507 = vsub.f32 %v1207, %v1415
  %v1508 = vsub.f32 %v1212, %v1418
  %v1509 = vsub.f32 %v1215, %v1421
  %v1510 = vsub.f32 %v1220, %v1424
  %v1511 = vsub.f32 %v1223, %v1427
  %v1512 = vsub.f32 %v1228, %v1430
  %v1513 = vsub.f32 %v1231, %v1433
  %v1514 = vsub.f32 %v1236, %v1436
  %v1515 = vsub.f32 %v1239, %v1439
  %v1516 = vsub.f32 %v1244, %v1442
  %v1517 = vsub.f32 %v1247, %v1445
  %v1518 = vsub.f32 %v1252, %v1448
  %v1519 = vsub.f32 %v1255, %v1451
  %v1520 = vsub.f32 %v1260, %v1454
  %v1521 = vsub.f32 %v1263, %v1457
  %v1522 = vmul.f32 %v1458, 1.442695
  %v1523 = vpow.pop %v1522
  %v1524 = vmul.f32 %v1459, 1.442695
  %v1525 = vpow.pop %v1524
  %v1526 = vmul.f32 %v1460, 1.442695
  %v1527 = vpow.pop %v1526
  %v1528 = vmul.f32 %v1461, 1.442695
  %v1529 = vpow.pop %v1528
  %v1530 = vmul.f32 %v1462, 1.442695
  %v1531 = vpow.pop %v1530
  %v1532 = vmul.f32 %v1463, 1.442695
  %v1533 = vpow.pop %v1532
  %v1534 = vmul.f32 %v1464, 1.442695
  %v1535 = vpow.pop %v1534
  %v1536 = vmul.f32 %v1465, 1.442695
  %v1537 = vpow.pop %v1536
  %v1538 = vmul.f32 %v1466, 1.442695
  %v1539 = vpow.pop %v1538
  %v1540 = vmul.f32 %v1467, 1.442695
  %v1541 = vpow.pop %v1540
  %v1542 = vmul.f32 %v1468, 1.442695
  %v1543 = vpow.pop %v1542
  %v1544 = vmul.f32 %v1469, 1.442695
  %v1545 = vpow.pop %v1544
  %v1546 = vmul.f32 %v1470, 1.442695
  %v1547 = vpow.pop %v1546
  %v1548 = vmul.f32 %v1471, 1.442695
  %v1549 = vpow.pop %v1548
  %v1550 = vmul.f32 %v1472, 1.442695
  %v1551 = vpow.pop %v1550
  %v1552 = vmul.f32 %v1473, 1.442695
  %v1553 = vpow.pop %v1552
  %v1554 = vmul.f32 %v1474, 1.442695
  %v1555 = vpow.pop %v1554
  %v1556 = vmul.f32 %v1475, 1.442695
  %v1557 = vpow.pop %v1556
  %v1558 = vmul.f32 %v1476, 1.442695
  %v1559 = vpow.pop %v1558
  %v1560 = vmul.f32 %v1477, 1.442695
  %v1561 = vpow.pop %v1560
  %v1562 = vmul.f32 %v1478, 1.442695
  %v1563 = vpow.pop %v1562
  %v1564 = vmul.f32 %v1479, 1.442695
  %v1565 = vpow.pop %v1564
  %v1566 = vmul.f32 %v1480, 1.442695
  %v1567 = vpow.pop %v1566
  %v1568 = vmul.f32 %v1481, 1.442695
  %v1569 = vpow.pop %v1568
  %v1570 = vmul.f32 %v1482, 1.442695
  %v1571 = vpow.pop %v1570
  %v1572 = vmul.f32 %v1483, 1.442695
  %v1573 = vpow.pop %v1572
  %v1574 = vmul.f32 %v1484, 1.442695
  %v1575 = vpow.pop %v1574
  %v1576 = vmul.f32 %v1485, 1.442695
  %v1577 = vpow.pop %v1576
  %v1578 = vmul.f32 %v1486, 1.442695
  %v1579 = vpow.pop %v1578
  %v1580 = vmul.f32 %v1487, 1.442695
  %v1581 = vpow.pop %v1580
  %v1582 = vmul.f32 %v1488, 1.442695
  %v1583 = vpow.pop %v1582
  %v1584 = vmul.f32 %v1489, 1.442695
  %v1585 = vpow.pop %v1584
  %v1586 = vmul.f32 %v1490, 1.442695
  %v1587 = vpow.pop %v1586
  %v1588 = vmul.f32 %v1491, 1.442695
  %v1589 = vpow.pop %v1588
  %v1590 = vmul.f32 %v1492, 1.442695
  %v1591 = vpow.pop %v1590
  %v1592 = vmul.f32 %v1493, 1.442695
  %v1593 = vpow.pop %v1592
  %v1594 = vmul.f32 %v1494, 1.442695
  %v1595 = vpow.pop %v1594
  %v1596 = vmul.f32 %v1495, 1.442695
  %v1597 = vpow.pop %v1596
  %v1598 = vmul.f32 %v1496, 1.442695
  %v1599 = vpow.pop %v1598
  %v1600 = vmul.f32 %v1497, 1.442695
  %v1601 = vpow.pop %v1600
  %v1602 = vmul.f32 %v1498, 1.442695
  %v1603 = vpow.pop %v1602
  %v1604 = vmul.f32 %v1499, 1.442695
  %v1605 = vpow.pop %v1604
  %v1606 = vmul.f32 %v1500, 1.442695
  %v1607 = vpow.pop %v1606
  %v1608 = vmul.f32 %v1501, 1.442695
  %v1609 = vpow.pop %v1608
  %v1610 = vmul.f32 %v1502, 1.442695
  %v1611 = vpow.pop %v1610
  %v1612 = vmul.f32 %v1503, 1.442695
  %v1613 = vpow.pop %v1612
  %v1614 = vmul.f32 %v1504, 1.442695
  %v1615 = vpow.pop %v1614
  %v1616 = vmul.f32 %v1505, 1.442695
  %v1617 = vpow.pop %v1616
  %v1618 = vmul.f32 %v1506, 1.442695
  %v1619 = vpow.pop %v1618
  %v1620 = vmul.f32 %v1507, 1.442695
  %v1621 = vpow.pop %v1620
  %v1622 = vmul.f32 %v1508, 1.442695
  %v1623 = vpow.pop %v1622
  %v1624 = vmul.f32 %v1509, 1.442695
  %v1625 = vpow.pop %v1624
  %v1626 = vmul.f32 %v1510, 1.442695
  %v1627 = vpow.pop %v1626
  %v1628 = vmul.f32 %v1511, 1.442695
  %v1629 = vpow.pop %v1628
  %v1630 = vmul.f32 %v1512, 1.442695
  %v1631 = vpow.pop %v1630
  %v1632 = vmul.f32 %v1513, 1.442695
  %v1633 = vpow.pop %v1632
  %v1634 = vmul.f32 %v1514, 1.442695
  %v1635 = vpow.pop %v1634
  %v1636 = vmul.f32 %v1515, 1.442695
  %v1637 = vpow.pop %v1636
  %v1638 = vmul.f32 %v1516, 1.442695
  %v1639 = vpow.pop %v1638
  %v1640 = vmul.f32 %v1517, 1.442695
  %v1641 = vpow.pop %v1640
  %v1642 = vmul.f32 %v1518, 1.442695
  %v1643 = vpow.pop %v1642
  %v1644 = vmul.f32 %v1519, 1.442695
  %v1645 = vpow.pop %v1644
  %v1646 = vmul.f32 %v1520, 1.442695
  %v1647 = vpow.pop %v1646
  %v1648 = vmul.f32 %v1521, 1.442695
  %v1649 = vpow.pop %v1648
  %v1650 = vsel %vm384, %v1523, 0.0
  %1651 = vadd.xlane.f32.xlu0 %v1650
  %v1652 = vpop.xlane.xlu0 %1651
  %v1653 = vsel %vm384, %v1525, 0.0
  %1654 = vadd.xlane.f32.xlu0 %v1653
  %v1655 = vpop.xlane.xlu0 %1654
  %v1656 = vsel %vm384, %v1527, 0.0
  %1657 = vadd.xlane.f32.xlu0 %v1656
  %v1658 = vpop.xlane.xlu0 %1657
  %v1659 = vsel %vm384, %v1529, 0.0
  %1660 = vadd.xlane.f32.xlu0 %v1659
  %v1661 = vpop.xlane.xlu0 %1660
  %v1662 = vsel %vm384, %v1531, 0.0
  %1663 = vadd.xlane.f32.xlu0 %v1662
  %v1664 = vpop.xlane.xlu0 %1663
  %v1665 = vsel %vm384, %v1533, 0.0
  %1666 = vadd.xlane.f32.xlu0 %v1665
  %v1667 = vpop.xlane.xlu0 %1666
  %v1668 = vsel %vm384, %v1535, 0.0
  %1669 = vadd.xlane.f32.xlu0 %v1668
  %v1670 = vpop.xlane.xlu0 %1669
  %v1671 = vsel %vm384, %v1537, 0.0
  %1672 = vadd.xlane.f32.xlu0 %v1671
  %v1673 = vpop.xlane.xlu0 %1672
  %v1674 = vsel %vm384, %v1539, 0.0
  %1675 = vadd.xlane.f32.xlu0 %v1674
  %v1676 = vpop.xlane.xlu0 %1675
  %v1677 = vsel %vm384, %v1541, 0.0
  %1678 = vadd.xlane.f32.xlu0 %v1677
  %v1679 = vpop.xlane.xlu0 %1678
  %v1680 = vsel %vm384, %v1543, 0.0
  %1681 = vadd.xlane.f32.xlu0 %v1680
  %v1682 = vpop.xlane.xlu0 %1681
  %v1683 = vsel %vm384, %v1545, 0.0
  %1684 = vadd.xlane.f32.xlu0 %v1683
  %v1685 = vpop.xlane.xlu0 %1684
  %v1686 = vsel %vm384, %v1547, 0.0
  %1687 = vadd.xlane.f32.xlu0 %v1686
  %v1688 = vpop.xlane.xlu0 %1687
  %v1689 = vsel %vm384, %v1549, 0.0
  %1690 = vadd.xlane.f32.xlu0 %v1689
  %v1691 = vpop.xlane.xlu0 %1690
  %v1692 = vsel %vm384, %v1551, 0.0
  %1693 = vadd.xlane.f32.xlu0 %v1692
  %v1694 = vpop.xlane.xlu0 %1693
  %v1695 = vsel %vm384, %v1553, 0.0
  %1696 = vadd.xlane.f32.xlu0 %v1695
  %v1697 = vpop.xlane.xlu0 %1696
  %v1698 = vsel %vm384, %v1555, 0.0
  %1699 = vadd.xlane.f32.xlu0 %v1698
  %v1700 = vpop.xlane.xlu0 %1699
  %v1701 = vsel %vm384, %v1557, 0.0
  %1702 = vadd.xlane.f32.xlu0 %v1701
  %v1703 = vpop.xlane.xlu0 %1702
  %v1704 = vsel %vm384, %v1559, 0.0
  %1705 = vadd.xlane.f32.xlu0 %v1704
  %v1706 = vpop.xlane.xlu0 %1705
  %v1707 = vsel %vm384, %v1561, 0.0
  %1708 = vadd.xlane.f32.xlu0 %v1707
  %v1709 = vpop.xlane.xlu0 %1708
  %v1710 = vsel %vm384, %v1563, 0.0
  %1711 = vadd.xlane.f32.xlu0 %v1710
  %v1712 = vpop.xlane.xlu0 %1711
  %v1713 = vsel %vm384, %v1565, 0.0
  %1714 = vadd.xlane.f32.xlu0 %v1713
  %v1715 = vpop.xlane.xlu0 %1714
  %v1716 = vsel %vm384, %v1567, 0.0
  %1717 = vadd.xlane.f32.xlu0 %v1716
  %v1718 = vpop.xlane.xlu0 %1717
  %v1719 = vsel %vm384, %v1569, 0.0
  %1720 = vadd.xlane.f32.xlu0 %v1719
  %v1721 = vpop.xlane.xlu0 %1720
  %v1722 = vsel %vm384, %v1571, 0.0
  %1723 = vadd.xlane.f32.xlu0 %v1722
  %v1724 = vpop.xlane.xlu0 %1723
  %v1725 = vsel %vm384, %v1573, 0.0
  %1726 = vadd.xlane.f32.xlu0 %v1725
  %v1727 = vpop.xlane.xlu0 %1726
  %v1728 = vsel %vm384, %v1575, 0.0
  %1729 = vadd.xlane.f32.xlu0 %v1728
  %v1730 = vpop.xlane.xlu0 %1729
  %v1731 = vsel %vm384, %v1577, 0.0
  %1732 = vadd.xlane.f32.xlu0 %v1731
  %v1733 = vpop.xlane.xlu0 %1732
  %v1734 = vsel %vm384, %v1579, 0.0
  %1735 = vadd.xlane.f32.xlu0 %v1734
  %v1736 = vpop.xlane.xlu0 %1735
  %v1737 = vsel %vm384, %v1581, 0.0
  %1738 = vadd.xlane.f32.xlu0 %v1737
  %v1739 = vpop.xlane.xlu0 %1738
  %v1740 = vsel %vm384, %v1583, 0.0
  %1741 = vadd.xlane.f32.xlu0 %v1740
  %v1742 = vpop.xlane.xlu0 %1741
  %v1743 = vsel %vm384, %v1585, 0.0
  %1744 = vadd.xlane.f32.xlu0 %v1743
  %v1745 = vpop.xlane.xlu0 %1744
  %v1746 = vsel %vm384, %v1587, 0.0
  %1747 = vadd.xlane.f32.xlu0 %v1746
  %v1748 = vpop.xlane.xlu0 %1747
  %v1749 = vsel %vm384, %v1589, 0.0
  %1750 = vadd.xlane.f32.xlu0 %v1749
  %v1751 = vpop.xlane.xlu0 %1750
  %v1752 = vsel %vm384, %v1591, 0.0
  %1753 = vadd.xlane.f32.xlu0 %v1752
  %v1754 = vpop.xlane.xlu0 %1753
  %v1755 = vsel %vm384, %v1593, 0.0
  %1756 = vadd.xlane.f32.xlu0 %v1755
  %v1757 = vpop.xlane.xlu0 %1756
  %v1758 = vsel %vm384, %v1595, 0.0
  %1759 = vadd.xlane.f32.xlu0 %v1758
  %v1760 = vpop.xlane.xlu0 %1759
  %v1761 = vsel %vm384, %v1597, 0.0
  %1762 = vadd.xlane.f32.xlu0 %v1761
  %v1763 = vpop.xlane.xlu0 %1762
  %v1764 = vsel %vm384, %v1599, 0.0
  %1765 = vadd.xlane.f32.xlu0 %v1764
  %v1766 = vpop.xlane.xlu0 %1765
  %v1767 = vsel %vm384, %v1601, 0.0
  %1768 = vadd.xlane.f32.xlu0 %v1767
  %v1769 = vpop.xlane.xlu0 %1768
  %v1770 = vsel %vm384, %v1603, 0.0
  %1771 = vadd.xlane.f32.xlu0 %v1770
  %v1772 = vpop.xlane.xlu0 %1771
  %v1773 = vsel %vm384, %v1605, 0.0
  %1774 = vadd.xlane.f32.xlu0 %v1773
  %v1775 = vpop.xlane.xlu0 %1774
  %v1776 = vsel %vm384, %v1607, 0.0
  %1777 = vadd.xlane.f32.xlu0 %v1776
  %v1778 = vpop.xlane.xlu0 %1777
  %v1779 = vsel %vm384, %v1609, 0.0
  %1780 = vadd.xlane.f32.xlu0 %v1779
  %v1781 = vpop.xlane.xlu0 %1780
  %v1782 = vsel %vm384, %v1611, 0.0
  %1783 = vadd.xlane.f32.xlu0 %v1782
  %v1784 = vpop.xlane.xlu0 %1783
  %v1785 = vsel %vm384, %v1613, 0.0
  %1786 = vadd.xlane.f32.xlu0 %v1785
  %v1787 = vpop.xlane.xlu0 %1786
  %v1788 = vsel %vm384, %v1615, 0.0
  %1789 = vadd.xlane.f32.xlu0 %v1788
  %v1790 = vpop.xlane.xlu0 %1789
  %v1791 = vsel %vm384, %v1617, 0.0
  %1792 = vadd.xlane.f32.xlu0 %v1791
  %v1793 = vpop.xlane.xlu0 %1792
  %v1794 = vsel %vm384, %v1619, 0.0
  %1795 = vadd.xlane.f32.xlu0 %v1794
  %v1796 = vpop.xlane.xlu0 %1795
  %v1797 = vsel %vm384, %v1621, 0.0
  %1798 = vadd.xlane.f32.xlu0 %v1797
  %v1799 = vpop.xlane.xlu0 %1798
  %v1800 = vsel %vm384, %v1623, 0.0
  %1801 = vadd.xlane.f32.xlu0 %v1800
  %v1802 = vpop.xlane.xlu0 %1801
  %v1803 = vsel %vm384, %v1625, 0.0
  %1804 = vadd.xlane.f32.xlu0 %v1803
  %v1805 = vpop.xlane.xlu0 %1804
  %v1806 = vsel %vm384, %v1627, 0.0
  %1807 = vadd.xlane.f32.xlu0 %v1806
  %v1808 = vpop.xlane.xlu0 %1807
  %v1809 = vsel %vm384, %v1629, 0.0
  %1810 = vadd.xlane.f32.xlu0 %v1809
  %v1811 = vpop.xlane.xlu0 %1810
  %v1812 = vsel %vm384, %v1631, 0.0
  %1813 = vadd.xlane.f32.xlu0 %v1812
  %v1814 = vpop.xlane.xlu0 %1813
  %v1815 = vsel %vm384, %v1633, 0.0
  %1816 = vadd.xlane.f32.xlu0 %v1815
  %v1817 = vpop.xlane.xlu0 %1816
  %v1818 = vsel %vm384, %v1635, 0.0
  %1819 = vadd.xlane.f32.xlu0 %v1818
  %v1820 = vpop.xlane.xlu0 %1819
  %v1821 = vsel %vm384, %v1637, 0.0
  %1822 = vadd.xlane.f32.xlu0 %v1821
  %v1823 = vpop.xlane.xlu0 %1822
  %v1824 = vsel %vm384, %v1639, 0.0
  %1825 = vadd.xlane.f32.xlu0 %v1824
  %v1826 = vpop.xlane.xlu0 %1825
  %v1827 = vsel %vm384, %v1641, 0.0
  %1828 = vadd.xlane.f32.xlu0 %v1827
  %v1829 = vpop.xlane.xlu0 %1828
  %v1830 = vsel %vm384, %v1643, 0.0
  %1831 = vadd.xlane.f32.xlu0 %v1830
  %v1832 = vpop.xlane.xlu0 %1831
  %v1833 = vsel %vm384, %v1645, 0.0
  %1834 = vadd.xlane.f32.xlu0 %v1833
  %v1835 = vpop.xlane.xlu0 %1834
  %v1836 = vsel %vm384, %v1647, 0.0
  %1837 = vadd.xlane.f32.xlu0 %v1836
  %v1838 = vpop.xlane.xlu0 %1837
  %v1839 = vsel %vm384, %v1649, 0.0
  %1840 = vadd.xlane.f32.xlu0 %v1839
  %v1841 = vpop.xlane.xlu0 %1840
  %v1842 = vrcp.pop %v1652
  %v1843 = vrcp.pop %v1655
  %v1844 = vrcp.pop %v1658
  %v1845 = vrcp.pop %v1661
  %v1846 = vrcp.pop %v1664
  %v1847 = vrcp.pop %v1667
  %v1848 = vrcp.pop %v1670
  %v1849 = vrcp.pop %v1673
  %v1850 = vrcp.pop %v1676
  %v1851 = vrcp.pop %v1679
  %v1852 = vrcp.pop %v1682
  %v1853 = vrcp.pop %v1685
  %v1854 = vrcp.pop %v1688
  %v1855 = vrcp.pop %v1691
  %v1856 = vrcp.pop %v1694
  %v1857 = vrcp.pop %v1697
  %v1858 = vrcp.pop %v1700
  %v1859 = vrcp.pop %v1703
  %v1860 = vrcp.pop %v1706
  %v1861 = vrcp.pop %v1709
  %v1862 = vrcp.pop %v1712
  %v1863 = vrcp.pop %v1715
  %v1864 = vrcp.pop %v1718
  %v1865 = vrcp.pop %v1721
  %v1866 = vrcp.pop %v1724
  %v1867 = vrcp.pop %v1727
  %v1868 = vrcp.pop %v1730
  %v1869 = vrcp.pop %v1733
  %v1870 = vrcp.pop %v1736
  %v1871 = vrcp.pop %v1739
  %v1872 = vrcp.pop %v1742
  %v1873 = vrcp.pop %v1745
  %v1874 = vrcp.pop %v1748
  %v1875 = vrcp.pop %v1751
  %v1876 = vrcp.pop %v1754
  %v1877 = vrcp.pop %v1757
  %v1878 = vrcp.pop %v1760
  %v1879 = vrcp.pop %v1763
  %v1880 = vrcp.pop %v1766
  %v1881 = vrcp.pop %v1769
  %v1882 = vrcp.pop %v1772
  %v1883 = vrcp.pop %v1775
  %v1884 = vrcp.pop %v1778
  %v1885 = vrcp.pop %v1781
  %v1886 = vrcp.pop %v1784
  %v1887 = vrcp.pop %v1787
  %v1888 = vrcp.pop %v1790
  %v1889 = vrcp.pop %v1793
  %v1890 = vrcp.pop %v1796
  %v1891 = vrcp.pop %v1799
  %v1892 = vrcp.pop %v1802
  %v1893 = vrcp.pop %v1805
  %v1894 = vrcp.pop %v1808
  %v1895 = vrcp.pop %v1811
  %v1896 = vrcp.pop %v1814
  %v1897 = vrcp.pop %v1817
  %v1898 = vrcp.pop %v1820
  %v1899 = vrcp.pop %v1823
  %v1900 = vrcp.pop %v1826
  %v1901 = vrcp.pop %v1829
  %v1902 = vrcp.pop %v1832
  %v1903 = vrcp.pop %v1835
  %v1904 = vrcp.pop %v1838
  %v1905 = vrcp.pop %v1841
  %v1906 = vmul.f32 %v1523, %v1842
  %v1907 = vmul.f32 %v1525, %v1843
  %v1908 = vmul.f32 %v1527, %v1844
  %v1909 = vmul.f32 %v1529, %v1845
  %v1910 = vmul.f32 %v1531, %v1846
  %v1911 = vmul.f32 %v1533, %v1847
  %v1912 = vmul.f32 %v1535, %v1848
  %v1913 = vmul.f32 %v1537, %v1849
  %v1914 = vmul.f32 %v1539, %v1850
  %v1915 = vmul.f32 %v1541, %v1851
  %v1916 = vmul.f32 %v1543, %v1852
  %v1917 = vmul.f32 %v1545, %v1853
  %v1918 = vmul.f32 %v1547, %v1854
  %v1919 = vmul.f32 %v1549, %v1855
  %v1920 = vmul.f32 %v1551, %v1856
  %v1921 = vmul.f32 %v1553, %v1857
  %v1922 = vmul.f32 %v1555, %v1858
  %v1923 = vmul.f32 %v1557, %v1859
  %v1924 = vmul.f32 %v1559, %v1860
  %v1925 = vmul.f32 %v1561, %v1861
  %v1926 = vmul.f32 %v1563, %v1862
  %v1927 = vmul.f32 %v1565, %v1863
  %v1928 = vmul.f32 %v1567, %v1864
  %v1929 = vmul.f32 %v1569, %v1865
  %v1930 = vmul.f32 %v1571, %v1866
  %v1931 = vmul.f32 %v1573, %v1867
  %v1932 = vmul.f32 %v1575, %v1868
  %v1933 = vmul.f32 %v1577, %v1869
  %v1934 = vmul.f32 %v1579, %v1870
  %v1935 = vmul.f32 %v1581, %v1871
  %v1936 = vmul.f32 %v1583, %v1872
  %v1937 = vmul.f32 %v1585, %v1873
  %v1938 = vmul.f32 %v1587, %v1874
  %v1939 = vmul.f32 %v1589, %v1875
  %v1940 = vmul.f32 %v1591, %v1876
  %v1941 = vmul.f32 %v1593, %v1877
  %v1942 = vmul.f32 %v1595, %v1878
  %v1943 = vmul.f32 %v1597, %v1879
  %v1944 = vmul.f32 %v1599, %v1880
  %v1945 = vmul.f32 %v1601, %v1881
  %v1946 = vmul.f32 %v1603, %v1882
  %v1947 = vmul.f32 %v1605, %v1883
  %v1948 = vmul.f32 %v1607, %v1884
  %v1949 = vmul.f32 %v1609, %v1885
  %v1950 = vmul.f32 %v1611, %v1886
  %v1951 = vmul.f32 %v1613, %v1887
  %v1952 = vmul.f32 %v1615, %v1888
  %v1953 = vmul.f32 %v1617, %v1889
  %v1954 = vmul.f32 %v1619, %v1890
  %v1955 = vmul.f32 %v1621, %v1891
  %v1956 = vmul.f32 %v1623, %v1892
  %v1957 = vmul.f32 %v1625, %v1893
  %v1958 = vmul.f32 %v1627, %v1894
  %v1959 = vmul.f32 %v1629, %v1895
  %v1960 = vmul.f32 %v1631, %v1896
  %v1961 = vmul.f32 %v1633, %v1897
  %v1962 = vmul.f32 %v1635, %v1898
  %v1963 = vmul.f32 %v1637, %v1899
  %v1964 = vmul.f32 %v1639, %v1900
  %v1965 = vmul.f32 %v1641, %v1901
  %v1966 = vmul.f32 %v1643, %v1902
  %v1967 = vmul.f32 %v1645, %v1903
  %v1968 = vmul.f32 %v1647, %v1904
  %v1969 = vmul.f32 %v1649, %v1905
  %v1970 = vpack.c.bf16 %v1907, %v1906
  %v1971 = vpack.c.bf16 %v1909, %v1908
  %v1972 = vpack.c.bf16 %v1911, %v1910
  %v1973 = vpack.c.bf16 %v1913, %v1912
  %v1974 = vpack.c.bf16 %v1915, %v1914
  %v1975 = vpack.c.bf16 %v1917, %v1916
  %v1976 = vpack.c.bf16 %v1919, %v1918
  %v1977 = vpack.c.bf16 %v1921, %v1920
  %v1978 = vpack.c.bf16 %v1923, %v1922
  %v1979 = vpack.c.bf16 %v1925, %v1924
  %v1980 = vpack.c.bf16 %v1927, %v1926
  %v1981 = vpack.c.bf16 %v1929, %v1928
  %v1982 = vpack.c.bf16 %v1931, %v1930
  %v1983 = vpack.c.bf16 %v1933, %v1932
  %v1984 = vpack.c.bf16 %v1935, %v1934
  %v1985 = vpack.c.bf16 %v1937, %v1936
  %v1986 = vpack.c.bf16 %v1939, %v1938
  %v1987 = vpack.c.bf16 %v1941, %v1940
  %v1988 = vpack.c.bf16 %v1943, %v1942
  %v1989 = vpack.c.bf16 %v1945, %v1944
  %v1990 = vpack.c.bf16 %v1947, %v1946
  %v1991 = vpack.c.bf16 %v1949, %v1948
  %v1992 = vpack.c.bf16 %v1951, %v1950
  %v1993 = vpack.c.bf16 %v1953, %v1952
  %v1994 = vpack.c.bf16 %v1955, %v1954
  %v1995 = vpack.c.bf16 %v1957, %v1956
  %v1996 = vpack.c.bf16 %v1959, %v1958
  %v1997 = vpack.c.bf16 %v1961, %v1960
  %v1998 = vpack.c.bf16 %v1963, %v1962
  %v1999 = vpack.c.bf16 %v1965, %v1964
  %v2000 = vpack.c.bf16 %v1967, %v1966
  %v2001 = vpack.c.bf16 %v1969, %v1968
  %v2003 = vsel %vm384, %v1970, 0
  %v2006 = vsel %vm384, %v1971, 0
  %v2009 = vsel %vm384, %v1972, 0
  %v2012 = vsel %vm384, %v1973, 0
  %v2015 = vsel %vm384, %v1974, 0
  %v2018 = vsel %vm384, %v1975, 0
  %v2021 = vsel %vm384, %v1976, 0
  %v2024 = vsel %vm384, %v1977, 0
  %v2027 = vsel %vm384, %v1978, 0
  %v2030 = vsel %vm384, %v1979, 0
  %v2033 = vsel %vm384, %v1980, 0
  %v2036 = vsel %vm384, %v1981, 0
  %v2039 = vsel %vm384, %v1982, 0
  %v2042 = vsel %vm384, %v1983, 0
  %v2045 = vsel %vm384, %v1984, 0
  %v2048 = vsel %vm384, %v1985, 0
  %2050 = vmatprep.subr.bf16.mxu0 0
  %2051 = vmatpush1.bf16.msra.mxu0 %v736
  %2052 = vmatprep.subr.bf16.mxu0 0
  %2053 = vmatpush1.bf16.msra.mxu0 %v737
  %2054 = vmatprep.subr.bf16.mxu0 0
  %2055 = vmatpush1.bf16.msra.mxu0 0
  %2056 = vmatprep.subr.bf16.mxu0 0
  %2057 = vmatpush1.bf16.msra.mxu0 0
  %2058 = vmatprep.subr.bf16.mxu0 0
  %2059 = vmatpush1.bf16.msra.mxu0 0
  %2060 = vmatprep.subr.bf16.mxu0 0
  %2061 = vmatpush1.bf16.msra.mxu0 0
  %2062 = vmatprep.subr.bf16.mxu0 0
  %2063 = vmatpush1.bf16.msra.mxu0 0
  %2064 = vmatprep.subr.bf16.mxu0 0
  %2065 = vmatpush1.bf16.msra.mxu0 0
  %2066 = vmatprep.subr.bf16.mxu0 0
  %2067 = vmatpush1.bf16.msra.mxu0 0
  %2068 = vmatprep.subr.bf16.mxu0 0
  %2069 = vmatpush1.bf16.msra.mxu0 0
  %2070 = vmatprep.subr.bf16.mxu0 0
  %2071 = vmatpush1.bf16.msra.mxu0 0
  %2072 = vmatprep.subr.bf16.mxu0 0
  %2073 = vmatpush1.bf16.msra.mxu0 0
  %2074 = vmatprep.subr.bf16.mxu0 0
  %2075 = vmatpush1.bf16.msra.mxu0 0
  %2076 = vmatprep.subr.bf16.mxu0 0
  %2077 = vmatpush1.bf16.msra.mxu0 0
  %2078 = vmatprep.subr.bf16.mxu0 0
  %2079 = vmatpush1.bf16.msra.mxu0 0
  %2080 = vmatprep.subr.bf16.mxu0 0
  %2081 = vmatpush1.bf16.msra.mxu0 0
  %2082 = vmatprep.mubr.bf16.mxu0 0
  %2083 = vmatmul.mubr.bf16.gmra.mrb[0].mxu0 %v2003
  %v2084 = vpop.f32.mrb[0].mxu0
  %v2085 = vadd.f32 0.0, %v2084
  %v2086 = vpop.f32.mrb[0].mxu0
  %v2087 = vpop.f32.mrb[0].mxu0
  %v2088 = vadd.f32 0.0, %v2087
  %v2089 = vpop.f32.mrb[0].mxu0
  %2090 = vmatprep.mubr.bf16.mxu0 0
  %2091 = vmatmul.mubr.bf16.gmra.mrb[0].mxu0 %v2006
  %v2092 = vpop.f32.mrb[0].mxu0
  %v2093 = vadd.f32 0.0, %v2092
  %v2094 = vpop.f32.mrb[0].mxu0
  %v2095 = vpop.f32.mrb[0].mxu0
  %v2096 = vadd.f32 0.0, %v2095
  %v2097 = vpop.f32.mrb[0].mxu0
  %2098 = vmatprep.mubr.bf16.mxu0 0
  %2099 = vmatmul.mubr.bf16.gmra.mrb[0].mxu0 %v2009
  %v2100 = vpop.f32.mrb[0].mxu0
  %v2101 = vadd.f32 0.0, %v2100
  %v2102 = vpop.f32.mrb[0].mxu0
  %v2103 = vpop.f32.mrb[0].mxu0
  %v2104 = vadd.f32 0.0, %v2103
  %v2105 = vpop.f32.mrb[0].mxu0
  %2106 = vmatprep.mubr.bf16.mxu0 0
  %2107 = vmatmul.mubr.bf16.gmra.mrb[0].mxu0 %v2012
  %v2108 = vpop.f32.mrb[0].mxu0
  %v2109 = vadd.f32 0.0, %v2108
  %v2110 = vpop.f32.mrb[0].mxu0
  %v2111 = vpop.f32.mrb[0].mxu0
  %v2112 = vadd.f32 0.0, %v2111
  %v2113 = vpop.f32.mrb[0].mxu0
  %2114 = vmatprep.mubr.bf16.mxu0 0
  %2115 = vmatmul.mubr.bf16.gmra.mrb[0].mxu0 %v2015
  %v2116 = vpop.f32.mrb[0].mxu0
  %v2117 = vadd.f32 0.0, %v2116
  %v2118 = vpop.f32.mrb[0].mxu0
  %v2119 = vpop.f32.mrb[0].mxu0
  %v2120 = vadd.f32 0.0, %v2119
  %v2121 = vpop.f32.mrb[0].mxu0
  %2122 = vmatprep.mubr.bf16.mxu0 0
  %2123 = vmatmul.mubr.bf16.gmra.mrb[0].mxu0 %v2018
  %v2124 = vpop.f32.mrb[0].mxu0
  %v2125 = vadd.f32 0.0, %v2124
  %v2126 = vpop.f32.mrb[0].mxu0
  %v2127 = vpop.f32.mrb[0].mxu0
  %v2128 = vadd.f32 0.0, %v2127
  %v2129 = vpop.f32.mrb[0].mxu0
  %2130 = vmatprep.mubr.bf16.mxu0 0
  %2131 = vmatmul.mubr.bf16.gmra.mrb[0].mxu0 %v2021
  %v2132 = vpop.f32.mrb[0].mxu0
  %v2133 = vadd.f32 0.0, %v2132
  %v2134 = vpop.f32.mrb[0].mxu0
  %v2135 = vpop.f32.mrb[0].mxu0
  %v2136 = vadd.f32 0.0, %v2135
  %v2137 = vpop.f32.mrb[0].mxu0
  %2138 = vmatprep.mubr.bf16.mxu0 0
  %2139 = vmatmul.mubr.bf16.gmra.mrb[0].mxu0 %v2024
  %v2140 = vpop.f32.mrb[0].mxu0
  %v2141 = vadd.f32 0.0, %v2140
  %v2142 = vpop.f32.mrb[0].mxu0
  %v2143 = vpop.f32.mrb[0].mxu0
  %v2144 = vadd.f32 0.0, %v2143
  %v2145 = vpop.f32.mrb[0].mxu0
  %2146 = vmatprep.mubr.bf16.mxu0 0
  %2147 = vmatmul.mubr.bf16.gmra.mrb[0].mxu0 %v2027
  %v2148 = vpop.f32.mrb[0].mxu0
  %v2149 = vadd.f32 0.0, %v2148
  %v2150 = vpop.f32.mrb[0].mxu0
  %v2151 = vpop.f32.mrb[0].mxu0
  %v2152 = vadd.f32 0.0, %v2151
  %v2153 = vpop.f32.mrb[0].mxu0
  %2154 = vmatprep.mubr.bf16.mxu0 0
  %2155 = vmatmul.mubr.bf16.gmra.mrb[0].mxu0 %v2030
  %v2156 = vpop.f32.mrb[0].mxu0
  %v2157 = vadd.f32 0.0, %v2156
  %v2158 = vpop.f32.mrb[0].mxu0
  %v2159 = vpop.f32.mrb[0].mxu0
  %v2160 = vadd.f32 0.0, %v2159
  %v2161 = vpop.f32.mrb[0].mxu0
  %2162 = vmatprep.mubr.bf16.mxu0 0
  %2163 = vmatmul.mubr.bf16.gmra.mrb[0].mxu0 %v2033
  %v2164 = vpop.f32.mrb[0].mxu0
  %v2165 = vadd.f32 0.0, %v2164
  %v2166 = vpop.f32.mrb[0].mxu0
  %v2167 = vpop.f32.mrb[0].mxu0
  %v2168 = vadd.f32 0.0, %v2167
  %v2169 = vpop.f32.mrb[0].mxu0
  %2170 = vmatprep.mubr.bf16.mxu0 0
  %2171 = vmatmul.mubr.bf16.gmra.mrb[0].mxu0 %v2036
  %v2172 = vpop.f32.mrb[0].mxu0
  %v2173 = vadd.f32 0.0, %v2172
  %v2174 = vpop.f32.mrb[0].mxu0
  %v2175 = vpop.f32.mrb[0].mxu0
  %v2176 = vadd.f32 0.0, %v2175
  %v2177 = vpop.f32.mrb[0].mxu0
  %2178 = vmatprep.mubr.bf16.mxu0 0
  %2179 = vmatmul.mubr.bf16.gmra.mrb[0].mxu0 %v2039
  %v2180 = vpop.f32.mrb[0].mxu0
  %v2181 = vadd.f32 0.0, %v2180
  %v2182 = vpop.f32.mrb[0].mxu0
  %v2183 = vpop.f32.mrb[0].mxu0
  %v2184 = vadd.f32 0.0, %v2183
  %v2185 = vpop.f32.mrb[0].mxu0
  %2186 = vmatprep.mubr.bf16.mxu0 0
  %2187 = vmatmul.mubr.bf16.gmra.mrb[0].mxu0 %v2042
  %v2188 = vpop.f32.mrb[0].mxu0
  %v2189 = vadd.f32 0.0, %v2188
  %v2190 = vpop.f32.mrb[0].mxu0
  %v2191 = vpop.f32.mrb[0].mxu0
  %v2192 = vadd.f32 0.0, %v2191
  %v2193 = vpop.f32.mrb[0].mxu0
  %2194 = vmatprep.mubr.bf16.mxu0 0
  %2195 = vmatmul.mubr.bf16.gmra.mrb[0].mxu0 %v2045
  %v2196 = vpop.f32.mrb[0].mxu0
  %v2197 = vadd.f32 0.0, %v2196
  %v2198 = vpop.f32.mrb[0].mxu0
  %v2199 = vpop.f32.mrb[0].mxu0
  %v2200 = vadd.f32 0.0, %v2199
  %v2201 = vpop.f32.mrb[0].mxu0
  %2202 = vmatprep.mubr.bf16.mxu0 0
  %2203 = vmatmul.mubr.bf16.gmra.mrb[0].mxu0 %v2048
  %v2204 = vpop.f32.mrb[0].mxu0
  %v2205 = vadd.f32 0.0, %v2204
  %v2206 = vpop.f32.mrb[0].mxu0
  %v2207 = vpop.f32.mrb[0].mxu0
  %v2208 = vadd.f32 0.0, %v2207
  %v2209 = vpop.f32.mrb[0].mxu0
  %2210 = vdwg.mxu0
  %v2212 = vsel %vm384, %v1986, 0
  %v2215 = vsel %vm384, %v1987, 0
  %v2218 = vsel %vm384, %v1988, 0
  %v2221 = vsel %vm384, %v1989, 0
  %v2224 = vsel %vm384, %v1990, 0
  %v2227 = vsel %vm384, %v1991, 0
  %v2230 = vsel %vm384, %v1992, 0
  %v2233 = vsel %vm384, %v1993, 0
  %v2236 = vsel %vm384, %v1994, 0
  %v2239 = vsel %vm384, %v1995, 0
  %v2242 = vsel %vm384, %v1996, 0
  %v2245 = vsel %vm384, %v1997, 0
  %v2248 = vsel %vm384, %v1998, 0
  %v2251 = vsel %vm384, %v1999, 0
  %v2254 = vsel %vm384, %v2000, 0
  %v2257 = vsel %vm384, %v2001, 0
  %2259 = vmatprep.subr.bf16.mxu0 0
  %2260 = vmatpush1.bf16.msra.mxu0 %v738
  %2261 = vmatprep.subr.bf16.mxu0 0
  %2262 = vmatpush1.bf16.msra.mxu0 %v739
  %2263 = vmatprep.subr.bf16.mxu0 0
  %2264 = vmatpush1.bf16.msra.mxu0 0
  %2265 = vmatprep.subr.bf16.mxu0 0
  %2266 = vmatpush1.bf16.msra.mxu0 0
  %2267 = vmatprep.subr.bf16.mxu0 0
  %2268 = vmatpush1.bf16.msra.mxu0 0
  %2269 = vmatprep.subr.bf16.mxu0 0
  %2270 = vmatpush1.bf16.msra.mxu0 0
  %2271 = vmatprep.subr.bf16.mxu0 0
  %2272 = vmatpush1.bf16.msra.mxu0 0
  %2273 = vmatprep.subr.bf16.mxu0 0
  %2274 = vmatpush1.bf16.msra.mxu0 0
  %2275 = vmatprep.subr.bf16.mxu0 0
  %2276 = vmatpush1.bf16.msra.mxu0 0
  %2277 = vmatprep.subr.bf16.mxu0 0
  %2278 = vmatpush1.bf16.msra.mxu0 0
  %2279 = vmatprep.subr.bf16.mxu0 0
  %2280 = vmatpush1.bf16.msra.mxu0 0
  %2281 = vmatprep.subr.bf16.mxu0 0
  %2282 = vmatpush1.bf16.msra.mxu0 0
  %2283 = vmatprep.subr.bf16.mxu0 0
  %2284 = vmatpush1.bf16.msra.mxu0 0
  %2285 = vmatprep.subr.bf16.mxu0 0
  %2286 = vmatpush1.bf16.msra.mxu0 0
  %2287 = vmatprep.subr.bf16.mxu0 0
  %2288 = vmatpush1.bf16.msra.mxu0 0
  %2289 = vmatprep.subr.bf16.mxu0 0
  %2290 = vmatpush1.bf16.msra.mxu0 0
  %2291 = vmatprep.mubr.bf16.mxu0 0
  %2292 = vmatmul.mubr.bf16.gmra.mrb[0].mxu0 %v2212
  %v2293 = vpop.f32.mrb[0].mxu0
  %v2294 = vadd.f32 0.0, %v2293
  %v2295 = vpop.f32.mrb[0].mxu0
  %v2296 = vpop.f32.mrb[0].mxu0
  %v2297 = vadd.f32 0.0, %v2296
  %v2298 = vpop.f32.mrb[0].mxu0
  %2299 = vmatprep.mubr.bf16.mxu0 0
  %2300 = vmatmul.mubr.bf16.gmra.mrb[0].mxu0 %v2215
  %v2301 = vpop.f32.mrb[0].mxu0
  %v2302 = vadd.f32 0.0, %v2301
  %v2303 = vpop.f32.mrb[0].mxu0
  %v2304 = vpop.f32.mrb[0].mxu0
  %v2305 = vadd.f32 0.0, %v2304
  %v2306 = vpop.f32.mrb[0].mxu0
  %2307 = vmatprep.mubr.bf16.mxu0 0
  %2308 = vmatmul.mubr.bf16.gmra.mrb[0].mxu0 %v2218
  %v2309 = vpop.f32.mrb[0].mxu0
  %v2310 = vadd.f32 0.0, %v2309
  %v2311 = vpop.f32.mrb[0].mxu0
  %v2312 = vpop.f32.mrb[0].mxu0
  %v2313 = vadd.f32 0.0, %v2312
  %v2314 = vpop.f32.mrb[0].mxu0
  %2315 = vmatprep.mubr.bf16.mxu0 0
  %2316 = vmatmul.mubr.bf16.gmra.mrb[0].mxu0 %v2221
  %v2317 = vpop.f32.mrb[0].mxu0
  %v2318 = vadd.f32 0.0, %v2317
  %v2319 = vpop.f32.mrb[0].mxu0
  %v2320 = vpop.f32.mrb[0].mxu0
  %v2321 = vadd.f32 0.0, %v2320
  %v2322 = vpop.f32.mrb[0].mxu0
  %2323 = vmatprep.mubr.bf16.mxu0 0
  %2324 = vmatmul.mubr.bf16.gmra.mrb[0].mxu0 %v2224
  %v2325 = vpop.f32.mrb[0].mxu0
  %v2326 = vadd.f32 0.0, %v2325
  %v2327 = vpop.f32.mrb[0].mxu0
  %v2328 = vpop.f32.mrb[0].mxu0
  %v2329 = vadd.f32 0.0, %v2328
  %v2330 = vpop.f32.mrb[0].mxu0
  %2331 = vmatprep.mubr.bf16.mxu0 0
  %2332 = vmatmul.mubr.bf16.gmra.mrb[0].mxu0 %v2227
  %v2333 = vpop.f32.mrb[0].mxu0
  %v2334 = vadd.f32 0.0, %v2333
  %v2335 = vpop.f32.mrb[0].mxu0
  %v2336 = vpop.f32.mrb[0].mxu0
  %v2337 = vadd.f32 0.0, %v2336
  %v2338 = vpop.f32.mrb[0].mxu0
  %2339 = vmatprep.mubr.bf16.mxu0 0
  %2340 = vmatmul.mubr.bf16.gmra.mrb[0].mxu0 %v2230
  %v2341 = vpop.f32.mrb[0].mxu0
  %v2342 = vadd.f32 0.0, %v2341
  %v2343 = vpop.f32.mrb[0].mxu0
  %v2344 = vpop.f32.mrb[0].mxu0
  %v2345 = vadd.f32 0.0, %v2344
  %v2346 = vpop.f32.mrb[0].mxu0
  %2347 = vmatprep.mubr.bf16.mxu0 0
  %2348 = vmatmul.mubr.bf16.gmra.mrb[0].mxu0 %v2233
  %v2349 = vpop.f32.mrb[0].mxu0
  %v2350 = vadd.f32 0.0, %v2349
  %v2351 = vpop.f32.mrb[0].mxu0
  %v2352 = vpop.f32.mrb[0].mxu0
  %v2353 = vadd.f32 0.0, %v2352
  %v2354 = vpop.f32.mrb[0].mxu0
  %2355 = vmatprep.mubr.bf16.mxu0 0
  %2356 = vmatmul.mubr.bf16.gmra.mrb[0].mxu0 %v2236
  %v2357 = vpop.f32.mrb[0].mxu0
  %v2358 = vadd.f32 0.0, %v2357
  %v2359 = vpop.f32.mrb[0].mxu0
  %v2360 = vpop.f32.mrb[0].mxu0
  %v2361 = vadd.f32 0.0, %v2360
  %v2362 = vpop.f32.mrb[0].mxu0
  %2363 = vmatprep.mubr.bf16.mxu0 0
  %2364 = vmatmul.mubr.bf16.gmra.mrb[0].mxu0 %v2239
  %v2365 = vpop.f32.mrb[0].mxu0
  %v2366 = vadd.f32 0.0, %v2365
  %v2367 = vpop.f32.mrb[0].mxu0
  %v2368 = vpop.f32.mrb[0].mxu0
  %v2369 = vadd.f32 0.0, %v2368
  %v2370 = vpop.f32.mrb[0].mxu0
  %2371 = vmatprep.mubr.bf16.mxu0 0
  %2372 = vmatmul.mubr.bf16.gmra.mrb[0].mxu0 %v2242
  %v2373 = vpop.f32.mrb[0].mxu0
  %v2374 = vadd.f32 0.0, %v2373
  %v2375 = vpop.f32.mrb[0].mxu0
  %v2376 = vpop.f32.mrb[0].mxu0
  %v2377 = vadd.f32 0.0, %v2376
  %v2378 = vpop.f32.mrb[0].mxu0
  %2379 = vmatprep.mubr.bf16.mxu0 0
  %2380 = vmatmul.mubr.bf16.gmra.mrb[0].mxu0 %v2245
  %v2381 = vpop.f32.mrb[0].mxu0
  %v2382 = vadd.f32 0.0, %v2381
  %v2383 = vpop.f32.mrb[0].mxu0
  %v2384 = vpop.f32.mrb[0].mxu0
  %v2385 = vadd.f32 0.0, %v2384
  %v2386 = vpop.f32.mrb[0].mxu0
  %2387 = vmatprep.mubr.bf16.mxu0 0
  %2388 = vmatmul.mubr.bf16.gmra.mrb[0].mxu0 %v2248
  %v2389 = vpop.f32.mrb[0].mxu0
  %v2390 = vadd.f32 0.0, %v2389
  %v2391 = vpop.f32.mrb[0].mxu0
  %v2392 = vpop.f32.mrb[0].mxu0
  %v2393 = vadd.f32 0.0, %v2392
  %v2394 = vpop.f32.mrb[0].mxu0
  %2395 = vmatprep.mubr.bf16.mxu0 0
  %2396 = vmatmul.mubr.bf16.gmra.mrb[0].mxu0 %v2251
  %v2397 = vpop.f32.mrb[0].mxu0
  %v2398 = vadd.f32 0.0, %v2397
  %v2399 = vpop.f32.mrb[0].mxu0
  %v2400 = vpop.f32.mrb[0].mxu0
  %v2401 = vadd.f32 0.0, %v2400
  %v2402 = vpop.f32.mrb[0].mxu0
  %2403 = vmatprep.mubr.bf16.mxu0 0
  %2404 = vmatmul.mubr.bf16.gmra.mrb[0].mxu0 %v2254
  %v2405 = vpop.f32.mrb[0].mxu0
  %v2406 = vadd.f32 0.0, %v2405
  %v2407 = vpop.f32.mrb[0].mxu0
  %v2408 = vpop.f32.mrb[0].mxu0
  %v2409 = vadd.f32 0.0, %v2408
  %v2410 = vpop.f32.mrb[0].mxu0
  %2411 = vmatprep.mubr.bf16.mxu0 0
  %2412 = vmatmul.mubr.bf16.gmra.mrb[0].mxu0 %v2257
  %v2413 = vpop.f32.mrb[0].mxu0
  %v2414 = vadd.f32 0.0, %v2413
  %v2415 = vpop.f32.mrb[0].mxu0
  %v2416 = vpop.f32.mrb[0].mxu0
  %v2417 = vadd.f32 0.0, %v2416
  %v2418 = vpop.f32.mrb[0].mxu0
  %2419 = vdwg.mxu0
  %v2420 = vunpack.c.l.bf16 %v754
  %v2421 = vunpack.c.l.bf16 %v761
  %v2422 = vunpack.c.l.bf16 %v768
  %v2423 = vunpack.c.l.bf16 %v775
  %v2424 = vunpack.c.l.bf16 %v782
  %v2425 = vunpack.c.l.bf16 %v789
  %v2426 = vunpack.c.l.bf16 %v796
  %v2427 = vunpack.c.l.bf16 %v803
  %v2428 = vmul.f32 %v2085, %v2420
  %v2429 = vmul.f32 %v2088, %v2420
  %v2430 = vmul.f32 %v2093, %v2420
  %v2431 = vmul.f32 %v2096, %v2420
  %v2432 = vmul.f32 %v2101, %v2421
  %v2433 = vmul.f32 %v2104, %v2421
  %v2434 = vmul.f32 %v2109, %v2421
  %v2435 = vmul.f32 %v2112, %v2421
  %v2436 = vmul.f32 %v2117, %v2422
  %v2437 = vmul.f32 %v2120, %v2422
  %v2438 = vmul.f32 %v2125, %v2422
  %v2439 = vmul.f32 %v2128, %v2422
  %v2440 = vmul.f32 %v2133, %v2423
  %v2441 = vmul.f32 %v2136, %v2423
  %v2442 = vmul.f32 %v2141, %v2423
  %v2443 = vmul.f32 %v2144, %v2423
  %v2444 = vmul.f32 %v2149, %v2424
  %v2445 = vmul.f32 %v2152, %v2424
  %v2446 = vmul.f32 %v2157, %v2424
  %v2447 = vmul.f32 %v2160, %v2424
  %v2448 = vmul.f32 %v2165, %v2425
  %v2449 = vmul.f32 %v2168, %v2425
  %v2450 = vmul.f32 %v2173, %v2425
  %v2451 = vmul.f32 %v2176, %v2425
  %v2452 = vmul.f32 %v2181, %v2426
  %v2453 = vmul.f32 %v2184, %v2426
  %v2454 = vmul.f32 %v2189, %v2426
  %v2455 = vmul.f32 %v2192, %v2426
  %v2456 = vmul.f32 %v2197, %v2427
  %v2457 = vmul.f32 %v2200, %v2427
  %v2458 = vmul.f32 %v2205, %v2427
  %v2459 = vmul.f32 %v2208, %v2427
  %v2460 = vmul.f32 %v2294, %v2420
  %v2461 = vmul.f32 %v2297, %v2420
  %v2462 = vmul.f32 %v2302, %v2420
  %v2463 = vmul.f32 %v2305, %v2420
  %v2464 = vmul.f32 %v2310, %v2421
  %v2465 = vmul.f32 %v2313, %v2421
  %v2466 = vmul.f32 %v2318, %v2421
  %v2467 = vmul.f32 %v2321, %v2421
  %v2468 = vmul.f32 %v2326, %v2422
  %v2469 = vmul.f32 %v2329, %v2422
  %v2470 = vmul.f32 %v2334, %v2422
  %v2471 = vmul.f32 %v2337, %v2422
  %v2472 = vmul.f32 %v2342, %v2423
  %v2473 = vmul.f32 %v2345, %v2423
  %v2474 = vmul.f32 %v2350, %v2423
  %v2475 = vmul.f32 %v2353, %v2423
  %v2476 = vmul.f32 %v2358, %v2424
  %v2477 = vmul.f32 %v2361, %v2424
  %v2478 = vmul.f32 %v2366, %v2424
  %v2479 = vmul.f32 %v2369, %v2424
  %v2480 = vmul.f32 %v2374, %v2425
  %v2481 = vmul.f32 %v2377, %v2425
  %v2482 = vmul.f32 %v2382, %v2425
  %v2483 = vmul.f32 %v2385, %v2425
  %v2484 = vmul.f32 %v2390, %v2426
  %v2485 = vmul.f32 %v2393, %v2426
  %v2486 = vmul.f32 %v2398, %v2426
  %v2487 = vmul.f32 %v2401, %v2426
  %v2488 = vmul.f32 %v2406, %v2427
  %v2489 = vmul.f32 %v2409, %v2427
  %v2490 = vmul.f32 %v2414, %v2427
  %v2491 = vmul.f32 %v2417, %v2427
  %v2492 = vsel %vm384, %v2428, 0.0
  %v2493 = vsel %vm384, %v2429, 0.0
  %v2494 = vadd.f32 %v2492, %v2493
  %v2495 = vsel %vm384, %v2430, 0.0
  %v2496 = vadd.f32 %v2494, %v2495
  %v2497 = vsel %vm384, %v2431, 0.0
  %v2498 = vadd.f32 %v2496, %v2497
  %v2499 = vsel %vm384, %v2432, 0.0
  %v2500 = vadd.f32 %v2498, %v2499
  %v2501 = vsel %vm384, %v2433, 0.0
  %v2502 = vadd.f32 %v2500, %v2501
  %v2503 = vsel %vm384, %v2434, 0.0
  %v2504 = vadd.f32 %v2502, %v2503
  %v2505 = vsel %vm384, %v2435, 0.0
  %v2506 = vadd.f32 %v2504, %v2505
  %v2507 = vsel %vm384, %v2436, 0.0
  %v2508 = vadd.f32 %v2506, %v2507
  %v2509 = vsel %vm384, %v2437, 0.0
  %v2510 = vadd.f32 %v2508, %v2509
  %v2511 = vsel %vm384, %v2438, 0.0
  %v2512 = vadd.f32 %v2510, %v2511
  %v2513 = vsel %vm384, %v2439, 0.0
  %v2514 = vadd.f32 %v2512, %v2513
  %v2515 = vsel %vm384, %v2440, 0.0
  %v2516 = vadd.f32 %v2514, %v2515
  %v2517 = vsel %vm384, %v2441, 0.0
  %v2518 = vadd.f32 %v2516, %v2517
  %v2519 = vsel %vm384, %v2442, 0.0
  %v2520 = vadd.f32 %v2518, %v2519
  %v2521 = vsel %vm384, %v2443, 0.0
  %v2522 = vadd.f32 %v2520, %v2521
  %v2523 = vsel %vm384, %v2444, 0.0
  %v2524 = vadd.f32 %v2522, %v2523
  %v2525 = vsel %vm384, %v2445, 0.0
  %v2526 = vadd.f32 %v2524, %v2525
  %v2527 = vsel %vm384, %v2446, 0.0
  %v2528 = vadd.f32 %v2526, %v2527
  %v2529 = vsel %vm384, %v2447, 0.0
  %v2530 = vadd.f32 %v2528, %v2529
  %v2531 = vsel %vm384, %v2448, 0.0
  %v2532 = vadd.f32 %v2530, %v2531
  %v2533 = vsel %vm384, %v2449, 0.0
  %v2534 = vadd.f32 %v2532, %v2533
  %v2535 = vsel %vm384, %v2450, 0.0
  %v2536 = vadd.f32 %v2534, %v2535
  %v2537 = vsel %vm384, %v2451, 0.0
  %v2538 = vadd.f32 %v2536, %v2537
  %v2539 = vsel %vm384, %v2452, 0.0
  %v2540 = vadd.f32 %v2538, %v2539
  %v2541 = vsel %vm384, %v2453, 0.0
  %v2542 = vadd.f32 %v2540, %v2541
  %v2543 = vsel %vm384, %v2454, 0.0
  %v2544 = vadd.f32 %v2542, %v2543
  %v2545 = vsel %vm384, %v2455, 0.0
  %v2546 = vadd.f32 %v2544, %v2545
  %v2547 = vsel %vm384, %v2456, 0.0
  %v2548 = vadd.f32 %v2546, %v2547
  %v2549 = vsel %vm384, %v2457, 0.0
  %v2550 = vadd.f32 %v2548, %v2549
  %v2551 = vsel %vm384, %v2458, 0.0
  %v2552 = vadd.f32 %v2550, %v2551
  %v2553 = vsel %vm384, %v2459, 0.0
  %v2554 = vadd.f32 %v2552, %v2553
  %v2555 = vrot.slane %v2554, 4
  %v2556 = vadd.f32 %v2554, %v2555
  %v2557 = vrot.slane %v2556, 2
  %v2558 = vadd.f32 %v2556, %v2557
  %v2559 = vrot.slane %v2558, 1
  %v2560 = vadd.f32 %v2558, %v2559
  %v2561 = vsel %vm384, %v2460, 0.0
  %v2562 = vsel %vm384, %v2461, 0.0
  %v2563 = vadd.f32 %v2561, %v2562
  %v2564 = vsel %vm384, %v2462, 0.0
  %v2565 = vadd.f32 %v2563, %v2564
  %v2566 = vsel %vm384, %v2463, 0.0
  %v2567 = vadd.f32 %v2565, %v2566
  %v2568 = vsel %vm384, %v2464, 0.0
  %v2569 = vadd.f32 %v2567, %v2568
  %v2570 = vsel %vm384, %v2465, 0.0
  %v2571 = vadd.f32 %v2569, %v2570
  %v2572 = vsel %vm384, %v2466, 0.0
  %v2573 = vadd.f32 %v2571, %v2572
  %v2574 = vsel %vm384, %v2467, 0.0
  %v2575 = vadd.f32 %v2573, %v2574
  %v2576 = vsel %vm384, %v2468, 0.0
  %v2577 = vadd.f32 %v2575, %v2576
  %v2578 = vsel %vm384, %v2469, 0.0
  %v2579 = vadd.f32 %v2577, %v2578
  %v2580 = vsel %vm384, %v2470, 0.0
  %v2581 = vadd.f32 %v2579, %v2580
  %v2582 = vsel %vm384, %v2471, 0.0
  %v2583 = vadd.f32 %v2581, %v2582
  %v2584 = vsel %vm384, %v2472, 0.0
  %v2585 = vadd.f32 %v2583, %v2584
  %v2586 = vsel %vm384, %v2473, 0.0
  %v2587 = vadd.f32 %v2585, %v2586
  %v2588 = vsel %vm384, %v2474, 0.0
  %v2589 = vadd.f32 %v2587, %v2588
  %v2590 = vsel %vm384, %v2475, 0.0
  %v2591 = vadd.f32 %v2589, %v2590
  %v2592 = vsel %vm384, %v2476, 0.0
  %v2593 = vadd.f32 %v2591, %v2592
  %v2594 = vsel %vm384, %v2477, 0.0
  %v2595 = vadd.f32 %v2593, %v2594
  %v2596 = vsel %vm384, %v2478, 0.0
  %v2597 = vadd.f32 %v2595, %v2596
  %v2598 = vsel %vm384, %v2479, 0.0
  %v2599 = vadd.f32 %v2597, %v2598
  %v2600 = vsel %vm384, %v2480, 0.0
  %v2601 = vadd.f32 %v2599, %v2600
  %v2602 = vsel %vm384, %v2481, 0.0
  %v2603 = vadd.f32 %v2601, %v2602
  %v2604 = vsel %vm384, %v2482, 0.0
  %v2605 = vadd.f32 %v2603, %v2604
  %v2606 = vsel %vm384, %v2483, 0.0
  %v2607 = vadd.f32 %v2605, %v2606
  %v2608 = vsel %vm384, %v2484, 0.0
  %v2609 = vadd.f32 %v2607, %v2608
  %v2610 = vsel %vm384, %v2485, 0.0
  %v2611 = vadd.f32 %v2609, %v2610
  %v2612 = vsel %vm384, %v2486, 0.0
  %v2613 = vadd.f32 %v2611, %v2612
  %v2614 = vsel %vm384, %v2487, 0.0
  %v2615 = vadd.f32 %v2613, %v2614
  %v2616 = vsel %vm384, %v2488, 0.0
  %v2617 = vadd.f32 %v2615, %v2616
  %v2618 = vsel %vm384, %v2489, 0.0
  %v2619 = vadd.f32 %v2617, %v2618
  %v2620 = vsel %vm384, %v2490, 0.0
  %v2621 = vadd.f32 %v2619, %v2620
  %v2622 = vsel %vm384, %v2491, 0.0
  %v2623 = vadd.f32 %v2621, %v2622
  %v2624 = vrot.slane %v2623, 4
  %v2625 = vadd.f32 %v2623, %v2624
  %v2626 = vrot.slane %v2625, 2
  %v2627 = vadd.f32 %v2625, %v2626
  %v2628 = vrot.slane %v2627, 1
  %v2629 = vadd.f32 %v2627, %v2628
  %v2630 = vmul.f32 %v2560, 0.03125
  %v2631 = vmul.f32 %v2629, 0.03125
  %v2632 = vpack.c.bf16 %v2630, %v2630
  %v2633 = vpack.c.bf16 %v2631, %v2631
  %v2634 = vld [vmem:[%s14] sm:$0xf]
  %v2635 = vld [vmem:[%s14 + $0x4] sm:$0xf]
  %v2636 = vld [vmem:[%s14 + $0x8] sm:$0xf]
  %v2637 = vld [vmem:[%s14 + $0xc] sm:$0xf]
  %v2638 = vld [vmem:[%s15] sm:$0x1]
  %v2640 = vlaneseq
  %v2641 = vshrl.u32 %v2640, 7
  %v2642 = vsub.s32 0, %v2641
  %v2643 = vrot.slane %v2638, %v2642
  %v2647 = vunpack.c.l.b16 %v2632
  %v2648 = vunpack.c.l.b16 %v2633
  %vm2649 = vcmask 1041409
  %v2650 = vsel %vm2649, %v2648, %v2647
  %v2651 = vpack.c.b16 %v2650, %v2650
  %v2656 = vunpack.c.l.b16 %v2634
  %v2657 = vunpack.c.l.b16 %v2635
  %v2658 = vunpack.c.l.b16 %v2636
  %v2659 = vunpack.c.l.b16 %v2637
  %v2660 = vpack.c.b16 %v2657, %v2656
  %v2661 = vpack.c.b16 %v2659, %v2658
  %v2665 = vsel %vm384, %v2651, 0
  %2667 = vmatprep.subr.bf16.mxu0 0
  %2668 = vmatpush1.bf16.msra.mxu0 %v2660
  %2669 = vmatprep.subr.bf16.mxu0 0
  %2670 = vmatpush1.bf16.msra.mxu0 %v2661
  %2671 = vmatprep.subr.bf16.mxu0 0
  %2672 = vmatpush1.bf16.msra.mxu0 0
  %2673 = vmatprep.subr.bf16.mxu0 0
  %2674 = vmatpush1.bf16.msra.mxu0 0
  %2675 = vmatprep.subr.bf16.mxu0 0
  %2676 = vmatpush1.bf16.msra.mxu0 0
  %2677 = vmatprep.subr.bf16.mxu0 0
  %2678 = vmatpush1.bf16.msra.mxu0 0
  %2679 = vmatprep.subr.bf16.mxu0 0
  %2680 = vmatpush1.bf16.msra.mxu0 0
  %2681 = vmatprep.subr.bf16.mxu0 0
  %2682 = vmatpush1.bf16.msra.mxu0 0
  %2683 = vmatprep.subr.bf16.mxu0 0
  %2684 = vmatpush1.bf16.msra.mxu0 0
  %2685 = vmatprep.subr.bf16.mxu0 0
  %2686 = vmatpush1.bf16.msra.mxu0 0
  %2687 = vmatprep.subr.bf16.mxu0 0
  %2688 = vmatpush1.bf16.msra.mxu0 0
  %2689 = vmatprep.subr.bf16.mxu0 0
  %2690 = vmatpush1.bf16.msra.mxu0 0
  %2691 = vmatprep.subr.bf16.mxu0 0
  %2692 = vmatpush1.bf16.msra.mxu0 0
  %2693 = vmatprep.subr.bf16.mxu0 0
  %2694 = vmatpush1.bf16.msra.mxu0 0
  %2695 = vmatprep.subr.bf16.mxu0 0
  %2696 = vmatpush1.bf16.msra.mxu0 0
  %2697 = vmatprep.subr.bf16.mxu0 0
  %2698 = vmatpush1.bf16.msra.mxu0 0
  %2699 = vmatprep.mubr.bf16.mxu0 0
  %2700 = vmatmul.mubr.bf16.gmra.mrb[0].mxu0 %v2665
  %v2701 = vpop.f32.mrb[0].mxu0
  %v2702 = vadd.f32 %v2643, %v2701
  %v2703 = vpop.f32.mrb[0].mxu0
  %v2704 = vpop.f32.mrb[0].mxu0
  %v2705 = vpop.f32.mrb[0].mxu0
  %2706 = vdwg.mxu0
  %v2707 = vpack.c.bf16 %v2702, %v2702
  %v2708 = vld [vmem:[%s16] sm:$0xff]
  %v2709 = vld [vmem:[%s16 + $0x8] sm:$0xff]
  %v2710 = vld [vmem:[%s16 + $0x10] sm:$0xff]
  %v2711 = vld [vmem:[%s16 + $0x18] sm:$0xff]
  %v2712 = vld [vmem:[%s16 + $0x20] sm:$0xff]
  %v2713 = vld [vmem:[%s16 + $0x28] sm:$0xff]
  %v2714 = vld [vmem:[%s16 + $0x30] sm:$0xff]
  %v2715 = vld [vmem:[%s16 + $0x38] sm:$0xff]
  %v2716 = vld [vmem:[%s16 + $0x40] sm:$0xff]
  %v2717 = vld [vmem:[%s16 + $0x48] sm:$0xff]
  %v2718 = vld [vmem:[%s16 + $0x50] sm:$0xff]
  %v2719 = vld [vmem:[%s16 + $0x58] sm:$0xff]
  %v2720 = vld [vmem:[%s16 + $0x60] sm:$0xff]
  %v2721 = vld [vmem:[%s16 + $0x68] sm:$0xff]
  %v2722 = vld [vmem:[%s16 + $0x70] sm:$0xff]
  %v2723 = vld [vmem:[%s16 + $0x78] sm:$0xff]
  %v2724 = vld [vmem:[%s17] sm:$0xff]
  %v2726 = vlaneseq
  %v2727 = vshrl.u32 %v2726, 7
  %v2728 = vsub.s32 0, %v2727
  %v2729 = vrot.slane %v2724, %v2728
  %v2730 = vlaneseq
  %v2731 = vshrl.u32 %v2730, 7
  %v2732 = vsub.s32 1, %v2731
  %v2733 = vrot.slane %v2724, %v2732
  %v2734 = vlaneseq
  %v2735 = vshrl.u32 %v2734, 7
  %v2736 = vsub.s32 2, %v2735
  %v2737 = vrot.slane %v2724, %v2736
  %v2738 = vlaneseq
  %v2739 = vshrl.u32 %v2738, 7
  %v2740 = vsub.s32 3, %v2739
  %v2741 = vrot.slane %v2724, %v2740
  %v2742 = vlaneseq
  %v2743 = vshrl.u32 %v2742, 7
  %v2744 = vsub.s32 4, %v2743
  %v2745 = vrot.slane %v2724, %v2744
  %v2746 = vlaneseq
  %v2747 = vshrl.u32 %v2746, 7
  %v2748 = vsub.s32 5, %v2747
  %v2749 = vrot.slane %v2724, %v2748
  %v2750 = vlaneseq
  %v2751 = vshrl.u32 %v2750, 7
  %v2752 = vsub.s32 6, %v2751
  %v2753 = vrot.slane %v2724, %v2752
  %v2754 = vlaneseq
  %v2755 = vshrl.u32 %v2754, 7
  %v2756 = vsub.s32 7, %v2755
  %v2757 = vrot.slane %v2724, %v2756
  %v2782 = vunpack.c.l.b16 %v2708
  %v2783 = vunpack.c.h.b16 %v2708
  %v2784 = vunpack.c.l.b16 %v2709
  %v2785 = vunpack.c.h.b16 %v2709
  %v2786 = vunpack.c.l.b16 %v2710
  %v2787 = vunpack.c.h.b16 %v2710
  %v2788 = vunpack.c.l.b16 %v2711
  %v2789 = vunpack.c.h.b16 %v2711
  %v2790 = vunpack.c.l.b16 %v2712
  %v2791 = vunpack.c.h.b16 %v2712
  %v2792 = vunpack.c.l.b16 %v2713
  %v2793 = vunpack.c.h.b16 %v2713
  %v2794 = vunpack.c.l.b16 %v2714
  %v2795 = vunpack.c.h.b16 %v2714
  %v2796 = vunpack.c.l.b16 %v2715
  %v2797 = vunpack.c.h.b16 %v2715
  %v2798 = vunpack.c.l.b16 %v2716
  %v2799 = vunpack.c.h.b16 %v2716
  %v2800 = vunpack.c.l.b16 %v2717
  %v2801 = vunpack.c.h.b16 %v2717
  %v2802 = vunpack.c.l.b16 %v2718
  %v2803 = vunpack.c.h.b16 %v2718
  %v2804 = vunpack.c.l.b16 %v2719
  %v2805 = vunpack.c.h.b16 %v2719
  %v2806 = vunpack.c.l.b16 %v2720
  %v2807 = vunpack.c.h.b16 %v2720
  %v2808 = vunpack.c.l.b16 %v2721
  %v2809 = vunpack.c.h.b16 %v2721
  %v2810 = vunpack.c.l.b16 %v2722
  %v2811 = vunpack.c.h.b16 %v2722
  %v2812 = vunpack.c.l.b16 %v2723
  %v2813 = vunpack.c.h.b16 %v2723
  %v2814 = vpack.c.b16 %v2790, %v2782
  %v2815 = vpack.c.b16 %v2791, %v2783
  %v2816 = vpack.c.b16 %v2792, %v2784
  %v2817 = vpack.c.b16 %v2793, %v2785
  %v2818 = vpack.c.b16 %v2794, %v2786
  %v2819 = vpack.c.b16 %v2795, %v2787
  %v2820 = vpack.c.b16 %v2796, %v2788
  %v2821 = vpack.c.b16 %v2797, %v2789
  %v2822 = vpack.c.b16 %v2806, %v2798
  %v2823 = vpack.c.b16 %v2807, %v2799
  %v2824 = vpack.c.b16 %v2808, %v2800
  %v2825 = vpack.c.b16 %v2809, %v2801
  %v2826 = vpack.c.b16 %v2810, %v2802
  %v2827 = vpack.c.b16 %v2811, %v2803
  %v2828 = vpack.c.b16 %v2812, %v2804
  %v2829 = vpack.c.b16 %v2813, %v2805
  %v2847 = vsel %vm384, %v2707, 0
  %2849 = vmatprep.subr.bf16.mxu0 %v2815
  %2850 = vmatpush1.bf16.msra.mxu0 %v2814
  %2851 = vmatprep.subr.bf16.mxu0 %v2823
  %2852 = vmatpush1.bf16.msra.mxu0 %v2822
  %2853 = vmatprep.subr.bf16.mxu0 0
  %2854 = vmatpush1.bf16.msra.mxu0 0
  %2855 = vmatprep.subr.bf16.mxu0 0
  %2856 = vmatpush1.bf16.msra.mxu0 0
  %2857 = vmatprep.subr.bf16.mxu0 0
  %2858 = vmatpush1.bf16.msra.mxu0 0
  %2859 = vmatprep.subr.bf16.mxu0 0
  %2860 = vmatpush1.bf16.msra.mxu0 0
  %2861 = vmatprep.subr.bf16.mxu0 0
  %2862 = vmatpush1.bf16.msra.mxu0 0
  %2863 = vmatprep.subr.bf16.mxu0 0
  %2864 = vmatpush1.bf16.msra.mxu0 0
  %2865 = vmatprep.subr.bf16.mxu0 0
  %2866 = vmatpush1.bf16.msra.mxu0 0
  %2867 = vmatprep.subr.bf16.mxu0 0
  %2868 = vmatpush1.bf16.msra.mxu0 0
  %2869 = vmatprep.subr.bf16.mxu0 0
  %2870 = vmatpush1.bf16.msra.mxu0 0
  %2871 = vmatprep.subr.bf16.mxu0 0
  %2872 = vmatpush1.bf16.msra.mxu0 0
  %2873 = vmatprep.subr.bf16.mxu0 0
  %2874 = vmatpush1.bf16.msra.mxu0 0
  %2875 = vmatprep.subr.bf16.mxu0 0
  %2876 = vmatpush1.bf16.msra.mxu0 0
  %2877 = vmatprep.subr.bf16.mxu0 0
  %2878 = vmatpush1.bf16.msra.mxu0 0
  %2879 = vmatprep.subr.bf16.mxu0 0
  %2880 = vmatpush1.bf16.msra.mxu0 0
  %2881 = vmatprep.mubr.bf16.mxu0 0
  %2882 = vmatmul.mubr.bf16.gmra.mrb[0].mxu0 %v2847
  %v2883 = vpop.f32.mrb[0].mxu0
  %v2884 = vadd.f32 %v2729, %v2883
  %v2885 = vpop.f32.mrb[0].mxu0
  %v2886 = vadd.f32 %v2733, %v2885
  %v2887 = vpop.f32.mrb[0].mxu0
  %v2888 = vpop.f32.mrb[0].mxu0
  %2889 = vdwg.mxu0
  %2890 = vmatprep.subr.bf16.mxu0 %v2817
  %2891 = vmatpush1.bf16.msra.mxu0 %v2816
  %2892 = vmatprep.subr.bf16.mxu0 %v2825
  %2893 = vmatpush1.bf16.msra.mxu0 %v2824
  %2894 = vmatprep.subr.bf16.mxu0 0
  %2895 = vmatpush1.bf16.msra.mxu0 0
  %2896 = vmatprep.subr.bf16.mxu0 0
  %2897 = vmatpush1.bf16.msra.mxu0 0
  %2898 = vmatprep.subr.bf16.mxu0 0
  %2899 = vmatpush1.bf16.msra.mxu0 0
  %2900 = vmatprep.subr.bf16.mxu0 0
  %2901 = vmatpush1.bf16.msra.mxu0 0
  %2902 = vmatprep.subr.bf16.mxu0 0
  %2903 = vmatpush1.bf16.msra.mxu0 0
  %2904 = vmatprep.subr.bf16.mxu0 0
  %2905 = vmatpush1.bf16.msra.mxu0 0
  %2906 = vmatprep.subr.bf16.mxu0 0
  %2907 = vmatpush1.bf16.msra.mxu0 0
  %2908 = vmatprep.subr.bf16.mxu0 0
  %2909 = vmatpush1.bf16.msra.mxu0 0
  %2910 = vmatprep.subr.bf16.mxu0 0
  %2911 = vmatpush1.bf16.msra.mxu0 0
  %2912 = vmatprep.subr.bf16.mxu0 0
  %2913 = vmatpush1.bf16.msra.mxu0 0
  %2914 = vmatprep.subr.bf16.mxu0 0
  %2915 = vmatpush1.bf16.msra.mxu0 0
  %2916 = vmatprep.subr.bf16.mxu0 0
  %2917 = vmatpush1.bf16.msra.mxu0 0
  %2918 = vmatprep.subr.bf16.mxu0 0
  %2919 = vmatpush1.bf16.msra.mxu0 0
  %2920 = vmatprep.subr.bf16.mxu0 0
  %2921 = vmatpush1.bf16.msra.mxu0 0
  %2922 = vmatprep.mubr.bf16.mxu0 0
  %2923 = vmatmul.mubr.bf16.gmra.mrb[0].mxu0 %v2847
  %v2924 = vpop.f32.mrb[0].mxu0
  %v2925 = vadd.f32 %v2737, %v2924
  %v2926 = vpop.f32.mrb[0].mxu0
  %v2927 = vadd.f32 %v2741, %v2926
  %v2928 = vpop.f32.mrb[0].mxu0
  %v2929 = vpop.f32.mrb[0].mxu0
  %2930 = vdwg.mxu0
  %2931 = vmatprep.subr.bf16.mxu0 %v2819
  %2932 = vmatpush1.bf16.msra.mxu0 %v2818
  %2933 = vmatprep.subr.bf16.mxu0 %v2827
  %2934 = vmatpush1.bf16.msra.mxu0 %v2826
  %2935 = vmatprep.subr.bf16.mxu0 0
  %2936 = vmatpush1.bf16.msra.mxu0 0
  %2937 = vmatprep.subr.bf16.mxu0 0
  %2938 = vmatpush1.bf16.msra.mxu0 0
  %2939 = vmatprep.subr.bf16.mxu0 0
  %2940 = vmatpush1.bf16.msra.mxu0 0
  %2941 = vmatprep.subr.bf16.mxu0 0
  %2942 = vmatpush1.bf16.msra.mxu0 0
  %2943 = vmatprep.subr.bf16.mxu0 0
  %2944 = vmatpush1.bf16.msra.mxu0 0
  %2945 = vmatprep.subr.bf16.mxu0 0
  %2946 = vmatpush1.bf16.msra.mxu0 0
  %2947 = vmatprep.subr.bf16.mxu0 0
  %2948 = vmatpush1.bf16.msra.mxu0 0
  %2949 = vmatprep.subr.bf16.mxu0 0
  %2950 = vmatpush1.bf16.msra.mxu0 0
  %2951 = vmatprep.subr.bf16.mxu0 0
  %2952 = vmatpush1.bf16.msra.mxu0 0
  %2953 = vmatprep.subr.bf16.mxu0 0
  %2954 = vmatpush1.bf16.msra.mxu0 0
  %2955 = vmatprep.subr.bf16.mxu0 0
  %2956 = vmatpush1.bf16.msra.mxu0 0
  %2957 = vmatprep.subr.bf16.mxu0 0
  %2958 = vmatpush1.bf16.msra.mxu0 0
  %2959 = vmatprep.subr.bf16.mxu0 0
  %2960 = vmatpush1.bf16.msra.mxu0 0
  %2961 = vmatprep.subr.bf16.mxu0 0
  %2962 = vmatpush1.bf16.msra.mxu0 0
  %2963 = vmatprep.mubr.bf16.mxu0 0
  %2964 = vmatmul.mubr.bf16.gmra.mrb[0].mxu0 %v2847
  %v2965 = vpop.f32.mrb[0].mxu0
  %v2966 = vadd.f32 %v2745, %v2965
  %v2967 = vpop.f32.mrb[0].mxu0
  %v2968 = vadd.f32 %v2749, %v2967
  %v2969 = vpop.f32.mrb[0].mxu0
  %v2970 = vpop.f32.mrb[0].mxu0
  %2971 = vdwg.mxu0
  %2972 = vmatprep.subr.bf16.mxu0 %v2821
  %2973 = vmatpush1.bf16.msra.mxu0 %v2820
  %2974 = vmatprep.subr.bf16.mxu0 %v2829
  %2975 = vmatpush1.bf16.msra.mxu0 %v2828
  %2976 = vmatprep.subr.bf16.mxu0 0
  %2977 = vmatpush1.bf16.msra.mxu0 0
  %2978 = vmatprep.subr.bf16.mxu0 0
  %2979 = vmatpush1.bf16.msra.mxu0 0
  %2980 = vmatprep.subr.bf16.mxu0 0
  %2981 = vmatpush1.bf16.msra.mxu0 0
  %2982 = vmatprep.subr.bf16.mxu0 0
  %2983 = vmatpush1.bf16.msra.mxu0 0
  %2984 = vmatprep.subr.bf16.mxu0 0
  %2985 = vmatpush1.bf16.msra.mxu0 0
  %2986 = vmatprep.subr.bf16.mxu0 0
  %2987 = vmatpush1.bf16.msra.mxu0 0
  %2988 = vmatprep.subr.bf16.mxu0 0
  %2989 = vmatpush1.bf16.msra.mxu0 0
  %2990 = vmatprep.subr.bf16.mxu0 0
  %2991 = vmatpush1.bf16.msra.mxu0 0
  %2992 = vmatprep.subr.bf16.mxu0 0
  %2993 = vmatpush1.bf16.msra.mxu0 0
  %2994 = vmatprep.subr.bf16.mxu0 0
  %2995 = vmatpush1.bf16.msra.mxu0 0
  %2996 = vmatprep.subr.bf16.mxu0 0
  %2997 = vmatpush1.bf16.msra.mxu0 0
  %2998 = vmatprep.subr.bf16.mxu0 0
  %2999 = vmatpush1.bf16.msra.mxu0 0
  %3000 = vmatprep.subr.bf16.mxu0 0
  %3001 = vmatpush1.bf16.msra.mxu0 0
  %3002 = vmatprep.subr.bf16.mxu0 0
  %3003 = vmatpush1.bf16.msra.mxu0 0
  %3004 = vmatprep.mubr.bf16.mxu0 0
  %3005 = vmatmul.mubr.bf16.gmra.mrb[0].mxu0 %v2847
  %v3006 = vpop.f32.mrb[0].mxu0
  %v3007 = vadd.f32 %v2753, %v3006
  %v3008 = vpop.f32.mrb[0].mxu0
  %v3009 = vadd.f32 %v2757, %v3008
  %v3010 = vpop.f32.mrb[0].mxu0
  %v3011 = vpop.f32.mrb[0].mxu0
  %3012 = vdwg.mxu0
  %v3013 = vmax.f32 %v2884, 0.0
  %v3014 = vmax.f32 %v2886, 0.0
  %v3015 = vmax.f32 %v2925, 0.0
  %v3016 = vmax.f32 %v2927, 0.0
  %v3017 = vmax.f32 %v2966, 0.0
  %v3018 = vmax.f32 %v2968, 0.0
  %v3019 = vmax.f32 %v3007, 0.0
  %v3020 = vmax.f32 %v3009, 0.0
  %v3021 = vpack.c.bf16 %v3013, %v3013
  %v3022 = vpack.c.bf16 %v3014, %v3014
  %v3023 = vpack.c.bf16 %v3015, %v3015
  %v3024 = vpack.c.bf16 %v3016, %v3016
  %v3025 = vpack.c.bf16 %v3017, %v3017
  %v3026 = vpack.c.bf16 %v3018, %v3018
  %v3027 = vpack.c.bf16 %v3019, %v3019
  %v3028 = vpack.c.bf16 %v3020, %v3020
  %v3029 = vld [vmem:[%s18] sm:$0xf]
  %v3030 = vld [vmem:[%s18 + $0x4] sm:$0xf]
  %v3031 = vld [vmem:[%s18 + $0x8] sm:$0xf]
  %v3032 = vld [vmem:[%s18 + $0xc] sm:$0xf]
  %v3033 = vld [vmem:[%s18 + $0x10] sm:$0xf]
  %v3034 = vld [vmem:[%s18 + $0x14] sm:$0xf]
  %v3035 = vld [vmem:[%s18 + $0x18] sm:$0xf]
  %v3036 = vld [vmem:[%s18 + $0x1c] sm:$0xf]
  %v3037 = vld [vmem:[%s18 + $0x20] sm:$0xf]
  %v3038 = vld [vmem:[%s18 + $0x24] sm:$0xf]
  %v3039 = vld [vmem:[%s18 + $0x28] sm:$0xf]
  %v3040 = vld [vmem:[%s18 + $0x2c] sm:$0xf]
  %v3041 = vld [vmem:[%s18 + $0x30] sm:$0xf]
  %v3042 = vld [vmem:[%s18 + $0x34] sm:$0xf]
  %v3043 = vld [vmem:[%s18 + $0x38] sm:$0xf]
  %v3044 = vld [vmem:[%s18 + $0x3c] sm:$0xf]
  %v3045 = vld [vmem:[%s18 + $0x40] sm:$0xf]
  %v3046 = vld [vmem:[%s18 + $0x44] sm:$0xf]
  %v3047 = vld [vmem:[%s18 + $0x48] sm:$0xf]
  %v3048 = vld [vmem:[%s18 + $0x4c] sm:$0xf]
  %v3049 = vld [vmem:[%s18 + $0x50] sm:$0xf]
  %v3050 = vld [vmem:[%s18 + $0x54] sm:$0xf]
  %v3051 = vld [vmem:[%s18 + $0x58] sm:$0xf]
  %v3052 = vld [vmem:[%s18 + $0x5c] sm:$0xf]
  %v3053 = vld [vmem:[%s18 + $0x60] sm:$0xf]
  %v3054 = vld [vmem:[%s18 + $0x64] sm:$0xf]
  %v3055 = vld [vmem:[%s18 + $0x68] sm:$0xf]
  %v3056 = vld [vmem:[%s18 + $0x6c] sm:$0xf]
  %v3057 = vld [vmem:[%s18 + $0x70] sm:$0xf]
  %v3058 = vld [vmem:[%s18 + $0x74] sm:$0xf]
  %v3059 = vld [vmem:[%s18 + $0x78] sm:$0xf]
  %v3060 = vld [vmem:[%s18 + $0x7c] sm:$0xf]
  %v3061 = vld [vmem:[%s18 + $0x80] sm:$0xf]
  %v3062 = vld [vmem:[%s18 + $0x84] sm:$0xf]
  %v3063 = vld [vmem:[%s18 + $0x88] sm:$0xf]
  %v3064 = vld [vmem:[%s18 + $0x8c] sm:$0xf]
  %v3065 = vld [vmem:[%s18 + $0x90] sm:$0xf]
  %v3066 = vld [vmem:[%s18 + $0x94] sm:$0xf]
  %v3067 = vld [vmem:[%s18 + $0x98] sm:$0xf]
  %v3068 = vld [vmem:[%s18 + $0x9c] sm:$0xf]
  %v3069 = vld [vmem:[%s18 + $0xa0] sm:$0xf]
  %v3070 = vld [vmem:[%s18 + $0xa4] sm:$0xf]
  %v3071 = vld [vmem:[%s18 + $0xa8] sm:$0xf]
  %v3072 = vld [vmem:[%s18 + $0xac] sm:$0xf]
  %v3073 = vld [vmem:[%s18 + $0xb0] sm:$0xf]
  %v3074 = vld [vmem:[%s18 + $0xb4] sm:$0xf]
  %v3075 = vld [vmem:[%s18 + $0xb8] sm:$0xf]
  %v3076 = vld [vmem:[%s18 + $0xbc] sm:$0xf]
  %v3077 = vld [vmem:[%s18 + $0xc0] sm:$0xf]
  %v3078 = vld [vmem:[%s18 + $0xc4] sm:$0xf]
  %v3079 = vld [vmem:[%s18 + $0xc8] sm:$0xf]
  %v3080 = vld [vmem:[%s18 + $0xcc] sm:$0xf]
  %v3081 = vld [vmem:[%s18 + $0xd0] sm:$0xf]
  %v3082 = vld [vmem:[%s18 + $0xd4] sm:$0xf]
  %v3083 = vld [vmem:[%s18 + $0xd8] sm:$0xf]
  %v3084 = vld [vmem:[%s18 + $0xdc] sm:$0xf]
  %v3085 = vld [vmem:[%s18 + $0xe0] sm:$0xf]
  %v3086 = vld [vmem:[%s18 + $0xe4] sm:$0xf]
  %v3087 = vld [vmem:[%s18 + $0xe8] sm:$0xf]
  %v3088 = vld [vmem:[%s18 + $0xec] sm:$0xf]
  %v3089 = vld [vmem:[%s18 + $0xf0] sm:$0xf]
  %v3090 = vld [vmem:[%s18 + $0xf4] sm:$0xf]
  %v3091 = vld [vmem:[%s18 + $0xf8] sm:$0xf]
  %v3092 = vld [vmem:[%s18 + $0xfc] sm:$0xf]
  %v3093 = vld [vmem:[%s18 + $0x100] sm:$0xf]
  %v3094 = vld [vmem:[%s18 + $0x104] sm:$0xf]
  %v3095 = vld [vmem:[%s18 + $0x108] sm:$0xf]
  %v3096 = vld [vmem:[%s18 + $0x10c] sm:$0xf]
  %v3097 = vld [vmem:[%s18 + $0x110] sm:$0xf]
  %v3098 = vld [vmem:[%s18 + $0x114] sm:$0xf]
  %v3099 = vld [vmem:[%s18 + $0x118] sm:$0xf]
  %v3100 = vld [vmem:[%s18 + $0x11c] sm:$0xf]
  %v3101 = vld [vmem:[%s18 + $0x120] sm:$0xf]
  %v3102 = vld [vmem:[%s18 + $0x124] sm:$0xf]
  %v3103 = vld [vmem:[%s18 + $0x128] sm:$0xf]
  %v3104 = vld [vmem:[%s18 + $0x12c] sm:$0xf]
  %v3105 = vld [vmem:[%s18 + $0x130] sm:$0xf]
  %v3106 = vld [vmem:[%s18 + $0x134] sm:$0xf]
  %v3107 = vld [vmem:[%s18 + $0x138] sm:$0xf]
  %v3108 = vld [vmem:[%s18 + $0x13c] sm:$0xf]
  %v3109 = vld [vmem:[%s18 + $0x140] sm:$0xf]
  %v3110 = vld [vmem:[%s18 + $0x144] sm:$0xf]
  %v3111 = vld [vmem:[%s18 + $0x148] sm:$0xf]
  %v3112 = vld [vmem:[%s18 + $0x14c] sm:$0xf]
  %v3113 = vld [vmem:[%s18 + $0x150] sm:$0xf]
  %v3114 = vld [vmem:[%s18 + $0x154] sm:$0xf]
  %v3115 = vld [vmem:[%s18 + $0x158] sm:$0xf]
  %v3116 = vld [vmem:[%s18 + $0x15c] sm:$0xf]
  %v3117 = vld [vmem:[%s18 + $0x160] sm:$0xf]
  %v3118 = vld [vmem:[%s18 + $0x164] sm:$0xf]
  %v3119 = vld [vmem:[%s18 + $0x168] sm:$0xf]
  %v3120 = vld [vmem:[%s18 + $0x16c] sm:$0xf]
  %v3121 = vld [vmem:[%s18 + $0x170] sm:$0xf]
  %v3122 = vld [vmem:[%s18 + $0x174] sm:$0xf]
  %v3123 = vld [vmem:[%s18 + $0x178] sm:$0xf]
  %v3124 = vld [vmem:[%s18 + $0x17c] sm:$0xf]
  %v3125 = vld [vmem:[%s18 + $0x180] sm:$0xf]
  %v3126 = vld [vmem:[%s18 + $0x184] sm:$0xf]
  %v3127 = vld [vmem:[%s18 + $0x188] sm:$0xf]
  %v3128 = vld [vmem:[%s18 + $0x18c] sm:$0xf]
  %v3129 = vld [vmem:[%s18 + $0x190] sm:$0xf]
  %v3130 = vld [vmem:[%s18 + $0x194] sm:$0xf]
  %v3131 = vld [vmem:[%s18 + $0x198] sm:$0xf]
  %v3132 = vld [vmem:[%s18 + $0x19c] sm:$0xf]
  %v3133 = vld [vmem:[%s18 + $0x1a0] sm:$0xf]
  %v3134 = vld [vmem:[%s18 + $0x1a4] sm:$0xf]
  %v3135 = vld [vmem:[%s18 + $0x1a8] sm:$0xf]
  %v3136 = vld [vmem:[%s18 + $0x1ac] sm:$0xf]
  %v3137 = vld [vmem:[%s18 + $0x1b0] sm:$0xf]
  %v3138 = vld [vmem:[%s18 + $0x1b4] sm:$0xf]
  %v3139 = vld [vmem:[%s18 + $0x1b8] sm:$0xf]
  %v3140 = vld [vmem:[%s18 + $0x1bc] sm:$0xf]
  %v3141 = vld [vmem:[%s18 + $0x1c0] sm:$0xf]
  %v3142 = vld [vmem:[%s18 + $0x1c4] sm:$0xf]
  %v3143 = vld [vmem:[%s18 + $0x1c8] sm:$0xf]
  %v3144 = vld [vmem:[%s18 + $0x1cc] sm:$0xf]
  %v3145 = vld [vmem:[%s18 + $0x1d0] sm:$0xf]
  %v3146 = vld [vmem:[%s18 + $0x1d4] sm:$0xf]
  %v3147 = vld [vmem:[%s18 + $0x1d8] sm:$0xf]
  %v3148 = vld [vmem:[%s18 + $0x1dc] sm:$0xf]
  %v3149 = vld [vmem:[%s18 + $0x1e0] sm:$0xf]
  %v3150 = vld [vmem:[%s18 + $0x1e4] sm:$0xf]
  %v3151 = vld [vmem:[%s18 + $0x1e8] sm:$0xf]
  %v3152 = vld [vmem:[%s18 + $0x1ec] sm:$0xf]
  %v3153 = vld [vmem:[%s18 + $0x1f0] sm:$0xf]
  %v3154 = vld [vmem:[%s18 + $0x1f4] sm:$0xf]
  %v3155 = vld [vmem:[%s18 + $0x1f8] sm:$0xf]
  %v3156 = vld [vmem:[%s18 + $0x1fc] sm:$0xf]
  %v3157 = vld [vmem:[%s19] sm:$0x1]
  %v3159 = vlaneseq
  %v3160 = vshrl.u32 %v3159, 7
  %v3161 = vsub.s32 0, %v3160
  %v3162 = vrot.slane %v3157, %v3161
  %v3292 = vunpack.c.l.b16 %v3029
  %v3293 = vunpack.c.l.b16 %v3030
  %v3294 = vunpack.c.l.b16 %v3031
  %v3295 = vunpack.c.l.b16 %v3032
  %v3296 = vunpack.c.l.b16 %v3033
  %v3297 = vunpack.c.l.b16 %v3034
  %v3298 = vunpack.c.l.b16 %v3035
  %v3299 = vunpack.c.l.b16 %v3036
  %v3300 = vunpack.c.l.b16 %v3037
  %v3301 = vunpack.c.l.b16 %v3038
  %v3302 = vunpack.c.l.b16 %v3039
  %v3303 = vunpack.c.l.b16 %v3040
  %v3304 = vunpack.c.l.b16 %v3041
  %v3305 = vunpack.c.l.b16 %v3042
  %v3306 = vunpack.c.l.b16 %v3043
  %v3307 = vunpack.c.l.b16 %v3044
  %v3308 = vunpack.c.l.b16 %v3045
  %v3309 = vunpack.c.l.b16 %v3046
  %v3310 = vunpack.c.l.b16 %v3047
  %v3311 = vunpack.c.l.b16 %v3048
  %v3312 = vunpack.c.l.b16 %v3049
  %v3313 = vunpack.c.l.b16 %v3050
  %v3314 = vunpack.c.l.b16 %v3051
  %v3315 = vunpack.c.l.b16 %v3052
  %v3316 = vunpack.c.l.b16 %v3053
  %v3317 = vunpack.c.l.b16 %v3054
  %v3318 = vunpack.c.l.b16 %v3055
  %v3319 = vunpack.c.l.b16 %v3056
  %v3320 = vunpack.c.l.b16 %v3057
  %v3321 = vunpack.c.l.b16 %v3058
  %v3322 = vunpack.c.l.b16 %v3059
  %v3323 = vunpack.c.l.b16 %v3060
  %v3324 = vunpack.c.l.b16 %v3061
  %v3325 = vunpack.c.l.b16 %v3062
  %v3326 = vunpack.c.l.b16 %v3063
  %v3327 = vunpack.c.l.b16 %v3064
  %v3328 = vunpack.c.l.b16 %v3065
  %v3329 = vunpack.c.l.b16 %v3066
  %v3330 = vunpack.c.l.b16 %v3067
  %v3331 = vunpack.c.l.b16 %v3068
  %v3332 = vunpack.c.l.b16 %v3069
  %v3333 = vunpack.c.l.b16 %v3070
  %v3334 = vunpack.c.l.b16 %v3071
  %v3335 = vunpack.c.l.b16 %v3072
  %v3336 = vunpack.c.l.b16 %v3073
  %v3337 = vunpack.c.l.b16 %v3074
  %v3338 = vunpack.c.l.b16 %v3075
  %v3339 = vunpack.c.l.b16 %v3076
  %v3340 = vunpack.c.l.b16 %v3077
  %v3341 = vunpack.c.l.b16 %v3078
  %v3342 = vunpack.c.l.b16 %v3079
  %v3343 = vunpack.c.l.b16 %v3080
  %v3344 = vunpack.c.l.b16 %v3081
  %v3345 = vunpack.c.l.b16 %v3082
  %v3346 = vunpack.c.l.b16 %v3083
  %v3347 = vunpack.c.l.b16 %v3084
  %v3348 = vunpack.c.l.b16 %v3085
  %v3349 = vunpack.c.l.b16 %v3086
  %v3350 = vunpack.c.l.b16 %v3087
  %v3351 = vunpack.c.l.b16 %v3088
  %v3352 = vunpack.c.l.b16 %v3089
  %v3353 = vunpack.c.l.b16 %v3090
  %v3354 = vunpack.c.l.b16 %v3091
  %v3355 = vunpack.c.l.b16 %v3092
  %v3356 = vunpack.c.l.b16 %v3093
  %v3357 = vunpack.c.l.b16 %v3094
  %v3358 = vunpack.c.l.b16 %v3095
  %v3359 = vunpack.c.l.b16 %v3096
  %v3360 = vunpack.c.l.b16 %v3097
  %v3361 = vunpack.c.l.b16 %v3098
  %v3362 = vunpack.c.l.b16 %v3099
  %v3363 = vunpack.c.l.b16 %v3100
  %v3364 = vunpack.c.l.b16 %v3101
  %v3365 = vunpack.c.l.b16 %v3102
  %v3366 = vunpack.c.l.b16 %v3103
  %v3367 = vunpack.c.l.b16 %v3104
  %v3368 = vunpack.c.l.b16 %v3105
  %v3369 = vunpack.c.l.b16 %v3106
  %v3370 = vunpack.c.l.b16 %v3107
  %v3371 = vunpack.c.l.b16 %v3108
  %v3372 = vunpack.c.l.b16 %v3109
  %v3373 = vunpack.c.l.b16 %v3110
  %v3374 = vunpack.c.l.b16 %v3111
  %v3375 = vunpack.c.l.b16 %v3112
  %v3376 = vunpack.c.l.b16 %v3113
  %v3377 = vunpack.c.l.b16 %v3114
  %v3378 = vunpack.c.l.b16 %v3115
  %v3379 = vunpack.c.l.b16 %v3116
  %v3380 = vunpack.c.l.b16 %v3117
  %v3381 = vunpack.c.l.b16 %v3118
  %v3382 = vunpack.c.l.b16 %v3119
  %v3383 = vunpack.c.l.b16 %v3120
  %v3384 = vunpack.c.l.b16 %v3121
  %v3385 = vunpack.c.l.b16 %v3122
  %v3386 = vunpack.c.l.b16 %v3123
  %v3387 = vunpack.c.l.b16 %v3124
  %v3388 = vunpack.c.l.b16 %v3125
  %v3389 = vunpack.c.l.b16 %v3126
  %v3390 = vunpack.c.l.b16 %v3127
  %v3391 = vunpack.c.l.b16 %v3128
  %v3392 = vunpack.c.l.b16 %v3129
  %v3393 = vunpack.c.l.b16 %v3130
  %v3394 = vunpack.c.l.b16 %v3131
  %v3395 = vunpack.c.l.b16 %v3132
  %v3396 = vunpack.c.l.b16 %v3133
  %v3397 = vunpack.c.l.b16 %v3134
  %v3398 = vunpack.c.l.b16 %v3135
  %v3399 = vunpack.c.l.b16 %v3136
  %v3400 = vunpack.c.l.b16 %v3137
  %v3401 = vunpack.c.l.b16 %v3138
  %v3402 = vunpack.c.l.b16 %v3139
  %v3403 = vunpack.c.l.b16 %v3140
  %v3404 = vunpack.c.l.b16 %v3141
  %v3405 = vunpack.c.l.b16 %v3142
  %v3406 = vunpack.c.l.b16 %v3143
  %v3407 = vunpack.c.l.b16 %v3144
  %v3408 = vunpack.c.l.b16 %v3145
  %v3409 = vunpack.c.l.b16 %v3146
  %v3410 = vunpack.c.l.b16 %v3147
  %v3411 = vunpack.c.l.b16 %v3148
  %v3412 = vunpack.c.l.b16 %v3149
  %v3413 = vunpack.c.l.b16 %v3150
  %v3414 = vunpack.c.l.b16 %v3151
  %v3415 = vunpack.c.l.b16 %v3152
  %v3416 = vunpack.c.l.b16 %v3153
  %v3417 = vunpack.c.l.b16 %v3154
  %v3418 = vunpack.c.l.b16 %v3155
  %v3419 = vunpack.c.l.b16 %v3156
  %v3420 = vpack.c.b16 %v3293, %v3292
  %v3421 = vpack.c.b16 %v3295, %v3294
  %v3422 = vpack.c.b16 %v3297, %v3296
  %v3423 = vpack.c.b16 %v3299, %v3298
  %v3424 = vpack.c.b16 %v3301, %v3300
  %v3425 = vpack.c.b16 %v3303, %v3302
  %v3426 = vpack.c.b16 %v3305, %v3304
  %v3427 = vpack.c.b16 %v3307, %v3306
  %v3428 = vpack.c.b16 %v3309, %v3308
  %v3429 = vpack.c.b16 %v3311, %v3310
  %v3430 = vpack.c.b16 %v3313, %v3312
  %v3431 = vpack.c.b16 %v3315, %v3314
  %v3432 = vpack.c.b16 %v3317, %v3316
  %v3433 = vpack.c.b16 %v3319, %v3318
  %v3434 = vpack.c.b16 %v3321, %v3320
  %v3435 = vpack.c.b16 %v3323, %v3322
  %v3436 = vpack.c.b16 %v3325, %v3324
  %v3437 = vpack.c.b16 %v3327, %v3326
  %v3438 = vpack.c.b16 %v3329, %v3328
  %v3439 = vpack.c.b16 %v3331, %v3330
  %v3440 = vpack.c.b16 %v3333, %v3332
  %v3441 = vpack.c.b16 %v3335, %v3334
  %v3442 = vpack.c.b16 %v3337, %v3336
  %v3443 = vpack.c.b16 %v3339, %v3338
  %v3444 = vpack.c.b16 %v3341, %v3340
  %v3445 = vpack.c.b16 %v3343, %v3342
  %v3446 = vpack.c.b16 %v3345, %v3344
  %v3447 = vpack.c.b16 %v3347, %v3346
  %v3448 = vpack.c.b16 %v3349, %v3348
  %v3449 = vpack.c.b16 %v3351, %v3350
  %v3450 = vpack.c.b16 %v3353, %v3352
  %v3451 = vpack.c.b16 %v3355, %v3354
  %v3452 = vpack.c.b16 %v3357, %v3356
  %v3453 = vpack.c.b16 %v3359, %v3358
  %v3454 = vpack.c.b16 %v3361, %v3360
  %v3455 = vpack.c.b16 %v3363, %v3362
  %v3456 = vpack.c.b16 %v3365, %v3364
  %v3457 = vpack.c.b16 %v3367, %v3366
  %v3458 = vpack.c.b16 %v3369, %v3368
  %v3459 = vpack.c.b16 %v3371, %v3370
  %v3460 = vpack.c.b16 %v3373, %v3372
  %v3461 = vpack.c.b16 %v3375, %v3374
  %v3462 = vpack.c.b16 %v3377, %v3376
  %v3463 = vpack.c.b16 %v3379, %v3378
  %v3464 = vpack.c.b16 %v3381, %v3380
  %v3465 = vpack.c.b16 %v3383, %v3382
  %v3466 = vpack.c.b16 %v3385, %v3384
  %v3467 = vpack.c.b16 %v3387, %v3386
  %v3468 = vpack.c.b16 %v3389, %v3388
  %v3469 = vpack.c.b16 %v3391, %v3390
  %v3470 = vpack.c.b16 %v3393, %v3392
  %v3471 = vpack.c.b16 %v3395, %v3394
  %v3472 = vpack.c.b16 %v3397, %v3396
  %v3473 = vpack.c.b16 %v3399, %v3398
  %v3474 = vpack.c.b16 %v3401, %v3400
  %v3475 = vpack.c.b16 %v3403, %v3402
  %v3476 = vpack.c.b16 %v3405, %v3404
  %v3477 = vpack.c.b16 %v3407, %v3406
  %v3478 = vpack.c.b16 %v3409, %v3408
  %v3479 = vpack.c.b16 %v3411, %v3410
  %v3480 = vpack.c.b16 %v3413, %v3412
  %v3481 = vpack.c.b16 %v3415, %v3414
  %v3482 = vpack.c.b16 %v3417, %v3416
  %v3483 = vpack.c.b16 %v3419, %v3418
  %3548 = vmatprep.subr.bf16.mxu0 0
  %3549 = vmatpush1.bf16.msra.mxu0 %v3420
  %3550 = vmatprep.subr.bf16.mxu0 0
  %3551 = vmatpush1.bf16.msra.mxu0 %v3421
  %3552 = vmatprep.subr.bf16.mxu0 0
  %3553 = vmatpush1.bf16.msra.mxu0 %v3422
  %3554 = vmatprep.subr.bf16.mxu0 0
  %3555 = vmatpush1.bf16.msra.mxu0 %v3423
  %3556 = vmatprep.subr.bf16.mxu0 0
  %3557 = vmatpush1.bf16.msra.mxu0 %v3424
  %3558 = vmatprep.subr.bf16.mxu0 0
  %3559 = vmatpush1.bf16.msra.mxu0 %v3425
  %3560 = vmatprep.subr.bf16.mxu0 0
  %3561 = vmatpush1.bf16.msra.mxu0 %v3426
  %3562 = vmatprep.subr.bf16.mxu0 0
  %3563 = vmatpush1.bf16.msra.mxu0 %v3427
  %3564 = vmatprep.subr.bf16.mxu0 0
  %3565 = vmatpush1.bf16.msra.mxu0 %v3428
  %3566 = vmatprep.subr.bf16.mxu0 0
  %3567 = vmatpush1.bf16.msra.mxu0 %v3429
  %3568 = vmatprep.subr.bf16.mxu0 0
  %3569 = vmatpush1.bf16.msra.mxu0 %v3430
  %3570 = vmatprep.subr.bf16.mxu0 0
  %3571 = vmatpush1.bf16.msra.mxu0 %v3431
  %3572 = vmatprep.subr.bf16.mxu0 0
  %3573 = vmatpush1.bf16.msra.mxu0 %v3432
  %3574 = vmatprep.subr.bf16.mxu0 0
  %3575 = vmatpush1.bf16.msra.mxu0 %v3433
  %3576 = vmatprep.subr.bf16.mxu0 0
  %3577 = vmatpush1.bf16.msra.mxu0 %v3434
  %3578 = vmatprep.subr.bf16.mxu0 0
  %3579 = vmatpush1.bf16.msra.mxu0 %v3435
  %3580 = vmatprep.mubr.bf16.mxu0 %v3022
  %3581 = vmatmul.mubr.bf16.gmra.mrb[0].mxu0 %v3021
  %v3582 = vpop.f32.mrb[0].mxu0
  %v3583 = vadd.f32 %v3162, %v3582
  %v3584 = vpop.f32.mrb[0].mxu0
  %v3585 = vpop.f32.mrb[0].mxu0
  %v3586 = vpop.f32.mrb[0].mxu0
  %3587 = vdwg.mxu0
  %3588 = vmatprep.subr.bf16.mxu0 0
  %3589 = vmatpush1.bf16.msra.mxu0 %v3436
  %3590 = vmatprep.subr.bf16.mxu0 0
  %3591 = vmatpush1.bf16.msra.mxu0 %v3437
  %3592 = vmatprep.subr.bf16.mxu0 0
  %3593 = vmatpush1.bf16.msra.mxu0 %v3438
  %3594 = vmatprep.subr.bf16.mxu0 0
  %3595 = vmatpush1.bf16.msra.mxu0 %v3439
  %3596 = vmatprep.subr.bf16.mxu0 0
  %3597 = vmatpush1.bf16.msra.mxu0 %v3440
  %3598 = vmatprep.subr.bf16.mxu0 0
  %3599 = vmatpush1.bf16.msra.mxu0 %v3441
  %3600 = vmatprep.subr.bf16.mxu0 0
  %3601 = vmatpush1.bf16.msra.mxu0 %v3442
  %3602 = vmatprep.subr.bf16.mxu0 0
  %3603 = vmatpush1.bf16.msra.mxu0 %v3443
  %3604 = vmatprep.subr.bf16.mxu0 0
  %3605 = vmatpush1.bf16.msra.mxu0 %v3444
  %3606 = vmatprep.subr.bf16.mxu0 0
  %3607 = vmatpush1.bf16.msra.mxu0 %v3445
  %3608 = vmatprep.subr.bf16.mxu0 0
  %3609 = vmatpush1.bf16.msra.mxu0 %v3446
  %3610 = vmatprep.subr.bf16.mxu0 0
  %3611 = vmatpush1.bf16.msra.mxu0 %v3447
  %3612 = vmatprep.subr.bf16.mxu0 0
  %3613 = vmatpush1.bf16.msra.mxu0 %v3448
  %3614 = vmatprep.subr.bf16.mxu0 0
  %3615 = vmatpush1.bf16.msra.mxu0 %v3449
  %3616 = vmatprep.subr.bf16.mxu0 0
  %3617 = vmatpush1.bf16.msra.mxu0 %v3450
  %3618 = vmatprep.subr.bf16.mxu0 0
  %3619 = vmatpush1.bf16.msra.mxu0 %v3451
  %3620 = vmatprep.mubr.bf16.mxu0 %v3024
  %3621 = vmatmul.mubr.bf16.gmra.mrb[0].mxu0 %v3023
  %v3622 = vpop.f32.mrb[0].mxu0
  %v3623 = vadd.f32 %v3583, %v3622
  %v3624 = vpop.f32.mrb[0].mxu0
  %v3625 = vpop.f32.mrb[0].mxu0
  %v3626 = vpop.f32.mrb[0].mxu0
  %3627 = vdwg.mxu0
  %3628 = vmatprep.subr.bf16.mxu0 0
  %3629 = vmatpush1.bf16.msra.mxu0 %v3452
  %3630 = vmatprep.subr.bf16.mxu0 0
  %3631 = vmatpush1.bf16.msra.mxu0 %v3453
  %3632 = vmatprep.subr.bf16.mxu0 0
  %3633 = vmatpush1.bf16.msra.mxu0 %v3454
  %3634 = vmatprep.subr.bf16.mxu0 0
  %3635 = vmatpush1.bf16.msra.mxu0 %v3455
  %3636 = vmatprep.subr.bf16.mxu0 0
  %3637 = vmatpush1.bf16.msra.mxu0 %v3456
  %3638 = vmatprep.subr.bf16.mxu0 0
  %3639 = vmatpush1.bf16.msra.mxu0 %v3457
  %3640 = vmatprep.subr.bf16.mxu0 0
  %3641 = vmatpush1.bf16.msra.mxu0 %v3458
  %3642 = vmatprep.subr.bf16.mxu0 0
  %3643 = vmatpush1.bf16.msra.mxu0 %v3459
  %3644 = vmatprep.subr.bf16.mxu0 0
  %3645 = vmatpush1.bf16.msra.mxu0 %v3460
  %3646 = vmatprep.subr.bf16.mxu0 0
  %3647 = vmatpush1.bf16.msra.mxu0 %v3461
  %3648 = vmatprep.subr.bf16.mxu0 0
  %3649 = vmatpush1.bf16.msra.mxu0 %v3462
  %3650 = vmatprep.subr.bf16.mxu0 0
  %3651 = vmatpush1.bf16.msra.mxu0 %v3463
  %3652 = vmatprep.subr.bf16.mxu0 0
  %3653 = vmatpush1.bf16.msra.mxu0 %v3464
  %3654 = vmatprep.subr.bf16.mxu0 0
  %3655 = vmatpush1.bf16.msra.mxu0 %v3465
  %3656 = vmatprep.subr.bf16.mxu0 0
  %3657 = vmatpush1.bf16.msra.mxu0 %v3466
  %3658 = vmatprep.subr.bf16.mxu0 0
  %3659 = vmatpush1.bf16.msra.mxu0 %v3467
  %3660 = vmatprep.mubr.bf16.mxu0 %v3026
  %3661 = vmatmul.mubr.bf16.gmra.mrb[0].mxu0 %v3025
  %v3662 = vpop.f32.mrb[0].mxu0
  %v3663 = vadd.f32 %v3623, %v3662
  %v3664 = vpop.f32.mrb[0].mxu0
  %v3665 = vpop.f32.mrb[0].mxu0
  %v3666 = vpop.f32.mrb[0].mxu0
  %3667 = vdwg.mxu0
  %3668 = vmatprep.subr.bf16.mxu0 0
  %3669 = vmatpush1.bf16.msra.mxu0 %v3468
  %3670 = vmatprep.subr.bf16.mxu0 0
  %3671 = vmatpush1.bf16.msra.mxu0 %v3469
  %3672 = vmatprep.subr.bf16.mxu0 0
  %3673 = vmatpush1.bf16.msra.mxu0 %v3470
  %3674 = vmatprep.subr.bf16.mxu0 0
  %3675 = vmatpush1.bf16.msra.mxu0 %v3471
  %3676 = vmatprep.subr.bf16.mxu0 0
  %3677 = vmatpush1.bf16.msra.mxu0 %v3472
  %3678 = vmatprep.subr.bf16.mxu0 0
  %3679 = vmatpush1.bf16.msra.mxu0 %v3473
  %3680 = vmatprep.subr.bf16.mxu0 0
  %3681 = vmatpush1.bf16.msra.mxu0 %v3474
  %3682 = vmatprep.subr.bf16.mxu0 0
  %3683 = vmatpush1.bf16.msra.mxu0 %v3475
  %3684 = vmatprep.subr.bf16.mxu0 0
  %3685 = vmatpush1.bf16.msra.mxu0 %v3476
  %3686 = vmatprep.subr.bf16.mxu0 0
  %3687 = vmatpush1.bf16.msra.mxu0 %v3477
  %3688 = vmatprep.subr.bf16.mxu0 0
  %3689 = vmatpush1.bf16.msra.mxu0 %v3478
  %3690 = vmatprep.subr.bf16.mxu0 0
  %3691 = vmatpush1.bf16.msra.mxu0 %v3479
  %3692 = vmatprep.subr.bf16.mxu0 0
  %3693 = vmatpush1.bf16.msra.mxu0 %v3480
  %3694 = vmatprep.subr.bf16.mxu0 0
  %3695 = vmatpush1.bf16.msra.mxu0 %v3481
  %3696 = vmatprep.subr.bf16.mxu0 0
  %3697 = vmatpush1.bf16.msra.mxu0 %v3482
  %3698 = vmatprep.subr.bf16.mxu0 0
  %3699 = vmatpush1.bf16.msra.mxu0 %v3483
  %3700 = vmatprep.mubr.bf16.mxu0 %v3028
  %3701 = vmatmul.mubr.bf16.gmra.mrb[0].mxu0 %v3027
  %v3702 = vpop.f32.mrb[0].mxu0
  %v3703 = vadd.f32 %v3663, %v3702
  %v3704 = vpop.f32.mrb[0].mxu0
  %v3705 = vpop.f32.mrb[0].mxu0
  %v3706 = vpop.f32.mrb[0].mxu0
  %3707 = vdwg.mxu0
  %v3708 = vld [vmem:[%s3] sm:$0x3]
  %v3709 = vadd.f32 %v3703, %v3708
  %v3710 = vld [vmem:[%s1] sm:$0xf]
  %v3711 = vld [vmem:[%s1 + $0x4] sm:$0xf]
  %v3712 = vld [vmem:[%s1 + $0x8] sm:$0xf]
  %v3713 = vld [vmem:[%s1 + $0xc] sm:$0xf]
  %v3714 = vld [vmem:[%s1 + $0x10] sm:$0xf]
  %v3715 = vld [vmem:[%s1 + $0x14] sm:$0xf]
  %v3716 = vld [vmem:[%s1 + $0x18] sm:$0xf]
  %v3717 = vld [vmem:[%s1 + $0x1c] sm:$0xf]
  %v3720 = vunpack.c.l.s4 1966171168
  %v3721 = vunpack.c.0.s8 %v3720
  %v3722 = vlaneseq
  %v3723 = vshrl.u32 %v3722, 7
  %v3724 = vsub.s32 %v3721, %v3723
  %v3725 = vrot.slane %v3709, %v3724
  %v3726 = vcombine.high %v3725, %v3725
  %v3728 = vunpack.c.l.s4 1966171168
  %v3729 = vunpack.c.0.s8 %v3728
  %v3730 = vlaneseq
  %v3731 = vshrl.u32 %v3730, 7
  %v3732 = vsub.s32 %v3729, %v3731
  %v3733 = vrot.slane %v3725, %v3732
  %v3735 = vunpack.c.l.s4 1966171168
  %v3736 = vunpack.c.0.s8 %v3735
  %v3737 = vlaneseq
  %v3738 = vshrl.u32 %v3737, 7
  %v3739 = vsub.s32 %v3736, %v3738
  %v3740 = vrot.slane %v3726, %v3739
  %v3741 = vunpack.c.l.bf16 %v3710
  %v3742 = vunpack.c.l.bf16 %v3711
  %v3743 = vunpack.c.l.bf16 %v3712
  %v3744 = vunpack.c.l.bf16 %v3713
  %v3745 = vunpack.c.l.bf16 %v3714
  %v3746 = vunpack.c.l.bf16 %v3715
  %v3747 = vunpack.c.l.bf16 %v3716
  %v3748 = vunpack.c.l.bf16 %v3717
  %v3749 = vlaneseq
  %v3750 = vshrl.u32 %v3749, 7
  %v3751 = vsub.s32 0, %v3750
  %v3752 = vrot.slane %v3733, %v3751
  %v3753 = vlaneseq
  %v3754 = vshrl.u32 %v3753, 7
  %v3755 = vsub.s32 0, %v3754
  %v3756 = vrot.slane %v3740, %v3755
  %v3759 = vmul.f32 %v3741, %v3752
  %v3760 = vmul.f32 %v3742, %v3752
  %v3761 = vmul.f32 %v3743, %v3752
  %v3762 = vmul.f32 %v3744, %v3752
  %v3763 = vmul.f32 %v3745, %v3756
  %v3764 = vmul.f32 %v3746, %v3756
  %v3765 = vmul.f32 %v3747, %v3756
  %v3766 = vmul.f32 %v3748, %v3756
  %v3767 = vpack.c.bf16 %v3760, %v3759
  %v3768 = vpack.c.bf16 %v3762, %v3761
  %v3769 = vpack.c.bf16 %v3764, %v3763
  %v3770 = vpack.c.bf16 %v3766, %v3765
  %v3771 = vld [vmem:[%s2] sm:$0xf]
  %v3772 = vld [vmem:[%s2 + $0x4] sm:$0xf]
  %v3773 = vld [vmem:[%s2 + $0x8] sm:$0xf]
  %v3774 = vld [vmem:[%s2 + $0xc] sm:$0xf]
  %v3775 = vld [vmem:[%s2 + $0x10] sm:$0xf]
  %v3776 = vld [vmem:[%s2 + $0x14] sm:$0xf]
  %v3777 = vld [vmem:[%s2 + $0x18] sm:$0xf]
  %v3778 = vld [vmem:[%s2 + $0x1c] sm:$0xf]
  %v3783 = vunpack.c.l.b16 %v3771
  %v3784 = vunpack.c.l.b16 %v3772
  %v3785 = vunpack.c.l.b16 %v3773
  %v3786 = vunpack.c.l.b16 %v3774
  %v3787 = vpack.c.b16 %v3784, %v3783
  %v3788 = vpack.c.b16 %v3786, %v3785
  %v3792 = vsel %vm384, %v3767, 0
  %v3795 = vsel %vm384, %v3768, 0
  %3797 = vmatprep.subr.bf16.mxu0 0
  %3798 = vmatpush1.bf16.msra.mxu0 %v3787
  %3799 = vmatprep.subr.bf16.mxu0 0
  %3800 = vmatpush1.bf16.msra.mxu0 %v3788
  %3801 = vmatprep.subr.bf16.mxu0 0
  %3802 = vmatpush1.bf16.msra.mxu0 0
  %3803 = vmatprep.subr.bf16.mxu0 0
  %3804 = vmatpush1.bf16.msra.mxu0 0
  %3805 = vmatprep.subr.bf16.mxu0 0
  %3806 = vmatpush1.bf16.msra.mxu0 0
  %3807 = vmatprep.subr.bf16.mxu0 0
  %3808 = vmatpush1.bf16.msra.mxu0 0
  %3809 = vmatprep.subr.bf16.mxu0 0
  %3810 = vmatpush1.bf16.msra.mxu0 0
  %3811 = vmatprep.subr.bf16.mxu0 0
  %3812 = vmatpush1.bf16.msra.mxu0 0
  %3813 = vmatprep.subr.bf16.mxu0 0
  %3814 = vmatpush1.bf16.msra.mxu0 0
  %3815 = vmatprep.subr.bf16.mxu0 0
  %3816 = vmatpush1.bf16.msra.mxu0 0
  %3817 = vmatprep.subr.bf16.mxu0 0
  %3818 = vmatpush1.bf16.msra.mxu0 0
  %3819 = vmatprep.subr.bf16.mxu0 0
  %3820 = vmatpush1.bf16.msra.mxu0 0
  %3821 = vmatprep.subr.bf16.mxu0 0
  %3822 = vmatpush1.bf16.msra.mxu0 0
  %3823 = vmatprep.subr.bf16.mxu0 0
  %3824 = vmatpush1.bf16.msra.mxu0 0
  %3825 = vmatprep.subr.bf16.mxu0 0
  %3826 = vmatpush1.bf16.msra.mxu0 0
  %3827 = vmatprep.subr.bf16.mxu0 0
  %3828 = vmatpush1.bf16.msra.mxu0 0
  %3829 = vmatprep.mubr.bf16.mxu0 0
  %3830 = vmatmul.mubr.bf16.gmra.mrb[0].mxu0 %v3792
  %v3831 = vpop.f32.mrb[0].mxu0
  %v3832 = vadd.f32 0.0, %v3831
  %v3833 = vpop.f32.mrb[0].mxu0
  %v3834 = vpop.f32.mrb[0].mxu0
  %v3835 = vadd.f32 0.0, %v3834
  %v3836 = vpop.f32.mrb[0].mxu0
  %3837 = vmatprep.mubr.bf16.mxu0 0
  %3838 = vmatmul.mubr.bf16.gmra.mrb[0].mxu0 %v3795
  %v3839 = vpop.f32.mrb[0].mxu0
  %v3840 = vadd.f32 0.0, %v3839
  %v3841 = vpop.f32.mrb[0].mxu0
  %v3842 = vpop.f32.mrb[0].mxu0
  %v3843 = vadd.f32 0.0, %v3842
  %v3844 = vpop.f32.mrb[0].mxu0
  %3845 = vdwg.mxu0
  %v3850 = vunpack.c.l.b16 %v3775
  %v3851 = vunpack.c.l.b16 %v3776
  %v3852 = vunpack.c.l.b16 %v3777
  %v3853 = vunpack.c.l.b16 %v3778
  %v3854 = vpack.c.b16 %v3851, %v3850
  %v3855 = vpack.c.b16 %v3853, %v3852
  %v3859 = vsel %vm384, %v3769, 0
  %v3862 = vsel %vm384, %v3770, 0
  %3864 = vmatprep.subr.bf16.mxu0 0
  %3865 = vmatpush1.bf16.msra.mxu0 %v3854
  %3866 = vmatprep.subr.bf16.mxu0 0
  %3867 = vmatpush1.bf16.msra.mxu0 %v3855
  %3868 = vmatprep.subr.bf16.mxu0 0
  %3869 = vmatpush1.bf16.msra.mxu0 0
  %3870 = vmatprep.subr.bf16.mxu0 0
  %3871 = vmatpush1.bf16.msra.mxu0 0
  %3872 = vmatprep.subr.bf16.mxu0 0
  %3873 = vmatpush1.bf16.msra.mxu0 0
  %3874 = vmatprep.subr.bf16.mxu0 0
  %3875 = vmatpush1.bf16.msra.mxu0 0
  %3876 = vmatprep.subr.bf16.mxu0 0
  %3877 = vmatpush1.bf16.msra.mxu0 0
  %3878 = vmatprep.subr.bf16.mxu0 0
  %3879 = vmatpush1.bf16.msra.mxu0 0
  %3880 = vmatprep.subr.bf16.mxu0 0
  %3881 = vmatpush1.bf16.msra.mxu0 0
  %3882 = vmatprep.subr.bf16.mxu0 0
  %3883 = vmatpush1.bf16.msra.mxu0 0
  %3884 = vmatprep.subr.bf16.mxu0 0
  %3885 = vmatpush1.bf16.msra.mxu0 0
  %3886 = vmatprep.subr.bf16.mxu0 0
  %3887 = vmatpush1.bf16.msra.mxu0 0
  %3888 = vmatprep.subr.bf16.mxu0 0
  %3889 = vmatpush1.bf16.msra.mxu0 0
  %3890 = vmatprep.subr.bf16.mxu0 0
  %3891 = vmatpush1.bf16.msra.mxu0 0
  %3892 = vmatprep.subr.bf16.mxu0 0
  %3893 = vmatpush1.bf16.msra.mxu0 0
  %3894 = vmatprep.subr.bf16.mxu0 0
  %3895 = vmatpush1.bf16.msra.mxu0 0
  %3896 = vmatprep.mubr.bf16.mxu0 0
  %3897 = vmatmul.mubr.bf16.gmra.mrb[0].mxu0 %v3859
  %v3898 = vpop.f32.mrb[0].mxu0
  %v3899 = vadd.f32 0.0, %v3898
  %v3900 = vpop.f32.mrb[0].mxu0
  %v3901 = vpop.f32.mrb[0].mxu0
  %v3902 = vadd.f32 0.0, %v3901
  %v3903 = vpop.f32.mrb[0].mxu0
  %3904 = vmatprep.mubr.bf16.mxu0 0
  %3905 = vmatmul.mubr.bf16.gmra.mrb[0].mxu0 %v3862
  %v3906 = vpop.f32.mrb[0].mxu0
  %v3907 = vadd.f32 0.0, %v3906
  %v3908 = vpop.f32.mrb[0].mxu0
  %v3909 = vpop.f32.mrb[0].mxu0
  %v3910 = vadd.f32 0.0, %v3909
  %v3911 = vpop.f32.mrb[0].mxu0
  %3912 = vdwg.mxu0
  %3913 = vst.msk [vmem:[%s20] sm:$0xff] %vm384, %v3832
  %3914 = vst.msk [vmem:[%s20 + $0x8] sm:$0xff] %vm384, %v3835
  %3915 = vst.msk [vmem:[%s20 + $0x10] sm:$0xff] %vm384, %v3840
  %3916 = vst.msk [vmem:[%s20 + $0x18] sm:$0xff] %vm384, %v3843
  %3917 = vst.msk [vmem:[%s20 + $0x20] sm:$0xff] %vm384, %v3899
  %3918 = vst.msk [vmem:[%s20 + $0x28] sm:$0xff] %vm384, %v3902
  %3919 = vst.msk [vmem:[%s20 + $0x30] sm:$0xff] %vm384, %v3907
  %3920 = vst.msk [vmem:[%s20 + $0x38] sm:$0xff] %vm384, %v3910
  // Predicated region
  $region82: #{svd_noise_unet_forward.1} parent=0 // pred_check
    _
  $region83: #{svd_noise_unet_forward.1} parent=0 // pred_check_branch
    %3922 = sbr.rel (0) target = $region85
  $region84: #{svd_noise_unet_forward.1} parent=0 // pred_region
    _
  $region85: #{svd_noise_unet_forward.1} parent=0 // pred_fallthru
    _
  // Predicated region
  $region86: #{svd_noise_unet_forward.1} parent=0 // pred_check
    _
  $region87: #{svd_noise_unet_forward.1} parent=0 // pred_check_branch
    %3924 = sbr.rel (0) target = $region89
  $region88: #{svd_noise_unet_forward.1} parent=0 // pred_region
    _
  $region89: #{svd_noise_unet_forward.1} parent=0 // pred_fallthru
    _

</llo_original>
